<compile_context>
chip_gen: v5e
topology: v5e:2x2
jax: 0.10.0
libtpu: 0.0.40
codegen_flags: <defaults>
</compile_context>

<pallas_src>
import jax
import jax.numpy as jnp
from jax.experimental import pallas as pl
from jax.experimental.pallas import tpu as pltpu

_LIN1_K_TILE = 3840   # K tile for the linear1 contraction (multiple of 128)


def _round_up(x, m):
    return (x + m - 1) // m * m


# ----------------------------- Pallas kernels -------------------------------

def _conv_relu_pool_kernel(p00_ref, p01_ref, p10_ref, p11_ref, w_ref, b_ref, o_ref):
    # Fused VALID conv (im2col matmul) + bias + ReLU + 2x2/stride-2 max pool.
    # Each p?? holds the patches of one pooling-window corner; rows are pooled
    # output pixels (b, yp, xp).
    w = w_ref[...]
    m0 = jnp.maximum(jnp.dot(p00_ref[...], w, preferred_element_type=jnp.float32),
                     jnp.dot(p01_ref[...], w, preferred_element_type=jnp.float32))
    m1 = jnp.maximum(jnp.dot(p10_ref[...], w, preferred_element_type=jnp.float32),
                     jnp.dot(p11_ref[...], w, preferred_element_type=jnp.float32))
    o_ref[...] = jnp.maximum(jnp.maximum(m0, m1) + b_ref[...], 0.0).astype(o_ref.dtype)


def _mlp_head_kernel(x_ref, w1_ref, b1_ref, w2_ref, b2_ref, w3_ref, b3_ref,
                     o_ref, acc_ref):
    # Fused linear1(+ReLU) -> linear2(+ReLU) -> linear3.
    # Grid axis = K tiles of the linear1 contraction; acc_ref : (B, 128) f32.
    k = pl.program_id(0)

    @pl.when(k == 0)
    def _():
        acc_ref[...] = jnp.zeros_like(acc_ref)

    acc_ref[...] += jnp.dot(x_ref[...], w1_ref[...],
                            preferred_element_type=jnp.float32)

    @pl.when(k == pl.num_programs(0) - 1)
    def _():
        h1 = jnp.maximum(acc_ref[...] + b1_ref[...], 0.0)
        h2 = jnp.dot(h1, w2_ref[...], preferred_element_type=jnp.float32)
        h2 = jnp.maximum(h2 + b2_ref[...], 0.0)
        # linear3 has a single output unit -> lane reduction instead of an N=1 matmul.
        v = jnp.sum(h2 * w3_ref[...], axis=-1, keepdims=True) + b3_ref[...]
        o_ref[...] = v.astype(o_ref.dtype)


# ----------------------------- Pallas wrappers -------------------------------

def conv_relu_pool_pallas(x, w2d, b_row, kh, kw, *, channels_last, block_rows):
    """Fused VALID conv (stride 1) + ReLU + 2x2 max-pool (stride 2, floor).

    x       : (B, Cin, H, W) if not channels_last else (B, H, W, Cin)
    w2d     : (Cin*kh*kw, Cout)  -- torch conv weight flattened over (Cin,KH,KW)
    b_row   : (1, Cout)
    returns : (B, Hp, Wp, Cout)  NHWC pooled activation
    """
    if channels_last:
        B, H, W, Cin = x.shape
        chan = lambda ci: x[..., ci]
    else:
        B, Cin, H, W = x.shape
        chan = lambda ci: x[:, ci]
    Cout = w2d.shape[1]
    Ho, Wo = H - kh + 1, W - kw + 1
    Hp, Wp = Ho // 2, Wo // 2
    K = Cin * kh * kw
    M = B * Hp * Wp

    def corner(r, dx):          # im2col patches of one pooling-window corner (glue)
        cols = []
        for ci in range(Cin):
            xc = chan(ci)
            for ky in range(kh):
                for kx in range(kw):
                    cols.append(xc[:, r + ky:r + ky + 2 * Hp:2,
                                   dx + kx:dx + kx + 2 * Wp:2])
        return jnp.stack(cols, axis=-1).reshape(M, K)

    corners = [corner(0, 0), corner(0, 1), corner(1, 0), corner(1, 1)]

    bm = min(block_rows, _round_up(M, 8))
    p_spec = pl.BlockSpec((bm, K), lambda i: (i, 0))
    out = pl.pallas_call(
        _conv_relu_pool_kernel,
        out_shape=jax.ShapeDtypeStruct((M, Cout), jnp.float32),
        grid=(pl.cdiv(M, bm),),
        in_specs=[p_spec, p_spec, p_spec, p_spec,
                  pl.BlockSpec((K, Cout), lambda i: (0, 0)),
                  pl.BlockSpec((1, Cout), lambda i: (0, 0))],
        out_specs=pl.BlockSpec((bm, Cout), lambda i: (i, 0)),
        compiler_params=pltpu.CompilerParams(dimension_semantics=("parallel",)),
    )(*corners, w2d, b_row)
    return out.reshape(B, Hp, Wp, Cout)


def mlp_head_pallas(feat, w1, b1, w2, b2, w3_row, b3, *, tk=_LIN1_K_TILE):
    """v = relu(relu(feat@w1+b1) @ w2 + b2) . w3 + b3, as one Pallas kernel."""
    B, K = feat.shape
    Kp, N1 = w1.shape
    N2 = w2.shape[1]
    assert Kp % tk == 0 and Kp >= K
    if Kp != K:   # tiny (B, Kp-K) zero pad so every K tile is aligned & valid
        feat = jnp.pad(feat, ((0, 0), (0, Kp - K)))
    nk = Kp // tk
    return pl.pallas_call(
        _mlp_head_kernel,
        out_shape=jax.ShapeDtypeStruct((B, 1), jnp.float32),
        grid=(nk,),
        in_specs=[
            pl.BlockSpec((B, tk), lambda k: (0, k)),     # feat K chunk
            pl.BlockSpec((tk, N1), lambda k: (k, 0)),    # w1 K chunk (streamed)
            pl.BlockSpec((1, N1), lambda k: (0, 0)),
            pl.BlockSpec((N1, N2), lambda k: (0, 0)),
            pl.BlockSpec((1, N2), lambda k: (0, 0)),
            pl.BlockSpec((1, N2), lambda k: (0, 0)),     # w3 as a (1, 64) row
            pl.BlockSpec((1, 1), lambda k: (0, 0)),
        ],
        out_specs=pl.BlockSpec((B, 1), lambda k: (0, 0)),
        scratch_shapes=[pltpu.VMEM((B, N1), jnp.float32)],
        compiler_params=pltpu.CompilerParams(dimension_semantics=("arbitrary",)),
    )(feat, w1, b1, w2, b2, w3_row, b3)


# ------------------------------ critic forward -------------------------------

def critic_forward(prep, x_nchw):
    x = x_nchw.astype(jnp.float32)
    # conv1 reads the NCHW input directly (im2col slices per channel, no transpose)
    y = conv_relu_pool_pallas(x, prep["conv1_w2d"], prep["conv1_b"], 3, 3,
                              channels_last=False, block_rows=1024)   # (B,63,31,16)
    y = conv_relu_pool_pallas(y, prep["conv2_w2d"], prep["conv2_b"], 2, 2,
                              channels_last=True, block_rows=256)     # (B,31,15,32)
    B = y.shape[0]
    feat = y.reshape(B, -1)   # free NHWC flatten; lin1 rows were pre-permuted to match
    return mlp_head_pallas(feat, prep["lin1_w_kn"], prep["lin1_b"],
                           prep["lin2_w_kn"], prep["lin2_b"],
                           prep["lin3_w_row"], prep["lin3_b"])        # (B, 1)


def prepare_params(params):
    """One-time conversion of torch-layout params into kernel layouts (runs once,
    outside the jitted forward -> no per-call weight transposes)."""
    C2, Hp2, Wp2 = 32, 31, 15
    flat = C2 * Hp2 * Wp2                       # 14880
    k_pad = _round_up(flat, _LIN1_K_TILE)       # 15360

    # linear1: torch weight (128, flat) with flat in NCHW (c,h,w) order.
    # Reorder rows to NHWC (h,w,c), transpose to (K, N), zero-pad K to the tile.
    w1 = params["lin1_w"].reshape(128, C2, Hp2, Wp2)
    w1 = jnp.transpose(w1, (2, 3, 1, 0)).reshape(flat, 128)
    w1 = jnp.pad(w1, ((0, k_pad - flat), (0, 0)))

    def conv_w2d(w):            # (Cout,Cin,KH,KW) -> (Cin*KH*KW, Cout)
        return jnp.transpose(w, (1, 2, 3, 0)).reshape(-1, w.shape[0])

    return {
        "conv1_w2d": conv_w2d(params["conv1_w"]),
        "conv1_b": params["conv1_b"].reshape(1, -1),
        "conv2_w2d": conv_w2d(params["conv2_w"]),
        "conv2_b": params["conv2_b"].reshape(1, -1),
        "lin1_w_kn": w1,
        "lin1_b": params["lin1_b"].reshape(1, -1),
        "lin2_w_kn": params["lin2_w"].T,                 # (128, 64)
        "lin2_b": params["lin2_b"].reshape(1, -1),
        "lin3_w_row": params["lin3_w"].reshape(1, -1),   # (1, 64)
        "lin3_b": params["lin3_b"].reshape(1, -1),
    }


def reference_forward(params, x):
    """Pure-XLA reference with PyTorch semantics (sanity check only)."""
    dn = ("NCHW", "OIHW", "NCHW")
    y = jax.lax.conv_general_dilated(x, params["conv1_w"], (1, 1), "VALID",
                                     dimension_numbers=dn)
    y = jax.nn.relu(y + params["conv1_b"][None, :, None, None])
    y = jax.lax.reduce_window(y, -jnp.inf, jax.lax.max,
                              (1, 1, 2, 2), (1, 1, 2, 2), "VALID")
    y = jax.lax.conv_general_dilated(y, params["conv2_w"], (1, 1), "VALID",
                                     dimension_numbers=dn)
    y = jax.nn.relu(y + params["conv2_b"][None, :, None, None])
    y = jax.lax.reduce_window(y, -jnp.inf, jax.lax.max,
                              (1, 1, 2, 2), (1, 1, 2, 2), "VALID")
    feat = y.reshape(y.shape[0], -1)
    h = jax.nn.relu(feat @ params["lin1_w"].T + params["lin1_b"])
    h = jax.nn.relu(h @ params["lin2_w"].T + params["lin2_b"])
    return h @ params["lin3_w"].T + params["lin3_b"]


def init_params(key, input_dim):
    ks = jax.random.split(key, 10)

    def normal(k, shape, fan_in):
        return jax.random.normal(k, shape, jnp.float32) / jnp.sqrt(jnp.float32(fan_in))

    flat = 32 * 31 * 15
    return {
        # torch layouts: conv (Cout, Cin, KH, KW), linear (out, in)
        "conv1_w": normal(ks[0], (16, input_dim, 3, 3), input_dim * 9),
        "conv1_b": normal(ks[1], (16,), input_dim * 9),
        "conv2_w": normal(ks[2], (32, 16, 2, 2), 16 * 4),
        "conv2_b": normal(ks[3], (32,), 16 * 4),
        "lin1_w": normal(ks[4], (128, flat), flat),
        "lin1_b": normal(ks[5], (128,), flat),
        "lin2_w": normal(ks[6], (64, 128), 128),
        "lin2_b": normal(ks[7], (64,), 128),
        "lin3_w": normal(ks[8], (1, 64), 64),
        "lin3_b": normal(ks[9], (1,), 64),
    }


if __name__ == "__main__":
    key = jax.random.PRNGKey(0)
    k_in, k_par = jax.random.split(key)

    # spatial size 128x64 is forced by the hard-coded Linear(32*31*15, 128)
    B, input_dim, H, W = 2, 4, 128, 64
    x = jax.random.normal(k_in, (B, input_dim, H, W), jnp.float32)   # NCHW
    params = init_params(k_par, input_dim)

    prep = prepare_params(params)            # one-time weight layout prep
    fwd = jax.jit(critic_forward)

    v = jax.block_until_ready(fwd(prep, x))
    assert v.shape == (B, 1), v.shape
    assert bool(jnp.all(jnp.isfinite(v)))

    # sanity check against a pure-XLA reference of the PyTorch forward
    v_ref = jax.block_until_ready(reference_forward(params, x))
    assert bool(jnp.allclose(v, v_ref, rtol=5e-2, atol=5e-2)), (v, v_ref)

    print("KERNEL_OK")
</pallas_src>

<mosaic_0001>
module attributes {stable_mosaic.version = 11 : i64} {
  func.func @_conv_relu_pool_kernel(%arg0: i32, %arg1: memref<1024x36xf32, #tpu.memory_space<vmem>>, %arg2: memref<1024x36xf32, #tpu.memory_space<vmem>>, %arg3: memref<1024x36xf32, #tpu.memory_space<vmem>>, %arg4: memref<1024x36xf32, #tpu.memory_space<vmem>>, %arg5: memref<36x16xf32, #tpu.memory_space<vmem>>, %arg6: memref<1x16xf32, #tpu.memory_space<vmem>>, %arg7: memref<1024x16xf32, #tpu.memory_space<vmem>>) attributes {dimension_semantics = [#tpu.dimension_semantics<parallel>], iteration_bounds = array<i64: 4>, scalar_prefetch = 0 : i64, scratch_operands = 0 : i64, tpu.core_type = #tpu.core_type<tc>, window_params = [{transform_indices = @transform_0, window_bounds = array<i64: 1024, 36>}, {transform_indices = @transform_1, window_bounds = array<i64: 1024, 36>}, {transform_indices = @transform_2, window_bounds = array<i64: 1024, 36>}, {transform_indices = @transform_3, window_bounds = array<i64: 1024, 36>}, {pipeline_mode = #tpu.pipeline_mode<synchronous>, transform_indices = @transform_4, window_bounds = array<i64: 36, 16>}, {pipeline_mode = #tpu.pipeline_mode<synchronous>, transform_indices = @transform_5, window_bounds = array<i64: 1, 16>}, {transform_indices = @transform_6, window_bounds = array<i64: 1024, 16>}]} {
    %c0 = arith.constant 0 : index
    %c0_0 = arith.constant 0 : index
    %0 = vector.load %arg5[%c0, %c0_0] : memref<36x16xf32, #tpu.memory_space<vmem>>, vector<36x16xf32>
    %c0_1 = arith.constant 0 : index
    %c0_2 = arith.constant 0 : index
    %1 = vector.load %arg1[%c0_1, %c0_2] : memref<1024x36xf32, #tpu.memory_space<vmem>>, vector<1024x36xf32>
    %cst = arith.constant dense<0.000000e+00> : vector<1024x16xf32>
    %2 = tpu.matmul %1, %0, %cst {dimension_numbers = #tpu.dot_dimension_numbers<[1], [0], [0], [1], [0, 0, 1, 1], [], []>} : vector<1024x36xf32>, vector<36x16xf32>, vector<1024x16xf32> -> vector<1024x16xf32>
    %c0_3 = arith.constant 0 : index
    %c0_4 = arith.constant 0 : index
    %3 = vector.load %arg2[%c0_3, %c0_4] : memref<1024x36xf32, #tpu.memory_space<vmem>>, vector<1024x36xf32>
    %cst_5 = arith.constant dense<0.000000e+00> : vector<1024x16xf32>
    %4 = tpu.matmul %3, %0, %cst_5 {dimension_numbers = #tpu.dot_dimension_numbers<[1], [0], [0], [1], [0, 0, 1, 1], [], []>} : vector<1024x36xf32>, vector<36x16xf32>, vector<1024x16xf32> -> vector<1024x16xf32>
    %5 = arith.maximumf %2, %4 : vector<1024x16xf32>
    %c0_6 = arith.constant 0 : index
    %c0_7 = arith.constant 0 : index
    %6 = vector.load %arg3[%c0_6, %c0_7] : memref<1024x36xf32, #tpu.memory_space<vmem>>, vector<1024x36xf32>
    %cst_8 = arith.constant dense<0.000000e+00> : vector<1024x16xf32>
    %7 = tpu.matmul %6, %0, %cst_8 {dimension_numbers = #tpu.dot_dimension_numbers<[1], [0], [0], [1], [0, 0, 1, 1], [], []>} : vector<1024x36xf32>, vector<36x16xf32>, vector<1024x16xf32> -> vector<1024x16xf32>
    %c0_9 = arith.constant 0 : index
    %c0_10 = arith.constant 0 : index
    %8 = vector.load %arg4[%c0_9, %c0_10] : memref<1024x36xf32, #tpu.memory_space<vmem>>, vector<1024x36xf32>
    %cst_11 = arith.constant dense<0.000000e+00> : vector<1024x16xf32>
    %9 = tpu.matmul %8, %0, %cst_11 {dimension_numbers = #tpu.dot_dimension_numbers<[1], [0], [0], [1], [0, 0, 1, 1], [], []>} : vector<1024x36xf32>, vector<36x16xf32>, vector<1024x16xf32> -> vector<1024x16xf32>
    %10 = arith.maximumf %7, %9 : vector<1024x16xf32>
    %11 = arith.maximumf %5, %10 : vector<1024x16xf32>
    %c0_12 = arith.constant 0 : index
    %c0_13 = arith.constant 0 : index
    %12 = vector.load %arg6[%c0_12, %c0_13] : memref<1x16xf32, #tpu.memory_space<vmem>>, vector<1x16xf32>
    %13 = vector.broadcast %12 : vector<1x16xf32> to vector<1024x16xf32>
    %14 = arith.addf %11, %13 : vector<1024x16xf32>
    %cst_14 = arith.constant 0.000000e+00 : f32
    %15 = vector.broadcast %cst_14 : f32 to vector<1024x16xf32>
    %16 = arith.maximumf %14, %15 : vector<1024x16xf32>
    %c0_15 = arith.constant 0 : index
    %c0_16 = arith.constant 0 : index
    %17 = vector.load %arg7[%c0_15, %c0_16] : memref<1024x16xf32, #tpu.memory_space<vmem>>, vector<1024x16xf32>
    tpu.vector_store %arg7[%c0_15, %c0_16], %16 {strides = array<i32>} : memref<1024x16xf32, #tpu.memory_space<vmem>>, vector<1024x16xf32>,
    return
  }
  func.func @transform_0(%arg0: i32) -> (i32, i32) {
    %c0_i32 = arith.constant 0 : i32
    %c0_i32_0 = arith.constant 0 : i32
    return %arg0, %c0_i32 : i32, i32
  }
  func.func @transform_1(%arg0: i32) -> (i32, i32) {
    %c0_i32 = arith.constant 0 : i32
    %c0_i32_0 = arith.constant 0 : i32
    return %arg0, %c0_i32 : i32, i32
  }
  func.func @transform_2(%arg0: i32) -> (i32, i32) {
    %c0_i32 = arith.constant 0 : i32
    %c0_i32_0 = arith.constant 0 : i32
    return %arg0, %c0_i32 : i32, i32
  }
  func.func @transform_3(%arg0: i32) -> (i32, i32) {
    %c0_i32 = arith.constant 0 : i32
    %c0_i32_0 = arith.constant 0 : i32
    return %arg0, %c0_i32 : i32, i32
  }
  func.func @transform_4(%arg0: i32) -> (i32, i32) {
    %c0_i32 = arith.constant 0 : i32
    %c0_i32_0 = arith.constant 0 : i32
    %c0_i32_1 = arith.constant 0 : i32
    return %c0_i32, %c0_i32_0 : i32, i32
  }
  func.func @transform_5(%arg0: i32) -> (i32, i32) {
    %c0_i32 = arith.constant 0 : i32
    %c0_i32_0 = arith.constant 0 : i32
    %c0_i32_1 = arith.constant 0 : i32
    return %c0_i32, %c0_i32_0 : i32, i32
  }
  func.func @transform_6(%arg0: i32) -> (i32, i32) {
    %c0_i32 = arith.constant 0 : i32
    %c0_i32_0 = arith.constant 0 : i32
    return %arg0, %c0_i32 : i32, i32
  }
}

module attributes {stable_mosaic.version = 11 : i64} {
  func.func @_conv_relu_pool_kernel(%arg0: i32, %arg1: memref<256x64xf32, #tpu.memory_space<vmem>>, %arg2: memref<256x64xf32, #tpu.memory_space<vmem>>, %arg3: memref<256x64xf32, #tpu.memory_space<vmem>>, %arg4: memref<256x64xf32, #tpu.memory_space<vmem>>, %arg5: memref<64x32xf32, #tpu.memory_space<vmem>>, %arg6: memref<1x32xf32, #tpu.memory_space<vmem>>, %arg7: memref<256x32xf32, #tpu.memory_space<vmem>>) attributes {dimension_semantics = [#tpu.dimension_semantics<parallel>], iteration_bounds = array<i64: 4>, scalar_prefetch = 0 : i64, scratch_operands = 0 : i64, tpu.core_type = #tpu.core_type<tc>, window_params = [{transform_indices = @transform_0, window_bounds = array<i64: 256, 64>}, {transform_indices = @transform_1, window_bounds = array<i64: 256, 64>}, {transform_indices = @transform_2, window_bounds = array<i64: 256, 64>}, {transform_indices = @transform_3, window_bounds = array<i64: 256, 64>}, {pipeline_mode = #tpu.pipeline_mode<synchronous>, transform_indices = @transform_4, window_bounds = array<i64: 64, 32>}, {pipeline_mode = #tpu.pipeline_mode<synchronous>, transform_indices = @transform_5, window_bounds = array<i64: 1, 32>}, {transform_indices = @transform_6, window_bounds = array<i64: 256, 32>}]} {
    %c0 = arith.constant 0 : index
    %c0_0 = arith.constant 0 : index
    %0 = vector.load %arg5[%c0, %c0_0] : memref<64x32xf32, #tpu.memory_space<vmem>>, vector<64x32xf32>
    %c0_1 = arith.constant 0 : index
    %c0_2 = arith.constant 0 : index
    %1 = vector.load %arg1[%c0_1, %c0_2] : memref<256x64xf32, #tpu.memory_space<vmem>>, vector<256x64xf32>
    %cst = arith.constant dense<0.000000e+00> : vector<256x32xf32>
    %2 = tpu.matmul %1, %0, %cst {dimension_numbers = #tpu.dot_dimension_numbers<[1], [0], [0], [1], [0, 0, 1, 1], [], []>} : vector<256x64xf32>, vector<64x32xf32>, vector<256x32xf32> -> vector<256x32xf32>
    %c0_3 = arith.constant 0 : index
    %c0_4 = arith.constant 0 : index
    %3 = vector.load %arg2[%c0_3, %c0_4] : memref<256x64xf32, #tpu.memory_space<vmem>>, vector<256x64xf32>
    %cst_5 = arith.constant dense<0.000000e+00> : vector<256x32xf32>
    %4 = tpu.matmul %3, %0, %cst_5 {dimension_numbers = #tpu.dot_dimension_numbers<[1], [0], [0], [1], [0, 0, 1, 1], [], []>} : vector<256x64xf32>, vector<64x32xf32>, vector<256x32xf32> -> vector<256x32xf32>
    %5 = arith.maximumf %2, %4 : vector<256x32xf32>
    %c0_6 = arith.constant 0 : index
    %c0_7 = arith.constant 0 : index
    %6 = vector.load %arg3[%c0_6, %c0_7] : memref<256x64xf32, #tpu.memory_space<vmem>>, vector<256x64xf32>
    %cst_8 = arith.constant dense<0.000000e+00> : vector<256x32xf32>
    %7 = tpu.matmul %6, %0, %cst_8 {dimension_numbers = #tpu.dot_dimension_numbers<[1], [0], [0], [1], [0, 0, 1, 1], [], []>} : vector<256x64xf32>, vector<64x32xf32>, vector<256x32xf32> -> vector<256x32xf32>
    %c0_9 = arith.constant 0 : index
    %c0_10 = arith.constant 0 : index
    %8 = vector.load %arg4[%c0_9, %c0_10] : memref<256x64xf32, #tpu.memory_space<vmem>>, vector<256x64xf32>
    %cst_11 = arith.constant dense<0.000000e+00> : vector<256x32xf32>
    %9 = tpu.matmul %8, %0, %cst_11 {dimension_numbers = #tpu.dot_dimension_numbers<[1], [0], [0], [1], [0, 0, 1, 1], [], []>} : vector<256x64xf32>, vector<64x32xf32>, vector<256x32xf32> -> vector<256x32xf32>
    %10 = arith.maximumf %7, %9 : vector<256x32xf32>
    %11 = arith.maximumf %5, %10 : vector<256x32xf32>
    %c0_12 = arith.constant 0 : index
    %c0_13 = arith.constant 0 : index
    %12 = vector.load %arg6[%c0_12, %c0_13] : memref<1x32xf32, #tpu.memory_space<vmem>>, vector<1x32xf32>
    %13 = vector.broadcast %12 : vector<1x32xf32> to vector<256x32xf32>
    %14 = arith.addf %11, %13 : vector<256x32xf32>
    %cst_14 = arith.constant 0.000000e+00 : f32
    %15 = vector.broadcast %cst_14 : f32 to vector<256x32xf32>
    %16 = arith.maximumf %14, %15 : vector<256x32xf32>
    %c0_15 = arith.constant 0 : index
    %c0_16 = arith.constant 0 : index
    %17 = vector.load %arg7[%c0_15, %c0_16] : memref<256x32xf32, #tpu.memory_space<vmem>>, vector<256x32xf32>
    tpu.vector_store %arg7[%c0_15, %c0_16], %16 {strides = array<i32>} : memref<256x32xf32, #tpu.memory_space<vmem>>, vector<256x32xf32>,
    return
  }
  func.func @transform_0(%arg0: i32) -> (i32, i32) {
    %c0_i32 = arith.constant 0 : i32
    %c0_i32_0 = arith.constant 0 : i32
    return %arg0, %c0_i32 : i32, i32
  }
  func.func @transform_1(%arg0: i32) -> (i32, i32) {
    %c0_i32 = arith.constant 0 : i32
    %c0_i32_0 = arith.constant 0 : i32
    return %arg0, %c0_i32 : i32, i32
  }
  func.func @transform_2(%arg0: i32) -> (i32, i32) {
    %c0_i32 = arith.constant 0 : i32
    %c0_i32_0 = arith.constant 0 : i32
    return %arg0, %c0_i32 : i32, i32
  }
  func.func @transform_3(%arg0: i32) -> (i32, i32) {
    %c0_i32 = arith.constant 0 : i32
    %c0_i32_0 = arith.constant 0 : i32
    return %arg0, %c0_i32 : i32, i32
  }
  func.func @transform_4(%arg0: i32) -> (i32, i32) {
    %c0_i32 = arith.constant 0 : i32
    %c0_i32_0 = arith.constant 0 : i32
    %c0_i32_1 = arith.constant 0 : i32
    return %c0_i32, %c0_i32_0 : i32, i32
  }
  func.func @transform_5(%arg0: i32) -> (i32, i32) {
    %c0_i32 = arith.constant 0 : i32
    %c0_i32_0 = arith.constant 0 : i32
    %c0_i32_1 = arith.constant 0 : i32
    return %c0_i32, %c0_i32_0 : i32, i32
  }
  func.func @transform_6(%arg0: i32) -> (i32, i32) {
    %c0_i32 = arith.constant 0 : i32
    %c0_i32_0 = arith.constant 0 : i32
    return %arg0, %c0_i32 : i32, i32
  }
}

module attributes {stable_mosaic.version = 11 : i64} {
  func.func @_mlp_head_kernel(%arg0: i32, %arg1: memref<2x3840xf32, #tpu.memory_space<vmem>>, %arg2: memref<3840x128xf32, #tpu.memory_space<vmem>>, %arg3: memref<1x128xf32, #tpu.memory_space<vmem>>, %arg4: memref<128x64xf32, #tpu.memory_space<vmem>>, %arg5: memref<1x64xf32, #tpu.memory_space<vmem>>, %arg6: memref<1x64xf32, #tpu.memory_space<vmem>>, %arg7: memref<1x1xf32, #tpu.memory_space<vmem>>, %arg8: memref<2x1xf32, #tpu.memory_space<vmem>>, %arg9: memref<2x128xf32, #tpu.memory_space<vmem>>) attributes {dimension_semantics = [#tpu.dimension_semantics<arbitrary>], iteration_bounds = array<i64: 4>, scalar_prefetch = 0 : i64, scratch_operands = 1 : i64, tpu.core_type = #tpu.core_type<tc>, window_params = [{transform_indices = @transform_0, window_bounds = array<i64: 2, 3840>}, {transform_indices = @transform_1, window_bounds = array<i64: 3840, 128>}, {pipeline_mode = #tpu.pipeline_mode<synchronous>, transform_indices = @transform_2, window_bounds = array<i64: 1, 128>}, {pipeline_mode = #tpu.pipeline_mode<synchronous>, transform_indices = @transform_3, window_bounds = array<i64: 128, 64>}, {pipeline_mode = #tpu.pipeline_mode<synchronous>, transform_indices = @transform_4, window_bounds = array<i64: 1, 64>}, {pipeline_mode = #tpu.pipeline_mode<synchronous>, transform_indices = @transform_5, window_bounds = array<i64: 1, 64>}, {pipeline_mode = #tpu.pipeline_mode<synchronous>, transform_indices = @transform_6, window_bounds = array<i64: 1, 1>}, {pipeline_mode = #tpu.pipeline_mode<synchronous>, transform_indices = @transform_7, window_bounds = array<i64: 2, 1>}]} {
    %c0_i32 = arith.constant 0 : i32
    %0 = arith.cmpi eq, %arg0, %c0_i32 : i32
    %1 = arith.extui %0 : i1 to i32
    %c0_i32_0 = arith.constant 0 : i32
    %2 = arith.cmpi ne, %1, %c0_i32_0 : i32
    scf.if %2 {
      %cst_9 = arith.constant 0.000000e+00 : f32
      %12 = vector.broadcast %cst_9 : f32 to vector<2x128xf32>
      %c0_10 = arith.constant 0 : index
      %c0_11 = arith.constant 0 : index
      %13 = vector.load %arg9[%c0_10, %c0_11] : memref<2x128xf32, #tpu.memory_space<vmem>>, vector<2x128xf32>
      tpu.vector_store %arg9[%c0_10, %c0_11], %12 {strides = array<i32>} : memref<2x128xf32, #tpu.memory_space<vmem>>, vector<2x128xf32>,
    } else {
    }
    %c0 = arith.constant 0 : index
    %c0_1 = arith.constant 0 : index
    %3 = vector.load %arg9[%c0, %c0_1] : memref<2x128xf32, #tpu.memory_space<vmem>>, vector<2x128xf32>
    %c0_2 = arith.constant 0 : index
    %c0_3 = arith.constant 0 : index
    %4 = vector.load %arg1[%c0_2, %c0_3] : memref<2x3840xf32, #tpu.memory_space<vmem>>, vector<2x3840xf32>
    %c0_4 = arith.constant 0 : index
    %c0_5 = arith.constant 0 : index
    %5 = vector.load %arg2[%c0_4, %c0_5] : memref<3840x128xf32, #tpu.memory_space<vmem>>, vector<3840x128xf32>
    %cst = arith.constant dense<0.000000e+00> : vector<2x128xf32>
    %6 = tpu.matmul %4, %5, %cst {dimension_numbers = #tpu.dot_dimension_numbers<[1], [0], [0], [1], [0, 0, 1, 1], [], []>} : vector<2x3840xf32>, vector<3840x128xf32>, vector<2x128xf32> -> vector<2x128xf32>
    %7 = arith.addf %3, %6 : vector<2x128xf32>
    %c0_6 = arith.constant 0 : index
    %c0_7 = arith.constant 0 : index
    %8 = vector.load %arg9[%c0_6, %c0_7] : memref<2x128xf32, #tpu.memory_space<vmem>>, vector<2x128xf32>
    tpu.vector_store %arg9[%c0_6, %c0_7], %7 {strides = array<i32>} : memref<2x128xf32, #tpu.memory_space<vmem>>, vector<2x128xf32>,
    %c3_i32 = arith.constant 3 : i32
    %9 = arith.cmpi eq, %arg0, %c3_i32 : i32
    %10 = arith.extui %9 : i1 to i32
    %c0_i32_8 = arith.constant 0 : i32
    %11 = arith.cmpi ne, %10, %c0_i32_8 : i32
    scf.if %11 {
      %c0_9 = arith.constant 0 : index
      %c0_10 = arith.constant 0 : index
      %12 = vector.load %arg9[%c0_9, %c0_10] : memref<2x128xf32, #tpu.memory_space<vmem>>, vector<2x128xf32>
      %c0_11 = arith.constant 0 : index
      %c0_12 = arith.constant 0 : index
      %13 = vector.load %arg3[%c0_11, %c0_12] : memref<1x128xf32, #tpu.memory_space<vmem>>, vector<1x128xf32>
      %14 = vector.broadcast %13 : vector<1x128xf32> to vector<2x128xf32>
      %15 = arith.addf %12, %14 : vector<2x128xf32>
      %cst_13 = arith.constant 0.000000e+00 : f32
      %16 = vector.broadcast %cst_13 : f32 to vector<2x128xf32>
      %17 = arith.maximumf %15, %16 : vector<2x128xf32>
      %c0_14 = arith.constant 0 : index
      %c0_15 = arith.constant 0 : index
      %18 = vector.load %arg4[%c0_14, %c0_15] : memref<128x64xf32, #tpu.memory_space<vmem>>, vector<128x64xf32>
      %cst_16 = arith.constant dense<0.000000e+00> : vector<2x64xf32>
      %19 = tpu.matmul %17, %18, %cst_16 {dimension_numbers = #tpu.dot_dimension_numbers<[1], [0], [0], [1], [0, 0, 1, 1], [], []>} : vector<2x128xf32>, vector<128x64xf32>, vector<2x64xf32> -> vector<2x64xf32>
      %c0_17 = arith.constant 0 : index
      %c0_18 = arith.constant 0 : index
      %20 = vector.load %arg5[%c0_17, %c0_18] : memref<1x64xf32, #tpu.memory_space<vmem>>, vector<1x64xf32>
      %21 = vector.broadcast %20 : vector<1x64xf32> to vector<2x64xf32>
      %22 = arith.addf %19, %21 : vector<2x64xf32>
      %cst_19 = arith.constant 0.000000e+00 : f32
      %23 = vector.broadcast %cst_19 : f32 to vector<2x64xf32>
      %24 = arith.maximumf %22, %23 : vector<2x64xf32>
      %c0_20 = arith.constant 0 : index
      %c0_21 = arith.constant 0 : index
      %25 = vector.load %arg6[%c0_20, %c0_21] : memref<1x64xf32, #tpu.memory_space<vmem>>, vector<1x64xf32>
      %26 = vector.broadcast %25 : vector<1x64xf32> to vector<2x64xf32>
      %27 = arith.mulf %24, %26 : vector<2x64xf32>
      %cst_22 = arith.constant dense<0.000000e+00> : vector<2xf32>
      %28 = vector.multi_reduction <add>, %27, %cst_22 [1] : vector<2x64xf32> to vector<2xf32>
      %29 = vector.shape_cast %28 : vector<2xf32> to vector<2x1xf32>
      %c0_23 = arith.constant 0 : index
      %c0_24 = arith.constant 0 : index
      %30 = vector.load %arg7[%c0_23, %c0_24] : memref<1x1xf32, #tpu.memory_space<vmem>>, vector<1x1xf32>
      %31 = vector.broadcast %30 : vector<1x1xf32> to vector<2x1xf32>
      %32 = arith.addf %29, %31 : vector<2x1xf32>
      %c0_25 = arith.constant 0 : index
      %c0_26 = arith.constant 0 : index
      %33 = vector.load %arg8[%c0_25, %c0_26] : memref<2x1xf32, #tpu.memory_space<vmem>>, vector<2x1xf32>
      tpu.vector_store %arg8[%c0_25, %c0_26], %32 {strides = array<i32>} : memref<2x1xf32, #tpu.memory_space<vmem>>, vector<2x1xf32>,
    } else {
    }
    return
  }
  func.func @transform_0(%arg0: i32) -> (i32, i32) {
    %c0_i32 = arith.constant 0 : i32
    %c0_i32_0 = arith.constant 0 : i32
    return %c0_i32, %arg0 : i32, i32
  }
  func.func @transform_1(%arg0: i32) -> (i32, i32) {
    %c0_i32 = arith.constant 0 : i32
    %c0_i32_0 = arith.constant 0 : i32
    return %arg0, %c0_i32 : i32, i32
  }
  func.func @transform_2(%arg0: i32) -> (i32, i32) {
    %c0_i32 = arith.constant 0 : i32
    %c0_i32_0 = arith.constant 0 : i32
    %c0_i32_1 = arith.constant 0 : i32
    return %c0_i32, %c0_i32_0 : i32, i32
  }
  func.func @transform_3(%arg0: i32) -> (i32, i32) {
    %c0_i32 = arith.constant 0 : i32
    %c0_i32_0 = arith.constant 0 : i32
    %c0_i32_1 = arith.constant 0 : i32
    return %c0_i32, %c0_i32_0 : i32, i32
  }
  func.func @transform_4(%arg0: i32) -> (i32, i32) {
    %c0_i32 = arith.constant 0 : i32
    %c0_i32_0 = arith.constant 0 : i32
    %c0_i32_1 = arith.constant 0 : i32
    return %c0_i32, %c0_i32_0 : i32, i32
  }
  func.func @transform_5(%arg0: i32) -> (i32, i32) {
    %c0_i32 = arith.constant 0 : i32
    %c0_i32_0 = arith.constant 0 : i32
    %c0_i32_1 = arith.constant 0 : i32
    return %c0_i32, %c0_i32_0 : i32, i32
  }
  func.func @transform_6(%arg0: i32) -> (i32, i32) {
    %c0_i32 = arith.constant 0 : i32
    %c0_i32_0 = arith.constant 0 : i32
    %c0_i32_1 = arith.constant 0 : i32
    return %c0_i32, %c0_i32_0 : i32, i32
  }
  func.func @transform_7(%arg0: i32) -> (i32, i32) {
    %c0_i32 = arith.constant 0 : i32
    %c0_i32_0 = arith.constant 0 : i32
    %c0_i32_1 = arith.constant 0 : i32
    return %c0_i32, %c0_i32_0 : i32, i32
  }
}

</mosaic_0001>

<llo_original>
// kernel: critic_forward.3
$region0: #{critic_forward.3}
  #allocation0 [shape = 'u32[]', space=smem, size = 0x4, offset = 0x4, fixed_abs, tag = 'smem constant byte address 0x4 - core index']
  #allocation1 [shape = 'u32[72,128]{1,0:T(1,128)}', space=vmem, size = 0x9000, scoped, tag = 'internal scratch']
  %s0 = inlined_call_operand.vmem [shape: f32[3906,36], index: 0, kind: input, shape index: {}]
  %s1 = inlined_call_operand.vmem [shape: f32[3906,36], index: 1, kind: input, shape index: {}]
  %s2 = inlined_call_operand.vmem [shape: f32[3906,36], index: 2, kind: input, shape index: {}]
  %s3 = inlined_call_operand.vmem [shape: f32[3906,36], index: 3, kind: input, shape index: {}]
  %s4 = inlined_call_operand.vmem [shape: f32[36,16], index: 4, kind: input, shape index: {}]
  %s5 = inlined_call_operand.vmem [shape: f32[1,16], index: 5, kind: input, shape index: {}]
  %s6 = inlined_call_operand.vmem [shape: f32[3906,16], index: 6, kind: output, shape index: {}]
  %s7 = sld [smem:[#allocation0]]
  $region105: #{critic_forward.3} parent=0
    _
  %s9 = ssub.s32 1, %s7
  %s10 = scalar_select 0, %s9, %s7
  $region1: #{critic_forward.3} parent=0
    #allocation2 [shape = 'u8[1048576]{0}', space=vmem, size = 0x100000, scoped, tag = 'output window, operand 0']
    loop: start=0, step=1, limit=6
    $region2: #{critic_forward.3} parent=1 // loop_pre_header
      _
    $region3: #{critic_forward.3} parent=1 // loop_header
      %s12 = sphi 0, %s16
      %p13 = scmp.ge.s32.totalorder %s12, 6
      %s22 = sphi 0, %s24
      %s25 = sphi 0, %s22
      %s26 = sphi 0, %s25
      %s42 = sphi 0, %s26
      %s48 = sphi 0, %s50
      %s51 = sphi 0, %s48
      %s52 = sphi 0, %s51
      %s68 = sphi 0, %s52
      %s74 = sphi 0, %s76
      %s77 = sphi 0, %s74
      %s78 = sphi 0, %s77
      %s94 = sphi 0, %s78
      %s100 = sphi 0, %s102
      %s103 = sphi 0, %s100
      %s104 = sphi 0, %s103
      %s120 = sphi 0, %s104
      %s124 = sphi 0, %s124
      %s126 = sphi 0, %s124
      %s127 = sphi 0, %s126
      %s141 = sphi 0, %s127
      %s145 = sphi 0, %s145
      %s147 = sphi 0, %s145
      %s148 = sphi 0, %s147
      %s162 = sphi 0, %s148
      %s168 = sphi 0, %s170
      %s171 = sphi 0, %s168
      %s172 = sphi 0, %s171
      %s188 = sphi 0, %s172
    $region4: #{critic_forward.3} parent=1 // loop_header_branch
      %15 = sbr.rel (%p13) target = $region8
    $region5: #{critic_forward.3} parent=1 // loop_body
      %s17 = ssub.s32 %s12, 1
      %s18 = ssub.s32 %s12, 2
      %s19 = sadd.s32 %s12, 1
      %s20 = ssub.s32 %s12, %s19
      %p21 = scmp.eq.s32.totalorder %s20, 0
      %s23 = sadd.s32 %s22, 1
      %s24 = scalar_select %p21, %s22, %s23
      %p27 = pneg %p21
      %p28 = scmp.eq.s32.totalorder %s12, 3
      %p29 = por %p27, %p28
      %p30 = scmp.ne.s32.totalorder %s22, %s25
      %p31 = scmp.eq.s32.totalorder %s12, 0
      %p32 = por %p30, %p31
      %p33 = scmp.ne.s32.totalorder %s22, %s25
      %p34 = scmp.eq.s32.totalorder %s17, 3
      %p35 = por %p33, %p34
      %p36 = scmp.ne.s32.totalorder %s25, %s26
      %p37 = scmp.eq.s32.totalorder %s17, 0
      %p38 = por %p36, %p37
      %p39 = scmp.ne.s32.totalorder %s25, %s26
      %p40 = scmp.eq.s32.totalorder %s18, 3
      %p41 = por %p39, %p40
      %p43 = scmp.ne.s32.totalorder %s26, %s42
      %p44 = scmp.eq.s32.totalorder %s18, 0
      %p45 = por %p43, %p44
      %s46 = ssub.s32 %s12, %s19
      %p47 = scmp.eq.s32.totalorder %s46, 0
      %s49 = sadd.s32 %s48, 1
      %s50 = scalar_select %p47, %s48, %s49
      %p53 = pneg %p47
      %p54 = scmp.eq.s32.totalorder %s12, 3
      %p55 = por %p53, %p54
      %p56 = scmp.ne.s32.totalorder %s48, %s51
      %p57 = scmp.eq.s32.totalorder %s12, 0
      %p58 = por %p56, %p57
      %p59 = scmp.ne.s32.totalorder %s48, %s51
      %p60 = scmp.eq.s32.totalorder %s17, 3
      %p61 = por %p59, %p60
      %p62 = scmp.ne.s32.totalorder %s51, %s52
      %p63 = scmp.eq.s32.totalorder %s17, 0
      %p64 = por %p62, %p63
      %p65 = scmp.ne.s32.totalorder %s51, %s52
      %p66 = scmp.eq.s32.totalorder %s18, 3
      %p67 = por %p65, %p66
      %p69 = scmp.ne.s32.totalorder %s52, %s68
      %p70 = scmp.eq.s32.totalorder %s18, 0
      %p71 = por %p69, %p70
      %s72 = ssub.s32 %s12, %s19
      %p73 = scmp.eq.s32.totalorder %s72, 0
      %s75 = sadd.s32 %s74, 1
      %s76 = scalar_select %p73, %s74, %s75
      %p79 = pneg %p73
      %p80 = scmp.eq.s32.totalorder %s12, 3
      %p81 = por %p79, %p80
      %p82 = scmp.ne.s32.totalorder %s74, %s77
      %p83 = scmp.eq.s32.totalorder %s12, 0
      %p84 = por %p82, %p83
      %p85 = scmp.ne.s32.totalorder %s74, %s77
      %p86 = scmp.eq.s32.totalorder %s17, 3
      %p87 = por %p85, %p86
      %p88 = scmp.ne.s32.totalorder %s77, %s78
      %p89 = scmp.eq.s32.totalorder %s17, 0
      %p90 = por %p88, %p89
      %p91 = scmp.ne.s32.totalorder %s77, %s78
      %p92 = scmp.eq.s32.totalorder %s18, 3
      %p93 = por %p91, %p92
      %p95 = scmp.ne.s32.totalorder %s78, %s94
      %p96 = scmp.eq.s32.totalorder %s18, 0
      %p97 = por %p95, %p96
      %s98 = ssub.s32 %s12, %s19
      %p99 = scmp.eq.s32.totalorder %s98, 0
      %s101 = sadd.s32 %s100, 1
      %s102 = scalar_select %p99, %s100, %s101
      %p105 = pneg %p99
      %p106 = scmp.eq.s32.totalorder %s12, 3
      %p107 = por %p105, %p106
      %p108 = scmp.ne.s32.totalorder %s100, %s103
      %p109 = scmp.eq.s32.totalorder %s12, 0
      %p110 = por %p108, %p109
      %p111 = scmp.ne.s32.totalorder %s100, %s103
      %p112 = scmp.eq.s32.totalorder %s17, 3
      %p113 = por %p111, %p112
      %p114 = scmp.ne.s32.totalorder %s103, %s104
      %p115 = scmp.eq.s32.totalorder %s17, 0
      %p116 = por %p114, %p115
      %p117 = scmp.ne.s32.totalorder %s103, %s104
      %p118 = scmp.eq.s32.totalorder %s18, 3
      %p119 = por %p117, %p118
      %p121 = scmp.ne.s32.totalorder %s104, %s120
      %p122 = scmp.eq.s32.totalorder %s18, 0
      %p123 = por %p121, %p122
      %s125 = sadd.s32 %s124, 1
      %p128 = scmp.eq.s32.totalorder %s12, 3
      %p129 = scmp.ne.s32.totalorder %s124, %s126
      %p130 = scmp.eq.s32.totalorder %s12, 0
      %p131 = por %p129, %p130
      %p132 = scmp.ne.s32.totalorder %s124, %s126
      %p133 = scmp.eq.s32.totalorder %s17, 3
      %p134 = por %p132, %p133
      %p135 = scmp.ne.s32.totalorder %s126, %s127
      %p136 = scmp.eq.s32.totalorder %s17, 0
      %p137 = por %p135, %p136
      %p138 = scmp.ne.s32.totalorder %s126, %s127
      %p139 = scmp.eq.s32.totalorder %s18, 3
      %p140 = por %p138, %p139
      %p142 = scmp.ne.s32.totalorder %s127, %s141
      %p143 = scmp.eq.s32.totalorder %s18, 0
      %p144 = por %p142, %p143
      %s146 = sadd.s32 %s145, 1
      %p149 = scmp.eq.s32.totalorder %s12, 3
      %p150 = scmp.ne.s32.totalorder %s145, %s147
      %p151 = scmp.eq.s32.totalorder %s12, 0
      %p152 = por %p150, %p151
      %p153 = scmp.ne.s32.totalorder %s145, %s147
      %p154 = scmp.eq.s32.totalorder %s17, 3
      %p155 = por %p153, %p154
      %p156 = scmp.ne.s32.totalorder %s147, %s148
      %p157 = scmp.eq.s32.totalorder %s17, 0
      %p158 = por %p156, %p157
      %p159 = scmp.ne.s32.totalorder %s147, %s148
      %p160 = scmp.eq.s32.totalorder %s18, 3
      %p161 = por %p159, %p160
      %p163 = scmp.ne.s32.totalorder %s148, %s162
      %p164 = scmp.eq.s32.totalorder %s18, 0
      %p165 = por %p163, %p164
      %s166 = ssub.s32 %s12, %s19
      %p167 = scmp.eq.s32.totalorder %s166, 0
      %s169 = sadd.s32 %s168, 1
      %s170 = scalar_select %p167, %s168, %s169
      %p173 = pneg %p167
      %p174 = scmp.eq.s32.totalorder %s12, 3
      %p175 = por %p173, %p174
      %p176 = scmp.ne.s32.totalorder %s168, %s171
      %p177 = scmp.eq.s32.totalorder %s12, 0
      %p178 = por %p176, %p177
      %p179 = scmp.ne.s32.totalorder %s168, %s171
      %p180 = scmp.eq.s32.totalorder %s17, 3
      %p181 = por %p179, %p180
      %p182 = scmp.ne.s32.totalorder %s171, %s172
      %p183 = scmp.eq.s32.totalorder %s17, 0
      %p184 = por %p182, %p183
      %p185 = scmp.ne.s32.totalorder %s171, %s172
      %p186 = scmp.eq.s32.totalorder %s18, 3
      %p187 = por %p185, %p186
      %p189 = scmp.ne.s32.totalorder %s172, %s188
      %p190 = scmp.eq.s32.totalorder %s18, 0
      %p191 = por %p189, %p190
      %p192 = scmp.le.s32.totalorder 1, %s12
      %p193 = scmp.lt.s32.totalorder %s12, 5
      %p194 = pnand %p192, %p193
      %p195 = pneg %p194
      // Predicated region
      $region9: #{critic_forward.3} parent=5 // pred_check
        _
      $region10: #{critic_forward.3} parent=5 // pred_check_branch
        %197 = sbr.rel (%p194) target = $region12
      $region11: #{critic_forward.3} parent=5 // pred_region
        %s198 = ssub.s32 %s12, 1
        // Predicated region
        $region13: #{critic_forward.3} parent=11 // pred_check
          %p199 = pneg %p137
        $region14: #{critic_forward.3} parent=11 // pred_check_branch
          %201 = sbr.rel (%p199) target = $region16
        $region15: #{critic_forward.3} parent=11 // pred_region
          _
        $region16: #{critic_forward.3} parent=11 // pred_fallthru
          _
        // Predicated region
        $region17: #{critic_forward.3} parent=11 // pred_check
          %p202 = pneg %p158
        $region18: #{critic_forward.3} parent=11 // pred_check_branch
          %204 = sbr.rel (%p202) target = $region20
        $region19: #{critic_forward.3} parent=11 // pred_region
          _
        $region20: #{critic_forward.3} parent=11 // pred_fallthru
          _
      $region12: #{critic_forward.3} parent=5 // pred_fallthru
        _
      %p205 = scmp.lt.s32.totalorder %s12, 4
      // Predicated region
      $region21: #{critic_forward.3} parent=5 // pred_check
        %p206 = pneg %p205
      $region22: #{critic_forward.3} parent=5 // pred_check_branch
        %208 = sbr.rel (%p206) target = $region24
      $region23: #{critic_forward.3} parent=5 // pred_region
        // Predicated region
        $region25: #{critic_forward.3} parent=23 // pred_check
          %p209 = pneg %p32
        $region26: #{critic_forward.3} parent=23 // pred_check_branch
          %211 = sbr.rel (%p209) target = $region28
        $region27: #{critic_forward.3} parent=23 // pred_region
          %s212 = smul.u32 128, %s12
          %s213 = ssub.s32 489, %s212
          %p214 = scmp.lt.s32.totalorder %s213, 128
          %s215 = scalar_select %p214, %s213, 128
          %s216 = smul.u32 8, %s215
          %p217 = scmp.lt.s32.totalorder %s212, 488
          %s218 = scalar_select %p217, %s212, 488
          %s219 = smul.addr %s218, 8
          %s220 = scalar_lea.vmem %s0, %s219
          %s221 = smul.u32 128, %s12
          %s222 = ssub.s32 489, %s221
          %p223 = scmp.lt.s32.totalorder %s222, 128
          %s224 = scalar_select %p223, %s222, 128
          %s225 = smul.u32 8, %s224
        $region28: #{critic_forward.3} parent=23 // pred_fallthru
          _
        // Predicated region
        $region29: #{critic_forward.3} parent=23 // pred_check
          %p226 = pneg %p58
        $region30: #{critic_forward.3} parent=23 // pred_check_branch
          %228 = sbr.rel (%p226) target = $region32
        $region31: #{critic_forward.3} parent=23 // pred_region
          %s229 = smul.u32 128, %s12
          %s230 = ssub.s32 489, %s229
          %p231 = scmp.lt.s32.totalorder %s230, 128
          %s232 = scalar_select %p231, %s230, 128
          %s233 = smul.u32 8, %s232
          %p234 = scmp.lt.s32.totalorder %s229, 488
          %s235 = scalar_select %p234, %s229, 488
          %s236 = smul.addr %s235, 8
          %s237 = scalar_lea.vmem %s1, %s236
          %s238 = smul.u32 128, %s12
          %s239 = ssub.s32 489, %s238
          %p240 = scmp.lt.s32.totalorder %s239, 128
          %s241 = scalar_select %p240, %s239, 128
          %s242 = smul.u32 8, %s241
        $region32: #{critic_forward.3} parent=23 // pred_fallthru
          _
        // Predicated region
        $region33: #{critic_forward.3} parent=23 // pred_check
          %p243 = pneg %p84
        $region34: #{critic_forward.3} parent=23 // pred_check_branch
          %245 = sbr.rel (%p243) target = $region36
        $region35: #{critic_forward.3} parent=23 // pred_region
          %s246 = smul.u32 128, %s12
          %s247 = ssub.s32 489, %s246
          %p248 = scmp.lt.s32.totalorder %s247, 128
          %s249 = scalar_select %p248, %s247, 128
          %s250 = smul.u32 8, %s249
          %p251 = scmp.lt.s32.totalorder %s246, 488
          %s252 = scalar_select %p251, %s246, 488
          %s253 = smul.addr %s252, 8
          %s254 = scalar_lea.vmem %s2, %s253
          %s255 = smul.u32 128, %s12
          %s256 = ssub.s32 489, %s255
          %p257 = scmp.lt.s32.totalorder %s256, 128
          %s258 = scalar_select %p257, %s256, 128
          %s259 = smul.u32 8, %s258
        $region36: #{critic_forward.3} parent=23 // pred_fallthru
          _
        // Predicated region
        $region37: #{critic_forward.3} parent=23 // pred_check
          %p260 = pneg %p110
        $region38: #{critic_forward.3} parent=23 // pred_check_branch
          %262 = sbr.rel (%p260) target = $region40
        $region39: #{critic_forward.3} parent=23 // pred_region
          %s263 = smul.u32 128, %s12
          %s264 = ssub.s32 489, %s263
          %p265 = scmp.lt.s32.totalorder %s264, 128
          %s266 = scalar_select %p265, %s264, 128
          %s267 = smul.u32 8, %s266
          %p268 = scmp.lt.s32.totalorder %s263, 488
          %s269 = scalar_select %p268, %s263, 488
          %s270 = smul.addr %s269, 8
          %s271 = scalar_lea.vmem %s3, %s270
          %s272 = smul.u32 128, %s12
          %s273 = ssub.s32 489, %s272
          %p274 = scmp.lt.s32.totalorder %s273, 128
          %s275 = scalar_select %p274, %s273, 128
          %s276 = smul.u32 8, %s275
        $region40: #{critic_forward.3} parent=23 // pred_fallthru
          _
      $region24: #{critic_forward.3} parent=5 // pred_fallthru
        _
      %p277 = scmp.le.s32.totalorder 1, %s12
      %p278 = scmp.lt.s32.totalorder %s12, 5
      %p279 = pnand %p277, %p278
      %p280 = pneg %p279
      // Predicated region
      $region41: #{critic_forward.3} parent=5 // pred_check
        _
      $region42: #{critic_forward.3} parent=5 // pred_check_branch
        %282 = sbr.rel (%p279) target = $region44
      $region43: #{critic_forward.3} parent=5 // pred_region
        %s283 = ssub.s32 %s12, 1
        %s284 = smul.u32 128, %s17
        %s285 = ssub.s32 489, %s284
        %p286 = scmp.lt.s32.totalorder %s285, 128
        %s287 = scalar_select %p286, %s285, 128
        %s288 = smul.u32 8, %s287
        %p289 = scmp.lt.s32.totalorder %s284, 488
        %s290 = scalar_select %p289, %s284, 488
        %s291 = smul.addr %s290, 8
        %s292 = scalar_lea.vmem %s0, %s291
        %p293 = pneg %p38
        %p294 = pneg %p35
        %s295 = smul.u32 128, %s17
        %s296 = ssub.s32 489, %s295
        %p297 = scmp.lt.s32.totalorder %s296, 128
        %s298 = scalar_select %p297, %s296, 128
        %s299 = smul.u32 8, %s298
        %p300 = scmp.lt.s32.totalorder %s295, 488
        %s301 = scalar_select %p300, %s295, 488
        %s302 = smul.addr %s301, 8
        %s303 = scalar_lea.vmem %s1, %s302
        %p304 = pneg %p64
        %p305 = pneg %p61
        %s306 = smul.u32 128, %s17
        %s307 = ssub.s32 489, %s306
        %p308 = scmp.lt.s32.totalorder %s307, 128
        %s309 = scalar_select %p308, %s307, 128
        %s310 = smul.u32 8, %s309
        %p311 = scmp.lt.s32.totalorder %s306, 488
        %s312 = scalar_select %p311, %s306, 488
        %s313 = smul.addr %s312, 8
        %s314 = scalar_lea.vmem %s2, %s313
        %p315 = pneg %p90
        %p316 = pneg %p87
        %s317 = smul.u32 128, %s17
        %s318 = ssub.s32 489, %s317
        %p319 = scmp.lt.s32.totalorder %s318, 128
        %s320 = scalar_select %p319, %s318, 128
        %s321 = smul.u32 8, %s320
        %p322 = scmp.lt.s32.totalorder %s317, 488
        %s323 = scalar_select %p322, %s317, 488
        %s324 = smul.addr %s323, 8
        %s325 = scalar_lea.vmem %s3, %s324
        %p326 = pneg %p116
        %p327 = pneg %p113
        %p328 = pneg %p137
        %p329 = pneg %p134
        %p330 = pneg %p158
        %p331 = pneg %p155
        %p332 = pneg %p184
        %p333 = pneg %p181
        %s334 = sand.u32 %s171, 1
        %s335 = sand.u32 %s171, 1
        %s336 = smul.addr %s335, 1024
        %s337 = scalar_lea.vmem [#allocation2], %s336
        %s338 = smul.u32 128, %s17
        %s339 = ssub.s32 489, %s338
        %p340 = scmp.lt.s32.totalorder %s339, 128
        %s341 = scalar_select %p340, %s339, 128
        %s342 = smul.u32 8, %s341
        %p343 = scmp.lt.s32.totalorder %s338, 488
        %s344 = scalar_select %p343, %s338, 488
        %s345 = smul.addr %s344, 8
        %s346 = scalar_lea.vmem %s0, %s345
        %s347 = smul.u32 128, %s17
        %s348 = ssub.s32 489, %s347
        %p349 = scmp.lt.s32.totalorder %s348, 128
        %s350 = scalar_select %p349, %s348, 128
        %s351 = smul.u32 8, %s350
        %s352 = smul.u32 128, %s17
        %s353 = ssub.s32 489, %s352
        %p354 = scmp.lt.s32.totalorder %s353, 128
        %s355 = scalar_select %p354, %s353, 128
        %s356 = smul.u32 8, %s355
        %p357 = scmp.lt.s32.totalorder %s352, 488
        %s358 = scalar_select %p357, %s352, 488
        %s359 = smul.addr %s358, 8
        %s360 = scalar_lea.vmem %s1, %s359
        %s361 = smul.u32 128, %s17
        %s362 = ssub.s32 489, %s361
        %p363 = scmp.lt.s32.totalorder %s362, 128
        %s364 = scalar_select %p363, %s362, 128
        %s365 = smul.u32 8, %s364
        %s366 = smul.u32 128, %s17
        %s367 = ssub.s32 489, %s366
        %p368 = scmp.lt.s32.totalorder %s367, 128
        %s369 = scalar_select %p368, %s367, 128
        %s370 = smul.u32 8, %s369
        %p371 = scmp.lt.s32.totalorder %s366, 488
        %s372 = scalar_select %p371, %s366, 488
        %s373 = smul.addr %s372, 8
        %s374 = scalar_lea.vmem %s2, %s373
        %s375 = smul.u32 128, %s17
        %s376 = ssub.s32 489, %s375
        %p377 = scmp.lt.s32.totalorder %s376, 128
        %s378 = scalar_select %p377, %s376, 128
        %s379 = smul.u32 8, %s378
        %s380 = smul.u32 128, %s17
        %s381 = ssub.s32 489, %s380
        %p382 = scmp.lt.s32.totalorder %s381, 128
        %s383 = scalar_select %p382, %s381, 128
        %s384 = smul.u32 8, %s383
        %p385 = scmp.lt.s32.totalorder %s380, 488
        %s386 = scalar_select %p385, %s380, 488
        %s387 = smul.addr %s386, 8
        %s388 = scalar_lea.vmem %s3, %s387
        %s389 = smul.u32 128, %s17
        %s390 = ssub.s32 489, %s389
        %p391 = scmp.lt.s32.totalorder %s390, 128
        %s392 = scalar_select %p391, %s390, 128
        %s393 = smul.u32 8, %s392
        %s394 = smul.u32 128, %s17
        %s395 = ssub.s32 489, %s394
        %p396 = scmp.lt.s32.totalorder %s395, 128
        %s397 = scalar_select %p396, %s395, 128
        %s398 = smul.u32 8, %s397
        %v399 = vld [vmem:[%s4] sm:$0xff]
        %v400 = vld [vmem:[%s4 + $0x8] sm:$0xff]
        %v401 = vld [vmem:[%s4 + $0x10] sm:$0xff]
        %v402 = vld [vmem:[%s4 + $0x18] sm:$0xff]
        %v403 = vld [vmem:[%s4 + $0x20] sm:$0xf]
        %v404 = vld [vmem:[%s346] sm:$0xff]
        %v405 = vld [vmem:[%s346 + $0x8] sm:$0xff]
        %v406 = vld [vmem:[%s346 + $0x10] sm:$0xff]
        %v407 = vld [vmem:[%s346 + $0x18] sm:$0xff]
        %v408 = vld [vmem:[%s346 + $0x20] sm:$0xff]
        %v409 = vld [vmem:[%s346 + $0x28] sm:$0xff]
        %v410 = vld [vmem:[%s346 + $0x30] sm:$0xff]
        %v411 = vld [vmem:[%s346 + $0x38] sm:$0xff]
        %v412 = vld [vmem:[%s346 + $0x40] sm:$0xff]
        %v413 = vld [vmem:[%s346 + $0x48] sm:$0xff]
        %v414 = vld [vmem:[%s346 + $0x50] sm:$0xff]
        %v415 = vld [vmem:[%s346 + $0x58] sm:$0xff]
        %v416 = vld [vmem:[%s346 + $0x60] sm:$0xff]
        %v417 = vld [vmem:[%s346 + $0x68] sm:$0xff]
        %v418 = vld [vmem:[%s346 + $0x70] sm:$0xff]
        %v419 = vld [vmem:[%s346 + $0x78] sm:$0xff]
        %v420 = vld [vmem:[%s346 + $0x80] sm:$0xff]
        %v421 = vld [vmem:[%s346 + $0x88] sm:$0xff]
        %v422 = vld [vmem:[%s346 + $0x90] sm:$0xff]
        %v423 = vld [vmem:[%s346 + $0x98] sm:$0xff]
        %v424 = vld [vmem:[%s346 + $0xa0] sm:$0xff]
        %v425 = vld [vmem:[%s346 + $0xa8] sm:$0xff]
        %v426 = vld [vmem:[%s346 + $0xb0] sm:$0xff]
        %v427 = vld [vmem:[%s346 + $0xb8] sm:$0xff]
        %v428 = vld [vmem:[%s346 + $0xc0] sm:$0xff]
        %v429 = vld [vmem:[%s346 + $0xc8] sm:$0xff]
        %v430 = vld [vmem:[%s346 + $0xd0] sm:$0xff]
        %v431 = vld [vmem:[%s346 + $0xd8] sm:$0xff]
        %v432 = vld [vmem:[%s346 + $0xe0] sm:$0xff]
        %v433 = vld [vmem:[%s346 + $0xe8] sm:$0xff]
        %v434 = vld [vmem:[%s346 + $0xf0] sm:$0xff]
        %v435 = vld [vmem:[%s346 + $0xf8] sm:$0xff]
        %v436 = vld [vmem:[%s346 + $0x100] sm:$0xff]
        %v437 = vld [vmem:[%s346 + $0x108] sm:$0xff]
        %v438 = vld [vmem:[%s346 + $0x110] sm:$0xff]
        %v439 = vld [vmem:[%s346 + $0x118] sm:$0xff]
        %v440 = vld [vmem:[%s346 + $0x120] sm:$0xff]
        %v441 = vld [vmem:[%s346 + $0x128] sm:$0xff]
        %v442 = vld [vmem:[%s346 + $0x130] sm:$0xff]
        %v443 = vld [vmem:[%s346 + $0x138] sm:$0xff]
        %v444 = vld [vmem:[%s346 + $0x140] sm:$0xff]
        %v445 = vld [vmem:[%s346 + $0x148] sm:$0xff]
        %v446 = vld [vmem:[%s346 + $0x150] sm:$0xff]
        %v447 = vld [vmem:[%s346 + $0x158] sm:$0xff]
        %v448 = vld [vmem:[%s346 + $0x160] sm:$0xff]
        %v449 = vld [vmem:[%s346 + $0x168] sm:$0xff]
        %v450 = vld [vmem:[%s346 + $0x170] sm:$0xff]
        %v451 = vld [vmem:[%s346 + $0x178] sm:$0xff]
        %v452 = vld [vmem:[%s346 + $0x180] sm:$0xff]
        %v453 = vld [vmem:[%s346 + $0x188] sm:$0xff]
        %v454 = vld [vmem:[%s346 + $0x190] sm:$0xff]
        %v455 = vld [vmem:[%s346 + $0x198] sm:$0xff]
        %v456 = vld [vmem:[%s346 + $0x1a0] sm:$0xff]
        %v457 = vld [vmem:[%s346 + $0x1a8] sm:$0xff]
        %v458 = vld [vmem:[%s346 + $0x1b0] sm:$0xff]
        %v459 = vld [vmem:[%s346 + $0x1b8] sm:$0xff]
        %v460 = vld [vmem:[%s346 + $0x1c0] sm:$0xff]
        %v461 = vld [vmem:[%s346 + $0x1c8] sm:$0xff]
        %v462 = vld [vmem:[%s346 + $0x1d0] sm:$0xff]
        %v463 = vld [vmem:[%s346 + $0x1d8] sm:$0xff]
        %v464 = vld [vmem:[%s346 + $0x1e0] sm:$0xff]
        %v465 = vld [vmem:[%s346 + $0x1e8] sm:$0xff]
        %v466 = vld [vmem:[%s346 + $0x1f0] sm:$0xff]
        %v467 = vld [vmem:[%s346 + $0x1f8] sm:$0xff]
        %v468 = vld [vmem:[%s346 + $0x200] sm:$0xff]
        %v469 = vld [vmem:[%s346 + $0x208] sm:$0xff]
        %v470 = vld [vmem:[%s346 + $0x210] sm:$0xff]
        %v471 = vld [vmem:[%s346 + $0x218] sm:$0xff]
        %v472 = vld [vmem:[%s346 + $0x220] sm:$0xff]
        %v473 = vld [vmem:[%s346 + $0x228] sm:$0xff]
        %v474 = vld [vmem:[%s346 + $0x230] sm:$0xff]
        %v475 = vld [vmem:[%s346 + $0x238] sm:$0xff]
        %v476 = vld [vmem:[%s346 + $0x240] sm:$0xff]
        %v477 = vld [vmem:[%s346 + $0x248] sm:$0xff]
        %v478 = vld [vmem:[%s346 + $0x250] sm:$0xff]
        %v479 = vld [vmem:[%s346 + $0x258] sm:$0xff]
        %v480 = vld [vmem:[%s346 + $0x260] sm:$0xff]
        %v481 = vld [vmem:[%s346 + $0x268] sm:$0xff]
        %v482 = vld [vmem:[%s346 + $0x270] sm:$0xff]
        %v483 = vld [vmem:[%s346 + $0x278] sm:$0xff]
        %v484 = vld [vmem:[%s346 + $0x280] sm:$0xff]
        %v485 = vld [vmem:[%s346 + $0x288] sm:$0xff]
        %v486 = vld [vmem:[%s346 + $0x290] sm:$0xff]
        %v487 = vld [vmem:[%s346 + $0x298] sm:$0xff]
        %v488 = vld [vmem:[%s346 + $0x2a0] sm:$0xff]
        %v489 = vld [vmem:[%s346 + $0x2a8] sm:$0xff]
        %v490 = vld [vmem:[%s346 + $0x2b0] sm:$0xff]
        %v491 = vld [vmem:[%s346 + $0x2b8] sm:$0xff]
        %v492 = vld [vmem:[%s346 + $0x2c0] sm:$0xff]
        %v493 = vld [vmem:[%s346 + $0x2c8] sm:$0xff]
        %v494 = vld [vmem:[%s346 + $0x2d0] sm:$0xff]
        %v495 = vld [vmem:[%s346 + $0x2d8] sm:$0xff]
        %v496 = vld [vmem:[%s346 + $0x2e0] sm:$0xff]
        %v497 = vld [vmem:[%s346 + $0x2e8] sm:$0xff]
        %v498 = vld [vmem:[%s346 + $0x2f0] sm:$0xff]
        %v499 = vld [vmem:[%s346 + $0x2f8] sm:$0xff]
        %v500 = vld [vmem:[%s346 + $0x300] sm:$0xff]
        %v501 = vld [vmem:[%s346 + $0x308] sm:$0xff]
        %v502 = vld [vmem:[%s346 + $0x310] sm:$0xff]
        %v503 = vld [vmem:[%s346 + $0x318] sm:$0xff]
        %v504 = vld [vmem:[%s346 + $0x320] sm:$0xff]
        %v505 = vld [vmem:[%s346 + $0x328] sm:$0xff]
        %v506 = vld [vmem:[%s346 + $0x330] sm:$0xff]
        %v507 = vld [vmem:[%s346 + $0x338] sm:$0xff]
        %v508 = vld [vmem:[%s346 + $0x340] sm:$0xff]
        %v509 = vld [vmem:[%s346 + $0x348] sm:$0xff]
        %v510 = vld [vmem:[%s346 + $0x350] sm:$0xff]
        %v511 = vld [vmem:[%s346 + $0x358] sm:$0xff]
        %v512 = vld [vmem:[%s346 + $0x360] sm:$0xff]
        %v513 = vld [vmem:[%s346 + $0x368] sm:$0xff]
        %v514 = vld [vmem:[%s346 + $0x370] sm:$0xff]
        %v515 = vld [vmem:[%s346 + $0x378] sm:$0xff]
        %v516 = vld [vmem:[%s346 + $0x380] sm:$0xff]
        %v517 = vld [vmem:[%s346 + $0x388] sm:$0xff]
        %v518 = vld [vmem:[%s346 + $0x390] sm:$0xff]
        %v519 = vld [vmem:[%s346 + $0x398] sm:$0xff]
        %v520 = vld [vmem:[%s346 + $0x3a0] sm:$0xff]
        %v521 = vld [vmem:[%s346 + $0x3a8] sm:$0xff]
        %v522 = vld [vmem:[%s346 + $0x3b0] sm:$0xff]
        %v523 = vld [vmem:[%s346 + $0x3b8] sm:$0xff]
        %v524 = vld [vmem:[%s346 + $0x3c0] sm:$0xff]
        %v525 = vld [vmem:[%s346 + $0x3c8] sm:$0xff]
        %v526 = vld [vmem:[%s346 + $0x3d0] sm:$0xff]
        %v527 = vld [vmem:[%s346 + $0x3d8] sm:$0xff]
        %v528 = vld [vmem:[%s346 + $0x3e0] sm:$0xff]
        %v529 = vld [vmem:[%s346 + $0x3e8] sm:$0xff]
        %v530 = vld [vmem:[%s346 + $0x3f0] sm:$0xff]
        %v531 = vld [vmem:[%s346 + $0x3f8] sm:$0xff]
        %vm532 = vcmask 293888
        %v534 = vsel %vm532, %v404, 0
        %v537 = vsel %vm532, %v405, 0
        %v540 = vsel %vm532, %v406, 0
        %v543 = vsel %vm532, %v407, 0
        %v546 = vsel %vm532, %v408, 0
        %v549 = vsel %vm532, %v409, 0
        %v552 = vsel %vm532, %v410, 0
        %v555 = vsel %vm532, %v411, 0
        %v558 = vsel %vm532, %v412, 0
        %v561 = vsel %vm532, %v413, 0
        %v564 = vsel %vm532, %v414, 0
        %v567 = vsel %vm532, %v415, 0
        %v570 = vsel %vm532, %v416, 0
        %v573 = vsel %vm532, %v417, 0
        %v576 = vsel %vm532, %v418, 0
        %v579 = vsel %vm532, %v419, 0
        %v582 = vsel %vm532, %v420, 0
        %v585 = vsel %vm532, %v421, 0
        %v588 = vsel %vm532, %v422, 0
        %v591 = vsel %vm532, %v423, 0
        %v594 = vsel %vm532, %v424, 0
        %v597 = vsel %vm532, %v425, 0
        %v600 = vsel %vm532, %v426, 0
        %v603 = vsel %vm532, %v427, 0
        %v606 = vsel %vm532, %v428, 0
        %v609 = vsel %vm532, %v429, 0
        %v612 = vsel %vm532, %v430, 0
        %v615 = vsel %vm532, %v431, 0
        %v618 = vsel %vm532, %v432, 0
        %v621 = vsel %vm532, %v433, 0
        %v624 = vsel %vm532, %v434, 0
        %v627 = vsel %vm532, %v435, 0
        %v630 = vsel %vm532, %v436, 0
        %v633 = vsel %vm532, %v437, 0
        %v636 = vsel %vm532, %v438, 0
        %v639 = vsel %vm532, %v439, 0
        %v642 = vsel %vm532, %v440, 0
        %v645 = vsel %vm532, %v441, 0
        %v648 = vsel %vm532, %v442, 0
        %v651 = vsel %vm532, %v443, 0
        %v654 = vsel %vm532, %v444, 0
        %v657 = vsel %vm532, %v445, 0
        %v660 = vsel %vm532, %v446, 0
        %v663 = vsel %vm532, %v447, 0
        %v666 = vsel %vm532, %v448, 0
        %v669 = vsel %vm532, %v449, 0
        %v672 = vsel %vm532, %v450, 0
        %v675 = vsel %vm532, %v451, 0
        %v678 = vsel %vm532, %v452, 0
        %v681 = vsel %vm532, %v453, 0
        %v684 = vsel %vm532, %v454, 0
        %v687 = vsel %vm532, %v455, 0
        %v690 = vsel %vm532, %v456, 0
        %v693 = vsel %vm532, %v457, 0
        %v696 = vsel %vm532, %v458, 0
        %v699 = vsel %vm532, %v459, 0
        %v702 = vsel %vm532, %v460, 0
        %v705 = vsel %vm532, %v461, 0
        %v708 = vsel %vm532, %v462, 0
        %v711 = vsel %vm532, %v463, 0
        %v714 = vsel %vm532, %v464, 0
        %v717 = vsel %vm532, %v465, 0
        %v720 = vsel %vm532, %v466, 0
        %v723 = vsel %vm532, %v467, 0
        %v726 = vsel %vm532, %v468, 0
        %v729 = vsel %vm532, %v469, 0
        %v732 = vsel %vm532, %v470, 0
        %v735 = vsel %vm532, %v471, 0
        %v738 = vsel %vm532, %v472, 0
        %v741 = vsel %vm532, %v473, 0
        %v744 = vsel %vm532, %v474, 0
        %v747 = vsel %vm532, %v475, 0
        %v750 = vsel %vm532, %v476, 0
        %v753 = vsel %vm532, %v477, 0
        %v756 = vsel %vm532, %v478, 0
        %v759 = vsel %vm532, %v479, 0
        %v762 = vsel %vm532, %v480, 0
        %v765 = vsel %vm532, %v481, 0
        %v768 = vsel %vm532, %v482, 0
        %v771 = vsel %vm532, %v483, 0
        %v774 = vsel %vm532, %v484, 0
        %v777 = vsel %vm532, %v485, 0
        %v780 = vsel %vm532, %v486, 0
        %v783 = vsel %vm532, %v487, 0
        %v786 = vsel %vm532, %v488, 0
        %v789 = vsel %vm532, %v489, 0
        %v792 = vsel %vm532, %v490, 0
        %v795 = vsel %vm532, %v491, 0
        %v798 = vsel %vm532, %v492, 0
        %v801 = vsel %vm532, %v493, 0
        %v804 = vsel %vm532, %v494, 0
        %v807 = vsel %vm532, %v495, 0
        %v810 = vsel %vm532, %v496, 0
        %v813 = vsel %vm532, %v497, 0
        %v816 = vsel %vm532, %v498, 0
        %v819 = vsel %vm532, %v499, 0
        %v822 = vsel %vm532, %v500, 0
        %v825 = vsel %vm532, %v501, 0
        %v828 = vsel %vm532, %v502, 0
        %v831 = vsel %vm532, %v503, 0
        %v834 = vsel %vm532, %v504, 0
        %v837 = vsel %vm532, %v505, 0
        %v840 = vsel %vm532, %v506, 0
        %v843 = vsel %vm532, %v507, 0
        %v846 = vsel %vm532, %v508, 0
        %v849 = vsel %vm532, %v509, 0
        %v852 = vsel %vm532, %v510, 0
        %v855 = vsel %vm532, %v511, 0
        %v858 = vsel %vm532, %v512, 0
        %v861 = vsel %vm532, %v513, 0
        %v864 = vsel %vm532, %v514, 0
        %v867 = vsel %vm532, %v515, 0
        %v870 = vsel %vm532, %v516, 0
        %v873 = vsel %vm532, %v517, 0
        %v876 = vsel %vm532, %v518, 0
        %v879 = vsel %vm532, %v519, 0
        %v882 = vsel %vm532, %v520, 0
        %v885 = vsel %vm532, %v521, 0
        %v888 = vsel %vm532, %v522, 0
        %v891 = vsel %vm532, %v523, 0
        %v894 = vsel %vm532, %v524, 0
        %v897 = vsel %vm532, %v525, 0
        %v900 = vsel %vm532, %v526, 0
        %v903 = vsel %vm532, %v527, 0
        %v906 = vsel %vm532, %v528, 0
        %v909 = vsel %vm532, %v529, 0
        %v912 = vsel %vm532, %v530, 0
        %v915 = vsel %vm532, %v531, 0
        %vm917 = vcmask 1043456
        %v919 = vsel %vm917, %v403, 0
        %921 = vmatpush.msra.mxu0 0.0
        %922 = vmatpush.msra.mxu0 0.0
        %923 = vmatpush.msra.mxu0 0.0
        %924 = vmatpush.msra.mxu0 0.0
        %925 = vmatpush.msra.mxu0 0.0
        %926 = vmatpush.msra.mxu0 0.0
        %927 = vmatpush.msra.mxu0 0.0
        %928 = vmatpush.msra.mxu0 0.0
        %929 = vmatpush.msra.mxu0 0.0
        %930 = vmatpush.msra.mxu0 0.0
        %931 = vmatpush.msra.mxu0 0.0
        %932 = vmatpush.msra.mxu0 %v919
        %933 = vmatpush.msra.mxu0 %v402
        %934 = vmatpush.msra.mxu0 %v401
        %935 = vmatpush.msra.mxu0 %v400
        %936 = vmatpush.msra.mxu0 %v399
        %937 = vmatmul.f32.gmra.mxu0 %v534
        %v938 = vpop.f32.mrf.mxu0
        %v939 = vadd.f32 0.0, %v938
        %940 = vmatmul.f32.gmra.mxu0 %v537
        %v941 = vpop.f32.mrf.mxu0
        %v942 = vadd.f32 0.0, %v941
        %943 = vmatmul.f32.gmra.mxu0 %v540
        %v944 = vpop.f32.mrf.mxu0
        %v945 = vadd.f32 0.0, %v944
        %946 = vmatmul.f32.gmra.mxu0 %v543
        %v947 = vpop.f32.mrf.mxu0
        %v948 = vadd.f32 0.0, %v947
        %949 = vmatmul.f32.gmra.mxu0 %v546
        %v950 = vpop.f32.mrf.mxu0
        %v951 = vadd.f32 0.0, %v950
        %952 = vmatmul.f32.gmra.mxu0 %v549
        %v953 = vpop.f32.mrf.mxu0
        %v954 = vadd.f32 0.0, %v953
        %955 = vmatmul.f32.gmra.mxu0 %v552
        %v956 = vpop.f32.mrf.mxu0
        %v957 = vadd.f32 0.0, %v956
        %958 = vmatmul.f32.gmra.mxu0 %v555
        %v959 = vpop.f32.mrf.mxu0
        %v960 = vadd.f32 0.0, %v959
        %961 = vmatmul.f32.gmra.mxu0 %v558
        %v962 = vpop.f32.mrf.mxu0
        %v963 = vadd.f32 0.0, %v962
        %964 = vmatmul.f32.gmra.mxu0 %v561
        %v965 = vpop.f32.mrf.mxu0
        %v966 = vadd.f32 0.0, %v965
        %967 = vmatmul.f32.gmra.mxu0 %v564
        %v968 = vpop.f32.mrf.mxu0
        %v969 = vadd.f32 0.0, %v968
        %970 = vmatmul.f32.gmra.mxu0 %v567
        %v971 = vpop.f32.mrf.mxu0
        %v972 = vadd.f32 0.0, %v971
        %973 = vmatmul.f32.gmra.mxu0 %v570
        %v974 = vpop.f32.mrf.mxu0
        %v975 = vadd.f32 0.0, %v974
        %976 = vmatmul.f32.gmra.mxu0 %v573
        %v977 = vpop.f32.mrf.mxu0
        %v978 = vadd.f32 0.0, %v977
        %979 = vmatmul.f32.gmra.mxu0 %v576
        %v980 = vpop.f32.mrf.mxu0
        %v981 = vadd.f32 0.0, %v980
        %982 = vmatmul.f32.gmra.mxu0 %v579
        %v983 = vpop.f32.mrf.mxu0
        %v984 = vadd.f32 0.0, %v983
        %985 = vmatmul.f32.gmra.mxu0 %v582
        %v986 = vpop.f32.mrf.mxu0
        %v987 = vadd.f32 0.0, %v986
        %988 = vmatmul.f32.gmra.mxu0 %v585
        %v989 = vpop.f32.mrf.mxu0
        %v990 = vadd.f32 0.0, %v989
        %991 = vmatmul.f32.gmra.mxu0 %v588
        %v992 = vpop.f32.mrf.mxu0
        %v993 = vadd.f32 0.0, %v992
        %994 = vmatmul.f32.gmra.mxu0 %v591
        %v995 = vpop.f32.mrf.mxu0
        %v996 = vadd.f32 0.0, %v995
        %997 = vmatmul.f32.gmra.mxu0 %v594
        %v998 = vpop.f32.mrf.mxu0
        %v999 = vadd.f32 0.0, %v998
        %1000 = vmatmul.f32.gmra.mxu0 %v597
        %v1001 = vpop.f32.mrf.mxu0
        %v1002 = vadd.f32 0.0, %v1001
        %1003 = vmatmul.f32.gmra.mxu0 %v600
        %v1004 = vpop.f32.mrf.mxu0
        %v1005 = vadd.f32 0.0, %v1004
        %1006 = vmatmul.f32.gmra.mxu0 %v603
        %v1007 = vpop.f32.mrf.mxu0
        %v1008 = vadd.f32 0.0, %v1007
        %1009 = vmatmul.f32.gmra.mxu0 %v606
        %v1010 = vpop.f32.mrf.mxu0
        %v1011 = vadd.f32 0.0, %v1010
        %1012 = vmatmul.f32.gmra.mxu0 %v609
        %v1013 = vpop.f32.mrf.mxu0
        %v1014 = vadd.f32 0.0, %v1013
        %1015 = vmatmul.f32.gmra.mxu0 %v612
        %v1016 = vpop.f32.mrf.mxu0
        %v1017 = vadd.f32 0.0, %v1016
        %1018 = vmatmul.f32.gmra.mxu0 %v615
        %v1019 = vpop.f32.mrf.mxu0
        %v1020 = vadd.f32 0.0, %v1019
        %1021 = vmatmul.f32.gmra.mxu0 %v618
        %v1022 = vpop.f32.mrf.mxu0
        %v1023 = vadd.f32 0.0, %v1022
        %1024 = vmatmul.f32.gmra.mxu0 %v621
        %v1025 = vpop.f32.mrf.mxu0
        %v1026 = vadd.f32 0.0, %v1025
        %1027 = vmatmul.f32.gmra.mxu0 %v624
        %v1028 = vpop.f32.mrf.mxu0
        %v1029 = vadd.f32 0.0, %v1028
        %1030 = vmatmul.f32.gmra.mxu0 %v627
        %v1031 = vpop.f32.mrf.mxu0
        %v1032 = vadd.f32 0.0, %v1031
        %1033 = vmatmul.f32.gmra.mxu0 %v630
        %v1034 = vpop.f32.mrf.mxu0
        %v1035 = vadd.f32 0.0, %v1034
        %1036 = vmatmul.f32.gmra.mxu0 %v633
        %v1037 = vpop.f32.mrf.mxu0
        %v1038 = vadd.f32 0.0, %v1037
        %1039 = vmatmul.f32.gmra.mxu0 %v636
        %v1040 = vpop.f32.mrf.mxu0
        %v1041 = vadd.f32 0.0, %v1040
        %1042 = vmatmul.f32.gmra.mxu0 %v639
        %v1043 = vpop.f32.mrf.mxu0
        %v1044 = vadd.f32 0.0, %v1043
        %1045 = vmatmul.f32.gmra.mxu0 %v642
        %v1046 = vpop.f32.mrf.mxu0
        %v1047 = vadd.f32 0.0, %v1046
        %1048 = vmatmul.f32.gmra.mxu0 %v645
        %v1049 = vpop.f32.mrf.mxu0
        %v1050 = vadd.f32 0.0, %v1049
        %1051 = vmatmul.f32.gmra.mxu0 %v648
        %v1052 = vpop.f32.mrf.mxu0
        %v1053 = vadd.f32 0.0, %v1052
        %1054 = vmatmul.f32.gmra.mxu0 %v651
        %v1055 = vpop.f32.mrf.mxu0
        %v1056 = vadd.f32 0.0, %v1055
        %1057 = vmatmul.f32.gmra.mxu0 %v654
        %v1058 = vpop.f32.mrf.mxu0
        %v1059 = vadd.f32 0.0, %v1058
        %1060 = vmatmul.f32.gmra.mxu0 %v657
        %v1061 = vpop.f32.mrf.mxu0
        %v1062 = vadd.f32 0.0, %v1061
        %1063 = vmatmul.f32.gmra.mxu0 %v660
        %v1064 = vpop.f32.mrf.mxu0
        %v1065 = vadd.f32 0.0, %v1064
        %1066 = vmatmul.f32.gmra.mxu0 %v663
        %v1067 = vpop.f32.mrf.mxu0
        %v1068 = vadd.f32 0.0, %v1067
        %1069 = vmatmul.f32.gmra.mxu0 %v666
        %v1070 = vpop.f32.mrf.mxu0
        %v1071 = vadd.f32 0.0, %v1070
        %1072 = vmatmul.f32.gmra.mxu0 %v669
        %v1073 = vpop.f32.mrf.mxu0
        %v1074 = vadd.f32 0.0, %v1073
        %1075 = vmatmul.f32.gmra.mxu0 %v672
        %v1076 = vpop.f32.mrf.mxu0
        %v1077 = vadd.f32 0.0, %v1076
        %1078 = vmatmul.f32.gmra.mxu0 %v675
        %v1079 = vpop.f32.mrf.mxu0
        %v1080 = vadd.f32 0.0, %v1079
        %1081 = vmatmul.f32.gmra.mxu0 %v678
        %v1082 = vpop.f32.mrf.mxu0
        %v1083 = vadd.f32 0.0, %v1082
        %1084 = vmatmul.f32.gmra.mxu0 %v681
        %v1085 = vpop.f32.mrf.mxu0
        %v1086 = vadd.f32 0.0, %v1085
        %1087 = vmatmul.f32.gmra.mxu0 %v684
        %v1088 = vpop.f32.mrf.mxu0
        %v1089 = vadd.f32 0.0, %v1088
        %1090 = vmatmul.f32.gmra.mxu0 %v687
        %v1091 = vpop.f32.mrf.mxu0
        %v1092 = vadd.f32 0.0, %v1091
        %1093 = vmatmul.f32.gmra.mxu0 %v690
        %v1094 = vpop.f32.mrf.mxu0
        %v1095 = vadd.f32 0.0, %v1094
        %1096 = vmatmul.f32.gmra.mxu0 %v693
        %v1097 = vpop.f32.mrf.mxu0
        %v1098 = vadd.f32 0.0, %v1097
        %1099 = vmatmul.f32.gmra.mxu0 %v696
        %v1100 = vpop.f32.mrf.mxu0
        %v1101 = vadd.f32 0.0, %v1100
        %1102 = vmatmul.f32.gmra.mxu0 %v699
        %v1103 = vpop.f32.mrf.mxu0
        %v1104 = vadd.f32 0.0, %v1103
        %1105 = vmatmul.f32.gmra.mxu0 %v702
        %v1106 = vpop.f32.mrf.mxu0
        %v1107 = vadd.f32 0.0, %v1106
        %1108 = vmatmul.f32.gmra.mxu0 %v705
        %v1109 = vpop.f32.mrf.mxu0
        %v1110 = vadd.f32 0.0, %v1109
        %1111 = vmatmul.f32.gmra.mxu0 %v708
        %v1112 = vpop.f32.mrf.mxu0
        %v1113 = vadd.f32 0.0, %v1112
        %1114 = vmatmul.f32.gmra.mxu0 %v711
        %v1115 = vpop.f32.mrf.mxu0
        %v1116 = vadd.f32 0.0, %v1115
        %1117 = vmatmul.f32.gmra.mxu0 %v714
        %v1118 = vpop.f32.mrf.mxu0
        %v1119 = vadd.f32 0.0, %v1118
        %1120 = vmatmul.f32.gmra.mxu0 %v717
        %v1121 = vpop.f32.mrf.mxu0
        %v1122 = vadd.f32 0.0, %v1121
        %1123 = vmatmul.f32.gmra.mxu0 %v720
        %v1124 = vpop.f32.mrf.mxu0
        %v1125 = vadd.f32 0.0, %v1124
        %1126 = vmatmul.f32.gmra.mxu0 %v723
        %v1127 = vpop.f32.mrf.mxu0
        %v1128 = vadd.f32 0.0, %v1127
        %1129 = vmatmul.f32.gmra.mxu0 %v726
        %v1130 = vpop.f32.mrf.mxu0
        %v1131 = vadd.f32 0.0, %v1130
        %1132 = vmatmul.f32.gmra.mxu0 %v729
        %v1133 = vpop.f32.mrf.mxu0
        %v1134 = vadd.f32 0.0, %v1133
        %1135 = vmatmul.f32.gmra.mxu0 %v732
        %v1136 = vpop.f32.mrf.mxu0
        %v1137 = vadd.f32 0.0, %v1136
        %1138 = vmatmul.f32.gmra.mxu0 %v735
        %v1139 = vpop.f32.mrf.mxu0
        %v1140 = vadd.f32 0.0, %v1139
        %1141 = vmatmul.f32.gmra.mxu0 %v738
        %v1142 = vpop.f32.mrf.mxu0
        %v1143 = vadd.f32 0.0, %v1142
        %1144 = vmatmul.f32.gmra.mxu0 %v741
        %v1145 = vpop.f32.mrf.mxu0
        %v1146 = vadd.f32 0.0, %v1145
        %1147 = vmatmul.f32.gmra.mxu0 %v744
        %v1148 = vpop.f32.mrf.mxu0
        %v1149 = vadd.f32 0.0, %v1148
        %1150 = vmatmul.f32.gmra.mxu0 %v747
        %v1151 = vpop.f32.mrf.mxu0
        %v1152 = vadd.f32 0.0, %v1151
        %1153 = vmatmul.f32.gmra.mxu0 %v750
        %v1154 = vpop.f32.mrf.mxu0
        %v1155 = vadd.f32 0.0, %v1154
        %1156 = vmatmul.f32.gmra.mxu0 %v753
        %v1157 = vpop.f32.mrf.mxu0
        %v1158 = vadd.f32 0.0, %v1157
        %1159 = vmatmul.f32.gmra.mxu0 %v756
        %v1160 = vpop.f32.mrf.mxu0
        %v1161 = vadd.f32 0.0, %v1160
        %1162 = vmatmul.f32.gmra.mxu0 %v759
        %v1163 = vpop.f32.mrf.mxu0
        %v1164 = vadd.f32 0.0, %v1163
        %1165 = vmatmul.f32.gmra.mxu0 %v762
        %v1166 = vpop.f32.mrf.mxu0
        %v1167 = vadd.f32 0.0, %v1166
        %1168 = vmatmul.f32.gmra.mxu0 %v765
        %v1169 = vpop.f32.mrf.mxu0
        %v1170 = vadd.f32 0.0, %v1169
        %1171 = vmatmul.f32.gmra.mxu0 %v768
        %v1172 = vpop.f32.mrf.mxu0
        %v1173 = vadd.f32 0.0, %v1172
        %1174 = vmatmul.f32.gmra.mxu0 %v771
        %v1175 = vpop.f32.mrf.mxu0
        %v1176 = vadd.f32 0.0, %v1175
        %1177 = vmatmul.f32.gmra.mxu0 %v774
        %v1178 = vpop.f32.mrf.mxu0
        %v1179 = vadd.f32 0.0, %v1178
        %1180 = vmatmul.f32.gmra.mxu0 %v777
        %v1181 = vpop.f32.mrf.mxu0
        %v1182 = vadd.f32 0.0, %v1181
        %1183 = vmatmul.f32.gmra.mxu0 %v780
        %v1184 = vpop.f32.mrf.mxu0
        %v1185 = vadd.f32 0.0, %v1184
        %1186 = vmatmul.f32.gmra.mxu0 %v783
        %v1187 = vpop.f32.mrf.mxu0
        %v1188 = vadd.f32 0.0, %v1187
        %1189 = vmatmul.f32.gmra.mxu0 %v786
        %v1190 = vpop.f32.mrf.mxu0
        %v1191 = vadd.f32 0.0, %v1190
        %1192 = vmatmul.f32.gmra.mxu0 %v789
        %v1193 = vpop.f32.mrf.mxu0
        %v1194 = vadd.f32 0.0, %v1193
        %1195 = vmatmul.f32.gmra.mxu0 %v792
        %v1196 = vpop.f32.mrf.mxu0
        %v1197 = vadd.f32 0.0, %v1196
        %1198 = vmatmul.f32.gmra.mxu0 %v795
        %v1199 = vpop.f32.mrf.mxu0
        %v1200 = vadd.f32 0.0, %v1199
        %1201 = vmatmul.f32.gmra.mxu0 %v798
        %v1202 = vpop.f32.mrf.mxu0
        %v1203 = vadd.f32 0.0, %v1202
        %1204 = vmatmul.f32.gmra.mxu0 %v801
        %v1205 = vpop.f32.mrf.mxu0
        %v1206 = vadd.f32 0.0, %v1205
        %1207 = vmatmul.f32.gmra.mxu0 %v804
        %v1208 = vpop.f32.mrf.mxu0
        %v1209 = vadd.f32 0.0, %v1208
        %1210 = vmatmul.f32.gmra.mxu0 %v807
        %v1211 = vpop.f32.mrf.mxu0
        %v1212 = vadd.f32 0.0, %v1211
        %1213 = vmatmul.f32.gmra.mxu0 %v810
        %v1214 = vpop.f32.mrf.mxu0
        %v1215 = vadd.f32 0.0, %v1214
        %1216 = vmatmul.f32.gmra.mxu0 %v813
        %v1217 = vpop.f32.mrf.mxu0
        %v1218 = vadd.f32 0.0, %v1217
        %1219 = vmatmul.f32.gmra.mxu0 %v816
        %v1220 = vpop.f32.mrf.mxu0
        %v1221 = vadd.f32 0.0, %v1220
        %1222 = vmatmul.f32.gmra.mxu0 %v819
        %v1223 = vpop.f32.mrf.mxu0
        %v1224 = vadd.f32 0.0, %v1223
        %1225 = vmatmul.f32.gmra.mxu0 %v822
        %v1226 = vpop.f32.mrf.mxu0
        %v1227 = vadd.f32 0.0, %v1226
        %1228 = vmatmul.f32.gmra.mxu0 %v825
        %v1229 = vpop.f32.mrf.mxu0
        %v1230 = vadd.f32 0.0, %v1229
        %1231 = vmatmul.f32.gmra.mxu0 %v828
        %v1232 = vpop.f32.mrf.mxu0
        %v1233 = vadd.f32 0.0, %v1232
        %1234 = vmatmul.f32.gmra.mxu0 %v831
        %v1235 = vpop.f32.mrf.mxu0
        %v1236 = vadd.f32 0.0, %v1235
        %1237 = vmatmul.f32.gmra.mxu0 %v834
        %v1238 = vpop.f32.mrf.mxu0
        %v1239 = vadd.f32 0.0, %v1238
        %1240 = vmatmul.f32.gmra.mxu0 %v837
        %v1241 = vpop.f32.mrf.mxu0
        %v1242 = vadd.f32 0.0, %v1241
        %1243 = vmatmul.f32.gmra.mxu0 %v840
        %v1244 = vpop.f32.mrf.mxu0
        %v1245 = vadd.f32 0.0, %v1244
        %1246 = vmatmul.f32.gmra.mxu0 %v843
        %v1247 = vpop.f32.mrf.mxu0
        %v1248 = vadd.f32 0.0, %v1247
        %1249 = vmatmul.f32.gmra.mxu0 %v846
        %v1250 = vpop.f32.mrf.mxu0
        %v1251 = vadd.f32 0.0, %v1250
        %1252 = vmatmul.f32.gmra.mxu0 %v849
        %v1253 = vpop.f32.mrf.mxu0
        %v1254 = vadd.f32 0.0, %v1253
        %1255 = vmatmul.f32.gmra.mxu0 %v852
        %v1256 = vpop.f32.mrf.mxu0
        %v1257 = vadd.f32 0.0, %v1256
        %1258 = vmatmul.f32.gmra.mxu0 %v855
        %v1259 = vpop.f32.mrf.mxu0
        %v1260 = vadd.f32 0.0, %v1259
        %1261 = vmatmul.f32.gmra.mxu0 %v858
        %v1262 = vpop.f32.mrf.mxu0
        %v1263 = vadd.f32 0.0, %v1262
        %1264 = vmatmul.f32.gmra.mxu0 %v861
        %v1265 = vpop.f32.mrf.mxu0
        %v1266 = vadd.f32 0.0, %v1265
        %1267 = vmatmul.f32.gmra.mxu0 %v864
        %v1268 = vpop.f32.mrf.mxu0
        %v1269 = vadd.f32 0.0, %v1268
        %1270 = vmatmul.f32.gmra.mxu0 %v867
        %v1271 = vpop.f32.mrf.mxu0
        %v1272 = vadd.f32 0.0, %v1271
        %1273 = vmatmul.f32.gmra.mxu0 %v870
        %v1274 = vpop.f32.mrf.mxu0
        %v1275 = vadd.f32 0.0, %v1274
        %1276 = vmatmul.f32.gmra.mxu0 %v873
        %v1277 = vpop.f32.mrf.mxu0
        %v1278 = vadd.f32 0.0, %v1277
        %1279 = vmatmul.f32.gmra.mxu0 %v876
        %v1280 = vpop.f32.mrf.mxu0
        %v1281 = vadd.f32 0.0, %v1280
        %1282 = vmatmul.f32.gmra.mxu0 %v879
        %v1283 = vpop.f32.mrf.mxu0
        %v1284 = vadd.f32 0.0, %v1283
        %1285 = vmatmul.f32.gmra.mxu0 %v882
        %v1286 = vpop.f32.mrf.mxu0
        %v1287 = vadd.f32 0.0, %v1286
        %1288 = vmatmul.f32.gmra.mxu0 %v885
        %v1289 = vpop.f32.mrf.mxu0
        %v1290 = vadd.f32 0.0, %v1289
        %1291 = vmatmul.f32.gmra.mxu0 %v888
        %v1292 = vpop.f32.mrf.mxu0
        %v1293 = vadd.f32 0.0, %v1292
        %1294 = vmatmul.f32.gmra.mxu0 %v891
        %v1295 = vpop.f32.mrf.mxu0
        %v1296 = vadd.f32 0.0, %v1295
        %1297 = vmatmul.f32.gmra.mxu0 %v894
        %v1298 = vpop.f32.mrf.mxu0
        %v1299 = vadd.f32 0.0, %v1298
        %1300 = vmatmul.f32.gmra.mxu0 %v897
        %v1301 = vpop.f32.mrf.mxu0
        %v1302 = vadd.f32 0.0, %v1301
        %1303 = vmatmul.f32.gmra.mxu0 %v900
        %v1304 = vpop.f32.mrf.mxu0
        %v1305 = vadd.f32 0.0, %v1304
        %1306 = vmatmul.f32.gmra.mxu0 %v903
        %v1307 = vpop.f32.mrf.mxu0
        %v1308 = vadd.f32 0.0, %v1307
        %1309 = vmatmul.f32.gmra.mxu0 %v906
        %v1310 = vpop.f32.mrf.mxu0
        %v1311 = vadd.f32 0.0, %v1310
        %1312 = vmatmul.f32.gmra.mxu0 %v909
        %v1313 = vpop.f32.mrf.mxu0
        %v1314 = vadd.f32 0.0, %v1313
        %1315 = vmatmul.f32.gmra.mxu0 %v912
        %v1316 = vpop.f32.mrf.mxu0
        %v1317 = vadd.f32 0.0, %v1316
        %1318 = vmatmul.f32.gmra.mxu0 %v915
        %v1319 = vpop.f32.mrf.mxu0
        %v1320 = vadd.f32 0.0, %v1319
        %1321 = vdwg.mxu0
        %v1322 = vld [vmem:[%s360] sm:$0xff]
        %v1323 = vld [vmem:[%s360 + $0x8] sm:$0xff]
        %v1324 = vld [vmem:[%s360 + $0x10] sm:$0xff]
        %v1325 = vld [vmem:[%s360 + $0x18] sm:$0xff]
        %v1326 = vld [vmem:[%s360 + $0x20] sm:$0xff]
        %v1327 = vld [vmem:[%s360 + $0x28] sm:$0xff]
        %v1328 = vld [vmem:[%s360 + $0x30] sm:$0xff]
        %v1329 = vld [vmem:[%s360 + $0x38] sm:$0xff]
        %v1330 = vld [vmem:[%s360 + $0x40] sm:$0xff]
        %v1331 = vld [vmem:[%s360 + $0x48] sm:$0xff]
        %v1332 = vld [vmem:[%s360 + $0x50] sm:$0xff]
        %v1333 = vld [vmem:[%s360 + $0x58] sm:$0xff]
        %v1334 = vld [vmem:[%s360 + $0x60] sm:$0xff]
        %v1335 = vld [vmem:[%s360 + $0x68] sm:$0xff]
        %v1336 = vld [vmem:[%s360 + $0x70] sm:$0xff]
        %v1337 = vld [vmem:[%s360 + $0x78] sm:$0xff]
        %v1338 = vld [vmem:[%s360 + $0x80] sm:$0xff]
        %v1339 = vld [vmem:[%s360 + $0x88] sm:$0xff]
        %v1340 = vld [vmem:[%s360 + $0x90] sm:$0xff]
        %v1341 = vld [vmem:[%s360 + $0x98] sm:$0xff]
        %v1342 = vld [vmem:[%s360 + $0xa0] sm:$0xff]
        %v1343 = vld [vmem:[%s360 + $0xa8] sm:$0xff]
        %v1344 = vld [vmem:[%s360 + $0xb0] sm:$0xff]
        %v1345 = vld [vmem:[%s360 + $0xb8] sm:$0xff]
        %v1346 = vld [vmem:[%s360 + $0xc0] sm:$0xff]
        %v1347 = vld [vmem:[%s360 + $0xc8] sm:$0xff]
        %v1348 = vld [vmem:[%s360 + $0xd0] sm:$0xff]
        %v1349 = vld [vmem:[%s360 + $0xd8] sm:$0xff]
        %v1350 = vld [vmem:[%s360 + $0xe0] sm:$0xff]
        %v1351 = vld [vmem:[%s360 + $0xe8] sm:$0xff]
        %v1352 = vld [vmem:[%s360 + $0xf0] sm:$0xff]
        %v1353 = vld [vmem:[%s360 + $0xf8] sm:$0xff]
        %v1354 = vld [vmem:[%s360 + $0x100] sm:$0xff]
        %v1355 = vld [vmem:[%s360 + $0x108] sm:$0xff]
        %v1356 = vld [vmem:[%s360 + $0x110] sm:$0xff]
        %v1357 = vld [vmem:[%s360 + $0x118] sm:$0xff]
        %v1358 = vld [vmem:[%s360 + $0x120] sm:$0xff]
        %v1359 = vld [vmem:[%s360 + $0x128] sm:$0xff]
        %v1360 = vld [vmem:[%s360 + $0x130] sm:$0xff]
        %v1361 = vld [vmem:[%s360 + $0x138] sm:$0xff]
        %v1362 = vld [vmem:[%s360 + $0x140] sm:$0xff]
        %v1363 = vld [vmem:[%s360 + $0x148] sm:$0xff]
        %v1364 = vld [vmem:[%s360 + $0x150] sm:$0xff]
        %v1365 = vld [vmem:[%s360 + $0x158] sm:$0xff]
        %v1366 = vld [vmem:[%s360 + $0x160] sm:$0xff]
        %v1367 = vld [vmem:[%s360 + $0x168] sm:$0xff]
        %v1368 = vld [vmem:[%s360 + $0x170] sm:$0xff]
        %v1369 = vld [vmem:[%s360 + $0x178] sm:$0xff]
        %v1370 = vld [vmem:[%s360 + $0x180] sm:$0xff]
        %v1371 = vld [vmem:[%s360 + $0x188] sm:$0xff]
        %v1372 = vld [vmem:[%s360 + $0x190] sm:$0xff]
        %v1373 = vld [vmem:[%s360 + $0x198] sm:$0xff]
        %v1374 = vld [vmem:[%s360 + $0x1a0] sm:$0xff]
        %v1375 = vld [vmem:[%s360 + $0x1a8] sm:$0xff]
        %v1376 = vld [vmem:[%s360 + $0x1b0] sm:$0xff]
        %v1377 = vld [vmem:[%s360 + $0x1b8] sm:$0xff]
        %v1378 = vld [vmem:[%s360 + $0x1c0] sm:$0xff]
        %v1379 = vld [vmem:[%s360 + $0x1c8] sm:$0xff]
        %v1380 = vld [vmem:[%s360 + $0x1d0] sm:$0xff]
        %v1381 = vld [vmem:[%s360 + $0x1d8] sm:$0xff]
        %v1382 = vld [vmem:[%s360 + $0x1e0] sm:$0xff]
        %v1383 = vld [vmem:[%s360 + $0x1e8] sm:$0xff]
        %v1384 = vld [vmem:[%s360 + $0x1f0] sm:$0xff]
        %v1385 = vld [vmem:[%s360 + $0x1f8] sm:$0xff]
        %v1386 = vld [vmem:[%s360 + $0x200] sm:$0xff]
        %v1387 = vld [vmem:[%s360 + $0x208] sm:$0xff]
        %v1388 = vld [vmem:[%s360 + $0x210] sm:$0xff]
        %v1389 = vld [vmem:[%s360 + $0x218] sm:$0xff]
        %v1390 = vld [vmem:[%s360 + $0x220] sm:$0xff]
        %v1391 = vld [vmem:[%s360 + $0x228] sm:$0xff]
        %v1392 = vld [vmem:[%s360 + $0x230] sm:$0xff]
        %v1393 = vld [vmem:[%s360 + $0x238] sm:$0xff]
        %v1394 = vld [vmem:[%s360 + $0x240] sm:$0xff]
        %v1395 = vld [vmem:[%s360 + $0x248] sm:$0xff]
        %v1396 = vld [vmem:[%s360 + $0x250] sm:$0xff]
        %v1397 = vld [vmem:[%s360 + $0x258] sm:$0xff]
        %v1398 = vld [vmem:[%s360 + $0x260] sm:$0xff]
        %v1399 = vld [vmem:[%s360 + $0x268] sm:$0xff]
        %v1400 = vld [vmem:[%s360 + $0x270] sm:$0xff]
        %v1401 = vld [vmem:[%s360 + $0x278] sm:$0xff]
        %v1402 = vld [vmem:[%s360 + $0x280] sm:$0xff]
        %v1403 = vld [vmem:[%s360 + $0x288] sm:$0xff]
        %v1404 = vld [vmem:[%s360 + $0x290] sm:$0xff]
        %v1405 = vld [vmem:[%s360 + $0x298] sm:$0xff]
        %v1406 = vld [vmem:[%s360 + $0x2a0] sm:$0xff]
        %v1407 = vld [vmem:[%s360 + $0x2a8] sm:$0xff]
        %v1408 = vld [vmem:[%s360 + $0x2b0] sm:$0xff]
        %v1409 = vld [vmem:[%s360 + $0x2b8] sm:$0xff]
        %v1410 = vld [vmem:[%s360 + $0x2c0] sm:$0xff]
        %v1411 = vld [vmem:[%s360 + $0x2c8] sm:$0xff]
        %v1412 = vld [vmem:[%s360 + $0x2d0] sm:$0xff]
        %v1413 = vld [vmem:[%s360 + $0x2d8] sm:$0xff]
        %v1414 = vld [vmem:[%s360 + $0x2e0] sm:$0xff]
        %v1415 = vld [vmem:[%s360 + $0x2e8] sm:$0xff]
        %v1416 = vld [vmem:[%s360 + $0x2f0] sm:$0xff]
        %v1417 = vld [vmem:[%s360 + $0x2f8] sm:$0xff]
        %v1418 = vld [vmem:[%s360 + $0x300] sm:$0xff]
        %v1419 = vld [vmem:[%s360 + $0x308] sm:$0xff]
        %v1420 = vld [vmem:[%s360 + $0x310] sm:$0xff]
        %v1421 = vld [vmem:[%s360 + $0x318] sm:$0xff]
        %v1422 = vld [vmem:[%s360 + $0x320] sm:$0xff]
        %v1423 = vld [vmem:[%s360 + $0x328] sm:$0xff]
        %v1424 = vld [vmem:[%s360 + $0x330] sm:$0xff]
        %v1425 = vld [vmem:[%s360 + $0x338] sm:$0xff]
        %v1426 = vld [vmem:[%s360 + $0x340] sm:$0xff]
        %v1427 = vld [vmem:[%s360 + $0x348] sm:$0xff]
        %v1428 = vld [vmem:[%s360 + $0x350] sm:$0xff]
        %v1429 = vld [vmem:[%s360 + $0x358] sm:$0xff]
        %v1430 = vld [vmem:[%s360 + $0x360] sm:$0xff]
        %v1431 = vld [vmem:[%s360 + $0x368] sm:$0xff]
        %v1432 = vld [vmem:[%s360 + $0x370] sm:$0xff]
        %v1433 = vld [vmem:[%s360 + $0x378] sm:$0xff]
        %v1434 = vld [vmem:[%s360 + $0x380] sm:$0xff]
        %v1435 = vld [vmem:[%s360 + $0x388] sm:$0xff]
        %v1436 = vld [vmem:[%s360 + $0x390] sm:$0xff]
        %v1437 = vld [vmem:[%s360 + $0x398] sm:$0xff]
        %v1438 = vld [vmem:[%s360 + $0x3a0] sm:$0xff]
        %v1439 = vld [vmem:[%s360 + $0x3a8] sm:$0xff]
        %v1440 = vld [vmem:[%s360 + $0x3b0] sm:$0xff]
        %v1441 = vld [vmem:[%s360 + $0x3b8] sm:$0xff]
        %v1442 = vld [vmem:[%s360 + $0x3c0] sm:$0xff]
        %v1443 = vld [vmem:[%s360 + $0x3c8] sm:$0xff]
        %v1444 = vld [vmem:[%s360 + $0x3d0] sm:$0xff]
        %v1445 = vld [vmem:[%s360 + $0x3d8] sm:$0xff]
        %v1446 = vld [vmem:[%s360 + $0x3e0] sm:$0xff]
        %v1447 = vld [vmem:[%s360 + $0x3e8] sm:$0xff]
        %v1448 = vld [vmem:[%s360 + $0x3f0] sm:$0xff]
        %v1449 = vld [vmem:[%s360 + $0x3f8] sm:$0xff]
        %v1451 = vsel %vm532, %v1322, 0
        %v1454 = vsel %vm532, %v1323, 0
        %v1457 = vsel %vm532, %v1324, 0
        %v1460 = vsel %vm532, %v1325, 0
        %v1463 = vsel %vm532, %v1326, 0
        %v1466 = vsel %vm532, %v1327, 0
        %v1469 = vsel %vm532, %v1328, 0
        %v1472 = vsel %vm532, %v1329, 0
        %v1475 = vsel %vm532, %v1330, 0
        %v1478 = vsel %vm532, %v1331, 0
        %v1481 = vsel %vm532, %v1332, 0
        %v1484 = vsel %vm532, %v1333, 0
        %v1487 = vsel %vm532, %v1334, 0
        %v1490 = vsel %vm532, %v1335, 0
        %v1493 = vsel %vm532, %v1336, 0
        %v1496 = vsel %vm532, %v1337, 0
        %v1499 = vsel %vm532, %v1338, 0
        %v1502 = vsel %vm532, %v1339, 0
        %v1505 = vsel %vm532, %v1340, 0
        %v1508 = vsel %vm532, %v1341, 0
        %v1511 = vsel %vm532, %v1342, 0
        %v1514 = vsel %vm532, %v1343, 0
        %v1517 = vsel %vm532, %v1344, 0
        %v1520 = vsel %vm532, %v1345, 0
        %v1523 = vsel %vm532, %v1346, 0
        %v1526 = vsel %vm532, %v1347, 0
        %v1529 = vsel %vm532, %v1348, 0
        %v1532 = vsel %vm532, %v1349, 0
        %v1535 = vsel %vm532, %v1350, 0
        %v1538 = vsel %vm532, %v1351, 0
        %v1541 = vsel %vm532, %v1352, 0
        %v1544 = vsel %vm532, %v1353, 0
        %v1547 = vsel %vm532, %v1354, 0
        %v1550 = vsel %vm532, %v1355, 0
        %v1553 = vsel %vm532, %v1356, 0
        %v1556 = vsel %vm532, %v1357, 0
        %v1559 = vsel %vm532, %v1358, 0
        %v1562 = vsel %vm532, %v1359, 0
        %v1565 = vsel %vm532, %v1360, 0
        %v1568 = vsel %vm532, %v1361, 0
        %v1571 = vsel %vm532, %v1362, 0
        %v1574 = vsel %vm532, %v1363, 0
        %v1577 = vsel %vm532, %v1364, 0
        %v1580 = vsel %vm532, %v1365, 0
        %v1583 = vsel %vm532, %v1366, 0
        %v1586 = vsel %vm532, %v1367, 0
        %v1589 = vsel %vm532, %v1368, 0
        %v1592 = vsel %vm532, %v1369, 0
        %v1595 = vsel %vm532, %v1370, 0
        %v1598 = vsel %vm532, %v1371, 0
        %v1601 = vsel %vm532, %v1372, 0
        %v1604 = vsel %vm532, %v1373, 0
        %v1607 = vsel %vm532, %v1374, 0
        %v1610 = vsel %vm532, %v1375, 0
        %v1613 = vsel %vm532, %v1376, 0
        %v1616 = vsel %vm532, %v1377, 0
        %v1619 = vsel %vm532, %v1378, 0
        %v1622 = vsel %vm532, %v1379, 0
        %v1625 = vsel %vm532, %v1380, 0
        %v1628 = vsel %vm532, %v1381, 0
        %v1631 = vsel %vm532, %v1382, 0
        %v1634 = vsel %vm532, %v1383, 0
        %v1637 = vsel %vm532, %v1384, 0
        %v1640 = vsel %vm532, %v1385, 0
        %v1643 = vsel %vm532, %v1386, 0
        %v1646 = vsel %vm532, %v1387, 0
        %v1649 = vsel %vm532, %v1388, 0
        %v1652 = vsel %vm532, %v1389, 0
        %v1655 = vsel %vm532, %v1390, 0
        %v1658 = vsel %vm532, %v1391, 0
        %v1661 = vsel %vm532, %v1392, 0
        %v1664 = vsel %vm532, %v1393, 0
        %v1667 = vsel %vm532, %v1394, 0
        %v1670 = vsel %vm532, %v1395, 0
        %v1673 = vsel %vm532, %v1396, 0
        %v1676 = vsel %vm532, %v1397, 0
        %v1679 = vsel %vm532, %v1398, 0
        %v1682 = vsel %vm532, %v1399, 0
        %v1685 = vsel %vm532, %v1400, 0
        %v1688 = vsel %vm532, %v1401, 0
        %v1691 = vsel %vm532, %v1402, 0
        %v1694 = vsel %vm532, %v1403, 0
        %v1697 = vsel %vm532, %v1404, 0
        %v1700 = vsel %vm532, %v1405, 0
        %v1703 = vsel %vm532, %v1406, 0
        %v1706 = vsel %vm532, %v1407, 0
        %v1709 = vsel %vm532, %v1408, 0
        %v1712 = vsel %vm532, %v1409, 0
        %v1715 = vsel %vm532, %v1410, 0
        %v1718 = vsel %vm532, %v1411, 0
        %v1721 = vsel %vm532, %v1412, 0
        %v1724 = vsel %vm532, %v1413, 0
        %v1727 = vsel %vm532, %v1414, 0
        %v1730 = vsel %vm532, %v1415, 0
        %v1733 = vsel %vm532, %v1416, 0
        %v1736 = vsel %vm532, %v1417, 0
        %v1739 = vsel %vm532, %v1418, 0
        %v1742 = vsel %vm532, %v1419, 0
        %v1745 = vsel %vm532, %v1420, 0
        %v1748 = vsel %vm532, %v1421, 0
        %v1751 = vsel %vm532, %v1422, 0
        %v1754 = vsel %vm532, %v1423, 0
        %v1757 = vsel %vm532, %v1424, 0
        %v1760 = vsel %vm532, %v1425, 0
        %v1763 = vsel %vm532, %v1426, 0
        %v1766 = vsel %vm532, %v1427, 0
        %v1769 = vsel %vm532, %v1428, 0
        %v1772 = vsel %vm532, %v1429, 0
        %v1775 = vsel %vm532, %v1430, 0
        %v1778 = vsel %vm532, %v1431, 0
        %v1781 = vsel %vm532, %v1432, 0
        %v1784 = vsel %vm532, %v1433, 0
        %v1787 = vsel %vm532, %v1434, 0
        %v1790 = vsel %vm532, %v1435, 0
        %v1793 = vsel %vm532, %v1436, 0
        %v1796 = vsel %vm532, %v1437, 0
        %v1799 = vsel %vm532, %v1438, 0
        %v1802 = vsel %vm532, %v1439, 0
        %v1805 = vsel %vm532, %v1440, 0
        %v1808 = vsel %vm532, %v1441, 0
        %v1811 = vsel %vm532, %v1442, 0
        %v1814 = vsel %vm532, %v1443, 0
        %v1817 = vsel %vm532, %v1444, 0
        %v1820 = vsel %vm532, %v1445, 0
        %v1823 = vsel %vm532, %v1446, 0
        %v1826 = vsel %vm532, %v1447, 0
        %v1829 = vsel %vm532, %v1448, 0
        %v1832 = vsel %vm532, %v1449, 0
        %1834 = vmatpush.msra.mxu0 0.0
        %1835 = vmatpush.msra.mxu0 0.0
        %1836 = vmatpush.msra.mxu0 0.0
        %1837 = vmatpush.msra.mxu0 0.0
        %1838 = vmatpush.msra.mxu0 0.0
        %1839 = vmatpush.msra.mxu0 0.0
        %1840 = vmatpush.msra.mxu0 0.0
        %1841 = vmatpush.msra.mxu0 0.0
        %1842 = vmatpush.msra.mxu0 0.0
        %1843 = vmatpush.msra.mxu0 0.0
        %1844 = vmatpush.msra.mxu0 0.0
        %1845 = vmatpush.msra.mxu0 %v919
        %1846 = vmatpush.msra.mxu0 %v402
        %1847 = vmatpush.msra.mxu0 %v401
        %1848 = vmatpush.msra.mxu0 %v400
        %1849 = vmatpush.msra.mxu0 %v399
        %1850 = vmatmul.f32.gmra.mxu0 %v1451
        %v1851 = vpop.f32.mrf.mxu0
        %v1852 = vadd.f32 0.0, %v1851
        %1853 = vmatmul.f32.gmra.mxu0 %v1454
        %v1854 = vpop.f32.mrf.mxu0
        %v1855 = vadd.f32 0.0, %v1854
        %1856 = vmatmul.f32.gmra.mxu0 %v1457
        %v1857 = vpop.f32.mrf.mxu0
        %v1858 = vadd.f32 0.0, %v1857
        %1859 = vmatmul.f32.gmra.mxu0 %v1460
        %v1860 = vpop.f32.mrf.mxu0
        %v1861 = vadd.f32 0.0, %v1860
        %1862 = vmatmul.f32.gmra.mxu0 %v1463
        %v1863 = vpop.f32.mrf.mxu0
        %v1864 = vadd.f32 0.0, %v1863
        %1865 = vmatmul.f32.gmra.mxu0 %v1466
        %v1866 = vpop.f32.mrf.mxu0
        %v1867 = vadd.f32 0.0, %v1866
        %1868 = vmatmul.f32.gmra.mxu0 %v1469
        %v1869 = vpop.f32.mrf.mxu0
        %v1870 = vadd.f32 0.0, %v1869
        %1871 = vmatmul.f32.gmra.mxu0 %v1472
        %v1872 = vpop.f32.mrf.mxu0
        %v1873 = vadd.f32 0.0, %v1872
        %1874 = vmatmul.f32.gmra.mxu0 %v1475
        %v1875 = vpop.f32.mrf.mxu0
        %v1876 = vadd.f32 0.0, %v1875
        %1877 = vmatmul.f32.gmra.mxu0 %v1478
        %v1878 = vpop.f32.mrf.mxu0
        %v1879 = vadd.f32 0.0, %v1878
        %1880 = vmatmul.f32.gmra.mxu0 %v1481
        %v1881 = vpop.f32.mrf.mxu0
        %v1882 = vadd.f32 0.0, %v1881
        %1883 = vmatmul.f32.gmra.mxu0 %v1484
        %v1884 = vpop.f32.mrf.mxu0
        %v1885 = vadd.f32 0.0, %v1884
        %1886 = vmatmul.f32.gmra.mxu0 %v1487
        %v1887 = vpop.f32.mrf.mxu0
        %v1888 = vadd.f32 0.0, %v1887
        %1889 = vmatmul.f32.gmra.mxu0 %v1490
        %v1890 = vpop.f32.mrf.mxu0
        %v1891 = vadd.f32 0.0, %v1890
        %1892 = vmatmul.f32.gmra.mxu0 %v1493
        %v1893 = vpop.f32.mrf.mxu0
        %v1894 = vadd.f32 0.0, %v1893
        %1895 = vmatmul.f32.gmra.mxu0 %v1496
        %v1896 = vpop.f32.mrf.mxu0
        %v1897 = vadd.f32 0.0, %v1896
        %1898 = vmatmul.f32.gmra.mxu0 %v1499
        %v1899 = vpop.f32.mrf.mxu0
        %v1900 = vadd.f32 0.0, %v1899
        %1901 = vmatmul.f32.gmra.mxu0 %v1502
        %v1902 = vpop.f32.mrf.mxu0
        %v1903 = vadd.f32 0.0, %v1902
        %1904 = vmatmul.f32.gmra.mxu0 %v1505
        %v1905 = vpop.f32.mrf.mxu0
        %v1906 = vadd.f32 0.0, %v1905
        %1907 = vmatmul.f32.gmra.mxu0 %v1508
        %v1908 = vpop.f32.mrf.mxu0
        %v1909 = vadd.f32 0.0, %v1908
        %1910 = vmatmul.f32.gmra.mxu0 %v1511
        %v1911 = vpop.f32.mrf.mxu0
        %v1912 = vadd.f32 0.0, %v1911
        %1913 = vmatmul.f32.gmra.mxu0 %v1514
        %v1914 = vpop.f32.mrf.mxu0
        %v1915 = vadd.f32 0.0, %v1914
        %1916 = vmatmul.f32.gmra.mxu0 %v1517
        %v1917 = vpop.f32.mrf.mxu0
        %v1918 = vadd.f32 0.0, %v1917
        %1919 = vmatmul.f32.gmra.mxu0 %v1520
        %v1920 = vpop.f32.mrf.mxu0
        %v1921 = vadd.f32 0.0, %v1920
        %1922 = vmatmul.f32.gmra.mxu0 %v1523
        %v1923 = vpop.f32.mrf.mxu0
        %v1924 = vadd.f32 0.0, %v1923
        %1925 = vmatmul.f32.gmra.mxu0 %v1526
        %v1926 = vpop.f32.mrf.mxu0
        %v1927 = vadd.f32 0.0, %v1926
        %1928 = vmatmul.f32.gmra.mxu0 %v1529
        %v1929 = vpop.f32.mrf.mxu0
        %v1930 = vadd.f32 0.0, %v1929
        %1931 = vmatmul.f32.gmra.mxu0 %v1532
        %v1932 = vpop.f32.mrf.mxu0
        %v1933 = vadd.f32 0.0, %v1932
        %1934 = vmatmul.f32.gmra.mxu0 %v1535
        %v1935 = vpop.f32.mrf.mxu0
        %v1936 = vadd.f32 0.0, %v1935
        %1937 = vmatmul.f32.gmra.mxu0 %v1538
        %v1938 = vpop.f32.mrf.mxu0
        %v1939 = vadd.f32 0.0, %v1938
        %1940 = vmatmul.f32.gmra.mxu0 %v1541
        %v1941 = vpop.f32.mrf.mxu0
        %v1942 = vadd.f32 0.0, %v1941
        %1943 = vmatmul.f32.gmra.mxu0 %v1544
        %v1944 = vpop.f32.mrf.mxu0
        %v1945 = vadd.f32 0.0, %v1944
        %1946 = vmatmul.f32.gmra.mxu0 %v1547
        %v1947 = vpop.f32.mrf.mxu0
        %v1948 = vadd.f32 0.0, %v1947
        %1949 = vmatmul.f32.gmra.mxu0 %v1550
        %v1950 = vpop.f32.mrf.mxu0
        %v1951 = vadd.f32 0.0, %v1950
        %1952 = vmatmul.f32.gmra.mxu0 %v1553
        %v1953 = vpop.f32.mrf.mxu0
        %v1954 = vadd.f32 0.0, %v1953
        %1955 = vmatmul.f32.gmra.mxu0 %v1556
        %v1956 = vpop.f32.mrf.mxu0
        %v1957 = vadd.f32 0.0, %v1956
        %1958 = vmatmul.f32.gmra.mxu0 %v1559
        %v1959 = vpop.f32.mrf.mxu0
        %v1960 = vadd.f32 0.0, %v1959
        %1961 = vmatmul.f32.gmra.mxu0 %v1562
        %v1962 = vpop.f32.mrf.mxu0
        %v1963 = vadd.f32 0.0, %v1962
        %1964 = vmatmul.f32.gmra.mxu0 %v1565
        %v1965 = vpop.f32.mrf.mxu0
        %v1966 = vadd.f32 0.0, %v1965
        %1967 = vmatmul.f32.gmra.mxu0 %v1568
        %v1968 = vpop.f32.mrf.mxu0
        %v1969 = vadd.f32 0.0, %v1968
        %1970 = vmatmul.f32.gmra.mxu0 %v1571
        %v1971 = vpop.f32.mrf.mxu0
        %v1972 = vadd.f32 0.0, %v1971
        %1973 = vmatmul.f32.gmra.mxu0 %v1574
        %v1974 = vpop.f32.mrf.mxu0
        %v1975 = vadd.f32 0.0, %v1974
        %1976 = vmatmul.f32.gmra.mxu0 %v1577
        %v1977 = vpop.f32.mrf.mxu0
        %v1978 = vadd.f32 0.0, %v1977
        %1979 = vmatmul.f32.gmra.mxu0 %v1580
        %v1980 = vpop.f32.mrf.mxu0
        %v1981 = vadd.f32 0.0, %v1980
        %1982 = vmatmul.f32.gmra.mxu0 %v1583
        %v1983 = vpop.f32.mrf.mxu0
        %v1984 = vadd.f32 0.0, %v1983
        %1985 = vmatmul.f32.gmra.mxu0 %v1586
        %v1986 = vpop.f32.mrf.mxu0
        %v1987 = vadd.f32 0.0, %v1986
        %1988 = vmatmul.f32.gmra.mxu0 %v1589
        %v1989 = vpop.f32.mrf.mxu0
        %v1990 = vadd.f32 0.0, %v1989
        %1991 = vmatmul.f32.gmra.mxu0 %v1592
        %v1992 = vpop.f32.mrf.mxu0
        %v1993 = vadd.f32 0.0, %v1992
        %1994 = vmatmul.f32.gmra.mxu0 %v1595
        %v1995 = vpop.f32.mrf.mxu0
        %v1996 = vadd.f32 0.0, %v1995
        %1997 = vmatmul.f32.gmra.mxu0 %v1598
        %v1998 = vpop.f32.mrf.mxu0
        %v1999 = vadd.f32 0.0, %v1998
        %2000 = vmatmul.f32.gmra.mxu0 %v1601
        %v2001 = vpop.f32.mrf.mxu0
        %v2002 = vadd.f32 0.0, %v2001
        %2003 = vmatmul.f32.gmra.mxu0 %v1604
        %v2004 = vpop.f32.mrf.mxu0
        %v2005 = vadd.f32 0.0, %v2004
        %2006 = vmatmul.f32.gmra.mxu0 %v1607
        %v2007 = vpop.f32.mrf.mxu0
        %v2008 = vadd.f32 0.0, %v2007
        %2009 = vmatmul.f32.gmra.mxu0 %v1610
        %v2010 = vpop.f32.mrf.mxu0
        %v2011 = vadd.f32 0.0, %v2010
        %2012 = vmatmul.f32.gmra.mxu0 %v1613
        %v2013 = vpop.f32.mrf.mxu0
        %v2014 = vadd.f32 0.0, %v2013
        %2015 = vmatmul.f32.gmra.mxu0 %v1616
        %v2016 = vpop.f32.mrf.mxu0
        %v2017 = vadd.f32 0.0, %v2016
        %2018 = vmatmul.f32.gmra.mxu0 %v1619
        %v2019 = vpop.f32.mrf.mxu0
        %v2020 = vadd.f32 0.0, %v2019
        %2021 = vmatmul.f32.gmra.mxu0 %v1622
        %v2022 = vpop.f32.mrf.mxu0
        %v2023 = vadd.f32 0.0, %v2022
        %2024 = vmatmul.f32.gmra.mxu0 %v1625
        %v2025 = vpop.f32.mrf.mxu0
        %v2026 = vadd.f32 0.0, %v2025
        %2027 = vmatmul.f32.gmra.mxu0 %v1628
        %v2028 = vpop.f32.mrf.mxu0
        %v2029 = vadd.f32 0.0, %v2028
        %2030 = vmatmul.f32.gmra.mxu0 %v1631
        %v2031 = vpop.f32.mrf.mxu0
        %v2032 = vadd.f32 0.0, %v2031
        %2033 = vmatmul.f32.gmra.mxu0 %v1634
        %v2034 = vpop.f32.mrf.mxu0
        %v2035 = vadd.f32 0.0, %v2034
        %2036 = vmatmul.f32.gmra.mxu0 %v1637
        %v2037 = vpop.f32.mrf.mxu0
        %v2038 = vadd.f32 0.0, %v2037
        %2039 = vmatmul.f32.gmra.mxu0 %v1640
        %v2040 = vpop.f32.mrf.mxu0
        %v2041 = vadd.f32 0.0, %v2040
        %2042 = vmatmul.f32.gmra.mxu0 %v1643
        %v2043 = vpop.f32.mrf.mxu0
        %v2044 = vadd.f32 0.0, %v2043
        %2045 = vmatmul.f32.gmra.mxu0 %v1646
        %v2046 = vpop.f32.mrf.mxu0
        %v2047 = vadd.f32 0.0, %v2046
        %2048 = vmatmul.f32.gmra.mxu0 %v1649
        %v2049 = vpop.f32.mrf.mxu0
        %v2050 = vadd.f32 0.0, %v2049
        %2051 = vmatmul.f32.gmra.mxu0 %v1652
        %v2052 = vpop.f32.mrf.mxu0
        %v2053 = vadd.f32 0.0, %v2052
        %2054 = vmatmul.f32.gmra.mxu0 %v1655
        %v2055 = vpop.f32.mrf.mxu0
        %v2056 = vadd.f32 0.0, %v2055
        %2057 = vmatmul.f32.gmra.mxu0 %v1658
        %v2058 = vpop.f32.mrf.mxu0
        %v2059 = vadd.f32 0.0, %v2058
        %2060 = vmatmul.f32.gmra.mxu0 %v1661
        %v2061 = vpop.f32.mrf.mxu0
        %v2062 = vadd.f32 0.0, %v2061
        %2063 = vmatmul.f32.gmra.mxu0 %v1664
        %v2064 = vpop.f32.mrf.mxu0
        %v2065 = vadd.f32 0.0, %v2064
        %2066 = vmatmul.f32.gmra.mxu0 %v1667
        %v2067 = vpop.f32.mrf.mxu0
        %v2068 = vadd.f32 0.0, %v2067
        %2069 = vmatmul.f32.gmra.mxu0 %v1670
        %v2070 = vpop.f32.mrf.mxu0
        %v2071 = vadd.f32 0.0, %v2070
        %2072 = vmatmul.f32.gmra.mxu0 %v1673
        %v2073 = vpop.f32.mrf.mxu0
        %v2074 = vadd.f32 0.0, %v2073
        %2075 = vmatmul.f32.gmra.mxu0 %v1676
        %v2076 = vpop.f32.mrf.mxu0
        %v2077 = vadd.f32 0.0, %v2076
        %2078 = vmatmul.f32.gmra.mxu0 %v1679
        %v2079 = vpop.f32.mrf.mxu0
        %v2080 = vadd.f32 0.0, %v2079
        %2081 = vmatmul.f32.gmra.mxu0 %v1682
        %v2082 = vpop.f32.mrf.mxu0
        %v2083 = vadd.f32 0.0, %v2082
        %2084 = vmatmul.f32.gmra.mxu0 %v1685
        %v2085 = vpop.f32.mrf.mxu0
        %v2086 = vadd.f32 0.0, %v2085
        %2087 = vmatmul.f32.gmra.mxu0 %v1688
        %v2088 = vpop.f32.mrf.mxu0
        %v2089 = vadd.f32 0.0, %v2088
        %2090 = vmatmul.f32.gmra.mxu0 %v1691
        %v2091 = vpop.f32.mrf.mxu0
        %v2092 = vadd.f32 0.0, %v2091
        %2093 = vmatmul.f32.gmra.mxu0 %v1694
        %v2094 = vpop.f32.mrf.mxu0
        %v2095 = vadd.f32 0.0, %v2094
        %2096 = vmatmul.f32.gmra.mxu0 %v1697
        %v2097 = vpop.f32.mrf.mxu0
        %v2098 = vadd.f32 0.0, %v2097
        %2099 = vmatmul.f32.gmra.mxu0 %v1700
        %v2100 = vpop.f32.mrf.mxu0
        %v2101 = vadd.f32 0.0, %v2100
        %2102 = vmatmul.f32.gmra.mxu0 %v1703
        %v2103 = vpop.f32.mrf.mxu0
        %v2104 = vadd.f32 0.0, %v2103
        %2105 = vmatmul.f32.gmra.mxu0 %v1706
        %v2106 = vpop.f32.mrf.mxu0
        %v2107 = vadd.f32 0.0, %v2106
        %2108 = vmatmul.f32.gmra.mxu0 %v1709
        %v2109 = vpop.f32.mrf.mxu0
        %v2110 = vadd.f32 0.0, %v2109
        %2111 = vmatmul.f32.gmra.mxu0 %v1712
        %v2112 = vpop.f32.mrf.mxu0
        %v2113 = vadd.f32 0.0, %v2112
        %2114 = vmatmul.f32.gmra.mxu0 %v1715
        %v2115 = vpop.f32.mrf.mxu0
        %v2116 = vadd.f32 0.0, %v2115
        %2117 = vmatmul.f32.gmra.mxu0 %v1718
        %v2118 = vpop.f32.mrf.mxu0
        %v2119 = vadd.f32 0.0, %v2118
        %2120 = vmatmul.f32.gmra.mxu0 %v1721
        %v2121 = vpop.f32.mrf.mxu0
        %v2122 = vadd.f32 0.0, %v2121
        %2123 = vmatmul.f32.gmra.mxu0 %v1724
        %v2124 = vpop.f32.mrf.mxu0
        %v2125 = vadd.f32 0.0, %v2124
        %2126 = vmatmul.f32.gmra.mxu0 %v1727
        %v2127 = vpop.f32.mrf.mxu0
        %v2128 = vadd.f32 0.0, %v2127
        %2129 = vmatmul.f32.gmra.mxu0 %v1730
        %v2130 = vpop.f32.mrf.mxu0
        %v2131 = vadd.f32 0.0, %v2130
        %2132 = vmatmul.f32.gmra.mxu0 %v1733
        %v2133 = vpop.f32.mrf.mxu0
        %v2134 = vadd.f32 0.0, %v2133
        %2135 = vmatmul.f32.gmra.mxu0 %v1736
        %v2136 = vpop.f32.mrf.mxu0
        %v2137 = vadd.f32 0.0, %v2136
        %2138 = vmatmul.f32.gmra.mxu0 %v1739
        %v2139 = vpop.f32.mrf.mxu0
        %v2140 = vadd.f32 0.0, %v2139
        %2141 = vmatmul.f32.gmra.mxu0 %v1742
        %v2142 = vpop.f32.mrf.mxu0
        %v2143 = vadd.f32 0.0, %v2142
        %2144 = vmatmul.f32.gmra.mxu0 %v1745
        %v2145 = vpop.f32.mrf.mxu0
        %v2146 = vadd.f32 0.0, %v2145
        %2147 = vmatmul.f32.gmra.mxu0 %v1748
        %v2148 = vpop.f32.mrf.mxu0
        %v2149 = vadd.f32 0.0, %v2148
        %2150 = vmatmul.f32.gmra.mxu0 %v1751
        %v2151 = vpop.f32.mrf.mxu0
        %v2152 = vadd.f32 0.0, %v2151
        %2153 = vmatmul.f32.gmra.mxu0 %v1754
        %v2154 = vpop.f32.mrf.mxu0
        %v2155 = vadd.f32 0.0, %v2154
        %2156 = vmatmul.f32.gmra.mxu0 %v1757
        %v2157 = vpop.f32.mrf.mxu0
        %v2158 = vadd.f32 0.0, %v2157
        %2159 = vmatmul.f32.gmra.mxu0 %v1760
        %v2160 = vpop.f32.mrf.mxu0
        %v2161 = vadd.f32 0.0, %v2160
        %2162 = vmatmul.f32.gmra.mxu0 %v1763
        %v2163 = vpop.f32.mrf.mxu0
        %v2164 = vadd.f32 0.0, %v2163
        %2165 = vmatmul.f32.gmra.mxu0 %v1766
        %v2166 = vpop.f32.mrf.mxu0
        %v2167 = vadd.f32 0.0, %v2166
        %2168 = vmatmul.f32.gmra.mxu0 %v1769
        %v2169 = vpop.f32.mrf.mxu0
        %v2170 = vadd.f32 0.0, %v2169
        %2171 = vmatmul.f32.gmra.mxu0 %v1772
        %v2172 = vpop.f32.mrf.mxu0
        %v2173 = vadd.f32 0.0, %v2172
        %2174 = vmatmul.f32.gmra.mxu0 %v1775
        %v2175 = vpop.f32.mrf.mxu0
        %v2176 = vadd.f32 0.0, %v2175
        %2177 = vmatmul.f32.gmra.mxu0 %v1778
        %v2178 = vpop.f32.mrf.mxu0
        %v2179 = vadd.f32 0.0, %v2178
        %2180 = vmatmul.f32.gmra.mxu0 %v1781
        %v2181 = vpop.f32.mrf.mxu0
        %v2182 = vadd.f32 0.0, %v2181
        %2183 = vmatmul.f32.gmra.mxu0 %v1784
        %v2184 = vpop.f32.mrf.mxu0
        %v2185 = vadd.f32 0.0, %v2184
        %2186 = vmatmul.f32.gmra.mxu0 %v1787
        %v2187 = vpop.f32.mrf.mxu0
        %v2188 = vadd.f32 0.0, %v2187
        %2189 = vmatmul.f32.gmra.mxu0 %v1790
        %v2190 = vpop.f32.mrf.mxu0
        %v2191 = vadd.f32 0.0, %v2190
        %2192 = vmatmul.f32.gmra.mxu0 %v1793
        %v2193 = vpop.f32.mrf.mxu0
        %v2194 = vadd.f32 0.0, %v2193
        %2195 = vmatmul.f32.gmra.mxu0 %v1796
        %v2196 = vpop.f32.mrf.mxu0
        %v2197 = vadd.f32 0.0, %v2196
        %2198 = vmatmul.f32.gmra.mxu0 %v1799
        %v2199 = vpop.f32.mrf.mxu0
        %v2200 = vadd.f32 0.0, %v2199
        %2201 = vmatmul.f32.gmra.mxu0 %v1802
        %v2202 = vpop.f32.mrf.mxu0
        %v2203 = vadd.f32 0.0, %v2202
        %2204 = vmatmul.f32.gmra.mxu0 %v1805
        %v2205 = vpop.f32.mrf.mxu0
        %v2206 = vadd.f32 0.0, %v2205
        %2207 = vmatmul.f32.gmra.mxu0 %v1808
        %v2208 = vpop.f32.mrf.mxu0
        %v2209 = vadd.f32 0.0, %v2208
        %2210 = vmatmul.f32.gmra.mxu0 %v1811
        %v2211 = vpop.f32.mrf.mxu0
        %v2212 = vadd.f32 0.0, %v2211
        %2213 = vmatmul.f32.gmra.mxu0 %v1814
        %v2214 = vpop.f32.mrf.mxu0
        %v2215 = vadd.f32 0.0, %v2214
        %2216 = vmatmul.f32.gmra.mxu0 %v1817
        %v2217 = vpop.f32.mrf.mxu0
        %v2218 = vadd.f32 0.0, %v2217
        %2219 = vmatmul.f32.gmra.mxu0 %v1820
        %v2220 = vpop.f32.mrf.mxu0
        %v2221 = vadd.f32 0.0, %v2220
        %2222 = vmatmul.f32.gmra.mxu0 %v1823
        %v2223 = vpop.f32.mrf.mxu0
        %v2224 = vadd.f32 0.0, %v2223
        %2225 = vmatmul.f32.gmra.mxu0 %v1826
        %v2226 = vpop.f32.mrf.mxu0
        %v2227 = vadd.f32 0.0, %v2226
        %2228 = vmatmul.f32.gmra.mxu0 %v1829
        %v2229 = vpop.f32.mrf.mxu0
        %v2230 = vadd.f32 0.0, %v2229
        %2231 = vmatmul.f32.gmra.mxu0 %v1832
        %v2232 = vpop.f32.mrf.mxu0
        %v2233 = vadd.f32 0.0, %v2232
        %2234 = vdwg.mxu0
        %v2235 = vmax.f32 %v939, %v1852
        %v2236 = vmax.f32 %v942, %v1855
        %v2237 = vmax.f32 %v945, %v1858
        %v2238 = vmax.f32 %v948, %v1861
        %v2239 = vmax.f32 %v951, %v1864
        %v2240 = vmax.f32 %v954, %v1867
        %v2241 = vmax.f32 %v957, %v1870
        %v2242 = vmax.f32 %v960, %v1873
        %v2243 = vmax.f32 %v963, %v1876
        %v2244 = vmax.f32 %v966, %v1879
        %v2245 = vmax.f32 %v969, %v1882
        %v2246 = vmax.f32 %v972, %v1885
        %v2247 = vmax.f32 %v975, %v1888
        %v2248 = vmax.f32 %v978, %v1891
        %v2249 = vmax.f32 %v981, %v1894
        %v2250 = vmax.f32 %v984, %v1897
        %v2251 = vmax.f32 %v987, %v1900
        %v2252 = vmax.f32 %v990, %v1903
        %v2253 = vmax.f32 %v993, %v1906
        %v2254 = vmax.f32 %v996, %v1909
        %v2255 = vmax.f32 %v999, %v1912
        %v2256 = vmax.f32 %v1002, %v1915
        %v2257 = vmax.f32 %v1005, %v1918
        %v2258 = vmax.f32 %v1008, %v1921
        %v2259 = vmax.f32 %v1011, %v1924
        %v2260 = vmax.f32 %v1014, %v1927
        %v2261 = vmax.f32 %v1017, %v1930
        %v2262 = vmax.f32 %v1020, %v1933
        %v2263 = vmax.f32 %v1023, %v1936
        %v2264 = vmax.f32 %v1026, %v1939
        %v2265 = vmax.f32 %v1029, %v1942
        %v2266 = vmax.f32 %v1032, %v1945
        %v2267 = vmax.f32 %v1035, %v1948
        %v2268 = vmax.f32 %v1038, %v1951
        %v2269 = vmax.f32 %v1041, %v1954
        %v2270 = vmax.f32 %v1044, %v1957
        %v2271 = vmax.f32 %v1047, %v1960
        %v2272 = vmax.f32 %v1050, %v1963
        %v2273 = vmax.f32 %v1053, %v1966
        %v2274 = vmax.f32 %v1056, %v1969
        %v2275 = vmax.f32 %v1059, %v1972
        %v2276 = vmax.f32 %v1062, %v1975
        %v2277 = vmax.f32 %v1065, %v1978
        %v2278 = vmax.f32 %v1068, %v1981
        %v2279 = vmax.f32 %v1071, %v1984
        %v2280 = vmax.f32 %v1074, %v1987
        %v2281 = vmax.f32 %v1077, %v1990
        %v2282 = vmax.f32 %v1080, %v1993
        %v2283 = vmax.f32 %v1083, %v1996
        %v2284 = vmax.f32 %v1086, %v1999
        %v2285 = vmax.f32 %v1089, %v2002
        %v2286 = vmax.f32 %v1092, %v2005
        %v2287 = vmax.f32 %v1095, %v2008
        %v2288 = vmax.f32 %v1098, %v2011
        %v2289 = vmax.f32 %v1101, %v2014
        %v2290 = vmax.f32 %v1104, %v2017
        %v2291 = vmax.f32 %v1107, %v2020
        %v2292 = vmax.f32 %v1110, %v2023
        %v2293 = vmax.f32 %v1113, %v2026
        %v2294 = vmax.f32 %v1116, %v2029
        %v2295 = vmax.f32 %v1119, %v2032
        %v2296 = vmax.f32 %v1122, %v2035
        %v2297 = vmax.f32 %v1125, %v2038
        %v2298 = vmax.f32 %v1128, %v2041
        %v2299 = vmax.f32 %v1131, %v2044
        %v2300 = vmax.f32 %v1134, %v2047
        %v2301 = vmax.f32 %v1137, %v2050
        %v2302 = vmax.f32 %v1140, %v2053
        %v2303 = vmax.f32 %v1143, %v2056
        %v2304 = vmax.f32 %v1146, %v2059
        %v2305 = vmax.f32 %v1149, %v2062
        %v2306 = vmax.f32 %v1152, %v2065
        %v2307 = vmax.f32 %v1155, %v2068
        %v2308 = vmax.f32 %v1158, %v2071
        %v2309 = vmax.f32 %v1161, %v2074
        %v2310 = vmax.f32 %v1164, %v2077
        %v2311 = vmax.f32 %v1167, %v2080
        %v2312 = vmax.f32 %v1170, %v2083
        %v2313 = vmax.f32 %v1173, %v2086
        %v2314 = vmax.f32 %v1176, %v2089
        %v2315 = vmax.f32 %v1179, %v2092
        %v2316 = vmax.f32 %v1182, %v2095
        %v2317 = vmax.f32 %v1185, %v2098
        %v2318 = vmax.f32 %v1188, %v2101
        %v2319 = vmax.f32 %v1191, %v2104
        %v2320 = vmax.f32 %v1194, %v2107
        %v2321 = vmax.f32 %v1197, %v2110
        %v2322 = vmax.f32 %v1200, %v2113
        %v2323 = vmax.f32 %v1203, %v2116
        %v2324 = vmax.f32 %v1206, %v2119
        %v2325 = vmax.f32 %v1209, %v2122
        %v2326 = vmax.f32 %v1212, %v2125
        %v2327 = vmax.f32 %v1215, %v2128
        %v2328 = vmax.f32 %v1218, %v2131
        %v2329 = vmax.f32 %v1221, %v2134
        %v2330 = vmax.f32 %v1224, %v2137
        %v2331 = vmax.f32 %v1227, %v2140
        %v2332 = vmax.f32 %v1230, %v2143
        %v2333 = vmax.f32 %v1233, %v2146
        %v2334 = vmax.f32 %v1236, %v2149
        %v2335 = vmax.f32 %v1239, %v2152
        %v2336 = vmax.f32 %v1242, %v2155
        %v2337 = vmax.f32 %v1245, %v2158
        %v2338 = vmax.f32 %v1248, %v2161
        %v2339 = vmax.f32 %v1251, %v2164
        %v2340 = vmax.f32 %v1254, %v2167
        %v2341 = vmax.f32 %v1257, %v2170
        %v2342 = vmax.f32 %v1260, %v2173
        %v2343 = vmax.f32 %v1263, %v2176
        %v2344 = vmax.f32 %v1266, %v2179
        %v2345 = vmax.f32 %v1269, %v2182
        %v2346 = vmax.f32 %v1272, %v2185
        %v2347 = vmax.f32 %v1275, %v2188
        %v2348 = vmax.f32 %v1278, %v2191
        %v2349 = vmax.f32 %v1281, %v2194
        %v2350 = vmax.f32 %v1284, %v2197
        %v2351 = vmax.f32 %v1287, %v2200
        %v2352 = vmax.f32 %v1290, %v2203
        %v2353 = vmax.f32 %v1293, %v2206
        %v2354 = vmax.f32 %v1296, %v2209
        %v2355 = vmax.f32 %v1299, %v2212
        %v2356 = vmax.f32 %v1302, %v2215
        %v2357 = vmax.f32 %v1305, %v2218
        %v2358 = vmax.f32 %v1308, %v2221
        %v2359 = vmax.f32 %v1311, %v2224
        %v2360 = vmax.f32 %v1314, %v2227
        %v2361 = vmax.f32 %v1317, %v2230
        %v2362 = vmax.f32 %v1320, %v2233
        %v2363 = vld [vmem:[%s374] sm:$0xff]
        %v2364 = vld [vmem:[%s374 + $0x8] sm:$0xff]
        %v2365 = vld [vmem:[%s374 + $0x10] sm:$0xff]
        %v2366 = vld [vmem:[%s374 + $0x18] sm:$0xff]
        %v2367 = vld [vmem:[%s374 + $0x20] sm:$0xff]
        %v2368 = vld [vmem:[%s374 + $0x28] sm:$0xff]
        %v2369 = vld [vmem:[%s374 + $0x30] sm:$0xff]
        %v2370 = vld [vmem:[%s374 + $0x38] sm:$0xff]
        %v2371 = vld [vmem:[%s374 + $0x40] sm:$0xff]
        %v2372 = vld [vmem:[%s374 + $0x48] sm:$0xff]
        %v2373 = vld [vmem:[%s374 + $0x50] sm:$0xff]
        %v2374 = vld [vmem:[%s374 + $0x58] sm:$0xff]
        %v2375 = vld [vmem:[%s374 + $0x60] sm:$0xff]
        %v2376 = vld [vmem:[%s374 + $0x68] sm:$0xff]
        %v2377 = vld [vmem:[%s374 + $0x70] sm:$0xff]
        %v2378 = vld [vmem:[%s374 + $0x78] sm:$0xff]
        %v2379 = vld [vmem:[%s374 + $0x80] sm:$0xff]
        %v2380 = vld [vmem:[%s374 + $0x88] sm:$0xff]
        %v2381 = vld [vmem:[%s374 + $0x90] sm:$0xff]
        %v2382 = vld [vmem:[%s374 + $0x98] sm:$0xff]
        %v2383 = vld [vmem:[%s374 + $0xa0] sm:$0xff]
        %v2384 = vld [vmem:[%s374 + $0xa8] sm:$0xff]
        %v2385 = vld [vmem:[%s374 + $0xb0] sm:$0xff]
        %v2386 = vld [vmem:[%s374 + $0xb8] sm:$0xff]
        %v2387 = vld [vmem:[%s374 + $0xc0] sm:$0xff]
        %v2388 = vld [vmem:[%s374 + $0xc8] sm:$0xff]
        %v2389 = vld [vmem:[%s374 + $0xd0] sm:$0xff]
        %v2390 = vld [vmem:[%s374 + $0xd8] sm:$0xff]
        %v2391 = vld [vmem:[%s374 + $0xe0] sm:$0xff]
        %v2392 = vld [vmem:[%s374 + $0xe8] sm:$0xff]
        %v2393 = vld [vmem:[%s374 + $0xf0] sm:$0xff]
        %v2394 = vld [vmem:[%s374 + $0xf8] sm:$0xff]
        %v2395 = vld [vmem:[%s374 + $0x100] sm:$0xff]
        %v2396 = vld [vmem:[%s374 + $0x108] sm:$0xff]
        %v2397 = vld [vmem:[%s374 + $0x110] sm:$0xff]
        %v2398 = vld [vmem:[%s374 + $0x118] sm:$0xff]
        %v2399 = vld [vmem:[%s374 + $0x120] sm:$0xff]
        %v2400 = vld [vmem:[%s374 + $0x128] sm:$0xff]
        %v2401 = vld [vmem:[%s374 + $0x130] sm:$0xff]
        %v2402 = vld [vmem:[%s374 + $0x138] sm:$0xff]
        %v2403 = vld [vmem:[%s374 + $0x140] sm:$0xff]
        %v2404 = vld [vmem:[%s374 + $0x148] sm:$0xff]
        %v2405 = vld [vmem:[%s374 + $0x150] sm:$0xff]
        %v2406 = vld [vmem:[%s374 + $0x158] sm:$0xff]
        %v2407 = vld [vmem:[%s374 + $0x160] sm:$0xff]
        %v2408 = vld [vmem:[%s374 + $0x168] sm:$0xff]
        %v2409 = vld [vmem:[%s374 + $0x170] sm:$0xff]
        %v2410 = vld [vmem:[%s374 + $0x178] sm:$0xff]
        %v2411 = vld [vmem:[%s374 + $0x180] sm:$0xff]
        %v2412 = vld [vmem:[%s374 + $0x188] sm:$0xff]
        %v2413 = vld [vmem:[%s374 + $0x190] sm:$0xff]
        %v2414 = vld [vmem:[%s374 + $0x198] sm:$0xff]
        %v2415 = vld [vmem:[%s374 + $0x1a0] sm:$0xff]
        %v2416 = vld [vmem:[%s374 + $0x1a8] sm:$0xff]
        %v2417 = vld [vmem:[%s374 + $0x1b0] sm:$0xff]
        %v2418 = vld [vmem:[%s374 + $0x1b8] sm:$0xff]
        %v2419 = vld [vmem:[%s374 + $0x1c0] sm:$0xff]
        %v2420 = vld [vmem:[%s374 + $0x1c8] sm:$0xff]
        %v2421 = vld [vmem:[%s374 + $0x1d0] sm:$0xff]
        %v2422 = vld [vmem:[%s374 + $0x1d8] sm:$0xff]
        %v2423 = vld [vmem:[%s374 + $0x1e0] sm:$0xff]
        %v2424 = vld [vmem:[%s374 + $0x1e8] sm:$0xff]
        %v2425 = vld [vmem:[%s374 + $0x1f0] sm:$0xff]
        %v2426 = vld [vmem:[%s374 + $0x1f8] sm:$0xff]
        %v2427 = vld [vmem:[%s374 + $0x200] sm:$0xff]
        %v2428 = vld [vmem:[%s374 + $0x208] sm:$0xff]
        %v2429 = vld [vmem:[%s374 + $0x210] sm:$0xff]
        %v2430 = vld [vmem:[%s374 + $0x218] sm:$0xff]
        %v2431 = vld [vmem:[%s374 + $0x220] sm:$0xff]
        %v2432 = vld [vmem:[%s374 + $0x228] sm:$0xff]
        %v2433 = vld [vmem:[%s374 + $0x230] sm:$0xff]
        %v2434 = vld [vmem:[%s374 + $0x238] sm:$0xff]
        %v2435 = vld [vmem:[%s374 + $0x240] sm:$0xff]
        %v2436 = vld [vmem:[%s374 + $0x248] sm:$0xff]
        %v2437 = vld [vmem:[%s374 + $0x250] sm:$0xff]
        %v2438 = vld [vmem:[%s374 + $0x258] sm:$0xff]
        %v2439 = vld [vmem:[%s374 + $0x260] sm:$0xff]
        %v2440 = vld [vmem:[%s374 + $0x268] sm:$0xff]
        %v2441 = vld [vmem:[%s374 + $0x270] sm:$0xff]
        %v2442 = vld [vmem:[%s374 + $0x278] sm:$0xff]
        %v2443 = vld [vmem:[%s374 + $0x280] sm:$0xff]
        %v2444 = vld [vmem:[%s374 + $0x288] sm:$0xff]
        %v2445 = vld [vmem:[%s374 + $0x290] sm:$0xff]
        %v2446 = vld [vmem:[%s374 + $0x298] sm:$0xff]
        %v2447 = vld [vmem:[%s374 + $0x2a0] sm:$0xff]
        %v2448 = vld [vmem:[%s374 + $0x2a8] sm:$0xff]
        %v2449 = vld [vmem:[%s374 + $0x2b0] sm:$0xff]
        %v2450 = vld [vmem:[%s374 + $0x2b8] sm:$0xff]
        %v2451 = vld [vmem:[%s374 + $0x2c0] sm:$0xff]
        %v2452 = vld [vmem:[%s374 + $0x2c8] sm:$0xff]
        %v2453 = vld [vmem:[%s374 + $0x2d0] sm:$0xff]
        %v2454 = vld [vmem:[%s374 + $0x2d8] sm:$0xff]
        %v2455 = vld [vmem:[%s374 + $0x2e0] sm:$0xff]
        %v2456 = vld [vmem:[%s374 + $0x2e8] sm:$0xff]
        %v2457 = vld [vmem:[%s374 + $0x2f0] sm:$0xff]
        %v2458 = vld [vmem:[%s374 + $0x2f8] sm:$0xff]
        %v2459 = vld [vmem:[%s374 + $0x300] sm:$0xff]
        %v2460 = vld [vmem:[%s374 + $0x308] sm:$0xff]
        %v2461 = vld [vmem:[%s374 + $0x310] sm:$0xff]
        %v2462 = vld [vmem:[%s374 + $0x318] sm:$0xff]
        %v2463 = vld [vmem:[%s374 + $0x320] sm:$0xff]
        %v2464 = vld [vmem:[%s374 + $0x328] sm:$0xff]
        %v2465 = vld [vmem:[%s374 + $0x330] sm:$0xff]
        %v2466 = vld [vmem:[%s374 + $0x338] sm:$0xff]
        %v2467 = vld [vmem:[%s374 + $0x340] sm:$0xff]
        %v2468 = vld [vmem:[%s374 + $0x348] sm:$0xff]
        %v2469 = vld [vmem:[%s374 + $0x350] sm:$0xff]
        %v2470 = vld [vmem:[%s374 + $0x358] sm:$0xff]
        %v2471 = vld [vmem:[%s374 + $0x360] sm:$0xff]
        %v2472 = vld [vmem:[%s374 + $0x368] sm:$0xff]
        %v2473 = vld [vmem:[%s374 + $0x370] sm:$0xff]
        %v2474 = vld [vmem:[%s374 + $0x378] sm:$0xff]
        %v2475 = vld [vmem:[%s374 + $0x380] sm:$0xff]
        %v2476 = vld [vmem:[%s374 + $0x388] sm:$0xff]
        %v2477 = vld [vmem:[%s374 + $0x390] sm:$0xff]
        %v2478 = vld [vmem:[%s374 + $0x398] sm:$0xff]
        %v2479 = vld [vmem:[%s374 + $0x3a0] sm:$0xff]
        %v2480 = vld [vmem:[%s374 + $0x3a8] sm:$0xff]
        %v2481 = vld [vmem:[%s374 + $0x3b0] sm:$0xff]
        %v2482 = vld [vmem:[%s374 + $0x3b8] sm:$0xff]
        %v2483 = vld [vmem:[%s374 + $0x3c0] sm:$0xff]
        %v2484 = vld [vmem:[%s374 + $0x3c8] sm:$0xff]
        %v2485 = vld [vmem:[%s374 + $0x3d0] sm:$0xff]
        %v2486 = vld [vmem:[%s374 + $0x3d8] sm:$0xff]
        %v2487 = vld [vmem:[%s374 + $0x3e0] sm:$0xff]
        %v2488 = vld [vmem:[%s374 + $0x3e8] sm:$0xff]
        %v2489 = vld [vmem:[%s374 + $0x3f0] sm:$0xff]
        %v2490 = vld [vmem:[%s374 + $0x3f8] sm:$0xff]
        %v2492 = vsel %vm532, %v2363, 0
        %v2495 = vsel %vm532, %v2364, 0
        %v2498 = vsel %vm532, %v2365, 0
        %v2501 = vsel %vm532, %v2366, 0
        %v2504 = vsel %vm532, %v2367, 0
        %v2507 = vsel %vm532, %v2368, 0
        %v2510 = vsel %vm532, %v2369, 0
        %v2513 = vsel %vm532, %v2370, 0
        %v2516 = vsel %vm532, %v2371, 0
        %v2519 = vsel %vm532, %v2372, 0
        %v2522 = vsel %vm532, %v2373, 0
        %v2525 = vsel %vm532, %v2374, 0
        %v2528 = vsel %vm532, %v2375, 0
        %v2531 = vsel %vm532, %v2376, 0
        %v2534 = vsel %vm532, %v2377, 0
        %v2537 = vsel %vm532, %v2378, 0
        %v2540 = vsel %vm532, %v2379, 0
        %v2543 = vsel %vm532, %v2380, 0
        %v2546 = vsel %vm532, %v2381, 0
        %v2549 = vsel %vm532, %v2382, 0
        %v2552 = vsel %vm532, %v2383, 0
        %v2555 = vsel %vm532, %v2384, 0
        %v2558 = vsel %vm532, %v2385, 0
        %v2561 = vsel %vm532, %v2386, 0
        %v2564 = vsel %vm532, %v2387, 0
        %v2567 = vsel %vm532, %v2388, 0
        %v2570 = vsel %vm532, %v2389, 0
        %v2573 = vsel %vm532, %v2390, 0
        %v2576 = vsel %vm532, %v2391, 0
        %v2579 = vsel %vm532, %v2392, 0
        %v2582 = vsel %vm532, %v2393, 0
        %v2585 = vsel %vm532, %v2394, 0
        %v2588 = vsel %vm532, %v2395, 0
        %v2591 = vsel %vm532, %v2396, 0
        %v2594 = vsel %vm532, %v2397, 0
        %v2597 = vsel %vm532, %v2398, 0
        %v2600 = vsel %vm532, %v2399, 0
        %v2603 = vsel %vm532, %v2400, 0
        %v2606 = vsel %vm532, %v2401, 0
        %v2609 = vsel %vm532, %v2402, 0
        %v2612 = vsel %vm532, %v2403, 0
        %v2615 = vsel %vm532, %v2404, 0
        %v2618 = vsel %vm532, %v2405, 0
        %v2621 = vsel %vm532, %v2406, 0
        %v2624 = vsel %vm532, %v2407, 0
        %v2627 = vsel %vm532, %v2408, 0
        %v2630 = vsel %vm532, %v2409, 0
        %v2633 = vsel %vm532, %v2410, 0
        %v2636 = vsel %vm532, %v2411, 0
        %v2639 = vsel %vm532, %v2412, 0
        %v2642 = vsel %vm532, %v2413, 0
        %v2645 = vsel %vm532, %v2414, 0
        %v2648 = vsel %vm532, %v2415, 0
        %v2651 = vsel %vm532, %v2416, 0
        %v2654 = vsel %vm532, %v2417, 0
        %v2657 = vsel %vm532, %v2418, 0
        %v2660 = vsel %vm532, %v2419, 0
        %v2663 = vsel %vm532, %v2420, 0
        %v2666 = vsel %vm532, %v2421, 0
        %v2669 = vsel %vm532, %v2422, 0
        %v2672 = vsel %vm532, %v2423, 0
        %v2675 = vsel %vm532, %v2424, 0
        %v2678 = vsel %vm532, %v2425, 0
        %v2681 = vsel %vm532, %v2426, 0
        %v2684 = vsel %vm532, %v2427, 0
        %v2687 = vsel %vm532, %v2428, 0
        %v2690 = vsel %vm532, %v2429, 0
        %v2693 = vsel %vm532, %v2430, 0
        %v2696 = vsel %vm532, %v2431, 0
        %v2699 = vsel %vm532, %v2432, 0
        %v2702 = vsel %vm532, %v2433, 0
        %v2705 = vsel %vm532, %v2434, 0
        %v2708 = vsel %vm532, %v2435, 0
        %v2711 = vsel %vm532, %v2436, 0
        %v2714 = vsel %vm532, %v2437, 0
        %v2717 = vsel %vm532, %v2438, 0
        %v2720 = vsel %vm532, %v2439, 0
        %v2723 = vsel %vm532, %v2440, 0
        %v2726 = vsel %vm532, %v2441, 0
        %v2729 = vsel %vm532, %v2442, 0
        %v2732 = vsel %vm532, %v2443, 0
        %v2735 = vsel %vm532, %v2444, 0
        %v2738 = vsel %vm532, %v2445, 0
        %v2741 = vsel %vm532, %v2446, 0
        %v2744 = vsel %vm532, %v2447, 0
        %v2747 = vsel %vm532, %v2448, 0
        %v2750 = vsel %vm532, %v2449, 0
        %v2753 = vsel %vm532, %v2450, 0
        %v2756 = vsel %vm532, %v2451, 0
        %v2759 = vsel %vm532, %v2452, 0
        %v2762 = vsel %vm532, %v2453, 0
        %v2765 = vsel %vm532, %v2454, 0
        %v2768 = vsel %vm532, %v2455, 0
        %v2771 = vsel %vm532, %v2456, 0
        %v2774 = vsel %vm532, %v2457, 0
        %v2777 = vsel %vm532, %v2458, 0
        %v2780 = vsel %vm532, %v2459, 0
        %v2783 = vsel %vm532, %v2460, 0
        %v2786 = vsel %vm532, %v2461, 0
        %v2789 = vsel %vm532, %v2462, 0
        %v2792 = vsel %vm532, %v2463, 0
        %v2795 = vsel %vm532, %v2464, 0
        %v2798 = vsel %vm532, %v2465, 0
        %v2801 = vsel %vm532, %v2466, 0
        %v2804 = vsel %vm532, %v2467, 0
        %v2807 = vsel %vm532, %v2468, 0
        %v2810 = vsel %vm532, %v2469, 0
        %v2813 = vsel %vm532, %v2470, 0
        %v2816 = vsel %vm532, %v2471, 0
        %v2819 = vsel %vm532, %v2472, 0
        %v2822 = vsel %vm532, %v2473, 0
        %v2825 = vsel %vm532, %v2474, 0
        %v2828 = vsel %vm532, %v2475, 0
        %v2831 = vsel %vm532, %v2476, 0
        %v2834 = vsel %vm532, %v2477, 0
        %v2837 = vsel %vm532, %v2478, 0
        %v2840 = vsel %vm532, %v2479, 0
        %v2843 = vsel %vm532, %v2480, 0
        %v2846 = vsel %vm532, %v2481, 0
        %v2849 = vsel %vm532, %v2482, 0
        %v2852 = vsel %vm532, %v2483, 0
        %v2855 = vsel %vm532, %v2484, 0
        %v2858 = vsel %vm532, %v2485, 0
        %v2861 = vsel %vm532, %v2486, 0
        %v2864 = vsel %vm532, %v2487, 0
        %v2867 = vsel %vm532, %v2488, 0
        %v2870 = vsel %vm532, %v2489, 0
        %v2873 = vsel %vm532, %v2490, 0
        %2875 = vmatpush.msra.mxu0 0.0
        %2876 = vmatpush.msra.mxu0 0.0
        %2877 = vmatpush.msra.mxu0 0.0
        %2878 = vmatpush.msra.mxu0 0.0
        %2879 = vmatpush.msra.mxu0 0.0
        %2880 = vmatpush.msra.mxu0 0.0
        %2881 = vmatpush.msra.mxu0 0.0
        %2882 = vmatpush.msra.mxu0 0.0
        %2883 = vmatpush.msra.mxu0 0.0
        %2884 = vmatpush.msra.mxu0 0.0
        %2885 = vmatpush.msra.mxu0 0.0
        %2886 = vmatpush.msra.mxu0 %v919
        %2887 = vmatpush.msra.mxu0 %v402
        %2888 = vmatpush.msra.mxu0 %v401
        %2889 = vmatpush.msra.mxu0 %v400
        %2890 = vmatpush.msra.mxu0 %v399
        %2891 = vmatmul.f32.gmra.mxu0 %v2492
        %v2892 = vpop.f32.mrf.mxu0
        %v2893 = vadd.f32 0.0, %v2892
        %2894 = vmatmul.f32.gmra.mxu0 %v2495
        %v2895 = vpop.f32.mrf.mxu0
        %v2896 = vadd.f32 0.0, %v2895
        %2897 = vmatmul.f32.gmra.mxu0 %v2498
        %v2898 = vpop.f32.mrf.mxu0
        %v2899 = vadd.f32 0.0, %v2898
        %2900 = vmatmul.f32.gmra.mxu0 %v2501
        %v2901 = vpop.f32.mrf.mxu0
        %v2902 = vadd.f32 0.0, %v2901
        %2903 = vmatmul.f32.gmra.mxu0 %v2504
        %v2904 = vpop.f32.mrf.mxu0
        %v2905 = vadd.f32 0.0, %v2904
        %2906 = vmatmul.f32.gmra.mxu0 %v2507
        %v2907 = vpop.f32.mrf.mxu0
        %v2908 = vadd.f32 0.0, %v2907
        %2909 = vmatmul.f32.gmra.mxu0 %v2510
        %v2910 = vpop.f32.mrf.mxu0
        %v2911 = vadd.f32 0.0, %v2910
        %2912 = vmatmul.f32.gmra.mxu0 %v2513
        %v2913 = vpop.f32.mrf.mxu0
        %v2914 = vadd.f32 0.0, %v2913
        %2915 = vmatmul.f32.gmra.mxu0 %v2516
        %v2916 = vpop.f32.mrf.mxu0
        %v2917 = vadd.f32 0.0, %v2916
        %2918 = vmatmul.f32.gmra.mxu0 %v2519
        %v2919 = vpop.f32.mrf.mxu0
        %v2920 = vadd.f32 0.0, %v2919
        %2921 = vmatmul.f32.gmra.mxu0 %v2522
        %v2922 = vpop.f32.mrf.mxu0
        %v2923 = vadd.f32 0.0, %v2922
        %2924 = vmatmul.f32.gmra.mxu0 %v2525
        %v2925 = vpop.f32.mrf.mxu0
        %v2926 = vadd.f32 0.0, %v2925
        %2927 = vmatmul.f32.gmra.mxu0 %v2528
        %v2928 = vpop.f32.mrf.mxu0
        %v2929 = vadd.f32 0.0, %v2928
        %2930 = vmatmul.f32.gmra.mxu0 %v2531
        %v2931 = vpop.f32.mrf.mxu0
        %v2932 = vadd.f32 0.0, %v2931
        %2933 = vmatmul.f32.gmra.mxu0 %v2534
        %v2934 = vpop.f32.mrf.mxu0
        %v2935 = vadd.f32 0.0, %v2934
        %2936 = vmatmul.f32.gmra.mxu0 %v2537
        %v2937 = vpop.f32.mrf.mxu0
        %v2938 = vadd.f32 0.0, %v2937
        %2939 = vmatmul.f32.gmra.mxu0 %v2540
        %v2940 = vpop.f32.mrf.mxu0
        %v2941 = vadd.f32 0.0, %v2940
        %2942 = vmatmul.f32.gmra.mxu0 %v2543
        %v2943 = vpop.f32.mrf.mxu0
        %v2944 = vadd.f32 0.0, %v2943
        %2945 = vmatmul.f32.gmra.mxu0 %v2546
        %v2946 = vpop.f32.mrf.mxu0
        %v2947 = vadd.f32 0.0, %v2946
        %2948 = vmatmul.f32.gmra.mxu0 %v2549
        %v2949 = vpop.f32.mrf.mxu0
        %v2950 = vadd.f32 0.0, %v2949
        %2951 = vmatmul.f32.gmra.mxu0 %v2552
        %v2952 = vpop.f32.mrf.mxu0
        %v2953 = vadd.f32 0.0, %v2952
        %2954 = vmatmul.f32.gmra.mxu0 %v2555
        %v2955 = vpop.f32.mrf.mxu0
        %v2956 = vadd.f32 0.0, %v2955
        %2957 = vmatmul.f32.gmra.mxu0 %v2558
        %v2958 = vpop.f32.mrf.mxu0
        %v2959 = vadd.f32 0.0, %v2958
        %2960 = vmatmul.f32.gmra.mxu0 %v2561
        %v2961 = vpop.f32.mrf.mxu0
        %v2962 = vadd.f32 0.0, %v2961
        %2963 = vmatmul.f32.gmra.mxu0 %v2564
        %v2964 = vpop.f32.mrf.mxu0
        %v2965 = vadd.f32 0.0, %v2964
        %2966 = vmatmul.f32.gmra.mxu0 %v2567
        %v2967 = vpop.f32.mrf.mxu0
        %v2968 = vadd.f32 0.0, %v2967
        %2969 = vmatmul.f32.gmra.mxu0 %v2570
        %v2970 = vpop.f32.mrf.mxu0
        %v2971 = vadd.f32 0.0, %v2970
        %2972 = vmatmul.f32.gmra.mxu0 %v2573
        %v2973 = vpop.f32.mrf.mxu0
        %v2974 = vadd.f32 0.0, %v2973
        %2975 = vmatmul.f32.gmra.mxu0 %v2576
        %v2976 = vpop.f32.mrf.mxu0
        %v2977 = vadd.f32 0.0, %v2976
        %2978 = vmatmul.f32.gmra.mxu0 %v2579
        %v2979 = vpop.f32.mrf.mxu0
        %v2980 = vadd.f32 0.0, %v2979
        %2981 = vmatmul.f32.gmra.mxu0 %v2582
        %v2982 = vpop.f32.mrf.mxu0
        %v2983 = vadd.f32 0.0, %v2982
        %2984 = vmatmul.f32.gmra.mxu0 %v2585
        %v2985 = vpop.f32.mrf.mxu0
        %v2986 = vadd.f32 0.0, %v2985
        %2987 = vmatmul.f32.gmra.mxu0 %v2588
        %v2988 = vpop.f32.mrf.mxu0
        %v2989 = vadd.f32 0.0, %v2988
        %2990 = vmatmul.f32.gmra.mxu0 %v2591
        %v2991 = vpop.f32.mrf.mxu0
        %v2992 = vadd.f32 0.0, %v2991
        %2993 = vmatmul.f32.gmra.mxu0 %v2594
        %v2994 = vpop.f32.mrf.mxu0
        %v2995 = vadd.f32 0.0, %v2994
        %2996 = vmatmul.f32.gmra.mxu0 %v2597
        %v2997 = vpop.f32.mrf.mxu0
        %v2998 = vadd.f32 0.0, %v2997
        %2999 = vmatmul.f32.gmra.mxu0 %v2600
        %v3000 = vpop.f32.mrf.mxu0
        %v3001 = vadd.f32 0.0, %v3000
        %3002 = vmatmul.f32.gmra.mxu0 %v2603
        %v3003 = vpop.f32.mrf.mxu0
        %v3004 = vadd.f32 0.0, %v3003
        %3005 = vmatmul.f32.gmra.mxu0 %v2606
        %v3006 = vpop.f32.mrf.mxu0
        %v3007 = vadd.f32 0.0, %v3006
        %3008 = vmatmul.f32.gmra.mxu0 %v2609
        %v3009 = vpop.f32.mrf.mxu0
        %v3010 = vadd.f32 0.0, %v3009
        %3011 = vmatmul.f32.gmra.mxu0 %v2612
        %v3012 = vpop.f32.mrf.mxu0
        %v3013 = vadd.f32 0.0, %v3012
        %3014 = vmatmul.f32.gmra.mxu0 %v2615
        %v3015 = vpop.f32.mrf.mxu0
        %v3016 = vadd.f32 0.0, %v3015
        %3017 = vmatmul.f32.gmra.mxu0 %v2618
        %v3018 = vpop.f32.mrf.mxu0
        %v3019 = vadd.f32 0.0, %v3018
        %3020 = vmatmul.f32.gmra.mxu0 %v2621
        %v3021 = vpop.f32.mrf.mxu0
        %v3022 = vadd.f32 0.0, %v3021
        %3023 = vmatmul.f32.gmra.mxu0 %v2624
        %v3024 = vpop.f32.mrf.mxu0
        %v3025 = vadd.f32 0.0, %v3024
        %3026 = vmatmul.f32.gmra.mxu0 %v2627
        %v3027 = vpop.f32.mrf.mxu0
        %v3028 = vadd.f32 0.0, %v3027
        %3029 = vmatmul.f32.gmra.mxu0 %v2630
        %v3030 = vpop.f32.mrf.mxu0
        %v3031 = vadd.f32 0.0, %v3030
        %3032 = vmatmul.f32.gmra.mxu0 %v2633
        %v3033 = vpop.f32.mrf.mxu0
        %v3034 = vadd.f32 0.0, %v3033
        %3035 = vmatmul.f32.gmra.mxu0 %v2636
        %v3036 = vpop.f32.mrf.mxu0
        %v3037 = vadd.f32 0.0, %v3036
        %3038 = vmatmul.f32.gmra.mxu0 %v2639
        %v3039 = vpop.f32.mrf.mxu0
        %v3040 = vadd.f32 0.0, %v3039
        %3041 = vmatmul.f32.gmra.mxu0 %v2642
        %v3042 = vpop.f32.mrf.mxu0
        %v3043 = vadd.f32 0.0, %v3042
        %3044 = vmatmul.f32.gmra.mxu0 %v2645
        %v3045 = vpop.f32.mrf.mxu0
        %v3046 = vadd.f32 0.0, %v3045
        %3047 = vmatmul.f32.gmra.mxu0 %v2648
        %v3048 = vpop.f32.mrf.mxu0
        %v3049 = vadd.f32 0.0, %v3048
        %3050 = vmatmul.f32.gmra.mxu0 %v2651
        %v3051 = vpop.f32.mrf.mxu0
        %v3052 = vadd.f32 0.0, %v3051
        %3053 = vmatmul.f32.gmra.mxu0 %v2654
        %v3054 = vpop.f32.mrf.mxu0
        %v3055 = vadd.f32 0.0, %v3054
        %3056 = vmatmul.f32.gmra.mxu0 %v2657
        %v3057 = vpop.f32.mrf.mxu0
        %v3058 = vadd.f32 0.0, %v3057
        %3059 = vmatmul.f32.gmra.mxu0 %v2660
        %v3060 = vpop.f32.mrf.mxu0
        %v3061 = vadd.f32 0.0, %v3060
        %3062 = vmatmul.f32.gmra.mxu0 %v2663
        %v3063 = vpop.f32.mrf.mxu0
        %v3064 = vadd.f32 0.0, %v3063
        %3065 = vmatmul.f32.gmra.mxu0 %v2666
        %v3066 = vpop.f32.mrf.mxu0
        %v3067 = vadd.f32 0.0, %v3066
        %3068 = vmatmul.f32.gmra.mxu0 %v2669
        %v3069 = vpop.f32.mrf.mxu0
        %v3070 = vadd.f32 0.0, %v3069
        %3071 = vmatmul.f32.gmra.mxu0 %v2672
        %v3072 = vpop.f32.mrf.mxu0
        %v3073 = vadd.f32 0.0, %v3072
        %3074 = vmatmul.f32.gmra.mxu0 %v2675
        %v3075 = vpop.f32.mrf.mxu0
        %v3076 = vadd.f32 0.0, %v3075
        %3077 = vmatmul.f32.gmra.mxu0 %v2678
        %v3078 = vpop.f32.mrf.mxu0
        %v3079 = vadd.f32 0.0, %v3078
        %3080 = vmatmul.f32.gmra.mxu0 %v2681
        %v3081 = vpop.f32.mrf.mxu0
        %v3082 = vadd.f32 0.0, %v3081
        %3083 = vmatmul.f32.gmra.mxu0 %v2684
        %v3084 = vpop.f32.mrf.mxu0
        %v3085 = vadd.f32 0.0, %v3084
        %3086 = vmatmul.f32.gmra.mxu0 %v2687
        %v3087 = vpop.f32.mrf.mxu0
        %v3088 = vadd.f32 0.0, %v3087
        %3089 = vmatmul.f32.gmra.mxu0 %v2690
        %v3090 = vpop.f32.mrf.mxu0
        %v3091 = vadd.f32 0.0, %v3090
        %3092 = vmatmul.f32.gmra.mxu0 %v2693
        %v3093 = vpop.f32.mrf.mxu0
        %v3094 = vadd.f32 0.0, %v3093
        %3095 = vmatmul.f32.gmra.mxu0 %v2696
        %v3096 = vpop.f32.mrf.mxu0
        %v3097 = vadd.f32 0.0, %v3096
        %3098 = vmatmul.f32.gmra.mxu0 %v2699
        %v3099 = vpop.f32.mrf.mxu0
        %v3100 = vadd.f32 0.0, %v3099
        %3101 = vmatmul.f32.gmra.mxu0 %v2702
        %v3102 = vpop.f32.mrf.mxu0
        %v3103 = vadd.f32 0.0, %v3102
        %3104 = vmatmul.f32.gmra.mxu0 %v2705
        %v3105 = vpop.f32.mrf.mxu0
        %v3106 = vadd.f32 0.0, %v3105
        %3107 = vmatmul.f32.gmra.mxu0 %v2708
        %v3108 = vpop.f32.mrf.mxu0
        %v3109 = vadd.f32 0.0, %v3108
        %3110 = vmatmul.f32.gmra.mxu0 %v2711
        %v3111 = vpop.f32.mrf.mxu0
        %v3112 = vadd.f32 0.0, %v3111
        %3113 = vmatmul.f32.gmra.mxu0 %v2714
        %v3114 = vpop.f32.mrf.mxu0
        %v3115 = vadd.f32 0.0, %v3114
        %3116 = vmatmul.f32.gmra.mxu0 %v2717
        %v3117 = vpop.f32.mrf.mxu0
        %v3118 = vadd.f32 0.0, %v3117
        %3119 = vmatmul.f32.gmra.mxu0 %v2720
        %v3120 = vpop.f32.mrf.mxu0
        %v3121 = vadd.f32 0.0, %v3120
        %3122 = vmatmul.f32.gmra.mxu0 %v2723
        %v3123 = vpop.f32.mrf.mxu0
        %v3124 = vadd.f32 0.0, %v3123
        %3125 = vmatmul.f32.gmra.mxu0 %v2726
        %v3126 = vpop.f32.mrf.mxu0
        %v3127 = vadd.f32 0.0, %v3126
        %3128 = vmatmul.f32.gmra.mxu0 %v2729
        %v3129 = vpop.f32.mrf.mxu0
        %v3130 = vadd.f32 0.0, %v3129
        %3131 = vmatmul.f32.gmra.mxu0 %v2732
        %v3132 = vpop.f32.mrf.mxu0
        %v3133 = vadd.f32 0.0, %v3132
        %3134 = vmatmul.f32.gmra.mxu0 %v2735
        %v3135 = vpop.f32.mrf.mxu0
        %v3136 = vadd.f32 0.0, %v3135
        %3137 = vmatmul.f32.gmra.mxu0 %v2738
        %v3138 = vpop.f32.mrf.mxu0
        %v3139 = vadd.f32 0.0, %v3138
        %3140 = vmatmul.f32.gmra.mxu0 %v2741
        %v3141 = vpop.f32.mrf.mxu0
        %v3142 = vadd.f32 0.0, %v3141
        %3143 = vmatmul.f32.gmra.mxu0 %v2744
        %v3144 = vpop.f32.mrf.mxu0
        %v3145 = vadd.f32 0.0, %v3144
        %3146 = vmatmul.f32.gmra.mxu0 %v2747
        %v3147 = vpop.f32.mrf.mxu0
        %v3148 = vadd.f32 0.0, %v3147
        %3149 = vmatmul.f32.gmra.mxu0 %v2750
        %v3150 = vpop.f32.mrf.mxu0
        %v3151 = vadd.f32 0.0, %v3150
        %3152 = vmatmul.f32.gmra.mxu0 %v2753
        %v3153 = vpop.f32.mrf.mxu0
        %v3154 = vadd.f32 0.0, %v3153
        %3155 = vmatmul.f32.gmra.mxu0 %v2756
        %v3156 = vpop.f32.mrf.mxu0
        %v3157 = vadd.f32 0.0, %v3156
        %3158 = vmatmul.f32.gmra.mxu0 %v2759
        %v3159 = vpop.f32.mrf.mxu0
        %v3160 = vadd.f32 0.0, %v3159
        %3161 = vmatmul.f32.gmra.mxu0 %v2762
        %v3162 = vpop.f32.mrf.mxu0
        %v3163 = vadd.f32 0.0, %v3162
        %3164 = vmatmul.f32.gmra.mxu0 %v2765
        %v3165 = vpop.f32.mrf.mxu0
        %v3166 = vadd.f32 0.0, %v3165
        %3167 = vmatmul.f32.gmra.mxu0 %v2768
        %v3168 = vpop.f32.mrf.mxu0
        %v3169 = vadd.f32 0.0, %v3168
        %3170 = vmatmul.f32.gmra.mxu0 %v2771
        %v3171 = vpop.f32.mrf.mxu0
        %v3172 = vadd.f32 0.0, %v3171
        %3173 = vmatmul.f32.gmra.mxu0 %v2774
        %v3174 = vpop.f32.mrf.mxu0
        %v3175 = vadd.f32 0.0, %v3174
        %3176 = vmatmul.f32.gmra.mxu0 %v2777
        %v3177 = vpop.f32.mrf.mxu0
        %v3178 = vadd.f32 0.0, %v3177
        %3179 = vmatmul.f32.gmra.mxu0 %v2780
        %v3180 = vpop.f32.mrf.mxu0
        %v3181 = vadd.f32 0.0, %v3180
        %3182 = vmatmul.f32.gmra.mxu0 %v2783
        %v3183 = vpop.f32.mrf.mxu0
        %v3184 = vadd.f32 0.0, %v3183
        %3185 = vmatmul.f32.gmra.mxu0 %v2786
        %v3186 = vpop.f32.mrf.mxu0
        %v3187 = vadd.f32 0.0, %v3186
        %3188 = vmatmul.f32.gmra.mxu0 %v2789
        %v3189 = vpop.f32.mrf.mxu0
        %v3190 = vadd.f32 0.0, %v3189
        %3191 = vmatmul.f32.gmra.mxu0 %v2792
        %v3192 = vpop.f32.mrf.mxu0
        %v3193 = vadd.f32 0.0, %v3192
        %3194 = vmatmul.f32.gmra.mxu0 %v2795
        %v3195 = vpop.f32.mrf.mxu0
        %v3196 = vadd.f32 0.0, %v3195
        %3197 = vmatmul.f32.gmra.mxu0 %v2798
        %v3198 = vpop.f32.mrf.mxu0
        %v3199 = vadd.f32 0.0, %v3198
        %3200 = vmatmul.f32.gmra.mxu0 %v2801
        %v3201 = vpop.f32.mrf.mxu0
        %v3202 = vadd.f32 0.0, %v3201
        %3203 = vmatmul.f32.gmra.mxu0 %v2804
        %v3204 = vpop.f32.mrf.mxu0
        %v3205 = vadd.f32 0.0, %v3204
        %3206 = vmatmul.f32.gmra.mxu0 %v2807
        %v3207 = vpop.f32.mrf.mxu0
        %v3208 = vadd.f32 0.0, %v3207
        %3209 = vmatmul.f32.gmra.mxu0 %v2810
        %v3210 = vpop.f32.mrf.mxu0
        %v3211 = vadd.f32 0.0, %v3210
        %3212 = vmatmul.f32.gmra.mxu0 %v2813
        %v3213 = vpop.f32.mrf.mxu0
        %v3214 = vadd.f32 0.0, %v3213
        %3215 = vmatmul.f32.gmra.mxu0 %v2816
        %v3216 = vpop.f32.mrf.mxu0
        %v3217 = vadd.f32 0.0, %v3216
        %3218 = vmatmul.f32.gmra.mxu0 %v2819
        %v3219 = vpop.f32.mrf.mxu0
        %v3220 = vadd.f32 0.0, %v3219
        %3221 = vmatmul.f32.gmra.mxu0 %v2822
        %v3222 = vpop.f32.mrf.mxu0
        %v3223 = vadd.f32 0.0, %v3222
        %3224 = vmatmul.f32.gmra.mxu0 %v2825
        %v3225 = vpop.f32.mrf.mxu0
        %v3226 = vadd.f32 0.0, %v3225
        %3227 = vmatmul.f32.gmra.mxu0 %v2828
        %v3228 = vpop.f32.mrf.mxu0
        %v3229 = vadd.f32 0.0, %v3228
        %3230 = vmatmul.f32.gmra.mxu0 %v2831
        %v3231 = vpop.f32.mrf.mxu0
        %v3232 = vadd.f32 0.0, %v3231
        %3233 = vmatmul.f32.gmra.mxu0 %v2834
        %v3234 = vpop.f32.mrf.mxu0
        %v3235 = vadd.f32 0.0, %v3234
        %3236 = vmatmul.f32.gmra.mxu0 %v2837
        %v3237 = vpop.f32.mrf.mxu0
        %v3238 = vadd.f32 0.0, %v3237
        %3239 = vmatmul.f32.gmra.mxu0 %v2840
        %v3240 = vpop.f32.mrf.mxu0
        %v3241 = vadd.f32 0.0, %v3240
        %3242 = vmatmul.f32.gmra.mxu0 %v2843
        %v3243 = vpop.f32.mrf.mxu0
        %v3244 = vadd.f32 0.0, %v3243
        %3245 = vmatmul.f32.gmra.mxu0 %v2846
        %v3246 = vpop.f32.mrf.mxu0
        %v3247 = vadd.f32 0.0, %v3246
        %3248 = vmatmul.f32.gmra.mxu0 %v2849
        %v3249 = vpop.f32.mrf.mxu0
        %v3250 = vadd.f32 0.0, %v3249
        %3251 = vmatmul.f32.gmra.mxu0 %v2852
        %v3252 = vpop.f32.mrf.mxu0
        %v3253 = vadd.f32 0.0, %v3252
        %3254 = vmatmul.f32.gmra.mxu0 %v2855
        %v3255 = vpop.f32.mrf.mxu0
        %v3256 = vadd.f32 0.0, %v3255
        %3257 = vmatmul.f32.gmra.mxu0 %v2858
        %v3258 = vpop.f32.mrf.mxu0
        %v3259 = vadd.f32 0.0, %v3258
        %3260 = vmatmul.f32.gmra.mxu0 %v2861
        %v3261 = vpop.f32.mrf.mxu0
        %v3262 = vadd.f32 0.0, %v3261
        %3263 = vmatmul.f32.gmra.mxu0 %v2864
        %v3264 = vpop.f32.mrf.mxu0
        %v3265 = vadd.f32 0.0, %v3264
        %3266 = vmatmul.f32.gmra.mxu0 %v2867
        %v3267 = vpop.f32.mrf.mxu0
        %v3268 = vadd.f32 0.0, %v3267
        %3269 = vmatmul.f32.gmra.mxu0 %v2870
        %v3270 = vpop.f32.mrf.mxu0
        %v3271 = vadd.f32 0.0, %v3270
        %3272 = vmatmul.f32.gmra.mxu0 %v2873
        %v3273 = vpop.f32.mrf.mxu0
        %v3274 = vadd.f32 0.0, %v3273
        %3275 = vdwg.mxu0
        %v3276 = vld [vmem:[%s388] sm:$0xff]
        %v3277 = vld [vmem:[%s388 + $0x8] sm:$0xff]
        %v3278 = vld [vmem:[%s388 + $0x10] sm:$0xff]
        %v3279 = vld [vmem:[%s388 + $0x18] sm:$0xff]
        %v3280 = vld [vmem:[%s388 + $0x20] sm:$0xff]
        %v3281 = vld [vmem:[%s388 + $0x28] sm:$0xff]
        %v3282 = vld [vmem:[%s388 + $0x30] sm:$0xff]
        %v3283 = vld [vmem:[%s388 + $0x38] sm:$0xff]
        %v3284 = vld [vmem:[%s388 + $0x40] sm:$0xff]
        %v3285 = vld [vmem:[%s388 + $0x48] sm:$0xff]
        %v3286 = vld [vmem:[%s388 + $0x50] sm:$0xff]
        %v3287 = vld [vmem:[%s388 + $0x58] sm:$0xff]
        %v3288 = vld [vmem:[%s388 + $0x60] sm:$0xff]
        %v3289 = vld [vmem:[%s388 + $0x68] sm:$0xff]
        %v3290 = vld [vmem:[%s388 + $0x70] sm:$0xff]
        %v3291 = vld [vmem:[%s388 + $0x78] sm:$0xff]
        %v3292 = vld [vmem:[%s388 + $0x80] sm:$0xff]
        %v3293 = vld [vmem:[%s388 + $0x88] sm:$0xff]
        %v3294 = vld [vmem:[%s388 + $0x90] sm:$0xff]
        %v3295 = vld [vmem:[%s388 + $0x98] sm:$0xff]
        %v3296 = vld [vmem:[%s388 + $0xa0] sm:$0xff]
        %v3297 = vld [vmem:[%s388 + $0xa8] sm:$0xff]
        %v3298 = vld [vmem:[%s388 + $0xb0] sm:$0xff]
        %v3299 = vld [vmem:[%s388 + $0xb8] sm:$0xff]
        %v3300 = vld [vmem:[%s388 + $0xc0] sm:$0xff]
        %v3301 = vld [vmem:[%s388 + $0xc8] sm:$0xff]
        %v3302 = vld [vmem:[%s388 + $0xd0] sm:$0xff]
        %v3303 = vld [vmem:[%s388 + $0xd8] sm:$0xff]
        %v3304 = vld [vmem:[%s388 + $0xe0] sm:$0xff]
        %v3305 = vld [vmem:[%s388 + $0xe8] sm:$0xff]
        %v3306 = vld [vmem:[%s388 + $0xf0] sm:$0xff]
        %v3307 = vld [vmem:[%s388 + $0xf8] sm:$0xff]
        %v3308 = vld [vmem:[%s388 + $0x100] sm:$0xff]
        %v3309 = vld [vmem:[%s388 + $0x108] sm:$0xff]
        %v3310 = vld [vmem:[%s388 + $0x110] sm:$0xff]
        %v3311 = vld [vmem:[%s388 + $0x118] sm:$0xff]
        %v3312 = vld [vmem:[%s388 + $0x120] sm:$0xff]
        %v3313 = vld [vmem:[%s388 + $0x128] sm:$0xff]
        %v3314 = vld [vmem:[%s388 + $0x130] sm:$0xff]
        %v3315 = vld [vmem:[%s388 + $0x138] sm:$0xff]
        %v3316 = vld [vmem:[%s388 + $0x140] sm:$0xff]
        %v3317 = vld [vmem:[%s388 + $0x148] sm:$0xff]
        %v3318 = vld [vmem:[%s388 + $0x150] sm:$0xff]
        %v3319 = vld [vmem:[%s388 + $0x158] sm:$0xff]
        %v3320 = vld [vmem:[%s388 + $0x160] sm:$0xff]
        %v3321 = vld [vmem:[%s388 + $0x168] sm:$0xff]
        %v3322 = vld [vmem:[%s388 + $0x170] sm:$0xff]
        %v3323 = vld [vmem:[%s388 + $0x178] sm:$0xff]
        %v3324 = vld [vmem:[%s388 + $0x180] sm:$0xff]
        %v3325 = vld [vmem:[%s388 + $0x188] sm:$0xff]
        %v3326 = vld [vmem:[%s388 + $0x190] sm:$0xff]
        %v3327 = vld [vmem:[%s388 + $0x198] sm:$0xff]
        %v3328 = vld [vmem:[%s388 + $0x1a0] sm:$0xff]
        %v3329 = vld [vmem:[%s388 + $0x1a8] sm:$0xff]
        %v3330 = vld [vmem:[%s388 + $0x1b0] sm:$0xff]
        %v3331 = vld [vmem:[%s388 + $0x1b8] sm:$0xff]
        %v3332 = vld [vmem:[%s388 + $0x1c0] sm:$0xff]
        %v3333 = vld [vmem:[%s388 + $0x1c8] sm:$0xff]
        %v3334 = vld [vmem:[%s388 + $0x1d0] sm:$0xff]
        %v3335 = vld [vmem:[%s388 + $0x1d8] sm:$0xff]
        %v3336 = vld [vmem:[%s388 + $0x1e0] sm:$0xff]
        %v3337 = vld [vmem:[%s388 + $0x1e8] sm:$0xff]
        %v3338 = vld [vmem:[%s388 + $0x1f0] sm:$0xff]
        %v3339 = vld [vmem:[%s388 + $0x1f8] sm:$0xff]
        %v3340 = vld [vmem:[%s388 + $0x200] sm:$0xff]
        %v3341 = vld [vmem:[%s388 + $0x208] sm:$0xff]
        %v3342 = vld [vmem:[%s388 + $0x210] sm:$0xff]
        %v3343 = vld [vmem:[%s388 + $0x218] sm:$0xff]
        %v3344 = vld [vmem:[%s388 + $0x220] sm:$0xff]
        %v3345 = vld [vmem:[%s388 + $0x228] sm:$0xff]
        %v3346 = vld [vmem:[%s388 + $0x230] sm:$0xff]
        %v3347 = vld [vmem:[%s388 + $0x238] sm:$0xff]
        %v3348 = vld [vmem:[%s388 + $0x240] sm:$0xff]
        %v3349 = vld [vmem:[%s388 + $0x248] sm:$0xff]
        %v3350 = vld [vmem:[%s388 + $0x250] sm:$0xff]
        %v3351 = vld [vmem:[%s388 + $0x258] sm:$0xff]
        %v3352 = vld [vmem:[%s388 + $0x260] sm:$0xff]
        %v3353 = vld [vmem:[%s388 + $0x268] sm:$0xff]
        %v3354 = vld [vmem:[%s388 + $0x270] sm:$0xff]
        %v3355 = vld [vmem:[%s388 + $0x278] sm:$0xff]
        %v3356 = vld [vmem:[%s388 + $0x280] sm:$0xff]
        %v3357 = vld [vmem:[%s388 + $0x288] sm:$0xff]
        %v3358 = vld [vmem:[%s388 + $0x290] sm:$0xff]
        %v3359 = vld [vmem:[%s388 + $0x298] sm:$0xff]
        %v3360 = vld [vmem:[%s388 + $0x2a0] sm:$0xff]
        %v3361 = vld [vmem:[%s388 + $0x2a8] sm:$0xff]
        %v3362 = vld [vmem:[%s388 + $0x2b0] sm:$0xff]
        %v3363 = vld [vmem:[%s388 + $0x2b8] sm:$0xff]
        %v3364 = vld [vmem:[%s388 + $0x2c0] sm:$0xff]
        %v3365 = vld [vmem:[%s388 + $0x2c8] sm:$0xff]
        %v3366 = vld [vmem:[%s388 + $0x2d0] sm:$0xff]
        %v3367 = vld [vmem:[%s388 + $0x2d8] sm:$0xff]
        %v3368 = vld [vmem:[%s388 + $0x2e0] sm:$0xff]
        %v3369 = vld [vmem:[%s388 + $0x2e8] sm:$0xff]
        %v3370 = vld [vmem:[%s388 + $0x2f0] sm:$0xff]
        %v3371 = vld [vmem:[%s388 + $0x2f8] sm:$0xff]
        %v3372 = vld [vmem:[%s388 + $0x300] sm:$0xff]
        %v3373 = vld [vmem:[%s388 + $0x308] sm:$0xff]
        %v3374 = vld [vmem:[%s388 + $0x310] sm:$0xff]
        %v3375 = vld [vmem:[%s388 + $0x318] sm:$0xff]
        %v3376 = vld [vmem:[%s388 + $0x320] sm:$0xff]
        %v3377 = vld [vmem:[%s388 + $0x328] sm:$0xff]
        %v3378 = vld [vmem:[%s388 + $0x330] sm:$0xff]
        %v3379 = vld [vmem:[%s388 + $0x338] sm:$0xff]
        %v3380 = vld [vmem:[%s388 + $0x340] sm:$0xff]
        %v3381 = vld [vmem:[%s388 + $0x348] sm:$0xff]
        %v3382 = vld [vmem:[%s388 + $0x350] sm:$0xff]
        %v3383 = vld [vmem:[%s388 + $0x358] sm:$0xff]
        %v3384 = vld [vmem:[%s388 + $0x360] sm:$0xff]
        %v3385 = vld [vmem:[%s388 + $0x368] sm:$0xff]
        %v3386 = vld [vmem:[%s388 + $0x370] sm:$0xff]
        %v3387 = vld [vmem:[%s388 + $0x378] sm:$0xff]
        %v3388 = vld [vmem:[%s388 + $0x380] sm:$0xff]
        %v3389 = vld [vmem:[%s388 + $0x388] sm:$0xff]
        %v3390 = vld [vmem:[%s388 + $0x390] sm:$0xff]
        %v3391 = vld [vmem:[%s388 + $0x398] sm:$0xff]
        %v3392 = vld [vmem:[%s388 + $0x3a0] sm:$0xff]
        %v3393 = vld [vmem:[%s388 + $0x3a8] sm:$0xff]
        %v3394 = vld [vmem:[%s388 + $0x3b0] sm:$0xff]
        %v3395 = vld [vmem:[%s388 + $0x3b8] sm:$0xff]
        %v3396 = vld [vmem:[%s388 + $0x3c0] sm:$0xff]
        %v3397 = vld [vmem:[%s388 + $0x3c8] sm:$0xff]
        %v3398 = vld [vmem:[%s388 + $0x3d0] sm:$0xff]
        %v3399 = vld [vmem:[%s388 + $0x3d8] sm:$0xff]
        %v3400 = vld [vmem:[%s388 + $0x3e0] sm:$0xff]
        %v3401 = vld [vmem:[%s388 + $0x3e8] sm:$0xff]
        %v3402 = vld [vmem:[%s388 + $0x3f0] sm:$0xff]
        %v3403 = vld [vmem:[%s388 + $0x3f8] sm:$0xff]
        %v3405 = vsel %vm532, %v3276, 0
        %v3408 = vsel %vm532, %v3277, 0
        %v3411 = vsel %vm532, %v3278, 0
        %v3414 = vsel %vm532, %v3279, 0
        %v3417 = vsel %vm532, %v3280, 0
        %v3420 = vsel %vm532, %v3281, 0
        %v3423 = vsel %vm532, %v3282, 0
        %v3426 = vsel %vm532, %v3283, 0
        %v3429 = vsel %vm532, %v3284, 0
        %v3432 = vsel %vm532, %v3285, 0
        %v3435 = vsel %vm532, %v3286, 0
        %v3438 = vsel %vm532, %v3287, 0
        %v3441 = vsel %vm532, %v3288, 0
        %v3444 = vsel %vm532, %v3289, 0
        %v3447 = vsel %vm532, %v3290, 0
        %v3450 = vsel %vm532, %v3291, 0
        %v3453 = vsel %vm532, %v3292, 0
        %v3456 = vsel %vm532, %v3293, 0
        %v3459 = vsel %vm532, %v3294, 0
        %v3462 = vsel %vm532, %v3295, 0
        %v3465 = vsel %vm532, %v3296, 0
        %v3468 = vsel %vm532, %v3297, 0
        %v3471 = vsel %vm532, %v3298, 0
        %v3474 = vsel %vm532, %v3299, 0
        %v3477 = vsel %vm532, %v3300, 0
        %v3480 = vsel %vm532, %v3301, 0
        %v3483 = vsel %vm532, %v3302, 0
        %v3486 = vsel %vm532, %v3303, 0
        %v3489 = vsel %vm532, %v3304, 0
        %v3492 = vsel %vm532, %v3305, 0
        %v3495 = vsel %vm532, %v3306, 0
        %v3498 = vsel %vm532, %v3307, 0
        %v3501 = vsel %vm532, %v3308, 0
        %v3504 = vsel %vm532, %v3309, 0
        %v3507 = vsel %vm532, %v3310, 0
        %v3510 = vsel %vm532, %v3311, 0
        %v3513 = vsel %vm532, %v3312, 0
        %v3516 = vsel %vm532, %v3313, 0
        %v3519 = vsel %vm532, %v3314, 0
        %v3522 = vsel %vm532, %v3315, 0
        %v3525 = vsel %vm532, %v3316, 0
        %v3528 = vsel %vm532, %v3317, 0
        %v3531 = vsel %vm532, %v3318, 0
        %v3534 = vsel %vm532, %v3319, 0
        %v3537 = vsel %vm532, %v3320, 0
        %v3540 = vsel %vm532, %v3321, 0
        %v3543 = vsel %vm532, %v3322, 0
        %v3546 = vsel %vm532, %v3323, 0
        %v3549 = vsel %vm532, %v3324, 0
        %v3552 = vsel %vm532, %v3325, 0
        %v3555 = vsel %vm532, %v3326, 0
        %v3558 = vsel %vm532, %v3327, 0
        %v3561 = vsel %vm532, %v3328, 0
        %v3564 = vsel %vm532, %v3329, 0
        %v3567 = vsel %vm532, %v3330, 0
        %v3570 = vsel %vm532, %v3331, 0
        %v3573 = vsel %vm532, %v3332, 0
        %v3576 = vsel %vm532, %v3333, 0
        %v3579 = vsel %vm532, %v3334, 0
        %v3582 = vsel %vm532, %v3335, 0
        %v3585 = vsel %vm532, %v3336, 0
        %v3588 = vsel %vm532, %v3337, 0
        %v3591 = vsel %vm532, %v3338, 0
        %v3594 = vsel %vm532, %v3339, 0
        %v3597 = vsel %vm532, %v3340, 0
        %v3600 = vsel %vm532, %v3341, 0
        %v3603 = vsel %vm532, %v3342, 0
        %v3606 = vsel %vm532, %v3343, 0
        %v3609 = vsel %vm532, %v3344, 0
        %v3612 = vsel %vm532, %v3345, 0
        %v3615 = vsel %vm532, %v3346, 0
        %v3618 = vsel %vm532, %v3347, 0
        %v3621 = vsel %vm532, %v3348, 0
        %v3624 = vsel %vm532, %v3349, 0
        %v3627 = vsel %vm532, %v3350, 0
        %v3630 = vsel %vm532, %v3351, 0
        %v3633 = vsel %vm532, %v3352, 0
        %v3636 = vsel %vm532, %v3353, 0
        %v3639 = vsel %vm532, %v3354, 0
        %v3642 = vsel %vm532, %v3355, 0
        %v3645 = vsel %vm532, %v3356, 0
        %v3648 = vsel %vm532, %v3357, 0
        %v3651 = vsel %vm532, %v3358, 0
        %v3654 = vsel %vm532, %v3359, 0
        %v3657 = vsel %vm532, %v3360, 0
        %v3660 = vsel %vm532, %v3361, 0
        %v3663 = vsel %vm532, %v3362, 0
        %v3666 = vsel %vm532, %v3363, 0
        %v3669 = vsel %vm532, %v3364, 0
        %v3672 = vsel %vm532, %v3365, 0
        %v3675 = vsel %vm532, %v3366, 0
        %v3678 = vsel %vm532, %v3367, 0
        %v3681 = vsel %vm532, %v3368, 0
        %v3684 = vsel %vm532, %v3369, 0
        %v3687 = vsel %vm532, %v3370, 0
        %v3690 = vsel %vm532, %v3371, 0
        %v3693 = vsel %vm532, %v3372, 0
        %v3696 = vsel %vm532, %v3373, 0
        %v3699 = vsel %vm532, %v3374, 0
        %v3702 = vsel %vm532, %v3375, 0
        %v3705 = vsel %vm532, %v3376, 0
        %v3708 = vsel %vm532, %v3377, 0
        %v3711 = vsel %vm532, %v3378, 0
        %v3714 = vsel %vm532, %v3379, 0
        %v3717 = vsel %vm532, %v3380, 0
        %v3720 = vsel %vm532, %v3381, 0
        %v3723 = vsel %vm532, %v3382, 0
        %v3726 = vsel %vm532, %v3383, 0
        %v3729 = vsel %vm532, %v3384, 0
        %v3732 = vsel %vm532, %v3385, 0
        %v3735 = vsel %vm532, %v3386, 0
        %v3738 = vsel %vm532, %v3387, 0
        %v3741 = vsel %vm532, %v3388, 0
        %v3744 = vsel %vm532, %v3389, 0
        %v3747 = vsel %vm532, %v3390, 0
        %v3750 = vsel %vm532, %v3391, 0
        %v3753 = vsel %vm532, %v3392, 0
        %v3756 = vsel %vm532, %v3393, 0
        %v3759 = vsel %vm532, %v3394, 0
        %v3762 = vsel %vm532, %v3395, 0
        %v3765 = vsel %vm532, %v3396, 0
        %v3768 = vsel %vm532, %v3397, 0
        %v3771 = vsel %vm532, %v3398, 0
        %v3774 = vsel %vm532, %v3399, 0
        %v3777 = vsel %vm532, %v3400, 0
        %v3780 = vsel %vm532, %v3401, 0
        %v3783 = vsel %vm532, %v3402, 0
        %v3786 = vsel %vm532, %v3403, 0
        %3788 = vmatpush.msra.mxu0 0.0
        %3789 = vmatpush.msra.mxu0 0.0
        %3790 = vmatpush.msra.mxu0 0.0
        %3791 = vmatpush.msra.mxu0 0.0
        %3792 = vmatpush.msra.mxu0 0.0
        %3793 = vmatpush.msra.mxu0 0.0
        %3794 = vmatpush.msra.mxu0 0.0
        %3795 = vmatpush.msra.mxu0 0.0
        %3796 = vmatpush.msra.mxu0 0.0
        %3797 = vmatpush.msra.mxu0 0.0
        %3798 = vmatpush.msra.mxu0 0.0
        %3799 = vmatpush.msra.mxu0 %v919
        %3800 = vmatpush.msra.mxu0 %v402
        %3801 = vmatpush.msra.mxu0 %v401
        %3802 = vmatpush.msra.mxu0 %v400
        %3803 = vmatpush.msra.mxu0 %v399
        %3804 = vmatmul.f32.gmra.mxu0 %v3405
        %v3805 = vpop.f32.mrf.mxu0
        %v3806 = vadd.f32 0.0, %v3805
        %3807 = vmatmul.f32.gmra.mxu0 %v3408
        %v3808 = vpop.f32.mrf.mxu0
        %v3809 = vadd.f32 0.0, %v3808
        %3810 = vmatmul.f32.gmra.mxu0 %v3411
        %v3811 = vpop.f32.mrf.mxu0
        %v3812 = vadd.f32 0.0, %v3811
        %3813 = vmatmul.f32.gmra.mxu0 %v3414
        %v3814 = vpop.f32.mrf.mxu0
        %v3815 = vadd.f32 0.0, %v3814
        %3816 = vmatmul.f32.gmra.mxu0 %v3417
        %v3817 = vpop.f32.mrf.mxu0
        %v3818 = vadd.f32 0.0, %v3817
        %3819 = vmatmul.f32.gmra.mxu0 %v3420
        %v3820 = vpop.f32.mrf.mxu0
        %v3821 = vadd.f32 0.0, %v3820
        %3822 = vmatmul.f32.gmra.mxu0 %v3423
        %v3823 = vpop.f32.mrf.mxu0
        %v3824 = vadd.f32 0.0, %v3823
        %3825 = vmatmul.f32.gmra.mxu0 %v3426
        %v3826 = vpop.f32.mrf.mxu0
        %v3827 = vadd.f32 0.0, %v3826
        %3828 = vmatmul.f32.gmra.mxu0 %v3429
        %v3829 = vpop.f32.mrf.mxu0
        %v3830 = vadd.f32 0.0, %v3829
        %3831 = vmatmul.f32.gmra.mxu0 %v3432
        %v3832 = vpop.f32.mrf.mxu0
        %v3833 = vadd.f32 0.0, %v3832
        %3834 = vmatmul.f32.gmra.mxu0 %v3435
        %v3835 = vpop.f32.mrf.mxu0
        %v3836 = vadd.f32 0.0, %v3835
        %3837 = vmatmul.f32.gmra.mxu0 %v3438
        %v3838 = vpop.f32.mrf.mxu0
        %v3839 = vadd.f32 0.0, %v3838
        %3840 = vmatmul.f32.gmra.mxu0 %v3441
        %v3841 = vpop.f32.mrf.mxu0
        %v3842 = vadd.f32 0.0, %v3841
        %3843 = vmatmul.f32.gmra.mxu0 %v3444
        %v3844 = vpop.f32.mrf.mxu0
        %v3845 = vadd.f32 0.0, %v3844
        %3846 = vmatmul.f32.gmra.mxu0 %v3447
        %v3847 = vpop.f32.mrf.mxu0
        %v3848 = vadd.f32 0.0, %v3847
        %3849 = vmatmul.f32.gmra.mxu0 %v3450
        %v3850 = vpop.f32.mrf.mxu0
        %v3851 = vadd.f32 0.0, %v3850
        %3852 = vmatmul.f32.gmra.mxu0 %v3453
        %v3853 = vpop.f32.mrf.mxu0
        %v3854 = vadd.f32 0.0, %v3853
        %3855 = vmatmul.f32.gmra.mxu0 %v3456
        %v3856 = vpop.f32.mrf.mxu0
        %v3857 = vadd.f32 0.0, %v3856
        %3858 = vmatmul.f32.gmra.mxu0 %v3459
        %v3859 = vpop.f32.mrf.mxu0
        %v3860 = vadd.f32 0.0, %v3859
        %3861 = vmatmul.f32.gmra.mxu0 %v3462
        %v3862 = vpop.f32.mrf.mxu0
        %v3863 = vadd.f32 0.0, %v3862
        %3864 = vmatmul.f32.gmra.mxu0 %v3465
        %v3865 = vpop.f32.mrf.mxu0
        %v3866 = vadd.f32 0.0, %v3865
        %3867 = vmatmul.f32.gmra.mxu0 %v3468
        %v3868 = vpop.f32.mrf.mxu0
        %v3869 = vadd.f32 0.0, %v3868
        %3870 = vmatmul.f32.gmra.mxu0 %v3471
        %v3871 = vpop.f32.mrf.mxu0
        %v3872 = vadd.f32 0.0, %v3871
        %3873 = vmatmul.f32.gmra.mxu0 %v3474
        %v3874 = vpop.f32.mrf.mxu0
        %v3875 = vadd.f32 0.0, %v3874
        %3876 = vmatmul.f32.gmra.mxu0 %v3477
        %v3877 = vpop.f32.mrf.mxu0
        %v3878 = vadd.f32 0.0, %v3877
        %3879 = vmatmul.f32.gmra.mxu0 %v3480
        %v3880 = vpop.f32.mrf.mxu0
        %v3881 = vadd.f32 0.0, %v3880
        %3882 = vmatmul.f32.gmra.mxu0 %v3483
        %v3883 = vpop.f32.mrf.mxu0
        %v3884 = vadd.f32 0.0, %v3883
        %3885 = vmatmul.f32.gmra.mxu0 %v3486
        %v3886 = vpop.f32.mrf.mxu0
        %v3887 = vadd.f32 0.0, %v3886
        %3888 = vmatmul.f32.gmra.mxu0 %v3489
        %v3889 = vpop.f32.mrf.mxu0
        %v3890 = vadd.f32 0.0, %v3889
        %3891 = vmatmul.f32.gmra.mxu0 %v3492
        %v3892 = vpop.f32.mrf.mxu0
        %v3893 = vadd.f32 0.0, %v3892
        %3894 = vmatmul.f32.gmra.mxu0 %v3495
        %v3895 = vpop.f32.mrf.mxu0
        %v3896 = vadd.f32 0.0, %v3895
        %3897 = vmatmul.f32.gmra.mxu0 %v3498
        %v3898 = vpop.f32.mrf.mxu0
        %v3899 = vadd.f32 0.0, %v3898
        %3900 = vmatmul.f32.gmra.mxu0 %v3501
        %v3901 = vpop.f32.mrf.mxu0
        %v3902 = vadd.f32 0.0, %v3901
        %3903 = vmatmul.f32.gmra.mxu0 %v3504
        %v3904 = vpop.f32.mrf.mxu0
        %v3905 = vadd.f32 0.0, %v3904
        %3906 = vmatmul.f32.gmra.mxu0 %v3507
        %v3907 = vpop.f32.mrf.mxu0
        %v3908 = vadd.f32 0.0, %v3907
        %3909 = vmatmul.f32.gmra.mxu0 %v3510
        %v3910 = vpop.f32.mrf.mxu0
        %v3911 = vadd.f32 0.0, %v3910
        %3912 = vmatmul.f32.gmra.mxu0 %v3513
        %v3913 = vpop.f32.mrf.mxu0
        %v3914 = vadd.f32 0.0, %v3913
        %3915 = vmatmul.f32.gmra.mxu0 %v3516
        %v3916 = vpop.f32.mrf.mxu0
        %v3917 = vadd.f32 0.0, %v3916
        %3918 = vmatmul.f32.gmra.mxu0 %v3519
        %v3919 = vpop.f32.mrf.mxu0
        %v3920 = vadd.f32 0.0, %v3919
        %3921 = vmatmul.f32.gmra.mxu0 %v3522
        %v3922 = vpop.f32.mrf.mxu0
        %v3923 = vadd.f32 0.0, %v3922
        %3924 = vmatmul.f32.gmra.mxu0 %v3525
        %v3925 = vpop.f32.mrf.mxu0
        %v3926 = vadd.f32 0.0, %v3925
        %3927 = vmatmul.f32.gmra.mxu0 %v3528
        %v3928 = vpop.f32.mrf.mxu0
        %v3929 = vadd.f32 0.0, %v3928
        %3930 = vmatmul.f32.gmra.mxu0 %v3531
        %v3931 = vpop.f32.mrf.mxu0
        %v3932 = vadd.f32 0.0, %v3931
        %3933 = vmatmul.f32.gmra.mxu0 %v3534
        %v3934 = vpop.f32.mrf.mxu0
        %v3935 = vadd.f32 0.0, %v3934
        %3936 = vmatmul.f32.gmra.mxu0 %v3537
        %v3937 = vpop.f32.mrf.mxu0
        %v3938 = vadd.f32 0.0, %v3937
        %3939 = vmatmul.f32.gmra.mxu0 %v3540
        %v3940 = vpop.f32.mrf.mxu0
        %v3941 = vadd.f32 0.0, %v3940
        %3942 = vmatmul.f32.gmra.mxu0 %v3543
        %v3943 = vpop.f32.mrf.mxu0
        %v3944 = vadd.f32 0.0, %v3943
        %3945 = vmatmul.f32.gmra.mxu0 %v3546
        %v3946 = vpop.f32.mrf.mxu0
        %v3947 = vadd.f32 0.0, %v3946
        %3948 = vmatmul.f32.gmra.mxu0 %v3549
        %v3949 = vpop.f32.mrf.mxu0
        %v3950 = vadd.f32 0.0, %v3949
        %3951 = vmatmul.f32.gmra.mxu0 %v3552
        %v3952 = vpop.f32.mrf.mxu0
        %v3953 = vadd.f32 0.0, %v3952
        %3954 = vmatmul.f32.gmra.mxu0 %v3555
        %v3955 = vpop.f32.mrf.mxu0
        %v3956 = vadd.f32 0.0, %v3955
        %3957 = vmatmul.f32.gmra.mxu0 %v3558
        %v3958 = vpop.f32.mrf.mxu0
        %v3959 = vadd.f32 0.0, %v3958
        %3960 = vmatmul.f32.gmra.mxu0 %v3561
        %v3961 = vpop.f32.mrf.mxu0
        %v3962 = vadd.f32 0.0, %v3961
        %3963 = vmatmul.f32.gmra.mxu0 %v3564
        %v3964 = vpop.f32.mrf.mxu0
        %v3965 = vadd.f32 0.0, %v3964
        %3966 = vmatmul.f32.gmra.mxu0 %v3567
        %v3967 = vpop.f32.mrf.mxu0
        %v3968 = vadd.f32 0.0, %v3967
        %3969 = vmatmul.f32.gmra.mxu0 %v3570
        %v3970 = vpop.f32.mrf.mxu0
        %v3971 = vadd.f32 0.0, %v3970
        %3972 = vmatmul.f32.gmra.mxu0 %v3573
        %v3973 = vpop.f32.mrf.mxu0
        %v3974 = vadd.f32 0.0, %v3973
        %3975 = vmatmul.f32.gmra.mxu0 %v3576
        %v3976 = vpop.f32.mrf.mxu0
        %v3977 = vadd.f32 0.0, %v3976
        %3978 = vmatmul.f32.gmra.mxu0 %v3579
        %v3979 = vpop.f32.mrf.mxu0
        %v3980 = vadd.f32 0.0, %v3979
        %3981 = vmatmul.f32.gmra.mxu0 %v3582
        %v3982 = vpop.f32.mrf.mxu0
        %v3983 = vadd.f32 0.0, %v3982
        %3984 = vmatmul.f32.gmra.mxu0 %v3585
        %v3985 = vpop.f32.mrf.mxu0
        %v3986 = vadd.f32 0.0, %v3985
        %3987 = vmatmul.f32.gmra.mxu0 %v3588
        %v3988 = vpop.f32.mrf.mxu0
        %v3989 = vadd.f32 0.0, %v3988
        %3990 = vmatmul.f32.gmra.mxu0 %v3591
        %v3991 = vpop.f32.mrf.mxu0
        %v3992 = vadd.f32 0.0, %v3991
        %3993 = vmatmul.f32.gmra.mxu0 %v3594
        %v3994 = vpop.f32.mrf.mxu0
        %v3995 = vadd.f32 0.0, %v3994
        %3996 = vmatmul.f32.gmra.mxu0 %v3597
        %v3997 = vpop.f32.mrf.mxu0
        %v3998 = vadd.f32 0.0, %v3997
        %3999 = vmatmul.f32.gmra.mxu0 %v3600
        %v4000 = vpop.f32.mrf.mxu0
        %v4001 = vadd.f32 0.0, %v4000
        %4002 = vmatmul.f32.gmra.mxu0 %v3603
        %v4003 = vpop.f32.mrf.mxu0
        %v4004 = vadd.f32 0.0, %v4003
        %4005 = vmatmul.f32.gmra.mxu0 %v3606
        %v4006 = vpop.f32.mrf.mxu0
        %v4007 = vadd.f32 0.0, %v4006
        %4008 = vmatmul.f32.gmra.mxu0 %v3609
        %v4009 = vpop.f32.mrf.mxu0
        %v4010 = vadd.f32 0.0, %v4009
        %4011 = vmatmul.f32.gmra.mxu0 %v3612
        %v4012 = vpop.f32.mrf.mxu0
        %v4013 = vadd.f32 0.0, %v4012
        %4014 = vmatmul.f32.gmra.mxu0 %v3615
        %v4015 = vpop.f32.mrf.mxu0
        %v4016 = vadd.f32 0.0, %v4015
        %4017 = vmatmul.f32.gmra.mxu0 %v3618
        %v4018 = vpop.f32.mrf.mxu0
        %v4019 = vadd.f32 0.0, %v4018
        %4020 = vmatmul.f32.gmra.mxu0 %v3621
        %v4021 = vpop.f32.mrf.mxu0
        %v4022 = vadd.f32 0.0, %v4021
        %4023 = vmatmul.f32.gmra.mxu0 %v3624
        %v4024 = vpop.f32.mrf.mxu0
        %v4025 = vadd.f32 0.0, %v4024
        %4026 = vmatmul.f32.gmra.mxu0 %v3627
        %v4027 = vpop.f32.mrf.mxu0
        %v4028 = vadd.f32 0.0, %v4027
        %4029 = vmatmul.f32.gmra.mxu0 %v3630
        %v4030 = vpop.f32.mrf.mxu0
        %v4031 = vadd.f32 0.0, %v4030
        %4032 = vmatmul.f32.gmra.mxu0 %v3633
        %v4033 = vpop.f32.mrf.mxu0
        %v4034 = vadd.f32 0.0, %v4033
        %4035 = vmatmul.f32.gmra.mxu0 %v3636
        %v4036 = vpop.f32.mrf.mxu0
        %v4037 = vadd.f32 0.0, %v4036
        %4038 = vmatmul.f32.gmra.mxu0 %v3639
        %v4039 = vpop.f32.mrf.mxu0
        %v4040 = vadd.f32 0.0, %v4039
        %4041 = vmatmul.f32.gmra.mxu0 %v3642
        %v4042 = vpop.f32.mrf.mxu0
        %v4043 = vadd.f32 0.0, %v4042
        %4044 = vmatmul.f32.gmra.mxu0 %v3645
        %v4045 = vpop.f32.mrf.mxu0
        %v4046 = vadd.f32 0.0, %v4045
        %4047 = vmatmul.f32.gmra.mxu0 %v3648
        %v4048 = vpop.f32.mrf.mxu0
        %v4049 = vadd.f32 0.0, %v4048
        %4050 = vmatmul.f32.gmra.mxu0 %v3651
        %v4051 = vpop.f32.mrf.mxu0
        %v4052 = vadd.f32 0.0, %v4051
        %4053 = vmatmul.f32.gmra.mxu0 %v3654
        %v4054 = vpop.f32.mrf.mxu0
        %v4055 = vadd.f32 0.0, %v4054
        %4056 = vmatmul.f32.gmra.mxu0 %v3657
        %v4057 = vpop.f32.mrf.mxu0
        %v4058 = vadd.f32 0.0, %v4057
        %4059 = vmatmul.f32.gmra.mxu0 %v3660
        %v4060 = vpop.f32.mrf.mxu0
        %v4061 = vadd.f32 0.0, %v4060
        %4062 = vmatmul.f32.gmra.mxu0 %v3663
        %v4063 = vpop.f32.mrf.mxu0
        %v4064 = vadd.f32 0.0, %v4063
        %4065 = vmatmul.f32.gmra.mxu0 %v3666
        %v4066 = vpop.f32.mrf.mxu0
        %v4067 = vadd.f32 0.0, %v4066
        %4068 = vmatmul.f32.gmra.mxu0 %v3669
        %v4069 = vpop.f32.mrf.mxu0
        %v4070 = vadd.f32 0.0, %v4069
        %4071 = vmatmul.f32.gmra.mxu0 %v3672
        %v4072 = vpop.f32.mrf.mxu0
        %v4073 = vadd.f32 0.0, %v4072
        %4074 = vmatmul.f32.gmra.mxu0 %v3675
        %v4075 = vpop.f32.mrf.mxu0
        %v4076 = vadd.f32 0.0, %v4075
        %4077 = vmatmul.f32.gmra.mxu0 %v3678
        %v4078 = vpop.f32.mrf.mxu0
        %v4079 = vadd.f32 0.0, %v4078
        %4080 = vmatmul.f32.gmra.mxu0 %v3681
        %v4081 = vpop.f32.mrf.mxu0
        %v4082 = vadd.f32 0.0, %v4081
        %4083 = vmatmul.f32.gmra.mxu0 %v3684
        %v4084 = vpop.f32.mrf.mxu0
        %v4085 = vadd.f32 0.0, %v4084
        %4086 = vmatmul.f32.gmra.mxu0 %v3687
        %v4087 = vpop.f32.mrf.mxu0
        %v4088 = vadd.f32 0.0, %v4087
        %4089 = vmatmul.f32.gmra.mxu0 %v3690
        %v4090 = vpop.f32.mrf.mxu0
        %v4091 = vadd.f32 0.0, %v4090
        %4092 = vmatmul.f32.gmra.mxu0 %v3693
        %v4093 = vpop.f32.mrf.mxu0
        %v4094 = vadd.f32 0.0, %v4093
        %4095 = vmatmul.f32.gmra.mxu0 %v3696
        %v4096 = vpop.f32.mrf.mxu0
        %v4097 = vadd.f32 0.0, %v4096
        %4098 = vmatmul.f32.gmra.mxu0 %v3699
        %v4099 = vpop.f32.mrf.mxu0
        %v4100 = vadd.f32 0.0, %v4099
        %4101 = vmatmul.f32.gmra.mxu0 %v3702
        %v4102 = vpop.f32.mrf.mxu0
        %v4103 = vadd.f32 0.0, %v4102
        %4104 = vmatmul.f32.gmra.mxu0 %v3705
        %v4105 = vpop.f32.mrf.mxu0
        %v4106 = vadd.f32 0.0, %v4105
        %4107 = vmatmul.f32.gmra.mxu0 %v3708
        %v4108 = vpop.f32.mrf.mxu0
        %v4109 = vadd.f32 0.0, %v4108
        %4110 = vmatmul.f32.gmra.mxu0 %v3711
        %v4111 = vpop.f32.mrf.mxu0
        %v4112 = vadd.f32 0.0, %v4111
        %4113 = vmatmul.f32.gmra.mxu0 %v3714
        %v4114 = vpop.f32.mrf.mxu0
        %v4115 = vadd.f32 0.0, %v4114
        %4116 = vmatmul.f32.gmra.mxu0 %v3717
        %v4117 = vpop.f32.mrf.mxu0
        %v4118 = vadd.f32 0.0, %v4117
        %4119 = vmatmul.f32.gmra.mxu0 %v3720
        %v4120 = vpop.f32.mrf.mxu0
        %v4121 = vadd.f32 0.0, %v4120
        %4122 = vmatmul.f32.gmra.mxu0 %v3723
        %v4123 = vpop.f32.mrf.mxu0
        %v4124 = vadd.f32 0.0, %v4123
        %4125 = vmatmul.f32.gmra.mxu0 %v3726
        %v4126 = vpop.f32.mrf.mxu0
        %v4127 = vadd.f32 0.0, %v4126
        %4128 = vmatmul.f32.gmra.mxu0 %v3729
        %v4129 = vpop.f32.mrf.mxu0
        %v4130 = vadd.f32 0.0, %v4129
        %4131 = vmatmul.f32.gmra.mxu0 %v3732
        %v4132 = vpop.f32.mrf.mxu0
        %v4133 = vadd.f32 0.0, %v4132
        %4134 = vmatmul.f32.gmra.mxu0 %v3735
        %v4135 = vpop.f32.mrf.mxu0
        %v4136 = vadd.f32 0.0, %v4135
        %4137 = vmatmul.f32.gmra.mxu0 %v3738
        %v4138 = vpop.f32.mrf.mxu0
        %v4139 = vadd.f32 0.0, %v4138
        %4140 = vmatmul.f32.gmra.mxu0 %v3741
        %v4141 = vpop.f32.mrf.mxu0
        %v4142 = vadd.f32 0.0, %v4141
        %4143 = vmatmul.f32.gmra.mxu0 %v3744
        %v4144 = vpop.f32.mrf.mxu0
        %v4145 = vadd.f32 0.0, %v4144
        %4146 = vmatmul.f32.gmra.mxu0 %v3747
        %v4147 = vpop.f32.mrf.mxu0
        %v4148 = vadd.f32 0.0, %v4147
        %4149 = vmatmul.f32.gmra.mxu0 %v3750
        %v4150 = vpop.f32.mrf.mxu0
        %v4151 = vadd.f32 0.0, %v4150
        %4152 = vmatmul.f32.gmra.mxu0 %v3753
        %v4153 = vpop.f32.mrf.mxu0
        %v4154 = vadd.f32 0.0, %v4153
        %4155 = vmatmul.f32.gmra.mxu0 %v3756
        %v4156 = vpop.f32.mrf.mxu0
        %v4157 = vadd.f32 0.0, %v4156
        %4158 = vmatmul.f32.gmra.mxu0 %v3759
        %v4159 = vpop.f32.mrf.mxu0
        %v4160 = vadd.f32 0.0, %v4159
        %4161 = vmatmul.f32.gmra.mxu0 %v3762
        %v4162 = vpop.f32.mrf.mxu0
        %v4163 = vadd.f32 0.0, %v4162
        %4164 = vmatmul.f32.gmra.mxu0 %v3765
        %v4165 = vpop.f32.mrf.mxu0
        %v4166 = vadd.f32 0.0, %v4165
        %4167 = vmatmul.f32.gmra.mxu0 %v3768
        %v4168 = vpop.f32.mrf.mxu0
        %v4169 = vadd.f32 0.0, %v4168
        %4170 = vmatmul.f32.gmra.mxu0 %v3771
        %v4171 = vpop.f32.mrf.mxu0
        %v4172 = vadd.f32 0.0, %v4171
        %4173 = vmatmul.f32.gmra.mxu0 %v3774
        %v4174 = vpop.f32.mrf.mxu0
        %v4175 = vadd.f32 0.0, %v4174
        %4176 = vmatmul.f32.gmra.mxu0 %v3777
        %v4177 = vpop.f32.mrf.mxu0
        %v4178 = vadd.f32 0.0, %v4177
        %4179 = vmatmul.f32.gmra.mxu0 %v3780
        %v4180 = vpop.f32.mrf.mxu0
        %v4181 = vadd.f32 0.0, %v4180
        %4182 = vmatmul.f32.gmra.mxu0 %v3783
        %v4183 = vpop.f32.mrf.mxu0
        %v4184 = vadd.f32 0.0, %v4183
        %4185 = vmatmul.f32.gmra.mxu0 %v3786
        %v4186 = vpop.f32.mrf.mxu0
        %v4187 = vadd.f32 0.0, %v4186
        %4188 = vdwg.mxu0
        %v4189 = vmax.f32 %v2893, %v3806
        %v4190 = vmax.f32 %v2896, %v3809
        %v4191 = vmax.f32 %v2899, %v3812
        %v4192 = vmax.f32 %v2902, %v3815
        %v4193 = vmax.f32 %v2905, %v3818
        %v4194 = vmax.f32 %v2908, %v3821
        %v4195 = vmax.f32 %v2911, %v3824
        %v4196 = vmax.f32 %v2914, %v3827
        %v4197 = vmax.f32 %v2917, %v3830
        %v4198 = vmax.f32 %v2920, %v3833
        %v4199 = vmax.f32 %v2923, %v3836
        %v4200 = vmax.f32 %v2926, %v3839
        %v4201 = vmax.f32 %v2929, %v3842
        %v4202 = vmax.f32 %v2932, %v3845
        %v4203 = vmax.f32 %v2935, %v3848
        %v4204 = vmax.f32 %v2938, %v3851
        %v4205 = vmax.f32 %v2941, %v3854
        %v4206 = vmax.f32 %v2944, %v3857
        %v4207 = vmax.f32 %v2947, %v3860
        %v4208 = vmax.f32 %v2950, %v3863
        %v4209 = vmax.f32 %v2953, %v3866
        %v4210 = vmax.f32 %v2956, %v3869
        %v4211 = vmax.f32 %v2959, %v3872
        %v4212 = vmax.f32 %v2962, %v3875
        %v4213 = vmax.f32 %v2965, %v3878
        %v4214 = vmax.f32 %v2968, %v3881
        %v4215 = vmax.f32 %v2971, %v3884
        %v4216 = vmax.f32 %v2974, %v3887
        %v4217 = vmax.f32 %v2977, %v3890
        %v4218 = vmax.f32 %v2980, %v3893
        %v4219 = vmax.f32 %v2983, %v3896
        %v4220 = vmax.f32 %v2986, %v3899
        %v4221 = vmax.f32 %v2989, %v3902
        %v4222 = vmax.f32 %v2992, %v3905
        %v4223 = vmax.f32 %v2995, %v3908
        %v4224 = vmax.f32 %v2998, %v3911
        %v4225 = vmax.f32 %v3001, %v3914
        %v4226 = vmax.f32 %v3004, %v3917
        %v4227 = vmax.f32 %v3007, %v3920
        %v4228 = vmax.f32 %v3010, %v3923
        %v4229 = vmax.f32 %v3013, %v3926
        %v4230 = vmax.f32 %v3016, %v3929
        %v4231 = vmax.f32 %v3019, %v3932
        %v4232 = vmax.f32 %v3022, %v3935
        %v4233 = vmax.f32 %v3025, %v3938
        %v4234 = vmax.f32 %v3028, %v3941
        %v4235 = vmax.f32 %v3031, %v3944
        %v4236 = vmax.f32 %v3034, %v3947
        %v4237 = vmax.f32 %v3037, %v3950
        %v4238 = vmax.f32 %v3040, %v3953
        %v4239 = vmax.f32 %v3043, %v3956
        %v4240 = vmax.f32 %v3046, %v3959
        %v4241 = vmax.f32 %v3049, %v3962
        %v4242 = vmax.f32 %v3052, %v3965
        %v4243 = vmax.f32 %v3055, %v3968
        %v4244 = vmax.f32 %v3058, %v3971
        %v4245 = vmax.f32 %v3061, %v3974
        %v4246 = vmax.f32 %v3064, %v3977
        %v4247 = vmax.f32 %v3067, %v3980
        %v4248 = vmax.f32 %v3070, %v3983
        %v4249 = vmax.f32 %v3073, %v3986
        %v4250 = vmax.f32 %v3076, %v3989
        %v4251 = vmax.f32 %v3079, %v3992
        %v4252 = vmax.f32 %v3082, %v3995
        %v4253 = vmax.f32 %v3085, %v3998
        %v4254 = vmax.f32 %v3088, %v4001
        %v4255 = vmax.f32 %v3091, %v4004
        %v4256 = vmax.f32 %v3094, %v4007
        %v4257 = vmax.f32 %v3097, %v4010
        %v4258 = vmax.f32 %v3100, %v4013
        %v4259 = vmax.f32 %v3103, %v4016
        %v4260 = vmax.f32 %v3106, %v4019
        %v4261 = vmax.f32 %v3109, %v4022
        %v4262 = vmax.f32 %v3112, %v4025
        %v4263 = vmax.f32 %v3115, %v4028
        %v4264 = vmax.f32 %v3118, %v4031
        %v4265 = vmax.f32 %v3121, %v4034
        %v4266 = vmax.f32 %v3124, %v4037
        %v4267 = vmax.f32 %v3127, %v4040
        %v4268 = vmax.f32 %v3130, %v4043
        %v4269 = vmax.f32 %v3133, %v4046
        %v4270 = vmax.f32 %v3136, %v4049
        %v4271 = vmax.f32 %v3139, %v4052
        %v4272 = vmax.f32 %v3142, %v4055
        %v4273 = vmax.f32 %v3145, %v4058
        %v4274 = vmax.f32 %v3148, %v4061
        %v4275 = vmax.f32 %v3151, %v4064
        %v4276 = vmax.f32 %v3154, %v4067
        %v4277 = vmax.f32 %v3157, %v4070
        %v4278 = vmax.f32 %v3160, %v4073
        %v4279 = vmax.f32 %v3163, %v4076
        %v4280 = vmax.f32 %v3166, %v4079
        %v4281 = vmax.f32 %v3169, %v4082
        %v4282 = vmax.f32 %v3172, %v4085
        %v4283 = vmax.f32 %v3175, %v4088
        %v4284 = vmax.f32 %v3178, %v4091
        %v4285 = vmax.f32 %v3181, %v4094
        %v4286 = vmax.f32 %v3184, %v4097
        %v4287 = vmax.f32 %v3187, %v4100
        %v4288 = vmax.f32 %v3190, %v4103
        %v4289 = vmax.f32 %v3193, %v4106
        %v4290 = vmax.f32 %v3196, %v4109
        %v4291 = vmax.f32 %v3199, %v4112
        %v4292 = vmax.f32 %v3202, %v4115
        %v4293 = vmax.f32 %v3205, %v4118
        %v4294 = vmax.f32 %v3208, %v4121
        %v4295 = vmax.f32 %v3211, %v4124
        %v4296 = vmax.f32 %v3214, %v4127
        %v4297 = vmax.f32 %v3217, %v4130
        %v4298 = vmax.f32 %v3220, %v4133
        %v4299 = vmax.f32 %v3223, %v4136
        %v4300 = vmax.f32 %v3226, %v4139
        %v4301 = vmax.f32 %v3229, %v4142
        %v4302 = vmax.f32 %v3232, %v4145
        %v4303 = vmax.f32 %v3235, %v4148
        %v4304 = vmax.f32 %v3238, %v4151
        %v4305 = vmax.f32 %v3241, %v4154
        %v4306 = vmax.f32 %v3244, %v4157
        %v4307 = vmax.f32 %v3247, %v4160
        %v4308 = vmax.f32 %v3250, %v4163
        %v4309 = vmax.f32 %v3253, %v4166
        %v4310 = vmax.f32 %v3256, %v4169
        %v4311 = vmax.f32 %v3259, %v4172
        %v4312 = vmax.f32 %v3262, %v4175
        %v4313 = vmax.f32 %v3265, %v4178
        %v4314 = vmax.f32 %v3268, %v4181
        %v4315 = vmax.f32 %v3271, %v4184
        %v4316 = vmax.f32 %v3274, %v4187
        %v4317 = vmax.f32 %v2235, %v4189
        %v4318 = vmax.f32 %v2236, %v4190
        %v4319 = vmax.f32 %v2237, %v4191
        %v4320 = vmax.f32 %v2238, %v4192
        %v4321 = vmax.f32 %v2239, %v4193
        %v4322 = vmax.f32 %v2240, %v4194
        %v4323 = vmax.f32 %v2241, %v4195
        %v4324 = vmax.f32 %v2242, %v4196
        %v4325 = vmax.f32 %v2243, %v4197
        %v4326 = vmax.f32 %v2244, %v4198
        %v4327 = vmax.f32 %v2245, %v4199
        %v4328 = vmax.f32 %v2246, %v4200
        %v4329 = vmax.f32 %v2247, %v4201
        %v4330 = vmax.f32 %v2248, %v4202
        %v4331 = vmax.f32 %v2249, %v4203
        %v4332 = vmax.f32 %v2250, %v4204
        %v4333 = vmax.f32 %v2251, %v4205
        %v4334 = vmax.f32 %v2252, %v4206
        %v4335 = vmax.f32 %v2253, %v4207
        %v4336 = vmax.f32 %v2254, %v4208
        %v4337 = vmax.f32 %v2255, %v4209
        %v4338 = vmax.f32 %v2256, %v4210
        %v4339 = vmax.f32 %v2257, %v4211
        %v4340 = vmax.f32 %v2258, %v4212
        %v4341 = vmax.f32 %v2259, %v4213
        %v4342 = vmax.f32 %v2260, %v4214
        %v4343 = vmax.f32 %v2261, %v4215
        %v4344 = vmax.f32 %v2262, %v4216
        %v4345 = vmax.f32 %v2263, %v4217
        %v4346 = vmax.f32 %v2264, %v4218
        %v4347 = vmax.f32 %v2265, %v4219
        %v4348 = vmax.f32 %v2266, %v4220
        %v4349 = vmax.f32 %v2267, %v4221
        %v4350 = vmax.f32 %v2268, %v4222
        %v4351 = vmax.f32 %v2269, %v4223
        %v4352 = vmax.f32 %v2270, %v4224
        %v4353 = vmax.f32 %v2271, %v4225
        %v4354 = vmax.f32 %v2272, %v4226
        %v4355 = vmax.f32 %v2273, %v4227
        %v4356 = vmax.f32 %v2274, %v4228
        %v4357 = vmax.f32 %v2275, %v4229
        %v4358 = vmax.f32 %v2276, %v4230
        %v4359 = vmax.f32 %v2277, %v4231
        %v4360 = vmax.f32 %v2278, %v4232
        %v4361 = vmax.f32 %v2279, %v4233
        %v4362 = vmax.f32 %v2280, %v4234
        %v4363 = vmax.f32 %v2281, %v4235
        %v4364 = vmax.f32 %v2282, %v4236
        %v4365 = vmax.f32 %v2283, %v4237
        %v4366 = vmax.f32 %v2284, %v4238
        %v4367 = vmax.f32 %v2285, %v4239
        %v4368 = vmax.f32 %v2286, %v4240
        %v4369 = vmax.f32 %v2287, %v4241
        %v4370 = vmax.f32 %v2288, %v4242
        %v4371 = vmax.f32 %v2289, %v4243
        %v4372 = vmax.f32 %v2290, %v4244
        %v4373 = vmax.f32 %v2291, %v4245
        %v4374 = vmax.f32 %v2292, %v4246
        %v4375 = vmax.f32 %v2293, %v4247
        %v4376 = vmax.f32 %v2294, %v4248
        %v4377 = vmax.f32 %v2295, %v4249
        %v4378 = vmax.f32 %v2296, %v4250
        %v4379 = vmax.f32 %v2297, %v4251
        %v4380 = vmax.f32 %v2298, %v4252
        %v4381 = vmax.f32 %v2299, %v4253
        %v4382 = vmax.f32 %v2300, %v4254
        %v4383 = vmax.f32 %v2301, %v4255
        %v4384 = vmax.f32 %v2302, %v4256
        %v4385 = vmax.f32 %v2303, %v4257
        %v4386 = vmax.f32 %v2304, %v4258
        %v4387 = vmax.f32 %v2305, %v4259
        %v4388 = vmax.f32 %v2306, %v4260
        %v4389 = vmax.f32 %v2307, %v4261
        %v4390 = vmax.f32 %v2308, %v4262
        %v4391 = vmax.f32 %v2309, %v4263
        %v4392 = vmax.f32 %v2310, %v4264
        %v4393 = vmax.f32 %v2311, %v4265
        %v4394 = vmax.f32 %v2312, %v4266
        %v4395 = vmax.f32 %v2313, %v4267
        %v4396 = vmax.f32 %v2314, %v4268
        %v4397 = vmax.f32 %v2315, %v4269
        %v4398 = vmax.f32 %v2316, %v4270
        %v4399 = vmax.f32 %v2317, %v4271
        %v4400 = vmax.f32 %v2318, %v4272
        %v4401 = vmax.f32 %v2319, %v4273
        %v4402 = vmax.f32 %v2320, %v4274
        %v4403 = vmax.f32 %v2321, %v4275
        %v4404 = vmax.f32 %v2322, %v4276
        %v4405 = vmax.f32 %v2323, %v4277
        %v4406 = vmax.f32 %v2324, %v4278
        %v4407 = vmax.f32 %v2325, %v4279
        %v4408 = vmax.f32 %v2326, %v4280
        %v4409 = vmax.f32 %v2327, %v4281
        %v4410 = vmax.f32 %v2328, %v4282
        %v4411 = vmax.f32 %v2329, %v4283
        %v4412 = vmax.f32 %v2330, %v4284
        %v4413 = vmax.f32 %v2331, %v4285
        %v4414 = vmax.f32 %v2332, %v4286
        %v4415 = vmax.f32 %v2333, %v4287
        %v4416 = vmax.f32 %v2334, %v4288
        %v4417 = vmax.f32 %v2335, %v4289
        %v4418 = vmax.f32 %v2336, %v4290
        %v4419 = vmax.f32 %v2337, %v4291
        %v4420 = vmax.f32 %v2338, %v4292
        %v4421 = vmax.f32 %v2339, %v4293
        %v4422 = vmax.f32 %v2340, %v4294
        %v4423 = vmax.f32 %v2341, %v4295
        %v4424 = vmax.f32 %v2342, %v4296
        %v4425 = vmax.f32 %v2343, %v4297
        %v4426 = vmax.f32 %v2344, %v4298
        %v4427 = vmax.f32 %v2345, %v4299
        %v4428 = vmax.f32 %v2346, %v4300
        %v4429 = vmax.f32 %v2347, %v4301
        %v4430 = vmax.f32 %v2348, %v4302
        %v4431 = vmax.f32 %v2349, %v4303
        %v4432 = vmax.f32 %v2350, %v4304
        %v4433 = vmax.f32 %v2351, %v4305
        %v4434 = vmax.f32 %v2352, %v4306
        %v4435 = vmax.f32 %v2353, %v4307
        %v4436 = vmax.f32 %v2354, %v4308
        %v4437 = vmax.f32 %v2355, %v4309
        %v4438 = vmax.f32 %v2356, %v4310
        %v4439 = vmax.f32 %v2357, %v4311
        %v4440 = vmax.f32 %v2358, %v4312
        %v4441 = vmax.f32 %v2359, %v4313
        %v4442 = vmax.f32 %v2360, %v4314
        %v4443 = vmax.f32 %v2361, %v4315
        %v4444 = vmax.f32 %v2362, %v4316
        %v4445 = vld [vmem:[%s5] sm:$0x1]
        %v4447 = vperm.slane %v4445, 0
        %v4449 = vadd.f32 %v4317, %v4447
        %v4450 = vadd.f32 %v4318, %v4447
        %v4451 = vadd.f32 %v4319, %v4447
        %v4452 = vadd.f32 %v4320, %v4447
        %v4453 = vadd.f32 %v4321, %v4447
        %v4454 = vadd.f32 %v4322, %v4447
        %v4455 = vadd.f32 %v4323, %v4447
        %v4456 = vadd.f32 %v4324, %v4447
        %v4457 = vadd.f32 %v4325, %v4447
        %v4458 = vadd.f32 %v4326, %v4447
        %v4459 = vadd.f32 %v4327, %v4447
        %v4460 = vadd.f32 %v4328, %v4447
        %v4461 = vadd.f32 %v4329, %v4447
        %v4462 = vadd.f32 %v4330, %v4447
        %v4463 = vadd.f32 %v4331, %v4447
        %v4464 = vadd.f32 %v4332, %v4447
        %v4465 = vadd.f32 %v4333, %v4447
        %v4466 = vadd.f32 %v4334, %v4447
        %v4467 = vadd.f32 %v4335, %v4447
        %v4468 = vadd.f32 %v4336, %v4447
        %v4469 = vadd.f32 %v4337, %v4447
        %v4470 = vadd.f32 %v4338, %v4447
        %v4471 = vadd.f32 %v4339, %v4447
        %v4472 = vadd.f32 %v4340, %v4447
        %v4473 = vadd.f32 %v4341, %v4447
        %v4474 = vadd.f32 %v4342, %v4447
        %v4475 = vadd.f32 %v4343, %v4447
        %v4476 = vadd.f32 %v4344, %v4447
        %v4477 = vadd.f32 %v4345, %v4447
        %v4478 = vadd.f32 %v4346, %v4447
        %v4479 = vadd.f32 %v4347, %v4447
        %v4480 = vadd.f32 %v4348, %v4447
        %v4481 = vadd.f32 %v4349, %v4447
        %v4482 = vadd.f32 %v4350, %v4447
        %v4483 = vadd.f32 %v4351, %v4447
        %v4484 = vadd.f32 %v4352, %v4447
        %v4485 = vadd.f32 %v4353, %v4447
        %v4486 = vadd.f32 %v4354, %v4447
        %v4487 = vadd.f32 %v4355, %v4447
        %v4488 = vadd.f32 %v4356, %v4447
        %v4489 = vadd.f32 %v4357, %v4447
        %v4490 = vadd.f32 %v4358, %v4447
        %v4491 = vadd.f32 %v4359, %v4447
        %v4492 = vadd.f32 %v4360, %v4447
        %v4493 = vadd.f32 %v4361, %v4447
        %v4494 = vadd.f32 %v4362, %v4447
        %v4495 = vadd.f32 %v4363, %v4447
        %v4496 = vadd.f32 %v4364, %v4447
        %v4497 = vadd.f32 %v4365, %v4447
        %v4498 = vadd.f32 %v4366, %v4447
        %v4499 = vadd.f32 %v4367, %v4447
        %v4500 = vadd.f32 %v4368, %v4447
        %v4501 = vadd.f32 %v4369, %v4447
        %v4502 = vadd.f32 %v4370, %v4447
        %v4503 = vadd.f32 %v4371, %v4447
        %v4504 = vadd.f32 %v4372, %v4447
        %v4505 = vadd.f32 %v4373, %v4447
        %v4506 = vadd.f32 %v4374, %v4447
        %v4507 = vadd.f32 %v4375, %v4447
        %v4508 = vadd.f32 %v4376, %v4447
        %v4509 = vadd.f32 %v4377, %v4447
        %v4510 = vadd.f32 %v4378, %v4447
        %v4511 = vadd.f32 %v4379, %v4447
        %v4512 = vadd.f32 %v4380, %v4447
        %v4513 = vadd.f32 %v4381, %v4447
        %v4514 = vadd.f32 %v4382, %v4447
        %v4515 = vadd.f32 %v4383, %v4447
        %v4516 = vadd.f32 %v4384, %v4447
        %v4517 = vadd.f32 %v4385, %v4447
        %v4518 = vadd.f32 %v4386, %v4447
        %v4519 = vadd.f32 %v4387, %v4447
        %v4520 = vadd.f32 %v4388, %v4447
        %v4521 = vadd.f32 %v4389, %v4447
        %v4522 = vadd.f32 %v4390, %v4447
        %v4523 = vadd.f32 %v4391, %v4447
        %v4524 = vadd.f32 %v4392, %v4447
        %v4525 = vadd.f32 %v4393, %v4447
        %v4526 = vadd.f32 %v4394, %v4447
        %v4527 = vadd.f32 %v4395, %v4447
        %v4528 = vadd.f32 %v4396, %v4447
        %v4529 = vadd.f32 %v4397, %v4447
        %v4530 = vadd.f32 %v4398, %v4447
        %v4531 = vadd.f32 %v4399, %v4447
        %v4532 = vadd.f32 %v4400, %v4447
        %v4533 = vadd.f32 %v4401, %v4447
        %v4534 = vadd.f32 %v4402, %v4447
        %v4535 = vadd.f32 %v4403, %v4447
        %v4536 = vadd.f32 %v4404, %v4447
        %v4537 = vadd.f32 %v4405, %v4447
        %v4538 = vadd.f32 %v4406, %v4447
        %v4539 = vadd.f32 %v4407, %v4447
        %v4540 = vadd.f32 %v4408, %v4447
        %v4541 = vadd.f32 %v4409, %v4447
        %v4542 = vadd.f32 %v4410, %v4447
        %v4543 = vadd.f32 %v4411, %v4447
        %v4544 = vadd.f32 %v4412, %v4447
        %v4545 = vadd.f32 %v4413, %v4447
        %v4546 = vadd.f32 %v4414, %v4447
        %v4547 = vadd.f32 %v4415, %v4447
        %v4548 = vadd.f32 %v4416, %v4447
        %v4549 = vadd.f32 %v4417, %v4447
        %v4550 = vadd.f32 %v4418, %v4447
        %v4551 = vadd.f32 %v4419, %v4447
        %v4552 = vadd.f32 %v4420, %v4447
        %v4553 = vadd.f32 %v4421, %v4447
        %v4554 = vadd.f32 %v4422, %v4447
        %v4555 = vadd.f32 %v4423, %v4447
        %v4556 = vadd.f32 %v4424, %v4447
        %v4557 = vadd.f32 %v4425, %v4447
        %v4558 = vadd.f32 %v4426, %v4447
        %v4559 = vadd.f32 %v4427, %v4447
        %v4560 = vadd.f32 %v4428, %v4447
        %v4561 = vadd.f32 %v4429, %v4447
        %v4562 = vadd.f32 %v4430, %v4447
        %v4563 = vadd.f32 %v4431, %v4447
        %v4564 = vadd.f32 %v4432, %v4447
        %v4565 = vadd.f32 %v4433, %v4447
        %v4566 = vadd.f32 %v4434, %v4447
        %v4567 = vadd.f32 %v4435, %v4447
        %v4568 = vadd.f32 %v4436, %v4447
        %v4569 = vadd.f32 %v4437, %v4447
        %v4570 = vadd.f32 %v4438, %v4447
        %v4571 = vadd.f32 %v4439, %v4447
        %v4572 = vadd.f32 %v4440, %v4447
        %v4573 = vadd.f32 %v4441, %v4447
        %v4574 = vadd.f32 %v4442, %v4447
        %v4575 = vadd.f32 %v4443, %v4447
        %v4576 = vadd.f32 %v4444, %v4447
        %v4577 = vmax.f32 %v4449, 0.0
        %v4578 = vmax.f32 %v4450, 0.0
        %v4579 = vmax.f32 %v4451, 0.0
        %v4580 = vmax.f32 %v4452, 0.0
        %v4581 = vmax.f32 %v4453, 0.0
        %v4582 = vmax.f32 %v4454, 0.0
        %v4583 = vmax.f32 %v4455, 0.0
        %v4584 = vmax.f32 %v4456, 0.0
        %v4585 = vmax.f32 %v4457, 0.0
        %v4586 = vmax.f32 %v4458, 0.0
        %v4587 = vmax.f32 %v4459, 0.0
        %v4588 = vmax.f32 %v4460, 0.0
        %v4589 = vmax.f32 %v4461, 0.0
        %v4590 = vmax.f32 %v4462, 0.0
        %v4591 = vmax.f32 %v4463, 0.0
        %v4592 = vmax.f32 %v4464, 0.0
        %v4593 = vmax.f32 %v4465, 0.0
        %v4594 = vmax.f32 %v4466, 0.0
        %v4595 = vmax.f32 %v4467, 0.0
        %v4596 = vmax.f32 %v4468, 0.0
        %v4597 = vmax.f32 %v4469, 0.0
        %v4598 = vmax.f32 %v4470, 0.0
        %v4599 = vmax.f32 %v4471, 0.0
        %v4600 = vmax.f32 %v4472, 0.0
        %v4601 = vmax.f32 %v4473, 0.0
        %v4602 = vmax.f32 %v4474, 0.0
        %v4603 = vmax.f32 %v4475, 0.0
        %v4604 = vmax.f32 %v4476, 0.0
        %v4605 = vmax.f32 %v4477, 0.0
        %v4606 = vmax.f32 %v4478, 0.0
        %v4607 = vmax.f32 %v4479, 0.0
        %v4608 = vmax.f32 %v4480, 0.0
        %v4609 = vmax.f32 %v4481, 0.0
        %v4610 = vmax.f32 %v4482, 0.0
        %v4611 = vmax.f32 %v4483, 0.0
        %v4612 = vmax.f32 %v4484, 0.0
        %v4613 = vmax.f32 %v4485, 0.0
        %v4614 = vmax.f32 %v4486, 0.0
        %v4615 = vmax.f32 %v4487, 0.0
        %v4616 = vmax.f32 %v4488, 0.0
        %v4617 = vmax.f32 %v4489, 0.0
        %v4618 = vmax.f32 %v4490, 0.0
        %v4619 = vmax.f32 %v4491, 0.0
        %v4620 = vmax.f32 %v4492, 0.0
        %v4621 = vmax.f32 %v4493, 0.0
        %v4622 = vmax.f32 %v4494, 0.0
        %v4623 = vmax.f32 %v4495, 0.0
        %v4624 = vmax.f32 %v4496, 0.0
        %v4625 = vmax.f32 %v4497, 0.0
        %v4626 = vmax.f32 %v4498, 0.0
        %v4627 = vmax.f32 %v4499, 0.0
        %v4628 = vmax.f32 %v4500, 0.0
        %v4629 = vmax.f32 %v4501, 0.0
        %v4630 = vmax.f32 %v4502, 0.0
        %v4631 = vmax.f32 %v4503, 0.0
        %v4632 = vmax.f32 %v4504, 0.0
        %v4633 = vmax.f32 %v4505, 0.0
        %v4634 = vmax.f32 %v4506, 0.0
        %v4635 = vmax.f32 %v4507, 0.0
        %v4636 = vmax.f32 %v4508, 0.0
        %v4637 = vmax.f32 %v4509, 0.0
        %v4638 = vmax.f32 %v4510, 0.0
        %v4639 = vmax.f32 %v4511, 0.0
        %v4640 = vmax.f32 %v4512, 0.0
        %v4641 = vmax.f32 %v4513, 0.0
        %v4642 = vmax.f32 %v4514, 0.0
        %v4643 = vmax.f32 %v4515, 0.0
        %v4644 = vmax.f32 %v4516, 0.0
        %v4645 = vmax.f32 %v4517, 0.0
        %v4646 = vmax.f32 %v4518, 0.0
        %v4647 = vmax.f32 %v4519, 0.0
        %v4648 = vmax.f32 %v4520, 0.0
        %v4649 = vmax.f32 %v4521, 0.0
        %v4650 = vmax.f32 %v4522, 0.0
        %v4651 = vmax.f32 %v4523, 0.0
        %v4652 = vmax.f32 %v4524, 0.0
        %v4653 = vmax.f32 %v4525, 0.0
        %v4654 = vmax.f32 %v4526, 0.0
        %v4655 = vmax.f32 %v4527, 0.0
        %v4656 = vmax.f32 %v4528, 0.0
        %v4657 = vmax.f32 %v4529, 0.0
        %v4658 = vmax.f32 %v4530, 0.0
        %v4659 = vmax.f32 %v4531, 0.0
        %v4660 = vmax.f32 %v4532, 0.0
        %v4661 = vmax.f32 %v4533, 0.0
        %v4662 = vmax.f32 %v4534, 0.0
        %v4663 = vmax.f32 %v4535, 0.0
        %v4664 = vmax.f32 %v4536, 0.0
        %v4665 = vmax.f32 %v4537, 0.0
        %v4666 = vmax.f32 %v4538, 0.0
        %v4667 = vmax.f32 %v4539, 0.0
        %v4668 = vmax.f32 %v4540, 0.0
        %v4669 = vmax.f32 %v4541, 0.0
        %v4670 = vmax.f32 %v4542, 0.0
        %v4671 = vmax.f32 %v4543, 0.0
        %v4672 = vmax.f32 %v4544, 0.0
        %v4673 = vmax.f32 %v4545, 0.0
        %v4674 = vmax.f32 %v4546, 0.0
        %v4675 = vmax.f32 %v4547, 0.0
        %v4676 = vmax.f32 %v4548, 0.0
        %v4677 = vmax.f32 %v4549, 0.0
        %v4678 = vmax.f32 %v4550, 0.0
        %v4679 = vmax.f32 %v4551, 0.0
        %v4680 = vmax.f32 %v4552, 0.0
        %v4681 = vmax.f32 %v4553, 0.0
        %v4682 = vmax.f32 %v4554, 0.0
        %v4683 = vmax.f32 %v4555, 0.0
        %v4684 = vmax.f32 %v4556, 0.0
        %v4685 = vmax.f32 %v4557, 0.0
        %v4686 = vmax.f32 %v4558, 0.0
        %v4687 = vmax.f32 %v4559, 0.0
        %v4688 = vmax.f32 %v4560, 0.0
        %v4689 = vmax.f32 %v4561, 0.0
        %v4690 = vmax.f32 %v4562, 0.0
        %v4691 = vmax.f32 %v4563, 0.0
        %v4692 = vmax.f32 %v4564, 0.0
        %v4693 = vmax.f32 %v4565, 0.0
        %v4694 = vmax.f32 %v4566, 0.0
        %v4695 = vmax.f32 %v4567, 0.0
        %v4696 = vmax.f32 %v4568, 0.0
        %v4697 = vmax.f32 %v4569, 0.0
        %v4698 = vmax.f32 %v4570, 0.0
        %v4699 = vmax.f32 %v4571, 0.0
        %v4700 = vmax.f32 %v4572, 0.0
        %v4701 = vmax.f32 %v4573, 0.0
        %v4702 = vmax.f32 %v4574, 0.0
        %v4703 = vmax.f32 %v4575, 0.0
        %v4704 = vmax.f32 %v4576, 0.0
        %vm4705 = vcmask 130048
        %4706 = vst.msk [vmem:[%s337] sm:$0xff] %vm4705, %v4577
        %4707 = vst.msk [vmem:[%s337 + $0x8] sm:$0xff] %vm4705, %v4578
        %4708 = vst.msk [vmem:[%s337 + $0x10] sm:$0xff] %vm4705, %v4579
        %4709 = vst.msk [vmem:[%s337 + $0x18] sm:$0xff] %vm4705, %v4580
        %4710 = vst.msk [vmem:[%s337 + $0x20] sm:$0xff] %vm4705, %v4581
        %4711 = vst.msk [vmem:[%s337 + $0x28] sm:$0xff] %vm4705, %v4582
        %4712 = vst.msk [vmem:[%s337 + $0x30] sm:$0xff] %vm4705, %v4583
        %4713 = vst.msk [vmem:[%s337 + $0x38] sm:$0xff] %vm4705, %v4584
        %4714 = vst.msk [vmem:[%s337 + $0x40] sm:$0xff] %vm4705, %v4585
        %4715 = vst.msk [vmem:[%s337 + $0x48] sm:$0xff] %vm4705, %v4586
        %4716 = vst.msk [vmem:[%s337 + $0x50] sm:$0xff] %vm4705, %v4587
        %4717 = vst.msk [vmem:[%s337 + $0x58] sm:$0xff] %vm4705, %v4588
        %4718 = vst.msk [vmem:[%s337 + $0x60] sm:$0xff] %vm4705, %v4589
        %4719 = vst.msk [vmem:[%s337 + $0x68] sm:$0xff] %vm4705, %v4590
        %4720 = vst.msk [vmem:[%s337 + $0x70] sm:$0xff] %vm4705, %v4591
        %4721 = vst.msk [vmem:[%s337 + $0x78] sm:$0xff] %vm4705, %v4592
        %4722 = vst.msk [vmem:[%s337 + $0x80] sm:$0xff] %vm4705, %v4593
        %4723 = vst.msk [vmem:[%s337 + $0x88] sm:$0xff] %vm4705, %v4594
        %4724 = vst.msk [vmem:[%s337 + $0x90] sm:$0xff] %vm4705, %v4595
        %4725 = vst.msk [vmem:[%s337 + $0x98] sm:$0xff] %vm4705, %v4596
        %4726 = vst.msk [vmem:[%s337 + $0xa0] sm:$0xff] %vm4705, %v4597
        %4727 = vst.msk [vmem:[%s337 + $0xa8] sm:$0xff] %vm4705, %v4598
        %4728 = vst.msk [vmem:[%s337 + $0xb0] sm:$0xff] %vm4705, %v4599
        %4729 = vst.msk [vmem:[%s337 + $0xb8] sm:$0xff] %vm4705, %v4600
        %4730 = vst.msk [vmem:[%s337 + $0xc0] sm:$0xff] %vm4705, %v4601
        %4731 = vst.msk [vmem:[%s337 + $0xc8] sm:$0xff] %vm4705, %v4602
        %4732 = vst.msk [vmem:[%s337 + $0xd0] sm:$0xff] %vm4705, %v4603
        %4733 = vst.msk [vmem:[%s337 + $0xd8] sm:$0xff] %vm4705, %v4604
        %4734 = vst.msk [vmem:[%s337 + $0xe0] sm:$0xff] %vm4705, %v4605
        %4735 = vst.msk [vmem:[%s337 + $0xe8] sm:$0xff] %vm4705, %v4606
        %4736 = vst.msk [vmem:[%s337 + $0xf0] sm:$0xff] %vm4705, %v4607
        %4737 = vst.msk [vmem:[%s337 + $0xf8] sm:$0xff] %vm4705, %v4608
        %4738 = vst.msk [vmem:[%s337 + $0x100] sm:$0xff] %vm4705, %v4609
        %4739 = vst.msk [vmem:[%s337 + $0x108] sm:$0xff] %vm4705, %v4610
        %4740 = vst.msk [vmem:[%s337 + $0x110] sm:$0xff] %vm4705, %v4611
        %4741 = vst.msk [vmem:[%s337 + $0x118] sm:$0xff] %vm4705, %v4612
        %4742 = vst.msk [vmem:[%s337 + $0x120] sm:$0xff] %vm4705, %v4613
        %4743 = vst.msk [vmem:[%s337 + $0x128] sm:$0xff] %vm4705, %v4614
        %4744 = vst.msk [vmem:[%s337 + $0x130] sm:$0xff] %vm4705, %v4615
        %4745 = vst.msk [vmem:[%s337 + $0x138] sm:$0xff] %vm4705, %v4616
        %4746 = vst.msk [vmem:[%s337 + $0x140] sm:$0xff] %vm4705, %v4617
        %4747 = vst.msk [vmem:[%s337 + $0x148] sm:$0xff] %vm4705, %v4618
        %4748 = vst.msk [vmem:[%s337 + $0x150] sm:$0xff] %vm4705, %v4619
        %4749 = vst.msk [vmem:[%s337 + $0x158] sm:$0xff] %vm4705, %v4620
        %4750 = vst.msk [vmem:[%s337 + $0x160] sm:$0xff] %vm4705, %v4621
        %4751 = vst.msk [vmem:[%s337 + $0x168] sm:$0xff] %vm4705, %v4622
        %4752 = vst.msk [vmem:[%s337 + $0x170] sm:$0xff] %vm4705, %v4623
        %4753 = vst.msk [vmem:[%s337 + $0x178] sm:$0xff] %vm4705, %v4624
        %4754 = vst.msk [vmem:[%s337 + $0x180] sm:$0xff] %vm4705, %v4625
        %4755 = vst.msk [vmem:[%s337 + $0x188] sm:$0xff] %vm4705, %v4626
        %4756 = vst.msk [vmem:[%s337 + $0x190] sm:$0xff] %vm4705, %v4627
        %4757 = vst.msk [vmem:[%s337 + $0x198] sm:$0xff] %vm4705, %v4628
        %4758 = vst.msk [vmem:[%s337 + $0x1a0] sm:$0xff] %vm4705, %v4629
        %4759 = vst.msk [vmem:[%s337 + $0x1a8] sm:$0xff] %vm4705, %v4630
        %4760 = vst.msk [vmem:[%s337 + $0x1b0] sm:$0xff] %vm4705, %v4631
        %4761 = vst.msk [vmem:[%s337 + $0x1b8] sm:$0xff] %vm4705, %v4632
        %4762 = vst.msk [vmem:[%s337 + $0x1c0] sm:$0xff] %vm4705, %v4633
        %4763 = vst.msk [vmem:[%s337 + $0x1c8] sm:$0xff] %vm4705, %v4634
        %4764 = vst.msk [vmem:[%s337 + $0x1d0] sm:$0xff] %vm4705, %v4635
        %4765 = vst.msk [vmem:[%s337 + $0x1d8] sm:$0xff] %vm4705, %v4636
        %4766 = vst.msk [vmem:[%s337 + $0x1e0] sm:$0xff] %vm4705, %v4637
        %4767 = vst.msk [vmem:[%s337 + $0x1e8] sm:$0xff] %vm4705, %v4638
        %4768 = vst.msk [vmem:[%s337 + $0x1f0] sm:$0xff] %vm4705, %v4639
        %4769 = vst.msk [vmem:[%s337 + $0x1f8] sm:$0xff] %vm4705, %v4640
        %4770 = vst.msk [vmem:[%s337 + $0x200] sm:$0xff] %vm4705, %v4641
        %4771 = vst.msk [vmem:[%s337 + $0x208] sm:$0xff] %vm4705, %v4642
        %4772 = vst.msk [vmem:[%s337 + $0x210] sm:$0xff] %vm4705, %v4643
        %4773 = vst.msk [vmem:[%s337 + $0x218] sm:$0xff] %vm4705, %v4644
        %4774 = vst.msk [vmem:[%s337 + $0x220] sm:$0xff] %vm4705, %v4645
        %4775 = vst.msk [vmem:[%s337 + $0x228] sm:$0xff] %vm4705, %v4646
        %4776 = vst.msk [vmem:[%s337 + $0x230] sm:$0xff] %vm4705, %v4647
        %4777 = vst.msk [vmem:[%s337 + $0x238] sm:$0xff] %vm4705, %v4648
        %4778 = vst.msk [vmem:[%s337 + $0x240] sm:$0xff] %vm4705, %v4649
        %4779 = vst.msk [vmem:[%s337 + $0x248] sm:$0xff] %vm4705, %v4650
        %4780 = vst.msk [vmem:[%s337 + $0x250] sm:$0xff] %vm4705, %v4651
        %4781 = vst.msk [vmem:[%s337 + $0x258] sm:$0xff] %vm4705, %v4652
        %4782 = vst.msk [vmem:[%s337 + $0x260] sm:$0xff] %vm4705, %v4653
        %4783 = vst.msk [vmem:[%s337 + $0x268] sm:$0xff] %vm4705, %v4654
        %4784 = vst.msk [vmem:[%s337 + $0x270] sm:$0xff] %vm4705, %v4655
        %4785 = vst.msk [vmem:[%s337 + $0x278] sm:$0xff] %vm4705, %v4656
        %4786 = vst.msk [vmem:[%s337 + $0x280] sm:$0xff] %vm4705, %v4657
        %4787 = vst.msk [vmem:[%s337 + $0x288] sm:$0xff] %vm4705, %v4658
        %4788 = vst.msk [vmem:[%s337 + $0x290] sm:$0xff] %vm4705, %v4659
        %4789 = vst.msk [vmem:[%s337 + $0x298] sm:$0xff] %vm4705, %v4660
        %4790 = vst.msk [vmem:[%s337 + $0x2a0] sm:$0xff] %vm4705, %v4661
        %4791 = vst.msk [vmem:[%s337 + $0x2a8] sm:$0xff] %vm4705, %v4662
        %4792 = vst.msk [vmem:[%s337 + $0x2b0] sm:$0xff] %vm4705, %v4663
        %4793 = vst.msk [vmem:[%s337 + $0x2b8] sm:$0xff] %vm4705, %v4664
        %4794 = vst.msk [vmem:[%s337 + $0x2c0] sm:$0xff] %vm4705, %v4665
        %4795 = vst.msk [vmem:[%s337 + $0x2c8] sm:$0xff] %vm4705, %v4666
        %4796 = vst.msk [vmem:[%s337 + $0x2d0] sm:$0xff] %vm4705, %v4667
        %4797 = vst.msk [vmem:[%s337 + $0x2d8] sm:$0xff] %vm4705, %v4668
        %4798 = vst.msk [vmem:[%s337 + $0x2e0] sm:$0xff] %vm4705, %v4669
        %4799 = vst.msk [vmem:[%s337 + $0x2e8] sm:$0xff] %vm4705, %v4670
        %4800 = vst.msk [vmem:[%s337 + $0x2f0] sm:$0xff] %vm4705, %v4671
        %4801 = vst.msk [vmem:[%s337 + $0x2f8] sm:$0xff] %vm4705, %v4672
        %4802 = vst.msk [vmem:[%s337 + $0x300] sm:$0xff] %vm4705, %v4673
        %4803 = vst.msk [vmem:[%s337 + $0x308] sm:$0xff] %vm4705, %v4674
        %4804 = vst.msk [vmem:[%s337 + $0x310] sm:$0xff] %vm4705, %v4675
        %4805 = vst.msk [vmem:[%s337 + $0x318] sm:$0xff] %vm4705, %v4676
        %4806 = vst.msk [vmem:[%s337 + $0x320] sm:$0xff] %vm4705, %v4677
        %4807 = vst.msk [vmem:[%s337 + $0x328] sm:$0xff] %vm4705, %v4678
        %4808 = vst.msk [vmem:[%s337 + $0x330] sm:$0xff] %vm4705, %v4679
        %4809 = vst.msk [vmem:[%s337 + $0x338] sm:$0xff] %vm4705, %v4680
        %4810 = vst.msk [vmem:[%s337 + $0x340] sm:$0xff] %vm4705, %v4681
        %4811 = vst.msk [vmem:[%s337 + $0x348] sm:$0xff] %vm4705, %v4682
        %4812 = vst.msk [vmem:[%s337 + $0x350] sm:$0xff] %vm4705, %v4683
        %4813 = vst.msk [vmem:[%s337 + $0x358] sm:$0xff] %vm4705, %v4684
        %4814 = vst.msk [vmem:[%s337 + $0x360] sm:$0xff] %vm4705, %v4685
        %4815 = vst.msk [vmem:[%s337 + $0x368] sm:$0xff] %vm4705, %v4686
        %4816 = vst.msk [vmem:[%s337 + $0x370] sm:$0xff] %vm4705, %v4687
        %4817 = vst.msk [vmem:[%s337 + $0x378] sm:$0xff] %vm4705, %v4688
        %4818 = vst.msk [vmem:[%s337 + $0x380] sm:$0xff] %vm4705, %v4689
        %4819 = vst.msk [vmem:[%s337 + $0x388] sm:$0xff] %vm4705, %v4690
        %4820 = vst.msk [vmem:[%s337 + $0x390] sm:$0xff] %vm4705, %v4691
        %4821 = vst.msk [vmem:[%s337 + $0x398] sm:$0xff] %vm4705, %v4692
        %4822 = vst.msk [vmem:[%s337 + $0x3a0] sm:$0xff] %vm4705, %v4693
        %4823 = vst.msk [vmem:[%s337 + $0x3a8] sm:$0xff] %vm4705, %v4694
        %4824 = vst.msk [vmem:[%s337 + $0x3b0] sm:$0xff] %vm4705, %v4695
        %4825 = vst.msk [vmem:[%s337 + $0x3b8] sm:$0xff] %vm4705, %v4696
        %4826 = vst.msk [vmem:[%s337 + $0x3c0] sm:$0xff] %vm4705, %v4697
        %4827 = vst.msk [vmem:[%s337 + $0x3c8] sm:$0xff] %vm4705, %v4698
        %4828 = vst.msk [vmem:[%s337 + $0x3d0] sm:$0xff] %vm4705, %v4699
        %4829 = vst.msk [vmem:[%s337 + $0x3d8] sm:$0xff] %vm4705, %v4700
        %4830 = vst.msk [vmem:[%s337 + $0x3e0] sm:$0xff] %vm4705, %v4701
        %4831 = vst.msk [vmem:[%s337 + $0x3e8] sm:$0xff] %vm4705, %v4702
        %4832 = vst.msk [vmem:[%s337 + $0x3f0] sm:$0xff] %vm4705, %v4703
        %4833 = vst.msk [vmem:[%s337 + $0x3f8] sm:$0xff] %vm4705, %v4704
        %s4834 = sand.u32 %s171, 1
        %s4835 = sand.u32 %s171, 1
        %s4836 = smul.addr %s4835, 1024
        %s4837 = scalar_lea.vmem [#allocation2], %s4836
        // Predicated region
        $region45: #{critic_forward.3} parent=43 // pred_check
          %p4838 = pneg %p181
        $region46: #{critic_forward.3} parent=43 // pred_check_branch
          %4840 = sbr.rel (%p4838) target = $region48
        $region47: #{critic_forward.3} parent=43 // pred_region
          %s4841 = smul.u32 128, %s17
          %s4842 = ssub.s32 489, %s4841
          %p4843 = scmp.lt.s32.totalorder %s4842, 128
          %s4844 = scalar_select %p4843, %s4842, 128
          %s4845 = smul.u32 8, %s4844
          %p4846 = scmp.ne.s32.totalorder 0, %s4845
          %s4847 = smul.addr %s4841, 8
          %s4848 = scalar_lea.vmem %s6, %s4847
          // Predicated region
          $region49: #{critic_forward.3} parent=47 // pred_check
            %p4849 = pneg %p4846
          $region50: #{critic_forward.3} parent=47 // pred_check_branch
            %4851 = sbr.rel (%p4849) target = $region52
          $region51: #{critic_forward.3} parent=47 // pred_region
            // Predicated region
            $region53: #{critic_forward.3} parent=51 // pred_check
              _
            $region54: #{critic_forward.3} parent=51 // pred_check_branch
              %4853 = sbr.rel (0) target = $region56
            $region55: #{critic_forward.3} parent=51 // pred_region
              // Predicated region
              $region75: #{critic_forward.3} parent=55 // pred_check
                _
              $region76: #{critic_forward.3} parent=55 // pred_check_branch
                %4965 = sbr.rel (0) target = $region78
              $region77: #{critic_forward.3} parent=55 // pred_region
                %s4966 = sshrl.u32 %s4844, 5
                // While loop
                $region79: #{critic_forward.3} parent=77 // loop_pre_header
                  _
                $region80: #{critic_forward.3} parent=77 // loop_header
                  %s4968 = sphi 0, %s4970
                  %p4969 = scmp.ge.s32.totalorder %s4968, %s4966
                  %s4973 = sphi 0, %s5042
                  %s4974 = sphi %s4837, %s5045
                  %s4975 = sphi %s4848, %s5046
                $region81: #{critic_forward.3} parent=77 // loop_header_branch
                  %4972 = sbr.rel (%p4969) target = $region85
                $region82: #{critic_forward.3} parent=77 // loop_body
                  %v4976 = vld [vmem:[%s4974] sm:$0xff]
                  %4977 = vst [vmem:[%s4975] sm:$0xff] %v4976
                  %v4978 = vld [vmem:[%s4974 + $0x8] sm:$0xff]
                  %4979 = vst [vmem:[%s4975 + $0x8] sm:$0xff] %v4978
                  %v4980 = vld [vmem:[%s4974 + $0x10] sm:$0xff]
                  %4981 = vst [vmem:[%s4975 + $0x10] sm:$0xff] %v4980
                  %v4982 = vld [vmem:[%s4974 + $0x18] sm:$0xff]
                  %4983 = vst [vmem:[%s4975 + $0x18] sm:$0xff] %v4982
                  %v4984 = vld [vmem:[%s4974 + $0x20] sm:$0xff]
                  %4985 = vst [vmem:[%s4975 + $0x20] sm:$0xff] %v4984
                  %v4986 = vld [vmem:[%s4974 + $0x28] sm:$0xff]
                  %4987 = vst [vmem:[%s4975 + $0x28] sm:$0xff] %v4986
                  %v4988 = vld [vmem:[%s4974 + $0x30] sm:$0xff]
                  %4989 = vst [vmem:[%s4975 + $0x30] sm:$0xff] %v4988
                  %v4990 = vld [vmem:[%s4974 + $0x38] sm:$0xff]
                  %4991 = vst [vmem:[%s4975 + $0x38] sm:$0xff] %v4990
                  %v4992 = vld [vmem:[%s4974 + $0x40] sm:$0xff]
                  %4993 = vst [vmem:[%s4975 + $0x40] sm:$0xff] %v4992
                  %v4994 = vld [vmem:[%s4974 + $0x48] sm:$0xff]
                  %4995 = vst [vmem:[%s4975 + $0x48] sm:$0xff] %v4994
                  %v4996 = vld [vmem:[%s4974 + $0x50] sm:$0xff]
                  %4997 = vst [vmem:[%s4975 + $0x50] sm:$0xff] %v4996
                  %v4998 = vld [vmem:[%s4974 + $0x58] sm:$0xff]
                  %4999 = vst [vmem:[%s4975 + $0x58] sm:$0xff] %v4998
                  %v5000 = vld [vmem:[%s4974 + $0x60] sm:$0xff]
                  %5001 = vst [vmem:[%s4975 + $0x60] sm:$0xff] %v5000
                  %v5002 = vld [vmem:[%s4974 + $0x68] sm:$0xff]
                  %5003 = vst [vmem:[%s4975 + $0x68] sm:$0xff] %v5002
                  %v5004 = vld [vmem:[%s4974 + $0x70] sm:$0xff]
                  %5005 = vst [vmem:[%s4975 + $0x70] sm:$0xff] %v5004
                  %v5006 = vld [vmem:[%s4974 + $0x78] sm:$0xff]
                  %5007 = vst [vmem:[%s4975 + $0x78] sm:$0xff] %v5006
                  %v5008 = vld [vmem:[%s4974 + $0x80] sm:$0xff]
                  %5009 = vst [vmem:[%s4975 + $0x80] sm:$0xff] %v5008
                  %v5010 = vld [vmem:[%s4974 + $0x88] sm:$0xff]
                  %5011 = vst [vmem:[%s4975 + $0x88] sm:$0xff] %v5010
                  %v5012 = vld [vmem:[%s4974 + $0x90] sm:$0xff]
                  %5013 = vst [vmem:[%s4975 + $0x90] sm:$0xff] %v5012
                  %v5014 = vld [vmem:[%s4974 + $0x98] sm:$0xff]
                  %5015 = vst [vmem:[%s4975 + $0x98] sm:$0xff] %v5014
                  %v5016 = vld [vmem:[%s4974 + $0xa0] sm:$0xff]
                  %5017 = vst [vmem:[%s4975 + $0xa0] sm:$0xff] %v5016
                  %v5018 = vld [vmem:[%s4974 + $0xa8] sm:$0xff]
                  %5019 = vst [vmem:[%s4975 + $0xa8] sm:$0xff] %v5018
                  %v5020 = vld [vmem:[%s4974 + $0xb0] sm:$0xff]
                  %5021 = vst [vmem:[%s4975 + $0xb0] sm:$0xff] %v5020
                  %v5022 = vld [vmem:[%s4974 + $0xb8] sm:$0xff]
                  %5023 = vst [vmem:[%s4975 + $0xb8] sm:$0xff] %v5022
                  %v5024 = vld [vmem:[%s4974 + $0xc0] sm:$0xff]
                  %5025 = vst [vmem:[%s4975 + $0xc0] sm:$0xff] %v5024
                  %v5026 = vld [vmem:[%s4974 + $0xc8] sm:$0xff]
                  %5027 = vst [vmem:[%s4975 + $0xc8] sm:$0xff] %v5026
                  %v5028 = vld [vmem:[%s4974 + $0xd0] sm:$0xff]
                  %5029 = vst [vmem:[%s4975 + $0xd0] sm:$0xff] %v5028
                  %v5030 = vld [vmem:[%s4974 + $0xd8] sm:$0xff]
                  %5031 = vst [vmem:[%s4975 + $0xd8] sm:$0xff] %v5030
                  %v5032 = vld [vmem:[%s4974 + $0xe0] sm:$0xff]
                  %5033 = vst [vmem:[%s4975 + $0xe0] sm:$0xff] %v5032
                  %v5034 = vld [vmem:[%s4974 + $0xe8] sm:$0xff]
                  %5035 = vst [vmem:[%s4975 + $0xe8] sm:$0xff] %v5034
                  %v5036 = vld [vmem:[%s4974 + $0xf0] sm:$0xff]
                  %5037 = vst [vmem:[%s4975 + $0xf0] sm:$0xff] %v5036
                  %v5038 = vld [vmem:[%s4974 + $0xf8] sm:$0xff]
                  %5039 = vst [vmem:[%s4975 + $0xf8] sm:$0xff] %v5038
                  %s5040 = sadd.s32 1, %s4973
                  %p5041 = scmp.ge.s32.totalorder %s5040, %s4966
                  %s5042 = scalar_select %p5041, 0, %s5040
                  %s5043 = smul.u32 %s5042, 256
                  %s5044 = smul.u32 %s5042, 256
                  %s5045 = scalar_lea.vmem %s4837, %s5043 [#allocation2]
                  %s5046 = scalar_lea.vmem %s4848, %s5044
                $region83: #{critic_forward.3} parent=77 // loop_footer
                  %s4970 = sadd.s32 %s4968, 1
                $region84: #{critic_forward.3} parent=77 // loop_footer_branch
                  %4967 = sbr.rel target = $region80
                $region85: #{critic_forward.3} parent=77 // loop_exit
                  _
                %s5047 = sshrl.u32 %s4844, 5
                %s5048 = sand.u32 %s4844, 31
                %s5049 = smul.u32 %s5047, 32
                %s5050 = smul.u32 8, %s5049
                %s5051 = scalar_lea.vmem %s4837, %s5050 [#allocation2]
                %s5052 = smul.u32 8, %s5049
                %s5053 = scalar_lea.vmem %s4848, %s5052
                // While loop
                $region86: #{critic_forward.3} parent=77 // loop_pre_header
                  _
                $region87: #{critic_forward.3} parent=77 // loop_header
                  %s5055 = sphi 0, %s5057
                  %p5056 = scmp.ge.s32.totalorder %s5055, %s5048
                  %s5060 = sphi 0, %s5067
                  %s5061 = sphi %s5051, %s5070
                  %s5062 = sphi %s5053, %s5071
                $region88: #{critic_forward.3} parent=77 // loop_header_branch
                  %5059 = sbr.rel (%p5056) target = $region92
                $region89: #{critic_forward.3} parent=77 // loop_body
                  %v5063 = vld [vmem:[%s5061] sm:$0xff]
                  %5064 = vst [vmem:[%s5062] sm:$0xff] %v5063
                  %s5065 = sadd.s32 1, %s5060
                  %p5066 = scmp.ge.s32.totalorder %s5065, %s5048
                  %s5067 = scalar_select %p5066, 0, %s5065
                  %s5068 = smul.u32 %s5067, 8
                  %s5069 = smul.u32 %s5067, 8
                  %s5070 = scalar_lea.vmem %s5051, %s5068 [#allocation2]
                  %s5071 = scalar_lea.vmem %s5053, %s5069
                $region90: #{critic_forward.3} parent=77 // loop_footer
                  %s5057 = sadd.s32 %s5055, 1
                $region91: #{critic_forward.3} parent=77 // loop_footer_branch
                  %5054 = sbr.rel target = $region87
                $region92: #{critic_forward.3} parent=77 // loop_exit
                  _
              $region78: #{critic_forward.3} parent=55 // pred_fallthru
                _
              // Predicated region
              $region93: #{critic_forward.3} parent=55 // pred_check
                _
              $region94: #{critic_forward.3} parent=55 // pred_check_branch
                %5073 = sbr.rel target = $region96
              $region95: #{critic_forward.3} parent=55 // pred_region
                _
              $region96: #{critic_forward.3} parent=55 // pred_fallthru
                _
            $region56: #{critic_forward.3} parent=51 // pred_fallthru
              _
            // Predicated region
            $region57: #{critic_forward.3} parent=51 // pred_check
              _
            $region58: #{critic_forward.3} parent=51 // pred_check_branch
              %4855 = sbr.rel target = $region60
            $region59: #{critic_forward.3} parent=51 // pred_region
              %s4857 = ssub.s32 256, 1
              %s4858 = sshrl.u32 %s4844, 5
              // While loop
              $region61: #{critic_forward.3} parent=59 // loop_pre_header
                _
              $region62: #{critic_forward.3} parent=59 // loop_header
                %s4860 = sphi 0, %s4862
                %p4861 = scmp.ge.s32.totalorder %s4860, %s4858
                %s4865 = sphi 0, %s4934
                %s4866 = sphi %s4837, %s4937
                %s4867 = sphi %s4848, %s4938
              $region63: #{critic_forward.3} parent=59 // loop_header_branch
                %4864 = sbr.rel (%p4861) target = $region67
              $region64: #{critic_forward.3} parent=59 // loop_body
                %v4868 = vld [vmem:[%s4866] sm:%s4857]
                %4869 = vst [vmem:[%s4867] sm:%s4857] %v4868
                %v4870 = vld [vmem:[%s4866 + $0x8] sm:%s4857]
                %4871 = vst [vmem:[%s4867 + $0x8] sm:%s4857] %v4870
                %v4872 = vld [vmem:[%s4866 + $0x10] sm:%s4857]
                %4873 = vst [vmem:[%s4867 + $0x10] sm:%s4857] %v4872
                %v4874 = vld [vmem:[%s4866 + $0x18] sm:%s4857]
                %4875 = vst [vmem:[%s4867 + $0x18] sm:%s4857] %v4874
                %v4876 = vld [vmem:[%s4866 + $0x20] sm:%s4857]
                %4877 = vst [vmem:[%s4867 + $0x20] sm:%s4857] %v4876
                %v4878 = vld [vmem:[%s4866 + $0x28] sm:%s4857]
                %4879 = vst [vmem:[%s4867 + $0x28] sm:%s4857] %v4878
                %v4880 = vld [vmem:[%s4866 + $0x30] sm:%s4857]
                %4881 = vst [vmem:[%s4867 + $0x30] sm:%s4857] %v4880
                %v4882 = vld [vmem:[%s4866 + $0x38] sm:%s4857]
                %4883 = vst [vmem:[%s4867 + $0x38] sm:%s4857] %v4882
                %v4884 = vld [vmem:[%s4866 + $0x40] sm:%s4857]
                %4885 = vst [vmem:[%s4867 + $0x40] sm:%s4857] %v4884
                %v4886 = vld [vmem:[%s4866 + $0x48] sm:%s4857]
                %4887 = vst [vmem:[%s4867 + $0x48] sm:%s4857] %v4886
                %v4888 = vld [vmem:[%s4866 + $0x50] sm:%s4857]
                %4889 = vst [vmem:[%s4867 + $0x50] sm:%s4857] %v4888
                %v4890 = vld [vmem:[%s4866 + $0x58] sm:%s4857]
                %4891 = vst [vmem:[%s4867 + $0x58] sm:%s4857] %v4890
                %v4892 = vld [vmem:[%s4866 + $0x60] sm:%s4857]
                %4893 = vst [vmem:[%s4867 + $0x60] sm:%s4857] %v4892
                %v4894 = vld [vmem:[%s4866 + $0x68] sm:%s4857]
                %4895 = vst [vmem:[%s4867 + $0x68] sm:%s4857] %v4894
                %v4896 = vld [vmem:[%s4866 + $0x70] sm:%s4857]
                %4897 = vst [vmem:[%s4867 + $0x70] sm:%s4857] %v4896
                %v4898 = vld [vmem:[%s4866 + $0x78] sm:%s4857]
                %4899 = vst [vmem:[%s4867 + $0x78] sm:%s4857] %v4898
                %v4900 = vld [vmem:[%s4866 + $0x80] sm:%s4857]
                %4901 = vst [vmem:[%s4867 + $0x80] sm:%s4857] %v4900
                %v4902 = vld [vmem:[%s4866 + $0x88] sm:%s4857]
                %4903 = vst [vmem:[%s4867 + $0x88] sm:%s4857] %v4902
                %v4904 = vld [vmem:[%s4866 + $0x90] sm:%s4857]
                %4905 = vst [vmem:[%s4867 + $0x90] sm:%s4857] %v4904
                %v4906 = vld [vmem:[%s4866 + $0x98] sm:%s4857]
                %4907 = vst [vmem:[%s4867 + $0x98] sm:%s4857] %v4906
                %v4908 = vld [vmem:[%s4866 + $0xa0] sm:%s4857]
                %4909 = vst [vmem:[%s4867 + $0xa0] sm:%s4857] %v4908
                %v4910 = vld [vmem:[%s4866 + $0xa8] sm:%s4857]
                %4911 = vst [vmem:[%s4867 + $0xa8] sm:%s4857] %v4910
                %v4912 = vld [vmem:[%s4866 + $0xb0] sm:%s4857]
                %4913 = vst [vmem:[%s4867 + $0xb0] sm:%s4857] %v4912
                %v4914 = vld [vmem:[%s4866 + $0xb8] sm:%s4857]
                %4915 = vst [vmem:[%s4867 + $0xb8] sm:%s4857] %v4914
                %v4916 = vld [vmem:[%s4866 + $0xc0] sm:%s4857]
                %4917 = vst [vmem:[%s4867 + $0xc0] sm:%s4857] %v4916
                %v4918 = vld [vmem:[%s4866 + $0xc8] sm:%s4857]
                %4919 = vst [vmem:[%s4867 + $0xc8] sm:%s4857] %v4918
                %v4920 = vld [vmem:[%s4866 + $0xd0] sm:%s4857]
                %4921 = vst [vmem:[%s4867 + $0xd0] sm:%s4857] %v4920
                %v4922 = vld [vmem:[%s4866 + $0xd8] sm:%s4857]
                %4923 = vst [vmem:[%s4867 + $0xd8] sm:%s4857] %v4922
                %v4924 = vld [vmem:[%s4866 + $0xe0] sm:%s4857]
                %4925 = vst [vmem:[%s4867 + $0xe0] sm:%s4857] %v4924
                %v4926 = vld [vmem:[%s4866 + $0xe8] sm:%s4857]
                %4927 = vst [vmem:[%s4867 + $0xe8] sm:%s4857] %v4926
                %v4928 = vld [vmem:[%s4866 + $0xf0] sm:%s4857]
                %4929 = vst [vmem:[%s4867 + $0xf0] sm:%s4857] %v4928
                %v4930 = vld [vmem:[%s4866 + $0xf8] sm:%s4857]
                %4931 = vst [vmem:[%s4867 + $0xf8] sm:%s4857] %v4930
                %s4932 = sadd.s32 1, %s4865
                %p4933 = scmp.ge.s32.totalorder %s4932, %s4858
                %s4934 = scalar_select %p4933, 0, %s4932
                %s4935 = smul.u32 %s4934, 256
                %s4936 = smul.u32 %s4934, 256
                %s4937 = scalar_lea.vmem %s4837, %s4935 [#allocation2]
                %s4938 = scalar_lea.vmem %s4848, %s4936
              $region65: #{critic_forward.3} parent=59 // loop_footer
                %s4862 = sadd.s32 %s4860, 1
              $region66: #{critic_forward.3} parent=59 // loop_footer_branch
                %4859 = sbr.rel target = $region62
              $region67: #{critic_forward.3} parent=59 // loop_exit
                _
              %s4939 = sshrl.u32 %s4844, 5
              %s4940 = sand.u32 %s4844, 31
              %s4941 = smul.u32 %s4939, 32
              %s4942 = smul.u32 8, %s4941
              %s4943 = scalar_lea.vmem %s4837, %s4942 [#allocation2]
              %s4944 = smul.u32 8, %s4941
              %s4945 = scalar_lea.vmem %s4848, %s4944
              // While loop
              $region68: #{critic_forward.3} parent=59 // loop_pre_header
                _
              $region69: #{critic_forward.3} parent=59 // loop_header
                %s4947 = sphi 0, %s4949
                %p4948 = scmp.ge.s32.totalorder %s4947, %s4940
                %s4952 = sphi 0, %s4959
                %s4953 = sphi %s4943, %s4962
                %s4954 = sphi %s4945, %s4963
              $region70: #{critic_forward.3} parent=59 // loop_header_branch
                %4951 = sbr.rel (%p4948) target = $region74
              $region71: #{critic_forward.3} parent=59 // loop_body
                %v4955 = vld [vmem:[%s4953] sm:%s4857]
                %4956 = vst [vmem:[%s4954] sm:%s4857] %v4955
                %s4957 = sadd.s32 1, %s4952
                %p4958 = scmp.ge.s32.totalorder %s4957, %s4940
                %s4959 = scalar_select %p4958, 0, %s4957
                %s4960 = smul.u32 %s4959, 8
                %s4961 = smul.u32 %s4959, 8
                %s4962 = scalar_lea.vmem %s4943, %s4960 [#allocation2]
                %s4963 = scalar_lea.vmem %s4945, %s4961
              $region72: #{critic_forward.3} parent=59 // loop_footer
                %s4949 = sadd.s32 %s4947, 1
              $region73: #{critic_forward.3} parent=59 // loop_footer_branch
                %4946 = sbr.rel target = $region69
              $region74: #{critic_forward.3} parent=59 // loop_exit
                _
            $region60: #{critic_forward.3} parent=51 // pred_fallthru
              _
          $region52: #{critic_forward.3} parent=47 // pred_fallthru
            _
          %5074 = vnop
        $region48: #{critic_forward.3} parent=43 // pred_fallthru
          _
      $region44: #{critic_forward.3} parent=5 // pred_fallthru
        _
      %p5075 = scmp.le.s32.totalorder 2, %s12
      // Predicated region
      $region97: #{critic_forward.3} parent=5 // pred_check
        %p5076 = pneg %p5075
      $region98: #{critic_forward.3} parent=5 // pred_check_branch
        %5078 = sbr.rel (%p5076) target = $region100
      $region99: #{critic_forward.3} parent=5 // pred_region
        %s5079 = ssub.s32 %s12, 2
        // Predicated region
        $region101: #{critic_forward.3} parent=99 // pred_check
          %p5080 = pneg %p187
        $region102: #{critic_forward.3} parent=99 // pred_check_branch
          %5082 = sbr.rel (%p5080) target = $region104
        $region103: #{critic_forward.3} parent=99 // pred_region
          %s5083 = sand.u32 %s172, 1
          %s5084 = sand.u32 %s172, 1
          %s5085 = smul.addr %s5084, 1024
          %s5086 = scalar_lea.vmem [#allocation2], %s5085
        $region104: #{critic_forward.3} parent=99 // pred_fallthru
          _
      $region100: #{critic_forward.3} parent=5 // pred_fallthru
        _
    $region6: #{critic_forward.3} parent=1 // loop_footer
      %s16 = sadd.s32 1, %s12
    $region7: #{critic_forward.3} parent=1 // loop_footer_branch
      %11 = sbr.rel target = $region3
    $region8: #{critic_forward.3} parent=1 // loop_exit
      _

// kernel: critic_forward.4
$region0: #{critic_forward.4}
  #allocation0 [shape = 'u32[]', space=smem, size = 0x4, offset = 0x4, fixed_abs, tag = 'smem constant byte address 0x4 - core index']
  #allocation1 [shape = 'u32[72,128]{1,0:T(1,128)}', space=vmem, size = 0x9000, scoped, tag = 'internal scratch']
  %s0 = inlined_call_operand.vmem [shape: f32[930,64], index: 0, kind: input, shape index: {}]
  %s1 = inlined_call_operand.vmem [shape: f32[930,64], index: 1, kind: input, shape index: {}]
  %s2 = inlined_call_operand.vmem [shape: f32[930,64], index: 2, kind: input, shape index: {}]
  %s3 = inlined_call_operand.vmem [shape: f32[930,64], index: 3, kind: input, shape index: {}]
  %s4 = inlined_call_operand.vmem [shape: f32[64,32], index: 4, kind: input, shape index: {}]
  %s5 = inlined_call_operand.vmem [shape: f32[1,32], index: 5, kind: input, shape index: {}]
  %s6 = inlined_call_operand.vmem [shape: f32[930,32], index: 6, kind: output, shape index: {}]
  %s7 = sld [smem:[#allocation0]]
  $region105: #{critic_forward.4} parent=0
    _
  %s9 = ssub.s32 1, %s7
  %s10 = scalar_select 0, %s9, %s7
  $region1: #{critic_forward.4} parent=0
    #allocation2 [shape = 'u8[262144]{0}', space=vmem, size = 0x40000, scoped, tag = 'output window, operand 0']
    loop: start=0, step=1, limit=6
    $region2: #{critic_forward.4} parent=1 // loop_pre_header
      _
    $region3: #{critic_forward.4} parent=1 // loop_header
      %s12 = sphi 0, %s16
      %p13 = scmp.ge.s32.totalorder %s12, 6
      %s22 = sphi 0, %s24
      %s25 = sphi 0, %s22
      %s26 = sphi 0, %s25
      %s42 = sphi 0, %s26
      %s48 = sphi 0, %s50
      %s51 = sphi 0, %s48
      %s52 = sphi 0, %s51
      %s68 = sphi 0, %s52
      %s74 = sphi 0, %s76
      %s77 = sphi 0, %s74
      %s78 = sphi 0, %s77
      %s94 = sphi 0, %s78
      %s100 = sphi 0, %s102
      %s103 = sphi 0, %s100
      %s104 = sphi 0, %s103
      %s120 = sphi 0, %s104
      %s124 = sphi 0, %s124
      %s126 = sphi 0, %s124
      %s127 = sphi 0, %s126
      %s141 = sphi 0, %s127
      %s145 = sphi 0, %s145
      %s147 = sphi 0, %s145
      %s148 = sphi 0, %s147
      %s162 = sphi 0, %s148
      %s168 = sphi 0, %s170
      %s171 = sphi 0, %s168
      %s172 = sphi 0, %s171
      %s188 = sphi 0, %s172
    $region4: #{critic_forward.4} parent=1 // loop_header_branch
      %15 = sbr.rel (%p13) target = $region8
    $region5: #{critic_forward.4} parent=1 // loop_body
      %s17 = ssub.s32 %s12, 1
      %s18 = ssub.s32 %s12, 2
      %s19 = sadd.s32 %s12, 1
      %s20 = ssub.s32 %s12, %s19
      %p21 = scmp.eq.s32.totalorder %s20, 0
      %s23 = sadd.s32 %s22, 1
      %s24 = scalar_select %p21, %s22, %s23
      %p27 = pneg %p21
      %p28 = scmp.eq.s32.totalorder %s12, 3
      %p29 = por %p27, %p28
      %p30 = scmp.ne.s32.totalorder %s22, %s25
      %p31 = scmp.eq.s32.totalorder %s12, 0
      %p32 = por %p30, %p31
      %p33 = scmp.ne.s32.totalorder %s22, %s25
      %p34 = scmp.eq.s32.totalorder %s17, 3
      %p35 = por %p33, %p34
      %p36 = scmp.ne.s32.totalorder %s25, %s26
      %p37 = scmp.eq.s32.totalorder %s17, 0
      %p38 = por %p36, %p37
      %p39 = scmp.ne.s32.totalorder %s25, %s26
      %p40 = scmp.eq.s32.totalorder %s18, 3
      %p41 = por %p39, %p40
      %p43 = scmp.ne.s32.totalorder %s26, %s42
      %p44 = scmp.eq.s32.totalorder %s18, 0
      %p45 = por %p43, %p44
      %s46 = ssub.s32 %s12, %s19
      %p47 = scmp.eq.s32.totalorder %s46, 0
      %s49 = sadd.s32 %s48, 1
      %s50 = scalar_select %p47, %s48, %s49
      %p53 = pneg %p47
      %p54 = scmp.eq.s32.totalorder %s12, 3
      %p55 = por %p53, %p54
      %p56 = scmp.ne.s32.totalorder %s48, %s51
      %p57 = scmp.eq.s32.totalorder %s12, 0
      %p58 = por %p56, %p57
      %p59 = scmp.ne.s32.totalorder %s48, %s51
      %p60 = scmp.eq.s32.totalorder %s17, 3
      %p61 = por %p59, %p60
      %p62 = scmp.ne.s32.totalorder %s51, %s52
      %p63 = scmp.eq.s32.totalorder %s17, 0
      %p64 = por %p62, %p63
      %p65 = scmp.ne.s32.totalorder %s51, %s52
      %p66 = scmp.eq.s32.totalorder %s18, 3
      %p67 = por %p65, %p66
      %p69 = scmp.ne.s32.totalorder %s52, %s68
      %p70 = scmp.eq.s32.totalorder %s18, 0
      %p71 = por %p69, %p70
      %s72 = ssub.s32 %s12, %s19
      %p73 = scmp.eq.s32.totalorder %s72, 0
      %s75 = sadd.s32 %s74, 1
      %s76 = scalar_select %p73, %s74, %s75
      %p79 = pneg %p73
      %p80 = scmp.eq.s32.totalorder %s12, 3
      %p81 = por %p79, %p80
      %p82 = scmp.ne.s32.totalorder %s74, %s77
      %p83 = scmp.eq.s32.totalorder %s12, 0
      %p84 = por %p82, %p83
      %p85 = scmp.ne.s32.totalorder %s74, %s77
      %p86 = scmp.eq.s32.totalorder %s17, 3
      %p87 = por %p85, %p86
      %p88 = scmp.ne.s32.totalorder %s77, %s78
      %p89 = scmp.eq.s32.totalorder %s17, 0
      %p90 = por %p88, %p89
      %p91 = scmp.ne.s32.totalorder %s77, %s78
      %p92 = scmp.eq.s32.totalorder %s18, 3
      %p93 = por %p91, %p92
      %p95 = scmp.ne.s32.totalorder %s78, %s94
      %p96 = scmp.eq.s32.totalorder %s18, 0
      %p97 = por %p95, %p96
      %s98 = ssub.s32 %s12, %s19
      %p99 = scmp.eq.s32.totalorder %s98, 0
      %s101 = sadd.s32 %s100, 1
      %s102 = scalar_select %p99, %s100, %s101
      %p105 = pneg %p99
      %p106 = scmp.eq.s32.totalorder %s12, 3
      %p107 = por %p105, %p106
      %p108 = scmp.ne.s32.totalorder %s100, %s103
      %p109 = scmp.eq.s32.totalorder %s12, 0
      %p110 = por %p108, %p109
      %p111 = scmp.ne.s32.totalorder %s100, %s103
      %p112 = scmp.eq.s32.totalorder %s17, 3
      %p113 = por %p111, %p112
      %p114 = scmp.ne.s32.totalorder %s103, %s104
      %p115 = scmp.eq.s32.totalorder %s17, 0
      %p116 = por %p114, %p115
      %p117 = scmp.ne.s32.totalorder %s103, %s104
      %p118 = scmp.eq.s32.totalorder %s18, 3
      %p119 = por %p117, %p118
      %p121 = scmp.ne.s32.totalorder %s104, %s120
      %p122 = scmp.eq.s32.totalorder %s18, 0
      %p123 = por %p121, %p122
      %s125 = sadd.s32 %s124, 1
      %p128 = scmp.eq.s32.totalorder %s12, 3
      %p129 = scmp.ne.s32.totalorder %s124, %s126
      %p130 = scmp.eq.s32.totalorder %s12, 0
      %p131 = por %p129, %p130
      %p132 = scmp.ne.s32.totalorder %s124, %s126
      %p133 = scmp.eq.s32.totalorder %s17, 3
      %p134 = por %p132, %p133
      %p135 = scmp.ne.s32.totalorder %s126, %s127
      %p136 = scmp.eq.s32.totalorder %s17, 0
      %p137 = por %p135, %p136
      %p138 = scmp.ne.s32.totalorder %s126, %s127
      %p139 = scmp.eq.s32.totalorder %s18, 3
      %p140 = por %p138, %p139
      %p142 = scmp.ne.s32.totalorder %s127, %s141
      %p143 = scmp.eq.s32.totalorder %s18, 0
      %p144 = por %p142, %p143
      %s146 = sadd.s32 %s145, 1
      %p149 = scmp.eq.s32.totalorder %s12, 3
      %p150 = scmp.ne.s32.totalorder %s145, %s147
      %p151 = scmp.eq.s32.totalorder %s12, 0
      %p152 = por %p150, %p151
      %p153 = scmp.ne.s32.totalorder %s145, %s147
      %p154 = scmp.eq.s32.totalorder %s17, 3
      %p155 = por %p153, %p154
      %p156 = scmp.ne.s32.totalorder %s147, %s148
      %p157 = scmp.eq.s32.totalorder %s17, 0
      %p158 = por %p156, %p157
      %p159 = scmp.ne.s32.totalorder %s147, %s148
      %p160 = scmp.eq.s32.totalorder %s18, 3
      %p161 = por %p159, %p160
      %p163 = scmp.ne.s32.totalorder %s148, %s162
      %p164 = scmp.eq.s32.totalorder %s18, 0
      %p165 = por %p163, %p164
      %s166 = ssub.s32 %s12, %s19
      %p167 = scmp.eq.s32.totalorder %s166, 0
      %s169 = sadd.s32 %s168, 1
      %s170 = scalar_select %p167, %s168, %s169
      %p173 = pneg %p167
      %p174 = scmp.eq.s32.totalorder %s12, 3
      %p175 = por %p173, %p174
      %p176 = scmp.ne.s32.totalorder %s168, %s171
      %p177 = scmp.eq.s32.totalorder %s12, 0
      %p178 = por %p176, %p177
      %p179 = scmp.ne.s32.totalorder %s168, %s171
      %p180 = scmp.eq.s32.totalorder %s17, 3
      %p181 = por %p179, %p180
      %p182 = scmp.ne.s32.totalorder %s171, %s172
      %p183 = scmp.eq.s32.totalorder %s17, 0
      %p184 = por %p182, %p183
      %p185 = scmp.ne.s32.totalorder %s171, %s172
      %p186 = scmp.eq.s32.totalorder %s18, 3
      %p187 = por %p185, %p186
      %p189 = scmp.ne.s32.totalorder %s172, %s188
      %p190 = scmp.eq.s32.totalorder %s18, 0
      %p191 = por %p189, %p190
      %p192 = scmp.le.s32.totalorder 1, %s12
      %p193 = scmp.lt.s32.totalorder %s12, 5
      %p194 = pnand %p192, %p193
      %p195 = pneg %p194
      // Predicated region
      $region9: #{critic_forward.4} parent=5 // pred_check
        _
      $region10: #{critic_forward.4} parent=5 // pred_check_branch
        %197 = sbr.rel (%p194) target = $region12
      $region11: #{critic_forward.4} parent=5 // pred_region
        %s198 = ssub.s32 %s12, 1
        // Predicated region
        $region13: #{critic_forward.4} parent=11 // pred_check
          %p199 = pneg %p137
        $region14: #{critic_forward.4} parent=11 // pred_check_branch
          %201 = sbr.rel (%p199) target = $region16
        $region15: #{critic_forward.4} parent=11 // pred_region
          _
        $region16: #{critic_forward.4} parent=11 // pred_fallthru
          _
        // Predicated region
        $region17: #{critic_forward.4} parent=11 // pred_check
          %p202 = pneg %p158
        $region18: #{critic_forward.4} parent=11 // pred_check_branch
          %204 = sbr.rel (%p202) target = $region20
        $region19: #{critic_forward.4} parent=11 // pred_region
          _
        $region20: #{critic_forward.4} parent=11 // pred_fallthru
          _
      $region12: #{critic_forward.4} parent=5 // pred_fallthru
        _
      %p205 = scmp.lt.s32.totalorder %s12, 4
      // Predicated region
      $region21: #{critic_forward.4} parent=5 // pred_check
        %p206 = pneg %p205
      $region22: #{critic_forward.4} parent=5 // pred_check_branch
        %208 = sbr.rel (%p206) target = $region24
      $region23: #{critic_forward.4} parent=5 // pred_region
        // Predicated region
        $region25: #{critic_forward.4} parent=23 // pred_check
          %p209 = pneg %p32
        $region26: #{critic_forward.4} parent=23 // pred_check_branch
          %211 = sbr.rel (%p209) target = $region28
        $region27: #{critic_forward.4} parent=23 // pred_region
          %s212 = smul.u32 32, %s12
          %s213 = ssub.s32 117, %s212
          %p214 = scmp.lt.s32.totalorder %s213, 32
          %s215 = scalar_select %p214, %s213, 32
          %s216 = smul.u32 8, %s215
          %p217 = scmp.lt.s32.totalorder %s212, 116
          %s218 = scalar_select %p217, %s212, 116
          %s219 = smul.addr %s218, 8
          %s220 = scalar_lea.vmem %s0, %s219
          %s221 = smul.u32 32, %s12
          %s222 = ssub.s32 117, %s221
          %p223 = scmp.lt.s32.totalorder %s222, 32
          %s224 = scalar_select %p223, %s222, 32
          %s225 = smul.u32 8, %s224
        $region28: #{critic_forward.4} parent=23 // pred_fallthru
          _
        // Predicated region
        $region29: #{critic_forward.4} parent=23 // pred_check
          %p226 = pneg %p58
        $region30: #{critic_forward.4} parent=23 // pred_check_branch
          %228 = sbr.rel (%p226) target = $region32
        $region31: #{critic_forward.4} parent=23 // pred_region
          %s229 = smul.u32 32, %s12
          %s230 = ssub.s32 117, %s229
          %p231 = scmp.lt.s32.totalorder %s230, 32
          %s232 = scalar_select %p231, %s230, 32
          %s233 = smul.u32 8, %s232
          %p234 = scmp.lt.s32.totalorder %s229, 116
          %s235 = scalar_select %p234, %s229, 116
          %s236 = smul.addr %s235, 8
          %s237 = scalar_lea.vmem %s1, %s236
          %s238 = smul.u32 32, %s12
          %s239 = ssub.s32 117, %s238
          %p240 = scmp.lt.s32.totalorder %s239, 32
          %s241 = scalar_select %p240, %s239, 32
          %s242 = smul.u32 8, %s241
        $region32: #{critic_forward.4} parent=23 // pred_fallthru
          _
        // Predicated region
        $region33: #{critic_forward.4} parent=23 // pred_check
          %p243 = pneg %p84
        $region34: #{critic_forward.4} parent=23 // pred_check_branch
          %245 = sbr.rel (%p243) target = $region36
        $region35: #{critic_forward.4} parent=23 // pred_region
          %s246 = smul.u32 32, %s12
          %s247 = ssub.s32 117, %s246
          %p248 = scmp.lt.s32.totalorder %s247, 32
          %s249 = scalar_select %p248, %s247, 32
          %s250 = smul.u32 8, %s249
          %p251 = scmp.lt.s32.totalorder %s246, 116
          %s252 = scalar_select %p251, %s246, 116
          %s253 = smul.addr %s252, 8
          %s254 = scalar_lea.vmem %s2, %s253
          %s255 = smul.u32 32, %s12
          %s256 = ssub.s32 117, %s255
          %p257 = scmp.lt.s32.totalorder %s256, 32
          %s258 = scalar_select %p257, %s256, 32
          %s259 = smul.u32 8, %s258
        $region36: #{critic_forward.4} parent=23 // pred_fallthru
          _
        // Predicated region
        $region37: #{critic_forward.4} parent=23 // pred_check
          %p260 = pneg %p110
        $region38: #{critic_forward.4} parent=23 // pred_check_branch
          %262 = sbr.rel (%p260) target = $region40
        $region39: #{critic_forward.4} parent=23 // pred_region
          %s263 = smul.u32 32, %s12
          %s264 = ssub.s32 117, %s263
          %p265 = scmp.lt.s32.totalorder %s264, 32
          %s266 = scalar_select %p265, %s264, 32
          %s267 = smul.u32 8, %s266
          %p268 = scmp.lt.s32.totalorder %s263, 116
          %s269 = scalar_select %p268, %s263, 116
          %s270 = smul.addr %s269, 8
          %s271 = scalar_lea.vmem %s3, %s270
          %s272 = smul.u32 32, %s12
          %s273 = ssub.s32 117, %s272
          %p274 = scmp.lt.s32.totalorder %s273, 32
          %s275 = scalar_select %p274, %s273, 32
          %s276 = smul.u32 8, %s275
        $region40: #{critic_forward.4} parent=23 // pred_fallthru
          _
      $region24: #{critic_forward.4} parent=5 // pred_fallthru
        _
      %p277 = scmp.le.s32.totalorder 1, %s12
      %p278 = scmp.lt.s32.totalorder %s12, 5
      %p279 = pnand %p277, %p278
      %p280 = pneg %p279
      // Predicated region
      $region41: #{critic_forward.4} parent=5 // pred_check
        _
      $region42: #{critic_forward.4} parent=5 // pred_check_branch
        %282 = sbr.rel (%p279) target = $region44
      $region43: #{critic_forward.4} parent=5 // pred_region
        %s283 = ssub.s32 %s12, 1
        %s284 = smul.u32 32, %s17
        %s285 = ssub.s32 117, %s284
        %p286 = scmp.lt.s32.totalorder %s285, 32
        %s287 = scalar_select %p286, %s285, 32
        %s288 = smul.u32 8, %s287
        %p289 = scmp.lt.s32.totalorder %s284, 116
        %s290 = scalar_select %p289, %s284, 116
        %s291 = smul.addr %s290, 8
        %s292 = scalar_lea.vmem %s0, %s291
        %p293 = pneg %p38
        %p294 = pneg %p35
        %s295 = smul.u32 32, %s17
        %s296 = ssub.s32 117, %s295
        %p297 = scmp.lt.s32.totalorder %s296, 32
        %s298 = scalar_select %p297, %s296, 32
        %s299 = smul.u32 8, %s298
        %p300 = scmp.lt.s32.totalorder %s295, 116
        %s301 = scalar_select %p300, %s295, 116
        %s302 = smul.addr %s301, 8
        %s303 = scalar_lea.vmem %s1, %s302
        %p304 = pneg %p64
        %p305 = pneg %p61
        %s306 = smul.u32 32, %s17
        %s307 = ssub.s32 117, %s306
        %p308 = scmp.lt.s32.totalorder %s307, 32
        %s309 = scalar_select %p308, %s307, 32
        %s310 = smul.u32 8, %s309
        %p311 = scmp.lt.s32.totalorder %s306, 116
        %s312 = scalar_select %p311, %s306, 116
        %s313 = smul.addr %s312, 8
        %s314 = scalar_lea.vmem %s2, %s313
        %p315 = pneg %p90
        %p316 = pneg %p87
        %s317 = smul.u32 32, %s17
        %s318 = ssub.s32 117, %s317
        %p319 = scmp.lt.s32.totalorder %s318, 32
        %s320 = scalar_select %p319, %s318, 32
        %s321 = smul.u32 8, %s320
        %p322 = scmp.lt.s32.totalorder %s317, 116
        %s323 = scalar_select %p322, %s317, 116
        %s324 = smul.addr %s323, 8
        %s325 = scalar_lea.vmem %s3, %s324
        %p326 = pneg %p116
        %p327 = pneg %p113
        %p328 = pneg %p137
        %p329 = pneg %p134
        %p330 = pneg %p158
        %p331 = pneg %p155
        %p332 = pneg %p184
        %p333 = pneg %p181
        %s334 = sand.u32 %s171, 1
        %s335 = sand.u32 %s171, 1
        %s336 = smul.addr %s335, 256
        %s337 = scalar_lea.vmem [#allocation2], %s336
        %s338 = smul.u32 32, %s17
        %s339 = ssub.s32 117, %s338
        %p340 = scmp.lt.s32.totalorder %s339, 32
        %s341 = scalar_select %p340, %s339, 32
        %s342 = smul.u32 8, %s341
        %p343 = scmp.lt.s32.totalorder %s338, 116
        %s344 = scalar_select %p343, %s338, 116
        %s345 = smul.addr %s344, 8
        %s346 = scalar_lea.vmem %s0, %s345
        %s347 = smul.u32 32, %s17
        %s348 = ssub.s32 117, %s347
        %p349 = scmp.lt.s32.totalorder %s348, 32
        %s350 = scalar_select %p349, %s348, 32
        %s351 = smul.u32 8, %s350
        %s352 = smul.u32 32, %s17
        %s353 = ssub.s32 117, %s352
        %p354 = scmp.lt.s32.totalorder %s353, 32
        %s355 = scalar_select %p354, %s353, 32
        %s356 = smul.u32 8, %s355
        %p357 = scmp.lt.s32.totalorder %s352, 116
        %s358 = scalar_select %p357, %s352, 116
        %s359 = smul.addr %s358, 8
        %s360 = scalar_lea.vmem %s1, %s359
        %s361 = smul.u32 32, %s17
        %s362 = ssub.s32 117, %s361
        %p363 = scmp.lt.s32.totalorder %s362, 32
        %s364 = scalar_select %p363, %s362, 32
        %s365 = smul.u32 8, %s364
        %s366 = smul.u32 32, %s17
        %s367 = ssub.s32 117, %s366
        %p368 = scmp.lt.s32.totalorder %s367, 32
        %s369 = scalar_select %p368, %s367, 32
        %s370 = smul.u32 8, %s369
        %p371 = scmp.lt.s32.totalorder %s366, 116
        %s372 = scalar_select %p371, %s366, 116
        %s373 = smul.addr %s372, 8
        %s374 = scalar_lea.vmem %s2, %s373
        %s375 = smul.u32 32, %s17
        %s376 = ssub.s32 117, %s375
        %p377 = scmp.lt.s32.totalorder %s376, 32
        %s378 = scalar_select %p377, %s376, 32
        %s379 = smul.u32 8, %s378
        %s380 = smul.u32 32, %s17
        %s381 = ssub.s32 117, %s380
        %p382 = scmp.lt.s32.totalorder %s381, 32
        %s383 = scalar_select %p382, %s381, 32
        %s384 = smul.u32 8, %s383
        %p385 = scmp.lt.s32.totalorder %s380, 116
        %s386 = scalar_select %p385, %s380, 116
        %s387 = smul.addr %s386, 8
        %s388 = scalar_lea.vmem %s3, %s387
        %s389 = smul.u32 32, %s17
        %s390 = ssub.s32 117, %s389
        %p391 = scmp.lt.s32.totalorder %s390, 32
        %s392 = scalar_select %p391, %s390, 32
        %s393 = smul.u32 8, %s392
        %s394 = smul.u32 32, %s17
        %s395 = ssub.s32 117, %s394
        %p396 = scmp.lt.s32.totalorder %s395, 32
        %s397 = scalar_select %p396, %s395, 32
        %s398 = smul.u32 8, %s397
        %v399 = vld [vmem:[%s4] sm:$0xff]
        %v400 = vld [vmem:[%s4 + $0x8] sm:$0xff]
        %v401 = vld [vmem:[%s4 + $0x10] sm:$0xff]
        %v402 = vld [vmem:[%s4 + $0x18] sm:$0xff]
        %v403 = vld [vmem:[%s4 + $0x20] sm:$0xff]
        %v404 = vld [vmem:[%s4 + $0x28] sm:$0xff]
        %v405 = vld [vmem:[%s4 + $0x30] sm:$0xff]
        %v406 = vld [vmem:[%s4 + $0x38] sm:$0xff]
        %v407 = vld [vmem:[%s346] sm:$0xff]
        %v408 = vld [vmem:[%s346 + $0x8] sm:$0xff]
        %v409 = vld [vmem:[%s346 + $0x10] sm:$0xff]
        %v410 = vld [vmem:[%s346 + $0x18] sm:$0xff]
        %v411 = vld [vmem:[%s346 + $0x20] sm:$0xff]
        %v412 = vld [vmem:[%s346 + $0x28] sm:$0xff]
        %v413 = vld [vmem:[%s346 + $0x30] sm:$0xff]
        %v414 = vld [vmem:[%s346 + $0x38] sm:$0xff]
        %v415 = vld [vmem:[%s346 + $0x40] sm:$0xff]
        %v416 = vld [vmem:[%s346 + $0x48] sm:$0xff]
        %v417 = vld [vmem:[%s346 + $0x50] sm:$0xff]
        %v418 = vld [vmem:[%s346 + $0x58] sm:$0xff]
        %v419 = vld [vmem:[%s346 + $0x60] sm:$0xff]
        %v420 = vld [vmem:[%s346 + $0x68] sm:$0xff]
        %v421 = vld [vmem:[%s346 + $0x70] sm:$0xff]
        %v422 = vld [vmem:[%s346 + $0x78] sm:$0xff]
        %v423 = vld [vmem:[%s346 + $0x80] sm:$0xff]
        %v424 = vld [vmem:[%s346 + $0x88] sm:$0xff]
        %v425 = vld [vmem:[%s346 + $0x90] sm:$0xff]
        %v426 = vld [vmem:[%s346 + $0x98] sm:$0xff]
        %v427 = vld [vmem:[%s346 + $0xa0] sm:$0xff]
        %v428 = vld [vmem:[%s346 + $0xa8] sm:$0xff]
        %v429 = vld [vmem:[%s346 + $0xb0] sm:$0xff]
        %v430 = vld [vmem:[%s346 + $0xb8] sm:$0xff]
        %v431 = vld [vmem:[%s346 + $0xc0] sm:$0xff]
        %v432 = vld [vmem:[%s346 + $0xc8] sm:$0xff]
        %v433 = vld [vmem:[%s346 + $0xd0] sm:$0xff]
        %v434 = vld [vmem:[%s346 + $0xd8] sm:$0xff]
        %v435 = vld [vmem:[%s346 + $0xe0] sm:$0xff]
        %v436 = vld [vmem:[%s346 + $0xe8] sm:$0xff]
        %v437 = vld [vmem:[%s346 + $0xf0] sm:$0xff]
        %v438 = vld [vmem:[%s346 + $0xf8] sm:$0xff]
        %vm439 = vcmask 523264
        %v441 = vsel %vm439, %v407, 0
        %v444 = vsel %vm439, %v408, 0
        %v447 = vsel %vm439, %v409, 0
        %v450 = vsel %vm439, %v410, 0
        %v453 = vsel %vm439, %v411, 0
        %v456 = vsel %vm439, %v412, 0
        %v459 = vsel %vm439, %v413, 0
        %v462 = vsel %vm439, %v414, 0
        %v465 = vsel %vm439, %v415, 0
        %v468 = vsel %vm439, %v416, 0
        %v471 = vsel %vm439, %v417, 0
        %v474 = vsel %vm439, %v418, 0
        %v477 = vsel %vm439, %v419, 0
        %v480 = vsel %vm439, %v420, 0
        %v483 = vsel %vm439, %v421, 0
        %v486 = vsel %vm439, %v422, 0
        %v489 = vsel %vm439, %v423, 0
        %v492 = vsel %vm439, %v424, 0
        %v495 = vsel %vm439, %v425, 0
        %v498 = vsel %vm439, %v426, 0
        %v501 = vsel %vm439, %v427, 0
        %v504 = vsel %vm439, %v428, 0
        %v507 = vsel %vm439, %v429, 0
        %v510 = vsel %vm439, %v430, 0
        %v513 = vsel %vm439, %v431, 0
        %v516 = vsel %vm439, %v432, 0
        %v519 = vsel %vm439, %v433, 0
        %v522 = vsel %vm439, %v434, 0
        %v525 = vsel %vm439, %v435, 0
        %v528 = vsel %vm439, %v436, 0
        %v531 = vsel %vm439, %v437, 0
        %v534 = vsel %vm439, %v438, 0
        %536 = vmatpush.msra.mxu0 0.0
        %537 = vmatpush.msra.mxu0 0.0
        %538 = vmatpush.msra.mxu0 0.0
        %539 = vmatpush.msra.mxu0 0.0
        %540 = vmatpush.msra.mxu0 0.0
        %541 = vmatpush.msra.mxu0 0.0
        %542 = vmatpush.msra.mxu0 0.0
        %543 = vmatpush.msra.mxu0 0.0
        %544 = vmatpush.msra.mxu0 %v406
        %545 = vmatpush.msra.mxu0 %v405
        %546 = vmatpush.msra.mxu0 %v404
        %547 = vmatpush.msra.mxu0 %v403
        %548 = vmatpush.msra.mxu0 %v402
        %549 = vmatpush.msra.mxu0 %v401
        %550 = vmatpush.msra.mxu0 %v400
        %551 = vmatpush.msra.mxu0 %v399
        %552 = vmatmul.f32.gmra.mxu0 %v441
        %v553 = vpop.f32.mrf.mxu0
        %v554 = vadd.f32 0.0, %v553
        %555 = vmatmul.f32.gmra.mxu0 %v444
        %v556 = vpop.f32.mrf.mxu0
        %v557 = vadd.f32 0.0, %v556
        %558 = vmatmul.f32.gmra.mxu0 %v447
        %v559 = vpop.f32.mrf.mxu0
        %v560 = vadd.f32 0.0, %v559
        %561 = vmatmul.f32.gmra.mxu0 %v450
        %v562 = vpop.f32.mrf.mxu0
        %v563 = vadd.f32 0.0, %v562
        %564 = vmatmul.f32.gmra.mxu0 %v453
        %v565 = vpop.f32.mrf.mxu0
        %v566 = vadd.f32 0.0, %v565
        %567 = vmatmul.f32.gmra.mxu0 %v456
        %v568 = vpop.f32.mrf.mxu0
        %v569 = vadd.f32 0.0, %v568
        %570 = vmatmul.f32.gmra.mxu0 %v459
        %v571 = vpop.f32.mrf.mxu0
        %v572 = vadd.f32 0.0, %v571
        %573 = vmatmul.f32.gmra.mxu0 %v462
        %v574 = vpop.f32.mrf.mxu0
        %v575 = vadd.f32 0.0, %v574
        %576 = vmatmul.f32.gmra.mxu0 %v465
        %v577 = vpop.f32.mrf.mxu0
        %v578 = vadd.f32 0.0, %v577
        %579 = vmatmul.f32.gmra.mxu0 %v468
        %v580 = vpop.f32.mrf.mxu0
        %v581 = vadd.f32 0.0, %v580
        %582 = vmatmul.f32.gmra.mxu0 %v471
        %v583 = vpop.f32.mrf.mxu0
        %v584 = vadd.f32 0.0, %v583
        %585 = vmatmul.f32.gmra.mxu0 %v474
        %v586 = vpop.f32.mrf.mxu0
        %v587 = vadd.f32 0.0, %v586
        %588 = vmatmul.f32.gmra.mxu0 %v477
        %v589 = vpop.f32.mrf.mxu0
        %v590 = vadd.f32 0.0, %v589
        %591 = vmatmul.f32.gmra.mxu0 %v480
        %v592 = vpop.f32.mrf.mxu0
        %v593 = vadd.f32 0.0, %v592
        %594 = vmatmul.f32.gmra.mxu0 %v483
        %v595 = vpop.f32.mrf.mxu0
        %v596 = vadd.f32 0.0, %v595
        %597 = vmatmul.f32.gmra.mxu0 %v486
        %v598 = vpop.f32.mrf.mxu0
        %v599 = vadd.f32 0.0, %v598
        %600 = vmatmul.f32.gmra.mxu0 %v489
        %v601 = vpop.f32.mrf.mxu0
        %v602 = vadd.f32 0.0, %v601
        %603 = vmatmul.f32.gmra.mxu0 %v492
        %v604 = vpop.f32.mrf.mxu0
        %v605 = vadd.f32 0.0, %v604
        %606 = vmatmul.f32.gmra.mxu0 %v495
        %v607 = vpop.f32.mrf.mxu0
        %v608 = vadd.f32 0.0, %v607
        %609 = vmatmul.f32.gmra.mxu0 %v498
        %v610 = vpop.f32.mrf.mxu0
        %v611 = vadd.f32 0.0, %v610
        %612 = vmatmul.f32.gmra.mxu0 %v501
        %v613 = vpop.f32.mrf.mxu0
        %v614 = vadd.f32 0.0, %v613
        %615 = vmatmul.f32.gmra.mxu0 %v504
        %v616 = vpop.f32.mrf.mxu0
        %v617 = vadd.f32 0.0, %v616
        %618 = vmatmul.f32.gmra.mxu0 %v507
        %v619 = vpop.f32.mrf.mxu0
        %v620 = vadd.f32 0.0, %v619
        %621 = vmatmul.f32.gmra.mxu0 %v510
        %v622 = vpop.f32.mrf.mxu0
        %v623 = vadd.f32 0.0, %v622
        %624 = vmatmul.f32.gmra.mxu0 %v513
        %v625 = vpop.f32.mrf.mxu0
        %v626 = vadd.f32 0.0, %v625
        %627 = vmatmul.f32.gmra.mxu0 %v516
        %v628 = vpop.f32.mrf.mxu0
        %v629 = vadd.f32 0.0, %v628
        %630 = vmatmul.f32.gmra.mxu0 %v519
        %v631 = vpop.f32.mrf.mxu0
        %v632 = vadd.f32 0.0, %v631
        %633 = vmatmul.f32.gmra.mxu0 %v522
        %v634 = vpop.f32.mrf.mxu0
        %v635 = vadd.f32 0.0, %v634
        %636 = vmatmul.f32.gmra.mxu0 %v525
        %v637 = vpop.f32.mrf.mxu0
        %v638 = vadd.f32 0.0, %v637
        %639 = vmatmul.f32.gmra.mxu0 %v528
        %v640 = vpop.f32.mrf.mxu0
        %v641 = vadd.f32 0.0, %v640
        %642 = vmatmul.f32.gmra.mxu0 %v531
        %v643 = vpop.f32.mrf.mxu0
        %v644 = vadd.f32 0.0, %v643
        %645 = vmatmul.f32.gmra.mxu0 %v534
        %v646 = vpop.f32.mrf.mxu0
        %v647 = vadd.f32 0.0, %v646
        %648 = vdwg.mxu0
        %v649 = vld [vmem:[%s360] sm:$0xff]
        %v650 = vld [vmem:[%s360 + $0x8] sm:$0xff]
        %v651 = vld [vmem:[%s360 + $0x10] sm:$0xff]
        %v652 = vld [vmem:[%s360 + $0x18] sm:$0xff]
        %v653 = vld [vmem:[%s360 + $0x20] sm:$0xff]
        %v654 = vld [vmem:[%s360 + $0x28] sm:$0xff]
        %v655 = vld [vmem:[%s360 + $0x30] sm:$0xff]
        %v656 = vld [vmem:[%s360 + $0x38] sm:$0xff]
        %v657 = vld [vmem:[%s360 + $0x40] sm:$0xff]
        %v658 = vld [vmem:[%s360 + $0x48] sm:$0xff]
        %v659 = vld [vmem:[%s360 + $0x50] sm:$0xff]
        %v660 = vld [vmem:[%s360 + $0x58] sm:$0xff]
        %v661 = vld [vmem:[%s360 + $0x60] sm:$0xff]
        %v662 = vld [vmem:[%s360 + $0x68] sm:$0xff]
        %v663 = vld [vmem:[%s360 + $0x70] sm:$0xff]
        %v664 = vld [vmem:[%s360 + $0x78] sm:$0xff]
        %v665 = vld [vmem:[%s360 + $0x80] sm:$0xff]
        %v666 = vld [vmem:[%s360 + $0x88] sm:$0xff]
        %v667 = vld [vmem:[%s360 + $0x90] sm:$0xff]
        %v668 = vld [vmem:[%s360 + $0x98] sm:$0xff]
        %v669 = vld [vmem:[%s360 + $0xa0] sm:$0xff]
        %v670 = vld [vmem:[%s360 + $0xa8] sm:$0xff]
        %v671 = vld [vmem:[%s360 + $0xb0] sm:$0xff]
        %v672 = vld [vmem:[%s360 + $0xb8] sm:$0xff]
        %v673 = vld [vmem:[%s360 + $0xc0] sm:$0xff]
        %v674 = vld [vmem:[%s360 + $0xc8] sm:$0xff]
        %v675 = vld [vmem:[%s360 + $0xd0] sm:$0xff]
        %v676 = vld [vmem:[%s360 + $0xd8] sm:$0xff]
        %v677 = vld [vmem:[%s360 + $0xe0] sm:$0xff]
        %v678 = vld [vmem:[%s360 + $0xe8] sm:$0xff]
        %v679 = vld [vmem:[%s360 + $0xf0] sm:$0xff]
        %v680 = vld [vmem:[%s360 + $0xf8] sm:$0xff]
        %v682 = vsel %vm439, %v649, 0
        %v685 = vsel %vm439, %v650, 0
        %v688 = vsel %vm439, %v651, 0
        %v691 = vsel %vm439, %v652, 0
        %v694 = vsel %vm439, %v653, 0
        %v697 = vsel %vm439, %v654, 0
        %v700 = vsel %vm439, %v655, 0
        %v703 = vsel %vm439, %v656, 0
        %v706 = vsel %vm439, %v657, 0
        %v709 = vsel %vm439, %v658, 0
        %v712 = vsel %vm439, %v659, 0
        %v715 = vsel %vm439, %v660, 0
        %v718 = vsel %vm439, %v661, 0
        %v721 = vsel %vm439, %v662, 0
        %v724 = vsel %vm439, %v663, 0
        %v727 = vsel %vm439, %v664, 0
        %v730 = vsel %vm439, %v665, 0
        %v733 = vsel %vm439, %v666, 0
        %v736 = vsel %vm439, %v667, 0
        %v739 = vsel %vm439, %v668, 0
        %v742 = vsel %vm439, %v669, 0
        %v745 = vsel %vm439, %v670, 0
        %v748 = vsel %vm439, %v671, 0
        %v751 = vsel %vm439, %v672, 0
        %v754 = vsel %vm439, %v673, 0
        %v757 = vsel %vm439, %v674, 0
        %v760 = vsel %vm439, %v675, 0
        %v763 = vsel %vm439, %v676, 0
        %v766 = vsel %vm439, %v677, 0
        %v769 = vsel %vm439, %v678, 0
        %v772 = vsel %vm439, %v679, 0
        %v775 = vsel %vm439, %v680, 0
        %777 = vmatpush.msra.mxu0 0.0
        %778 = vmatpush.msra.mxu0 0.0
        %779 = vmatpush.msra.mxu0 0.0
        %780 = vmatpush.msra.mxu0 0.0
        %781 = vmatpush.msra.mxu0 0.0
        %782 = vmatpush.msra.mxu0 0.0
        %783 = vmatpush.msra.mxu0 0.0
        %784 = vmatpush.msra.mxu0 0.0
        %785 = vmatpush.msra.mxu0 %v406
        %786 = vmatpush.msra.mxu0 %v405
        %787 = vmatpush.msra.mxu0 %v404
        %788 = vmatpush.msra.mxu0 %v403
        %789 = vmatpush.msra.mxu0 %v402
        %790 = vmatpush.msra.mxu0 %v401
        %791 = vmatpush.msra.mxu0 %v400
        %792 = vmatpush.msra.mxu0 %v399
        %793 = vmatmul.f32.gmra.mxu0 %v682
        %v794 = vpop.f32.mrf.mxu0
        %v795 = vadd.f32 0.0, %v794
        %796 = vmatmul.f32.gmra.mxu0 %v685
        %v797 = vpop.f32.mrf.mxu0
        %v798 = vadd.f32 0.0, %v797
        %799 = vmatmul.f32.gmra.mxu0 %v688
        %v800 = vpop.f32.mrf.mxu0
        %v801 = vadd.f32 0.0, %v800
        %802 = vmatmul.f32.gmra.mxu0 %v691
        %v803 = vpop.f32.mrf.mxu0
        %v804 = vadd.f32 0.0, %v803
        %805 = vmatmul.f32.gmra.mxu0 %v694
        %v806 = vpop.f32.mrf.mxu0
        %v807 = vadd.f32 0.0, %v806
        %808 = vmatmul.f32.gmra.mxu0 %v697
        %v809 = vpop.f32.mrf.mxu0
        %v810 = vadd.f32 0.0, %v809
        %811 = vmatmul.f32.gmra.mxu0 %v700
        %v812 = vpop.f32.mrf.mxu0
        %v813 = vadd.f32 0.0, %v812
        %814 = vmatmul.f32.gmra.mxu0 %v703
        %v815 = vpop.f32.mrf.mxu0
        %v816 = vadd.f32 0.0, %v815
        %817 = vmatmul.f32.gmra.mxu0 %v706
        %v818 = vpop.f32.mrf.mxu0
        %v819 = vadd.f32 0.0, %v818
        %820 = vmatmul.f32.gmra.mxu0 %v709
        %v821 = vpop.f32.mrf.mxu0
        %v822 = vadd.f32 0.0, %v821
        %823 = vmatmul.f32.gmra.mxu0 %v712
        %v824 = vpop.f32.mrf.mxu0
        %v825 = vadd.f32 0.0, %v824
        %826 = vmatmul.f32.gmra.mxu0 %v715
        %v827 = vpop.f32.mrf.mxu0
        %v828 = vadd.f32 0.0, %v827
        %829 = vmatmul.f32.gmra.mxu0 %v718
        %v830 = vpop.f32.mrf.mxu0
        %v831 = vadd.f32 0.0, %v830
        %832 = vmatmul.f32.gmra.mxu0 %v721
        %v833 = vpop.f32.mrf.mxu0
        %v834 = vadd.f32 0.0, %v833
        %835 = vmatmul.f32.gmra.mxu0 %v724
        %v836 = vpop.f32.mrf.mxu0
        %v837 = vadd.f32 0.0, %v836
        %838 = vmatmul.f32.gmra.mxu0 %v727
        %v839 = vpop.f32.mrf.mxu0
        %v840 = vadd.f32 0.0, %v839
        %841 = vmatmul.f32.gmra.mxu0 %v730
        %v842 = vpop.f32.mrf.mxu0
        %v843 = vadd.f32 0.0, %v842
        %844 = vmatmul.f32.gmra.mxu0 %v733
        %v845 = vpop.f32.mrf.mxu0
        %v846 = vadd.f32 0.0, %v845
        %847 = vmatmul.f32.gmra.mxu0 %v736
        %v848 = vpop.f32.mrf.mxu0
        %v849 = vadd.f32 0.0, %v848
        %850 = vmatmul.f32.gmra.mxu0 %v739
        %v851 = vpop.f32.mrf.mxu0
        %v852 = vadd.f32 0.0, %v851
        %853 = vmatmul.f32.gmra.mxu0 %v742
        %v854 = vpop.f32.mrf.mxu0
        %v855 = vadd.f32 0.0, %v854
        %856 = vmatmul.f32.gmra.mxu0 %v745
        %v857 = vpop.f32.mrf.mxu0
        %v858 = vadd.f32 0.0, %v857
        %859 = vmatmul.f32.gmra.mxu0 %v748
        %v860 = vpop.f32.mrf.mxu0
        %v861 = vadd.f32 0.0, %v860
        %862 = vmatmul.f32.gmra.mxu0 %v751
        %v863 = vpop.f32.mrf.mxu0
        %v864 = vadd.f32 0.0, %v863
        %865 = vmatmul.f32.gmra.mxu0 %v754
        %v866 = vpop.f32.mrf.mxu0
        %v867 = vadd.f32 0.0, %v866
        %868 = vmatmul.f32.gmra.mxu0 %v757
        %v869 = vpop.f32.mrf.mxu0
        %v870 = vadd.f32 0.0, %v869
        %871 = vmatmul.f32.gmra.mxu0 %v760
        %v872 = vpop.f32.mrf.mxu0
        %v873 = vadd.f32 0.0, %v872
        %874 = vmatmul.f32.gmra.mxu0 %v763
        %v875 = vpop.f32.mrf.mxu0
        %v876 = vadd.f32 0.0, %v875
        %877 = vmatmul.f32.gmra.mxu0 %v766
        %v878 = vpop.f32.mrf.mxu0
        %v879 = vadd.f32 0.0, %v878
        %880 = vmatmul.f32.gmra.mxu0 %v769
        %v881 = vpop.f32.mrf.mxu0
        %v882 = vadd.f32 0.0, %v881
        %883 = vmatmul.f32.gmra.mxu0 %v772
        %v884 = vpop.f32.mrf.mxu0
        %v885 = vadd.f32 0.0, %v884
        %886 = vmatmul.f32.gmra.mxu0 %v775
        %v887 = vpop.f32.mrf.mxu0
        %v888 = vadd.f32 0.0, %v887
        %889 = vdwg.mxu0
        %v890 = vmax.f32 %v554, %v795
        %v891 = vmax.f32 %v557, %v798
        %v892 = vmax.f32 %v560, %v801
        %v893 = vmax.f32 %v563, %v804
        %v894 = vmax.f32 %v566, %v807
        %v895 = vmax.f32 %v569, %v810
        %v896 = vmax.f32 %v572, %v813
        %v897 = vmax.f32 %v575, %v816
        %v898 = vmax.f32 %v578, %v819
        %v899 = vmax.f32 %v581, %v822
        %v900 = vmax.f32 %v584, %v825
        %v901 = vmax.f32 %v587, %v828
        %v902 = vmax.f32 %v590, %v831
        %v903 = vmax.f32 %v593, %v834
        %v904 = vmax.f32 %v596, %v837
        %v905 = vmax.f32 %v599, %v840
        %v906 = vmax.f32 %v602, %v843
        %v907 = vmax.f32 %v605, %v846
        %v908 = vmax.f32 %v608, %v849
        %v909 = vmax.f32 %v611, %v852
        %v910 = vmax.f32 %v614, %v855
        %v911 = vmax.f32 %v617, %v858
        %v912 = vmax.f32 %v620, %v861
        %v913 = vmax.f32 %v623, %v864
        %v914 = vmax.f32 %v626, %v867
        %v915 = vmax.f32 %v629, %v870
        %v916 = vmax.f32 %v632, %v873
        %v917 = vmax.f32 %v635, %v876
        %v918 = vmax.f32 %v638, %v879
        %v919 = vmax.f32 %v641, %v882
        %v920 = vmax.f32 %v644, %v885
        %v921 = vmax.f32 %v647, %v888
        %v922 = vld [vmem:[%s374] sm:$0xff]
        %v923 = vld [vmem:[%s374 + $0x8] sm:$0xff]
        %v924 = vld [vmem:[%s374 + $0x10] sm:$0xff]
        %v925 = vld [vmem:[%s374 + $0x18] sm:$0xff]
        %v926 = vld [vmem:[%s374 + $0x20] sm:$0xff]
        %v927 = vld [vmem:[%s374 + $0x28] sm:$0xff]
        %v928 = vld [vmem:[%s374 + $0x30] sm:$0xff]
        %v929 = vld [vmem:[%s374 + $0x38] sm:$0xff]
        %v930 = vld [vmem:[%s374 + $0x40] sm:$0xff]
        %v931 = vld [vmem:[%s374 + $0x48] sm:$0xff]
        %v932 = vld [vmem:[%s374 + $0x50] sm:$0xff]
        %v933 = vld [vmem:[%s374 + $0x58] sm:$0xff]
        %v934 = vld [vmem:[%s374 + $0x60] sm:$0xff]
        %v935 = vld [vmem:[%s374 + $0x68] sm:$0xff]
        %v936 = vld [vmem:[%s374 + $0x70] sm:$0xff]
        %v937 = vld [vmem:[%s374 + $0x78] sm:$0xff]
        %v938 = vld [vmem:[%s374 + $0x80] sm:$0xff]
        %v939 = vld [vmem:[%s374 + $0x88] sm:$0xff]
        %v940 = vld [vmem:[%s374 + $0x90] sm:$0xff]
        %v941 = vld [vmem:[%s374 + $0x98] sm:$0xff]
        %v942 = vld [vmem:[%s374 + $0xa0] sm:$0xff]
        %v943 = vld [vmem:[%s374 + $0xa8] sm:$0xff]
        %v944 = vld [vmem:[%s374 + $0xb0] sm:$0xff]
        %v945 = vld [vmem:[%s374 + $0xb8] sm:$0xff]
        %v946 = vld [vmem:[%s374 + $0xc0] sm:$0xff]
        %v947 = vld [vmem:[%s374 + $0xc8] sm:$0xff]
        %v948 = vld [vmem:[%s374 + $0xd0] sm:$0xff]
        %v949 = vld [vmem:[%s374 + $0xd8] sm:$0xff]
        %v950 = vld [vmem:[%s374 + $0xe0] sm:$0xff]
        %v951 = vld [vmem:[%s374 + $0xe8] sm:$0xff]
        %v952 = vld [vmem:[%s374 + $0xf0] sm:$0xff]
        %v953 = vld [vmem:[%s374 + $0xf8] sm:$0xff]
        %v955 = vsel %vm439, %v922, 0
        %v958 = vsel %vm439, %v923, 0
        %v961 = vsel %vm439, %v924, 0
        %v964 = vsel %vm439, %v925, 0
        %v967 = vsel %vm439, %v926, 0
        %v970 = vsel %vm439, %v927, 0
        %v973 = vsel %vm439, %v928, 0
        %v976 = vsel %vm439, %v929, 0
        %v979 = vsel %vm439, %v930, 0
        %v982 = vsel %vm439, %v931, 0
        %v985 = vsel %vm439, %v932, 0
        %v988 = vsel %vm439, %v933, 0
        %v991 = vsel %vm439, %v934, 0
        %v994 = vsel %vm439, %v935, 0
        %v997 = vsel %vm439, %v936, 0
        %v1000 = vsel %vm439, %v937, 0
        %v1003 = vsel %vm439, %v938, 0
        %v1006 = vsel %vm439, %v939, 0
        %v1009 = vsel %vm439, %v940, 0
        %v1012 = vsel %vm439, %v941, 0
        %v1015 = vsel %vm439, %v942, 0
        %v1018 = vsel %vm439, %v943, 0
        %v1021 = vsel %vm439, %v944, 0
        %v1024 = vsel %vm439, %v945, 0
        %v1027 = vsel %vm439, %v946, 0
        %v1030 = vsel %vm439, %v947, 0
        %v1033 = vsel %vm439, %v948, 0
        %v1036 = vsel %vm439, %v949, 0
        %v1039 = vsel %vm439, %v950, 0
        %v1042 = vsel %vm439, %v951, 0
        %v1045 = vsel %vm439, %v952, 0
        %v1048 = vsel %vm439, %v953, 0
        %1050 = vmatpush.msra.mxu0 0.0
        %1051 = vmatpush.msra.mxu0 0.0
        %1052 = vmatpush.msra.mxu0 0.0
        %1053 = vmatpush.msra.mxu0 0.0
        %1054 = vmatpush.msra.mxu0 0.0
        %1055 = vmatpush.msra.mxu0 0.0
        %1056 = vmatpush.msra.mxu0 0.0
        %1057 = vmatpush.msra.mxu0 0.0
        %1058 = vmatpush.msra.mxu0 %v406
        %1059 = vmatpush.msra.mxu0 %v405
        %1060 = vmatpush.msra.mxu0 %v404
        %1061 = vmatpush.msra.mxu0 %v403
        %1062 = vmatpush.msra.mxu0 %v402
        %1063 = vmatpush.msra.mxu0 %v401
        %1064 = vmatpush.msra.mxu0 %v400
        %1065 = vmatpush.msra.mxu0 %v399
        %1066 = vmatmul.f32.gmra.mxu0 %v955
        %v1067 = vpop.f32.mrf.mxu0
        %v1068 = vadd.f32 0.0, %v1067
        %1069 = vmatmul.f32.gmra.mxu0 %v958
        %v1070 = vpop.f32.mrf.mxu0
        %v1071 = vadd.f32 0.0, %v1070
        %1072 = vmatmul.f32.gmra.mxu0 %v961
        %v1073 = vpop.f32.mrf.mxu0
        %v1074 = vadd.f32 0.0, %v1073
        %1075 = vmatmul.f32.gmra.mxu0 %v964
        %v1076 = vpop.f32.mrf.mxu0
        %v1077 = vadd.f32 0.0, %v1076
        %1078 = vmatmul.f32.gmra.mxu0 %v967
        %v1079 = vpop.f32.mrf.mxu0
        %v1080 = vadd.f32 0.0, %v1079
        %1081 = vmatmul.f32.gmra.mxu0 %v970
        %v1082 = vpop.f32.mrf.mxu0
        %v1083 = vadd.f32 0.0, %v1082
        %1084 = vmatmul.f32.gmra.mxu0 %v973
        %v1085 = vpop.f32.mrf.mxu0
        %v1086 = vadd.f32 0.0, %v1085
        %1087 = vmatmul.f32.gmra.mxu0 %v976
        %v1088 = vpop.f32.mrf.mxu0
        %v1089 = vadd.f32 0.0, %v1088
        %1090 = vmatmul.f32.gmra.mxu0 %v979
        %v1091 = vpop.f32.mrf.mxu0
        %v1092 = vadd.f32 0.0, %v1091
        %1093 = vmatmul.f32.gmra.mxu0 %v982
        %v1094 = vpop.f32.mrf.mxu0
        %v1095 = vadd.f32 0.0, %v1094
        %1096 = vmatmul.f32.gmra.mxu0 %v985
        %v1097 = vpop.f32.mrf.mxu0
        %v1098 = vadd.f32 0.0, %v1097
        %1099 = vmatmul.f32.gmra.mxu0 %v988
        %v1100 = vpop.f32.mrf.mxu0
        %v1101 = vadd.f32 0.0, %v1100
        %1102 = vmatmul.f32.gmra.mxu0 %v991
        %v1103 = vpop.f32.mrf.mxu0
        %v1104 = vadd.f32 0.0, %v1103
        %1105 = vmatmul.f32.gmra.mxu0 %v994
        %v1106 = vpop.f32.mrf.mxu0
        %v1107 = vadd.f32 0.0, %v1106
        %1108 = vmatmul.f32.gmra.mxu0 %v997
        %v1109 = vpop.f32.mrf.mxu0
        %v1110 = vadd.f32 0.0, %v1109
        %1111 = vmatmul.f32.gmra.mxu0 %v1000
        %v1112 = vpop.f32.mrf.mxu0
        %v1113 = vadd.f32 0.0, %v1112
        %1114 = vmatmul.f32.gmra.mxu0 %v1003
        %v1115 = vpop.f32.mrf.mxu0
        %v1116 = vadd.f32 0.0, %v1115
        %1117 = vmatmul.f32.gmra.mxu0 %v1006
        %v1118 = vpop.f32.mrf.mxu0
        %v1119 = vadd.f32 0.0, %v1118
        %1120 = vmatmul.f32.gmra.mxu0 %v1009
        %v1121 = vpop.f32.mrf.mxu0
        %v1122 = vadd.f32 0.0, %v1121
        %1123 = vmatmul.f32.gmra.mxu0 %v1012
        %v1124 = vpop.f32.mrf.mxu0
        %v1125 = vadd.f32 0.0, %v1124
        %1126 = vmatmul.f32.gmra.mxu0 %v1015
        %v1127 = vpop.f32.mrf.mxu0
        %v1128 = vadd.f32 0.0, %v1127
        %1129 = vmatmul.f32.gmra.mxu0 %v1018
        %v1130 = vpop.f32.mrf.mxu0
        %v1131 = vadd.f32 0.0, %v1130
        %1132 = vmatmul.f32.gmra.mxu0 %v1021
        %v1133 = vpop.f32.mrf.mxu0
        %v1134 = vadd.f32 0.0, %v1133
        %1135 = vmatmul.f32.gmra.mxu0 %v1024
        %v1136 = vpop.f32.mrf.mxu0
        %v1137 = vadd.f32 0.0, %v1136
        %1138 = vmatmul.f32.gmra.mxu0 %v1027
        %v1139 = vpop.f32.mrf.mxu0
        %v1140 = vadd.f32 0.0, %v1139
        %1141 = vmatmul.f32.gmra.mxu0 %v1030
        %v1142 = vpop.f32.mrf.mxu0
        %v1143 = vadd.f32 0.0, %v1142
        %1144 = vmatmul.f32.gmra.mxu0 %v1033
        %v1145 = vpop.f32.mrf.mxu0
        %v1146 = vadd.f32 0.0, %v1145
        %1147 = vmatmul.f32.gmra.mxu0 %v1036
        %v1148 = vpop.f32.mrf.mxu0
        %v1149 = vadd.f32 0.0, %v1148
        %1150 = vmatmul.f32.gmra.mxu0 %v1039
        %v1151 = vpop.f32.mrf.mxu0
        %v1152 = vadd.f32 0.0, %v1151
        %1153 = vmatmul.f32.gmra.mxu0 %v1042
        %v1154 = vpop.f32.mrf.mxu0
        %v1155 = vadd.f32 0.0, %v1154
        %1156 = vmatmul.f32.gmra.mxu0 %v1045
        %v1157 = vpop.f32.mrf.mxu0
        %v1158 = vadd.f32 0.0, %v1157
        %1159 = vmatmul.f32.gmra.mxu0 %v1048
        %v1160 = vpop.f32.mrf.mxu0
        %v1161 = vadd.f32 0.0, %v1160
        %1162 = vdwg.mxu0
        %v1163 = vld [vmem:[%s388] sm:$0xff]
        %v1164 = vld [vmem:[%s388 + $0x8] sm:$0xff]
        %v1165 = vld [vmem:[%s388 + $0x10] sm:$0xff]
        %v1166 = vld [vmem:[%s388 + $0x18] sm:$0xff]
        %v1167 = vld [vmem:[%s388 + $0x20] sm:$0xff]
        %v1168 = vld [vmem:[%s388 + $0x28] sm:$0xff]
        %v1169 = vld [vmem:[%s388 + $0x30] sm:$0xff]
        %v1170 = vld [vmem:[%s388 + $0x38] sm:$0xff]
        %v1171 = vld [vmem:[%s388 + $0x40] sm:$0xff]
        %v1172 = vld [vmem:[%s388 + $0x48] sm:$0xff]
        %v1173 = vld [vmem:[%s388 + $0x50] sm:$0xff]
        %v1174 = vld [vmem:[%s388 + $0x58] sm:$0xff]
        %v1175 = vld [vmem:[%s388 + $0x60] sm:$0xff]
        %v1176 = vld [vmem:[%s388 + $0x68] sm:$0xff]
        %v1177 = vld [vmem:[%s388 + $0x70] sm:$0xff]
        %v1178 = vld [vmem:[%s388 + $0x78] sm:$0xff]
        %v1179 = vld [vmem:[%s388 + $0x80] sm:$0xff]
        %v1180 = vld [vmem:[%s388 + $0x88] sm:$0xff]
        %v1181 = vld [vmem:[%s388 + $0x90] sm:$0xff]
        %v1182 = vld [vmem:[%s388 + $0x98] sm:$0xff]
        %v1183 = vld [vmem:[%s388 + $0xa0] sm:$0xff]
        %v1184 = vld [vmem:[%s388 + $0xa8] sm:$0xff]
        %v1185 = vld [vmem:[%s388 + $0xb0] sm:$0xff]
        %v1186 = vld [vmem:[%s388 + $0xb8] sm:$0xff]
        %v1187 = vld [vmem:[%s388 + $0xc0] sm:$0xff]
        %v1188 = vld [vmem:[%s388 + $0xc8] sm:$0xff]
        %v1189 = vld [vmem:[%s388 + $0xd0] sm:$0xff]
        %v1190 = vld [vmem:[%s388 + $0xd8] sm:$0xff]
        %v1191 = vld [vmem:[%s388 + $0xe0] sm:$0xff]
        %v1192 = vld [vmem:[%s388 + $0xe8] sm:$0xff]
        %v1193 = vld [vmem:[%s388 + $0xf0] sm:$0xff]
        %v1194 = vld [vmem:[%s388 + $0xf8] sm:$0xff]
        %v1196 = vsel %vm439, %v1163, 0
        %v1199 = vsel %vm439, %v1164, 0
        %v1202 = vsel %vm439, %v1165, 0
        %v1205 = vsel %vm439, %v1166, 0
        %v1208 = vsel %vm439, %v1167, 0
        %v1211 = vsel %vm439, %v1168, 0
        %v1214 = vsel %vm439, %v1169, 0
        %v1217 = vsel %vm439, %v1170, 0
        %v1220 = vsel %vm439, %v1171, 0
        %v1223 = vsel %vm439, %v1172, 0
        %v1226 = vsel %vm439, %v1173, 0
        %v1229 = vsel %vm439, %v1174, 0
        %v1232 = vsel %vm439, %v1175, 0
        %v1235 = vsel %vm439, %v1176, 0
        %v1238 = vsel %vm439, %v1177, 0
        %v1241 = vsel %vm439, %v1178, 0
        %v1244 = vsel %vm439, %v1179, 0
        %v1247 = vsel %vm439, %v1180, 0
        %v1250 = vsel %vm439, %v1181, 0
        %v1253 = vsel %vm439, %v1182, 0
        %v1256 = vsel %vm439, %v1183, 0
        %v1259 = vsel %vm439, %v1184, 0
        %v1262 = vsel %vm439, %v1185, 0
        %v1265 = vsel %vm439, %v1186, 0
        %v1268 = vsel %vm439, %v1187, 0
        %v1271 = vsel %vm439, %v1188, 0
        %v1274 = vsel %vm439, %v1189, 0
        %v1277 = vsel %vm439, %v1190, 0
        %v1280 = vsel %vm439, %v1191, 0
        %v1283 = vsel %vm439, %v1192, 0
        %v1286 = vsel %vm439, %v1193, 0
        %v1289 = vsel %vm439, %v1194, 0
        %1291 = vmatpush.msra.mxu0 0.0
        %1292 = vmatpush.msra.mxu0 0.0
        %1293 = vmatpush.msra.mxu0 0.0
        %1294 = vmatpush.msra.mxu0 0.0
        %1295 = vmatpush.msra.mxu0 0.0
        %1296 = vmatpush.msra.mxu0 0.0
        %1297 = vmatpush.msra.mxu0 0.0
        %1298 = vmatpush.msra.mxu0 0.0
        %1299 = vmatpush.msra.mxu0 %v406
        %1300 = vmatpush.msra.mxu0 %v405
        %1301 = vmatpush.msra.mxu0 %v404
        %1302 = vmatpush.msra.mxu0 %v403
        %1303 = vmatpush.msra.mxu0 %v402
        %1304 = vmatpush.msra.mxu0 %v401
        %1305 = vmatpush.msra.mxu0 %v400
        %1306 = vmatpush.msra.mxu0 %v399
        %1307 = vmatmul.f32.gmra.mxu0 %v1196
        %v1308 = vpop.f32.mrf.mxu0
        %v1309 = vadd.f32 0.0, %v1308
        %1310 = vmatmul.f32.gmra.mxu0 %v1199
        %v1311 = vpop.f32.mrf.mxu0
        %v1312 = vadd.f32 0.0, %v1311
        %1313 = vmatmul.f32.gmra.mxu0 %v1202
        %v1314 = vpop.f32.mrf.mxu0
        %v1315 = vadd.f32 0.0, %v1314
        %1316 = vmatmul.f32.gmra.mxu0 %v1205
        %v1317 = vpop.f32.mrf.mxu0
        %v1318 = vadd.f32 0.0, %v1317
        %1319 = vmatmul.f32.gmra.mxu0 %v1208
        %v1320 = vpop.f32.mrf.mxu0
        %v1321 = vadd.f32 0.0, %v1320
        %1322 = vmatmul.f32.gmra.mxu0 %v1211
        %v1323 = vpop.f32.mrf.mxu0
        %v1324 = vadd.f32 0.0, %v1323
        %1325 = vmatmul.f32.gmra.mxu0 %v1214
        %v1326 = vpop.f32.mrf.mxu0
        %v1327 = vadd.f32 0.0, %v1326
        %1328 = vmatmul.f32.gmra.mxu0 %v1217
        %v1329 = vpop.f32.mrf.mxu0
        %v1330 = vadd.f32 0.0, %v1329
        %1331 = vmatmul.f32.gmra.mxu0 %v1220
        %v1332 = vpop.f32.mrf.mxu0
        %v1333 = vadd.f32 0.0, %v1332
        %1334 = vmatmul.f32.gmra.mxu0 %v1223
        %v1335 = vpop.f32.mrf.mxu0
        %v1336 = vadd.f32 0.0, %v1335
        %1337 = vmatmul.f32.gmra.mxu0 %v1226
        %v1338 = vpop.f32.mrf.mxu0
        %v1339 = vadd.f32 0.0, %v1338
        %1340 = vmatmul.f32.gmra.mxu0 %v1229
        %v1341 = vpop.f32.mrf.mxu0
        %v1342 = vadd.f32 0.0, %v1341
        %1343 = vmatmul.f32.gmra.mxu0 %v1232
        %v1344 = vpop.f32.mrf.mxu0
        %v1345 = vadd.f32 0.0, %v1344
        %1346 = vmatmul.f32.gmra.mxu0 %v1235
        %v1347 = vpop.f32.mrf.mxu0
        %v1348 = vadd.f32 0.0, %v1347
        %1349 = vmatmul.f32.gmra.mxu0 %v1238
        %v1350 = vpop.f32.mrf.mxu0
        %v1351 = vadd.f32 0.0, %v1350
        %1352 = vmatmul.f32.gmra.mxu0 %v1241
        %v1353 = vpop.f32.mrf.mxu0
        %v1354 = vadd.f32 0.0, %v1353
        %1355 = vmatmul.f32.gmra.mxu0 %v1244
        %v1356 = vpop.f32.mrf.mxu0
        %v1357 = vadd.f32 0.0, %v1356
        %1358 = vmatmul.f32.gmra.mxu0 %v1247
        %v1359 = vpop.f32.mrf.mxu0
        %v1360 = vadd.f32 0.0, %v1359
        %1361 = vmatmul.f32.gmra.mxu0 %v1250
        %v1362 = vpop.f32.mrf.mxu0
        %v1363 = vadd.f32 0.0, %v1362
        %1364 = vmatmul.f32.gmra.mxu0 %v1253
        %v1365 = vpop.f32.mrf.mxu0
        %v1366 = vadd.f32 0.0, %v1365
        %1367 = vmatmul.f32.gmra.mxu0 %v1256
        %v1368 = vpop.f32.mrf.mxu0
        %v1369 = vadd.f32 0.0, %v1368
        %1370 = vmatmul.f32.gmra.mxu0 %v1259
        %v1371 = vpop.f32.mrf.mxu0
        %v1372 = vadd.f32 0.0, %v1371
        %1373 = vmatmul.f32.gmra.mxu0 %v1262
        %v1374 = vpop.f32.mrf.mxu0
        %v1375 = vadd.f32 0.0, %v1374
        %1376 = vmatmul.f32.gmra.mxu0 %v1265
        %v1377 = vpop.f32.mrf.mxu0
        %v1378 = vadd.f32 0.0, %v1377
        %1379 = vmatmul.f32.gmra.mxu0 %v1268
        %v1380 = vpop.f32.mrf.mxu0
        %v1381 = vadd.f32 0.0, %v1380
        %1382 = vmatmul.f32.gmra.mxu0 %v1271
        %v1383 = vpop.f32.mrf.mxu0
        %v1384 = vadd.f32 0.0, %v1383
        %1385 = vmatmul.f32.gmra.mxu0 %v1274
        %v1386 = vpop.f32.mrf.mxu0
        %v1387 = vadd.f32 0.0, %v1386
        %1388 = vmatmul.f32.gmra.mxu0 %v1277
        %v1389 = vpop.f32.mrf.mxu0
        %v1390 = vadd.f32 0.0, %v1389
        %1391 = vmatmul.f32.gmra.mxu0 %v1280
        %v1392 = vpop.f32.mrf.mxu0
        %v1393 = vadd.f32 0.0, %v1392
        %1394 = vmatmul.f32.gmra.mxu0 %v1283
        %v1395 = vpop.f32.mrf.mxu0
        %v1396 = vadd.f32 0.0, %v1395
        %1397 = vmatmul.f32.gmra.mxu0 %v1286
        %v1398 = vpop.f32.mrf.mxu0
        %v1399 = vadd.f32 0.0, %v1398
        %1400 = vmatmul.f32.gmra.mxu0 %v1289
        %v1401 = vpop.f32.mrf.mxu0
        %v1402 = vadd.f32 0.0, %v1401
        %1403 = vdwg.mxu0
        %v1404 = vmax.f32 %v1068, %v1309
        %v1405 = vmax.f32 %v1071, %v1312
        %v1406 = vmax.f32 %v1074, %v1315
        %v1407 = vmax.f32 %v1077, %v1318
        %v1408 = vmax.f32 %v1080, %v1321
        %v1409 = vmax.f32 %v1083, %v1324
        %v1410 = vmax.f32 %v1086, %v1327
        %v1411 = vmax.f32 %v1089, %v1330
        %v1412 = vmax.f32 %v1092, %v1333
        %v1413 = vmax.f32 %v1095, %v1336
        %v1414 = vmax.f32 %v1098, %v1339
        %v1415 = vmax.f32 %v1101, %v1342
        %v1416 = vmax.f32 %v1104, %v1345
        %v1417 = vmax.f32 %v1107, %v1348
        %v1418 = vmax.f32 %v1110, %v1351
        %v1419 = vmax.f32 %v1113, %v1354
        %v1420 = vmax.f32 %v1116, %v1357
        %v1421 = vmax.f32 %v1119, %v1360
        %v1422 = vmax.f32 %v1122, %v1363
        %v1423 = vmax.f32 %v1125, %v1366
        %v1424 = vmax.f32 %v1128, %v1369
        %v1425 = vmax.f32 %v1131, %v1372
        %v1426 = vmax.f32 %v1134, %v1375
        %v1427 = vmax.f32 %v1137, %v1378
        %v1428 = vmax.f32 %v1140, %v1381
        %v1429 = vmax.f32 %v1143, %v1384
        %v1430 = vmax.f32 %v1146, %v1387
        %v1431 = vmax.f32 %v1149, %v1390
        %v1432 = vmax.f32 %v1152, %v1393
        %v1433 = vmax.f32 %v1155, %v1396
        %v1434 = vmax.f32 %v1158, %v1399
        %v1435 = vmax.f32 %v1161, %v1402
        %v1436 = vmax.f32 %v890, %v1404
        %v1437 = vmax.f32 %v891, %v1405
        %v1438 = vmax.f32 %v892, %v1406
        %v1439 = vmax.f32 %v893, %v1407
        %v1440 = vmax.f32 %v894, %v1408
        %v1441 = vmax.f32 %v895, %v1409
        %v1442 = vmax.f32 %v896, %v1410
        %v1443 = vmax.f32 %v897, %v1411
        %v1444 = vmax.f32 %v898, %v1412
        %v1445 = vmax.f32 %v899, %v1413
        %v1446 = vmax.f32 %v900, %v1414
        %v1447 = vmax.f32 %v901, %v1415
        %v1448 = vmax.f32 %v902, %v1416
        %v1449 = vmax.f32 %v903, %v1417
        %v1450 = vmax.f32 %v904, %v1418
        %v1451 = vmax.f32 %v905, %v1419
        %v1452 = vmax.f32 %v906, %v1420
        %v1453 = vmax.f32 %v907, %v1421
        %v1454 = vmax.f32 %v908, %v1422
        %v1455 = vmax.f32 %v909, %v1423
        %v1456 = vmax.f32 %v910, %v1424
        %v1457 = vmax.f32 %v911, %v1425
        %v1458 = vmax.f32 %v912, %v1426
        %v1459 = vmax.f32 %v913, %v1427
        %v1460 = vmax.f32 %v914, %v1428
        %v1461 = vmax.f32 %v915, %v1429
        %v1462 = vmax.f32 %v916, %v1430
        %v1463 = vmax.f32 %v917, %v1431
        %v1464 = vmax.f32 %v918, %v1432
        %v1465 = vmax.f32 %v919, %v1433
        %v1466 = vmax.f32 %v920, %v1434
        %v1467 = vmax.f32 %v921, %v1435
        %v1468 = vld [vmem:[%s5] sm:$0x1]
        %v1470 = vperm.slane %v1468, 0
        %v1472 = vadd.f32 %v1436, %v1470
        %v1473 = vadd.f32 %v1437, %v1470
        %v1474 = vadd.f32 %v1438, %v1470
        %v1475 = vadd.f32 %v1439, %v1470
        %v1476 = vadd.f32 %v1440, %v1470
        %v1477 = vadd.f32 %v1441, %v1470
        %v1478 = vadd.f32 %v1442, %v1470
        %v1479 = vadd.f32 %v1443, %v1470
        %v1480 = vadd.f32 %v1444, %v1470
        %v1481 = vadd.f32 %v1445, %v1470
        %v1482 = vadd.f32 %v1446, %v1470
        %v1483 = vadd.f32 %v1447, %v1470
        %v1484 = vadd.f32 %v1448, %v1470
        %v1485 = vadd.f32 %v1449, %v1470
        %v1486 = vadd.f32 %v1450, %v1470
        %v1487 = vadd.f32 %v1451, %v1470
        %v1488 = vadd.f32 %v1452, %v1470
        %v1489 = vadd.f32 %v1453, %v1470
        %v1490 = vadd.f32 %v1454, %v1470
        %v1491 = vadd.f32 %v1455, %v1470
        %v1492 = vadd.f32 %v1456, %v1470
        %v1493 = vadd.f32 %v1457, %v1470
        %v1494 = vadd.f32 %v1458, %v1470
        %v1495 = vadd.f32 %v1459, %v1470
        %v1496 = vadd.f32 %v1460, %v1470
        %v1497 = vadd.f32 %v1461, %v1470
        %v1498 = vadd.f32 %v1462, %v1470
        %v1499 = vadd.f32 %v1463, %v1470
        %v1500 = vadd.f32 %v1464, %v1470
        %v1501 = vadd.f32 %v1465, %v1470
        %v1502 = vadd.f32 %v1466, %v1470
        %v1503 = vadd.f32 %v1467, %v1470
        %v1504 = vmax.f32 %v1472, 0.0
        %v1505 = vmax.f32 %v1473, 0.0
        %v1506 = vmax.f32 %v1474, 0.0
        %v1507 = vmax.f32 %v1475, 0.0
        %v1508 = vmax.f32 %v1476, 0.0
        %v1509 = vmax.f32 %v1477, 0.0
        %v1510 = vmax.f32 %v1478, 0.0
        %v1511 = vmax.f32 %v1479, 0.0
        %v1512 = vmax.f32 %v1480, 0.0
        %v1513 = vmax.f32 %v1481, 0.0
        %v1514 = vmax.f32 %v1482, 0.0
        %v1515 = vmax.f32 %v1483, 0.0
        %v1516 = vmax.f32 %v1484, 0.0
        %v1517 = vmax.f32 %v1485, 0.0
        %v1518 = vmax.f32 %v1486, 0.0
        %v1519 = vmax.f32 %v1487, 0.0
        %v1520 = vmax.f32 %v1488, 0.0
        %v1521 = vmax.f32 %v1489, 0.0
        %v1522 = vmax.f32 %v1490, 0.0
        %v1523 = vmax.f32 %v1491, 0.0
        %v1524 = vmax.f32 %v1492, 0.0
        %v1525 = vmax.f32 %v1493, 0.0
        %v1526 = vmax.f32 %v1494, 0.0
        %v1527 = vmax.f32 %v1495, 0.0
        %v1528 = vmax.f32 %v1496, 0.0
        %v1529 = vmax.f32 %v1497, 0.0
        %v1530 = vmax.f32 %v1498, 0.0
        %v1531 = vmax.f32 %v1499, 0.0
        %v1532 = vmax.f32 %v1500, 0.0
        %v1533 = vmax.f32 %v1501, 0.0
        %v1534 = vmax.f32 %v1502, 0.0
        %v1535 = vmax.f32 %v1503, 0.0
        %vm1536 = vcmask 261120
        %1537 = vst.msk [vmem:[%s337] sm:$0xff] %vm1536, %v1504
        %1538 = vst.msk [vmem:[%s337 + $0x8] sm:$0xff] %vm1536, %v1505
        %1539 = vst.msk [vmem:[%s337 + $0x10] sm:$0xff] %vm1536, %v1506
        %1540 = vst.msk [vmem:[%s337 + $0x18] sm:$0xff] %vm1536, %v1507
        %1541 = vst.msk [vmem:[%s337 + $0x20] sm:$0xff] %vm1536, %v1508
        %1542 = vst.msk [vmem:[%s337 + $0x28] sm:$0xff] %vm1536, %v1509
        %1543 = vst.msk [vmem:[%s337 + $0x30] sm:$0xff] %vm1536, %v1510
        %1544 = vst.msk [vmem:[%s337 + $0x38] sm:$0xff] %vm1536, %v1511
        %1545 = vst.msk [vmem:[%s337 + $0x40] sm:$0xff] %vm1536, %v1512
        %1546 = vst.msk [vmem:[%s337 + $0x48] sm:$0xff] %vm1536, %v1513
        %1547 = vst.msk [vmem:[%s337 + $0x50] sm:$0xff] %vm1536, %v1514
        %1548 = vst.msk [vmem:[%s337 + $0x58] sm:$0xff] %vm1536, %v1515
        %1549 = vst.msk [vmem:[%s337 + $0x60] sm:$0xff] %vm1536, %v1516
        %1550 = vst.msk [vmem:[%s337 + $0x68] sm:$0xff] %vm1536, %v1517
        %1551 = vst.msk [vmem:[%s337 + $0x70] sm:$0xff] %vm1536, %v1518
        %1552 = vst.msk [vmem:[%s337 + $0x78] sm:$0xff] %vm1536, %v1519
        %1553 = vst.msk [vmem:[%s337 + $0x80] sm:$0xff] %vm1536, %v1520
        %1554 = vst.msk [vmem:[%s337 + $0x88] sm:$0xff] %vm1536, %v1521
        %1555 = vst.msk [vmem:[%s337 + $0x90] sm:$0xff] %vm1536, %v1522
        %1556 = vst.msk [vmem:[%s337 + $0x98] sm:$0xff] %vm1536, %v1523
        %1557 = vst.msk [vmem:[%s337 + $0xa0] sm:$0xff] %vm1536, %v1524
        %1558 = vst.msk [vmem:[%s337 + $0xa8] sm:$0xff] %vm1536, %v1525
        %1559 = vst.msk [vmem:[%s337 + $0xb0] sm:$0xff] %vm1536, %v1526
        %1560 = vst.msk [vmem:[%s337 + $0xb8] sm:$0xff] %vm1536, %v1527
        %1561 = vst.msk [vmem:[%s337 + $0xc0] sm:$0xff] %vm1536, %v1528
        %1562 = vst.msk [vmem:[%s337 + $0xc8] sm:$0xff] %vm1536, %v1529
        %1563 = vst.msk [vmem:[%s337 + $0xd0] sm:$0xff] %vm1536, %v1530
        %1564 = vst.msk [vmem:[%s337 + $0xd8] sm:$0xff] %vm1536, %v1531
        %1565 = vst.msk [vmem:[%s337 + $0xe0] sm:$0xff] %vm1536, %v1532
        %1566 = vst.msk [vmem:[%s337 + $0xe8] sm:$0xff] %vm1536, %v1533
        %1567 = vst.msk [vmem:[%s337 + $0xf0] sm:$0xff] %vm1536, %v1534
        %1568 = vst.msk [vmem:[%s337 + $0xf8] sm:$0xff] %vm1536, %v1535
        %s1569 = sand.u32 %s171, 1
        %s1570 = sand.u32 %s171, 1
        %s1571 = smul.addr %s1570, 256
        %s1572 = scalar_lea.vmem [#allocation2], %s1571
        // Predicated region
        $region45: #{critic_forward.4} parent=43 // pred_check
          %p1573 = pneg %p181
        $region46: #{critic_forward.4} parent=43 // pred_check_branch
          %1575 = sbr.rel (%p1573) target = $region48
        $region47: #{critic_forward.4} parent=43 // pred_region
          %s1576 = smul.u32 32, %s17
          %s1577 = ssub.s32 117, %s1576
          %p1578 = scmp.lt.s32.totalorder %s1577, 32
          %s1579 = scalar_select %p1578, %s1577, 32
          %s1580 = smul.u32 8, %s1579
          %p1581 = scmp.ne.s32.totalorder 0, %s1580
          %s1582 = smul.addr %s1576, 8
          %s1583 = scalar_lea.vmem %s6, %s1582
          // Predicated region
          $region49: #{critic_forward.4} parent=47 // pred_check
            %p1584 = pneg %p1581
          $region50: #{critic_forward.4} parent=47 // pred_check_branch
            %1586 = sbr.rel (%p1584) target = $region52
          $region51: #{critic_forward.4} parent=47 // pred_region
            // Predicated region
            $region53: #{critic_forward.4} parent=51 // pred_check
              _
            $region54: #{critic_forward.4} parent=51 // pred_check_branch
              %1588 = sbr.rel (0) target = $region56
            $region55: #{critic_forward.4} parent=51 // pred_region
              // Predicated region
              $region75: #{critic_forward.4} parent=55 // pred_check
                _
              $region76: #{critic_forward.4} parent=55 // pred_check_branch
                %1700 = sbr.rel (0) target = $region78
              $region77: #{critic_forward.4} parent=55 // pred_region
                %s1701 = sshrl.u32 %s1579, 5
                // While loop
                $region79: #{critic_forward.4} parent=77 // loop_pre_header
                  _
                $region80: #{critic_forward.4} parent=77 // loop_header
                  %s1703 = sphi 0, %s1705
                  %p1704 = scmp.ge.s32.totalorder %s1703, %s1701
                  %s1708 = sphi 0, %s1777
                  %s1709 = sphi %s1572, %s1780
                  %s1710 = sphi %s1583, %s1781
                $region81: #{critic_forward.4} parent=77 // loop_header_branch
                  %1707 = sbr.rel (%p1704) target = $region85
                $region82: #{critic_forward.4} parent=77 // loop_body
                  %v1711 = vld [vmem:[%s1709] sm:$0xff]
                  %1712 = vst [vmem:[%s1710] sm:$0xff] %v1711
                  %v1713 = vld [vmem:[%s1709 + $0x8] sm:$0xff]
                  %1714 = vst [vmem:[%s1710 + $0x8] sm:$0xff] %v1713
                  %v1715 = vld [vmem:[%s1709 + $0x10] sm:$0xff]
                  %1716 = vst [vmem:[%s1710 + $0x10] sm:$0xff] %v1715
                  %v1717 = vld [vmem:[%s1709 + $0x18] sm:$0xff]
                  %1718 = vst [vmem:[%s1710 + $0x18] sm:$0xff] %v1717
                  %v1719 = vld [vmem:[%s1709 + $0x20] sm:$0xff]
                  %1720 = vst [vmem:[%s1710 + $0x20] sm:$0xff] %v1719
                  %v1721 = vld [vmem:[%s1709 + $0x28] sm:$0xff]
                  %1722 = vst [vmem:[%s1710 + $0x28] sm:$0xff] %v1721
                  %v1723 = vld [vmem:[%s1709 + $0x30] sm:$0xff]
                  %1724 = vst [vmem:[%s1710 + $0x30] sm:$0xff] %v1723
                  %v1725 = vld [vmem:[%s1709 + $0x38] sm:$0xff]
                  %1726 = vst [vmem:[%s1710 + $0x38] sm:$0xff] %v1725
                  %v1727 = vld [vmem:[%s1709 + $0x40] sm:$0xff]
                  %1728 = vst [vmem:[%s1710 + $0x40] sm:$0xff] %v1727
                  %v1729 = vld [vmem:[%s1709 + $0x48] sm:$0xff]
                  %1730 = vst [vmem:[%s1710 + $0x48] sm:$0xff] %v1729
                  %v1731 = vld [vmem:[%s1709 + $0x50] sm:$0xff]
                  %1732 = vst [vmem:[%s1710 + $0x50] sm:$0xff] %v1731
                  %v1733 = vld [vmem:[%s1709 + $0x58] sm:$0xff]
                  %1734 = vst [vmem:[%s1710 + $0x58] sm:$0xff] %v1733
                  %v1735 = vld [vmem:[%s1709 + $0x60] sm:$0xff]
                  %1736 = vst [vmem:[%s1710 + $0x60] sm:$0xff] %v1735
                  %v1737 = vld [vmem:[%s1709 + $0x68] sm:$0xff]
                  %1738 = vst [vmem:[%s1710 + $0x68] sm:$0xff] %v1737
                  %v1739 = vld [vmem:[%s1709 + $0x70] sm:$0xff]
                  %1740 = vst [vmem:[%s1710 + $0x70] sm:$0xff] %v1739
                  %v1741 = vld [vmem:[%s1709 + $0x78] sm:$0xff]
                  %1742 = vst [vmem:[%s1710 + $0x78] sm:$0xff] %v1741
                  %v1743 = vld [vmem:[%s1709 + $0x80] sm:$0xff]
                  %1744 = vst [vmem:[%s1710 + $0x80] sm:$0xff] %v1743
                  %v1745 = vld [vmem:[%s1709 + $0x88] sm:$0xff]
                  %1746 = vst [vmem:[%s1710 + $0x88] sm:$0xff] %v1745
                  %v1747 = vld [vmem:[%s1709 + $0x90] sm:$0xff]
                  %1748 = vst [vmem:[%s1710 + $0x90] sm:$0xff] %v1747
                  %v1749 = vld [vmem:[%s1709 + $0x98] sm:$0xff]
                  %1750 = vst [vmem:[%s1710 + $0x98] sm:$0xff] %v1749
                  %v1751 = vld [vmem:[%s1709 + $0xa0] sm:$0xff]
                  %1752 = vst [vmem:[%s1710 + $0xa0] sm:$0xff] %v1751
                  %v1753 = vld [vmem:[%s1709 + $0xa8] sm:$0xff]
                  %1754 = vst [vmem:[%s1710 + $0xa8] sm:$0xff] %v1753
                  %v1755 = vld [vmem:[%s1709 + $0xb0] sm:$0xff]
                  %1756 = vst [vmem:[%s1710 + $0xb0] sm:$0xff] %v1755
                  %v1757 = vld [vmem:[%s1709 + $0xb8] sm:$0xff]
                  %1758 = vst [vmem:[%s1710 + $0xb8] sm:$0xff] %v1757
                  %v1759 = vld [vmem:[%s1709 + $0xc0] sm:$0xff]
                  %1760 = vst [vmem:[%s1710 + $0xc0] sm:$0xff] %v1759
                  %v1761 = vld [vmem:[%s1709 + $0xc8] sm:$0xff]
                  %1762 = vst [vmem:[%s1710 + $0xc8] sm:$0xff] %v1761
                  %v1763 = vld [vmem:[%s1709 + $0xd0] sm:$0xff]
                  %1764 = vst [vmem:[%s1710 + $0xd0] sm:$0xff] %v1763
                  %v1765 = vld [vmem:[%s1709 + $0xd8] sm:$0xff]
                  %1766 = vst [vmem:[%s1710 + $0xd8] sm:$0xff] %v1765
                  %v1767 = vld [vmem:[%s1709 + $0xe0] sm:$0xff]
                  %1768 = vst [vmem:[%s1710 + $0xe0] sm:$0xff] %v1767
                  %v1769 = vld [vmem:[%s1709 + $0xe8] sm:$0xff]
                  %1770 = vst [vmem:[%s1710 + $0xe8] sm:$0xff] %v1769
                  %v1771 = vld [vmem:[%s1709 + $0xf0] sm:$0xff]
                  %1772 = vst [vmem:[%s1710 + $0xf0] sm:$0xff] %v1771
                  %v1773 = vld [vmem:[%s1709 + $0xf8] sm:$0xff]
                  %1774 = vst [vmem:[%s1710 + $0xf8] sm:$0xff] %v1773
                  %s1775 = sadd.s32 1, %s1708
                  %p1776 = scmp.ge.s32.totalorder %s1775, %s1701
                  %s1777 = scalar_select %p1776, 0, %s1775
                  %s1778 = smul.u32 %s1777, 256
                  %s1779 = smul.u32 %s1777, 256
                  %s1780 = scalar_lea.vmem %s1572, %s1778 [#allocation2]
                  %s1781 = scalar_lea.vmem %s1583, %s1779
                $region83: #{critic_forward.4} parent=77 // loop_footer
                  %s1705 = sadd.s32 %s1703, 1
                $region84: #{critic_forward.4} parent=77 // loop_footer_branch
                  %1702 = sbr.rel target = $region80
                $region85: #{critic_forward.4} parent=77 // loop_exit
                  _
                %s1782 = sshrl.u32 %s1579, 5
                %s1783 = sand.u32 %s1579, 31
                %s1784 = smul.u32 %s1782, 32
                %s1785 = smul.u32 8, %s1784
                %s1786 = scalar_lea.vmem %s1572, %s1785 [#allocation2]
                %s1787 = smul.u32 8, %s1784
                %s1788 = scalar_lea.vmem %s1583, %s1787
                // While loop
                $region86: #{critic_forward.4} parent=77 // loop_pre_header
                  _
                $region87: #{critic_forward.4} parent=77 // loop_header
                  %s1790 = sphi 0, %s1792
                  %p1791 = scmp.ge.s32.totalorder %s1790, %s1783
                  %s1795 = sphi 0, %s1802
                  %s1796 = sphi %s1786, %s1805
                  %s1797 = sphi %s1788, %s1806
                $region88: #{critic_forward.4} parent=77 // loop_header_branch
                  %1794 = sbr.rel (%p1791) target = $region92
                $region89: #{critic_forward.4} parent=77 // loop_body
                  %v1798 = vld [vmem:[%s1796] sm:$0xff]
                  %1799 = vst [vmem:[%s1797] sm:$0xff] %v1798
                  %s1800 = sadd.s32 1, %s1795
                  %p1801 = scmp.ge.s32.totalorder %s1800, %s1783
                  %s1802 = scalar_select %p1801, 0, %s1800
                  %s1803 = smul.u32 %s1802, 8
                  %s1804 = smul.u32 %s1802, 8
                  %s1805 = scalar_lea.vmem %s1786, %s1803 [#allocation2]
                  %s1806 = scalar_lea.vmem %s1788, %s1804
                $region90: #{critic_forward.4} parent=77 // loop_footer
                  %s1792 = sadd.s32 %s1790, 1
                $region91: #{critic_forward.4} parent=77 // loop_footer_branch
                  %1789 = sbr.rel target = $region87
                $region92: #{critic_forward.4} parent=77 // loop_exit
                  _
              $region78: #{critic_forward.4} parent=55 // pred_fallthru
                _
              // Predicated region
              $region93: #{critic_forward.4} parent=55 // pred_check
                _
              $region94: #{critic_forward.4} parent=55 // pred_check_branch
                %1808 = sbr.rel target = $region96
              $region95: #{critic_forward.4} parent=55 // pred_region
                _
              $region96: #{critic_forward.4} parent=55 // pred_fallthru
                _
            $region56: #{critic_forward.4} parent=51 // pred_fallthru
              _
            // Predicated region
            $region57: #{critic_forward.4} parent=51 // pred_check
              _
            $region58: #{critic_forward.4} parent=51 // pred_check_branch
              %1590 = sbr.rel target = $region60
            $region59: #{critic_forward.4} parent=51 // pred_region
              %s1592 = ssub.s32 256, 1
              %s1593 = sshrl.u32 %s1579, 5
              // While loop
              $region61: #{critic_forward.4} parent=59 // loop_pre_header
                _
              $region62: #{critic_forward.4} parent=59 // loop_header
                %s1595 = sphi 0, %s1597
                %p1596 = scmp.ge.s32.totalorder %s1595, %s1593
                %s1600 = sphi 0, %s1669
                %s1601 = sphi %s1572, %s1672
                %s1602 = sphi %s1583, %s1673
              $region63: #{critic_forward.4} parent=59 // loop_header_branch
                %1599 = sbr.rel (%p1596) target = $region67
              $region64: #{critic_forward.4} parent=59 // loop_body
                %v1603 = vld [vmem:[%s1601] sm:%s1592]
                %1604 = vst [vmem:[%s1602] sm:%s1592] %v1603
                %v1605 = vld [vmem:[%s1601 + $0x8] sm:%s1592]
                %1606 = vst [vmem:[%s1602 + $0x8] sm:%s1592] %v1605
                %v1607 = vld [vmem:[%s1601 + $0x10] sm:%s1592]
                %1608 = vst [vmem:[%s1602 + $0x10] sm:%s1592] %v1607
                %v1609 = vld [vmem:[%s1601 + $0x18] sm:%s1592]
                %1610 = vst [vmem:[%s1602 + $0x18] sm:%s1592] %v1609
                %v1611 = vld [vmem:[%s1601 + $0x20] sm:%s1592]
                %1612 = vst [vmem:[%s1602 + $0x20] sm:%s1592] %v1611
                %v1613 = vld [vmem:[%s1601 + $0x28] sm:%s1592]
                %1614 = vst [vmem:[%s1602 + $0x28] sm:%s1592] %v1613
                %v1615 = vld [vmem:[%s1601 + $0x30] sm:%s1592]
                %1616 = vst [vmem:[%s1602 + $0x30] sm:%s1592] %v1615
                %v1617 = vld [vmem:[%s1601 + $0x38] sm:%s1592]
                %1618 = vst [vmem:[%s1602 + $0x38] sm:%s1592] %v1617
                %v1619 = vld [vmem:[%s1601 + $0x40] sm:%s1592]
                %1620 = vst [vmem:[%s1602 + $0x40] sm:%s1592] %v1619
                %v1621 = vld [vmem:[%s1601 + $0x48] sm:%s1592]
                %1622 = vst [vmem:[%s1602 + $0x48] sm:%s1592] %v1621
                %v1623 = vld [vmem:[%s1601 + $0x50] sm:%s1592]
                %1624 = vst [vmem:[%s1602 + $0x50] sm:%s1592] %v1623
                %v1625 = vld [vmem:[%s1601 + $0x58] sm:%s1592]
                %1626 = vst [vmem:[%s1602 + $0x58] sm:%s1592] %v1625
                %v1627 = vld [vmem:[%s1601 + $0x60] sm:%s1592]
                %1628 = vst [vmem:[%s1602 + $0x60] sm:%s1592] %v1627
                %v1629 = vld [vmem:[%s1601 + $0x68] sm:%s1592]
                %1630 = vst [vmem:[%s1602 + $0x68] sm:%s1592] %v1629
                %v1631 = vld [vmem:[%s1601 + $0x70] sm:%s1592]
                %1632 = vst [vmem:[%s1602 + $0x70] sm:%s1592] %v1631
                %v1633 = vld [vmem:[%s1601 + $0x78] sm:%s1592]
                %1634 = vst [vmem:[%s1602 + $0x78] sm:%s1592] %v1633
                %v1635 = vld [vmem:[%s1601 + $0x80] sm:%s1592]
                %1636 = vst [vmem:[%s1602 + $0x80] sm:%s1592] %v1635
                %v1637 = vld [vmem:[%s1601 + $0x88] sm:%s1592]
                %1638 = vst [vmem:[%s1602 + $0x88] sm:%s1592] %v1637
                %v1639 = vld [vmem:[%s1601 + $0x90] sm:%s1592]
                %1640 = vst [vmem:[%s1602 + $0x90] sm:%s1592] %v1639
                %v1641 = vld [vmem:[%s1601 + $0x98] sm:%s1592]
                %1642 = vst [vmem:[%s1602 + $0x98] sm:%s1592] %v1641
                %v1643 = vld [vmem:[%s1601 + $0xa0] sm:%s1592]
                %1644 = vst [vmem:[%s1602 + $0xa0] sm:%s1592] %v1643
                %v1645 = vld [vmem:[%s1601 + $0xa8] sm:%s1592]
                %1646 = vst [vmem:[%s1602 + $0xa8] sm:%s1592] %v1645
                %v1647 = vld [vmem:[%s1601 + $0xb0] sm:%s1592]
                %1648 = vst [vmem:[%s1602 + $0xb0] sm:%s1592] %v1647
                %v1649 = vld [vmem:[%s1601 + $0xb8] sm:%s1592]
                %1650 = vst [vmem:[%s1602 + $0xb8] sm:%s1592] %v1649
                %v1651 = vld [vmem:[%s1601 + $0xc0] sm:%s1592]
                %1652 = vst [vmem:[%s1602 + $0xc0] sm:%s1592] %v1651
                %v1653 = vld [vmem:[%s1601 + $0xc8] sm:%s1592]
                %1654 = vst [vmem:[%s1602 + $0xc8] sm:%s1592] %v1653
                %v1655 = vld [vmem:[%s1601 + $0xd0] sm:%s1592]
                %1656 = vst [vmem:[%s1602 + $0xd0] sm:%s1592] %v1655
                %v1657 = vld [vmem:[%s1601 + $0xd8] sm:%s1592]
                %1658 = vst [vmem:[%s1602 + $0xd8] sm:%s1592] %v1657
                %v1659 = vld [vmem:[%s1601 + $0xe0] sm:%s1592]
                %1660 = vst [vmem:[%s1602 + $0xe0] sm:%s1592] %v1659
                %v1661 = vld [vmem:[%s1601 + $0xe8] sm:%s1592]
                %1662 = vst [vmem:[%s1602 + $0xe8] sm:%s1592] %v1661
                %v1663 = vld [vmem:[%s1601 + $0xf0] sm:%s1592]
                %1664 = vst [vmem:[%s1602 + $0xf0] sm:%s1592] %v1663
                %v1665 = vld [vmem:[%s1601 + $0xf8] sm:%s1592]
                %1666 = vst [vmem:[%s1602 + $0xf8] sm:%s1592] %v1665
                %s1667 = sadd.s32 1, %s1600
                %p1668 = scmp.ge.s32.totalorder %s1667, %s1593
                %s1669 = scalar_select %p1668, 0, %s1667
                %s1670 = smul.u32 %s1669, 256
                %s1671 = smul.u32 %s1669, 256
                %s1672 = scalar_lea.vmem %s1572, %s1670 [#allocation2]
                %s1673 = scalar_lea.vmem %s1583, %s1671
              $region65: #{critic_forward.4} parent=59 // loop_footer
                %s1597 = sadd.s32 %s1595, 1
              $region66: #{critic_forward.4} parent=59 // loop_footer_branch
                %1594 = sbr.rel target = $region62
              $region67: #{critic_forward.4} parent=59 // loop_exit
                _
              %s1674 = sshrl.u32 %s1579, 5
              %s1675 = sand.u32 %s1579, 31
              %s1676 = smul.u32 %s1674, 32
              %s1677 = smul.u32 8, %s1676
              %s1678 = scalar_lea.vmem %s1572, %s1677 [#allocation2]
              %s1679 = smul.u32 8, %s1676
              %s1680 = scalar_lea.vmem %s1583, %s1679
              // While loop
              $region68: #{critic_forward.4} parent=59 // loop_pre_header
                _
              $region69: #{critic_forward.4} parent=59 // loop_header
                %s1682 = sphi 0, %s1684
                %p1683 = scmp.ge.s32.totalorder %s1682, %s1675
                %s1687 = sphi 0, %s1694
                %s1688 = sphi %s1678, %s1697
                %s1689 = sphi %s1680, %s1698
              $region70: #{critic_forward.4} parent=59 // loop_header_branch
                %1686 = sbr.rel (%p1683) target = $region74
              $region71: #{critic_forward.4} parent=59 // loop_body
                %v1690 = vld [vmem:[%s1688] sm:%s1592]
                %1691 = vst [vmem:[%s1689] sm:%s1592] %v1690
                %s1692 = sadd.s32 1, %s1687
                %p1693 = scmp.ge.s32.totalorder %s1692, %s1675
                %s1694 = scalar_select %p1693, 0, %s1692
                %s1695 = smul.u32 %s1694, 8
                %s1696 = smul.u32 %s1694, 8
                %s1697 = scalar_lea.vmem %s1678, %s1695 [#allocation2]
                %s1698 = scalar_lea.vmem %s1680, %s1696
              $region72: #{critic_forward.4} parent=59 // loop_footer
                %s1684 = sadd.s32 %s1682, 1
              $region73: #{critic_forward.4} parent=59 // loop_footer_branch
                %1681 = sbr.rel target = $region69
              $region74: #{critic_forward.4} parent=59 // loop_exit
                _
            $region60: #{critic_forward.4} parent=51 // pred_fallthru
              _
          $region52: #{critic_forward.4} parent=47 // pred_fallthru
            _
          %1809 = vnop
        $region48: #{critic_forward.4} parent=43 // pred_fallthru
          _
      $region44: #{critic_forward.4} parent=5 // pred_fallthru
        _
      %p1810 = scmp.le.s32.totalorder 2, %s12
      // Predicated region
      $region97: #{critic_forward.4} parent=5 // pred_check
        %p1811 = pneg %p1810
      $region98: #{critic_forward.4} parent=5 // pred_check_branch
        %1813 = sbr.rel (%p1811) target = $region100
      $region99: #{critic_forward.4} parent=5 // pred_region
        %s1814 = ssub.s32 %s12, 2
        // Predicated region
        $region101: #{critic_forward.4} parent=99 // pred_check
          %p1815 = pneg %p187
        $region102: #{critic_forward.4} parent=99 // pred_check_branch
          %1817 = sbr.rel (%p1815) target = $region104
        $region103: #{critic_forward.4} parent=99 // pred_region
          %s1818 = sand.u32 %s172, 1
          %s1819 = sand.u32 %s172, 1
          %s1820 = smul.addr %s1819, 256
          %s1821 = scalar_lea.vmem [#allocation2], %s1820
        $region104: #{critic_forward.4} parent=99 // pred_fallthru
          _
      $region100: #{critic_forward.4} parent=5 // pred_fallthru
        _
    $region6: #{critic_forward.4} parent=1 // loop_footer
      %s16 = sadd.s32 1, %s12
    $region7: #{critic_forward.4} parent=1 // loop_footer_branch
      %11 = sbr.rel target = $region3
    $region8: #{critic_forward.4} parent=1 // loop_exit
      _

// kernel: critic_forward.5
$region0: #{critic_forward.5}
  #allocation0 [shape = 'u32[]', space=smem, size = 0x4, offset = 0x4, fixed_abs, tag = 'smem constant byte address 0x4 - core index']
  #allocation1 [shape = 'u32[72,128]{1,0:T(1,128)}', space=vmem, size = 0x9000, scoped, tag = 'internal scratch']
  #allocation2 [shape = 'f32[2,128]{1,0:T(2,128)}', space=vmem, size = 0x400, scoped, tag = 'scratch operand']
  #allocation3 [shape = 'f32[1,1]{1,0:T(1,128)S(1)}', space=vmem, size = 0x200, scoped, tag = 'scoped memory for critic_forward.5']
  %s0 = inlined_call_operand.vmem [shape: f32[2,15360], index: 0, kind: input, shape index: {}]
  %s1 = inlined_call_operand.vmem [shape: f32[15360,128], index: 1, kind: input, shape index: {}]
  %s2 = inlined_call_operand.vmem [shape: f32[1,128], index: 2, kind: input, shape index: {}]
  %s3 = inlined_call_operand.vmem [shape: f32[128,64], index: 3, kind: input, shape index: {}]
  %s4 = inlined_call_operand.vmem [shape: f32[1,64], index: 4, kind: input, shape index: {}]
  %s5 = inlined_call_operand.vmem [shape: f32[1,64], index: 5, kind: input, shape index: {}]
  %s6 = inlined_call_operand.<no memory space> [shape: f32[1,1], index: 6, kind: input, shape index: {}]
  %s7 = inlined_call_operand.vmem [shape: f32[2,1], index: 7, kind: output, shape index: {}]
  %s8 = sld [smem:[#allocation0]]
  $region69: #{critic_forward.5} parent=0
    _
  %s10 = ssub.s32 1, %s8
  %s11 = scalar_select 0, %s10, %s8
  %v12 = vstv %s6
  %13 = vst [vmem:[#allocation3] sm:$0x1] %v12
  loop: start=0, step=1, limit=6
  $region2: #{critic_forward.5} parent=0 // loop_pre_header
    _
  $region3: #{critic_forward.5} parent=0 // loop_header
    %s15 = sphi 0, %s19
    %p16 = scmp.ge.s32.totalorder %s15, 6
    %s25 = sphi 0, %s27
    %s28 = sphi 0, %s25
    %s29 = sphi 0, %s28
    %s45 = sphi 0, %s29
    %s51 = sphi 0, %s53
    %s54 = sphi 0, %s51
    %s55 = sphi 0, %s54
    %s71 = sphi 0, %s55
    %s75 = sphi 0, %s75
    %s77 = sphi 0, %s75
    %s78 = sphi 0, %s77
    %s92 = sphi 0, %s78
    %s96 = sphi 0, %s96
    %s98 = sphi 0, %s96
    %s99 = sphi 0, %s98
    %s113 = sphi 0, %s99
    %s117 = sphi 0, %s117
    %s119 = sphi 0, %s117
    %s120 = sphi 0, %s119
    %s134 = sphi 0, %s120
    %s138 = sphi 0, %s138
    %s140 = sphi 0, %s138
    %s141 = sphi 0, %s140
    %s155 = sphi 0, %s141
    %s159 = sphi 0, %s159
    %s161 = sphi 0, %s159
    %s162 = sphi 0, %s161
    %s176 = sphi 0, %s162
    %s180 = sphi 0, %s180
    %s182 = sphi 0, %s180
    %s183 = sphi 0, %s182
    %s197 = sphi 0, %s183
  $region4: #{critic_forward.5} parent=0 // loop_header_branch
    %18 = sbr.rel (%p16) target = $region8
  $region5: #{critic_forward.5} parent=0 // loop_body
    %s20 = ssub.s32 %s15, 1
    %s21 = ssub.s32 %s15, 2
    %s22 = sadd.s32 %s15, 1
    %s23 = ssub.s32 %s15, %s22
    %p24 = scmp.eq.s32.totalorder %s23, 0
    %s26 = sadd.s32 %s25, 1
    %s27 = scalar_select %p24, %s25, %s26
    %p30 = pneg %p24
    %p31 = scmp.eq.s32.totalorder %s15, 3
    %p32 = por %p30, %p31
    %p33 = scmp.ne.s32.totalorder %s25, %s28
    %p34 = scmp.eq.s32.totalorder %s15, 0
    %p35 = por %p33, %p34
    %p36 = scmp.ne.s32.totalorder %s25, %s28
    %p37 = scmp.eq.s32.totalorder %s20, 3
    %p38 = por %p36, %p37
    %p39 = scmp.ne.s32.totalorder %s28, %s29
    %p40 = scmp.eq.s32.totalorder %s20, 0
    %p41 = por %p39, %p40
    %p42 = scmp.ne.s32.totalorder %s28, %s29
    %p43 = scmp.eq.s32.totalorder %s21, 3
    %p44 = por %p42, %p43
    %p46 = scmp.ne.s32.totalorder %s29, %s45
    %p47 = scmp.eq.s32.totalorder %s21, 0
    %p48 = por %p46, %p47
    %s49 = ssub.s32 %s15, %s22
    %p50 = scmp.eq.s32.totalorder %s49, 0
    %s52 = sadd.s32 %s51, 1
    %s53 = scalar_select %p50, %s51, %s52
    %p56 = pneg %p50
    %p57 = scmp.eq.s32.totalorder %s15, 3
    %p58 = por %p56, %p57
    %p59 = scmp.ne.s32.totalorder %s51, %s54
    %p60 = scmp.eq.s32.totalorder %s15, 0
    %p61 = por %p59, %p60
    %p62 = scmp.ne.s32.totalorder %s51, %s54
    %p63 = scmp.eq.s32.totalorder %s20, 3
    %p64 = por %p62, %p63
    %p65 = scmp.ne.s32.totalorder %s54, %s55
    %p66 = scmp.eq.s32.totalorder %s20, 0
    %p67 = por %p65, %p66
    %p68 = scmp.ne.s32.totalorder %s54, %s55
    %p69 = scmp.eq.s32.totalorder %s21, 3
    %p70 = por %p68, %p69
    %p72 = scmp.ne.s32.totalorder %s55, %s71
    %p73 = scmp.eq.s32.totalorder %s21, 0
    %p74 = por %p72, %p73
    %s76 = sadd.s32 %s75, 1
    %p79 = scmp.eq.s32.totalorder %s15, 3
    %p80 = scmp.ne.s32.totalorder %s75, %s77
    %p81 = scmp.eq.s32.totalorder %s15, 0
    %p82 = por %p80, %p81
    %p83 = scmp.ne.s32.totalorder %s75, %s77
    %p84 = scmp.eq.s32.totalorder %s20, 3
    %p85 = por %p83, %p84
    %p86 = scmp.ne.s32.totalorder %s77, %s78
    %p87 = scmp.eq.s32.totalorder %s20, 0
    %p88 = por %p86, %p87
    %p89 = scmp.ne.s32.totalorder %s77, %s78
    %p90 = scmp.eq.s32.totalorder %s21, 3
    %p91 = por %p89, %p90
    %p93 = scmp.ne.s32.totalorder %s78, %s92
    %p94 = scmp.eq.s32.totalorder %s21, 0
    %p95 = por %p93, %p94
    %s97 = sadd.s32 %s96, 1
    %p100 = scmp.eq.s32.totalorder %s15, 3
    %p101 = scmp.ne.s32.totalorder %s96, %s98
    %p102 = scmp.eq.s32.totalorder %s15, 0
    %p103 = por %p101, %p102
    %p104 = scmp.ne.s32.totalorder %s96, %s98
    %p105 = scmp.eq.s32.totalorder %s20, 3
    %p106 = por %p104, %p105
    %p107 = scmp.ne.s32.totalorder %s98, %s99
    %p108 = scmp.eq.s32.totalorder %s20, 0
    %p109 = por %p107, %p108
    %p110 = scmp.ne.s32.totalorder %s98, %s99
    %p111 = scmp.eq.s32.totalorder %s21, 3
    %p112 = por %p110, %p111
    %p114 = scmp.ne.s32.totalorder %s99, %s113
    %p115 = scmp.eq.s32.totalorder %s21, 0
    %p116 = por %p114, %p115
    %s118 = sadd.s32 %s117, 1
    %p121 = scmp.eq.s32.totalorder %s15, 3
    %p122 = scmp.ne.s32.totalorder %s117, %s119
    %p123 = scmp.eq.s32.totalorder %s15, 0
    %p124 = por %p122, %p123
    %p125 = scmp.ne.s32.totalorder %s117, %s119
    %p126 = scmp.eq.s32.totalorder %s20, 3
    %p127 = por %p125, %p126
    %p128 = scmp.ne.s32.totalorder %s119, %s120
    %p129 = scmp.eq.s32.totalorder %s20, 0
    %p130 = por %p128, %p129
    %p131 = scmp.ne.s32.totalorder %s119, %s120
    %p132 = scmp.eq.s32.totalorder %s21, 3
    %p133 = por %p131, %p132
    %p135 = scmp.ne.s32.totalorder %s120, %s134
    %p136 = scmp.eq.s32.totalorder %s21, 0
    %p137 = por %p135, %p136
    %s139 = sadd.s32 %s138, 1
    %p142 = scmp.eq.s32.totalorder %s15, 3
    %p143 = scmp.ne.s32.totalorder %s138, %s140
    %p144 = scmp.eq.s32.totalorder %s15, 0
    %p145 = por %p143, %p144
    %p146 = scmp.ne.s32.totalorder %s138, %s140
    %p147 = scmp.eq.s32.totalorder %s20, 3
    %p148 = por %p146, %p147
    %p149 = scmp.ne.s32.totalorder %s140, %s141
    %p150 = scmp.eq.s32.totalorder %s20, 0
    %p151 = por %p149, %p150
    %p152 = scmp.ne.s32.totalorder %s140, %s141
    %p153 = scmp.eq.s32.totalorder %s21, 3
    %p154 = por %p152, %p153
    %p156 = scmp.ne.s32.totalorder %s141, %s155
    %p157 = scmp.eq.s32.totalorder %s21, 0
    %p158 = por %p156, %p157
    %s160 = sadd.s32 %s159, 1
    %p163 = scmp.eq.s32.totalorder %s15, 3
    %p164 = scmp.ne.s32.totalorder %s159, %s161
    %p165 = scmp.eq.s32.totalorder %s15, 0
    %p166 = por %p164, %p165
    %p167 = scmp.ne.s32.totalorder %s159, %s161
    %p168 = scmp.eq.s32.totalorder %s20, 3
    %p169 = por %p167, %p168
    %p170 = scmp.ne.s32.totalorder %s161, %s162
    %p171 = scmp.eq.s32.totalorder %s20, 0
    %p172 = por %p170, %p171
    %p173 = scmp.ne.s32.totalorder %s161, %s162
    %p174 = scmp.eq.s32.totalorder %s21, 3
    %p175 = por %p173, %p174
    %p177 = scmp.ne.s32.totalorder %s162, %s176
    %p178 = scmp.eq.s32.totalorder %s21, 0
    %p179 = por %p177, %p178
    %s181 = sadd.s32 %s180, 1
    %p184 = scmp.eq.s32.totalorder %s15, 3
    %p185 = scmp.ne.s32.totalorder %s180, %s182
    %p186 = scmp.eq.s32.totalorder %s15, 0
    %p187 = por %p185, %p186
    %p188 = scmp.ne.s32.totalorder %s180, %s182
    %p189 = scmp.eq.s32.totalorder %s20, 3
    %p190 = por %p188, %p189
    %p191 = scmp.ne.s32.totalorder %s182, %s183
    %p192 = scmp.eq.s32.totalorder %s20, 0
    %p193 = por %p191, %p192
    %p194 = scmp.ne.s32.totalorder %s182, %s183
    %p195 = scmp.eq.s32.totalorder %s21, 3
    %p196 = por %p194, %p195
    %p198 = scmp.ne.s32.totalorder %s183, %s197
    %p199 = scmp.eq.s32.totalorder %s21, 0
    %p200 = por %p198, %p199
    %p201 = scmp.le.s32.totalorder 1, %s15
    %p202 = scmp.lt.s32.totalorder %s15, 5
    %p203 = pnand %p201, %p202
    %p204 = pneg %p203
    // Predicated region
    $region9: #{critic_forward.5} parent=5 // pred_check
      _
    $region10: #{critic_forward.5} parent=5 // pred_check_branch
      %206 = sbr.rel (%p203) target = $region12
    $region11: #{critic_forward.5} parent=5 // pred_region
      %s207 = ssub.s32 %s15, 1
      // Predicated region
      $region13: #{critic_forward.5} parent=11 // pred_check
        %p208 = pneg %p88
      $region14: #{critic_forward.5} parent=11 // pred_check_branch
        %210 = sbr.rel (%p208) target = $region16
      $region15: #{critic_forward.5} parent=11 // pred_region
        _
      $region16: #{critic_forward.5} parent=11 // pred_fallthru
        _
      // Predicated region
      $region17: #{critic_forward.5} parent=11 // pred_check
        %p211 = pneg %p109
      $region18: #{critic_forward.5} parent=11 // pred_check_branch
        %213 = sbr.rel (%p211) target = $region20
      $region19: #{critic_forward.5} parent=11 // pred_region
        _
      $region20: #{critic_forward.5} parent=11 // pred_fallthru
        _
      // Predicated region
      $region21: #{critic_forward.5} parent=11 // pred_check
        %p214 = pneg %p130
      $region22: #{critic_forward.5} parent=11 // pred_check_branch
        %216 = sbr.rel (%p214) target = $region24
      $region23: #{critic_forward.5} parent=11 // pred_region
        _
      $region24: #{critic_forward.5} parent=11 // pred_fallthru
        _
      // Predicated region
      $region25: #{critic_forward.5} parent=11 // pred_check
        %p217 = pneg %p151
      $region26: #{critic_forward.5} parent=11 // pred_check_branch
        %219 = sbr.rel (%p217) target = $region28
      $region27: #{critic_forward.5} parent=11 // pred_region
        _
      $region28: #{critic_forward.5} parent=11 // pred_fallthru
        _
      // Predicated region
      $region29: #{critic_forward.5} parent=11 // pred_check
        %p220 = pneg %p172
      $region30: #{critic_forward.5} parent=11 // pred_check_branch
        %222 = sbr.rel (%p220) target = $region32
      $region31: #{critic_forward.5} parent=11 // pred_region
        _
      $region32: #{critic_forward.5} parent=11 // pred_fallthru
        _
    $region12: #{critic_forward.5} parent=5 // pred_fallthru
      _
    %p223 = scmp.lt.s32.totalorder %s15, 4
    // Predicated region
    $region33: #{critic_forward.5} parent=5 // pred_check
      %p224 = pneg %p223
    $region34: #{critic_forward.5} parent=5 // pred_check_branch
      %226 = sbr.rel (%p224) target = $region36
    $region35: #{critic_forward.5} parent=5 // pred_region
      // Predicated region
      $region37: #{critic_forward.5} parent=35 // pred_check
        %p227 = pneg %p35
      $region38: #{critic_forward.5} parent=35 // pred_check_branch
        %229 = sbr.rel (%p227) target = $region40
      $region39: #{critic_forward.5} parent=35 // pred_region
        %s230 = smul.u32 30, %s15
        %p231 = scmp.lt.s32.totalorder %s230, 119
        %s232 = scalar_select %p231, %s230, 119
        %s233 = smul.addr %s232, 2
        %s234 = scalar_lea.vmem %s0, %s233
        %s235 = smul.u32 30, %s15
      $region40: #{critic_forward.5} parent=35 // pred_fallthru
        _
      // Predicated region
      $region41: #{critic_forward.5} parent=35 // pred_check
        %p236 = pneg %p61
      $region42: #{critic_forward.5} parent=35 // pred_check_branch
        %238 = sbr.rel (%p236) target = $region44
      $region43: #{critic_forward.5} parent=35 // pred_region
        %s239 = smul.u32 480, %s15
        %p240 = scmp.lt.s32.totalorder %s239, 1919
        %s241 = scalar_select %p240, %s239, 1919
        %s242 = smul.addr %s241, 8
        %s243 = scalar_lea.vmem %s1, %s242
        %s244 = smul.u32 480, %s15
      $region44: #{critic_forward.5} parent=35 // pred_fallthru
        _
    $region36: #{critic_forward.5} parent=5 // pred_fallthru
      _
    %p245 = scmp.le.s32.totalorder 1, %s15
    %p246 = scmp.lt.s32.totalorder %s15, 5
    %p247 = pnand %p245, %p246
    %p248 = pneg %p247
    // Predicated region
    $region45: #{critic_forward.5} parent=5 // pred_check
      _
    $region46: #{critic_forward.5} parent=5 // pred_check_branch
      %250 = sbr.rel (%p247) target = $region48
    $region47: #{critic_forward.5} parent=5 // pred_region
      %s251 = ssub.s32 %s15, 1
      %s252 = smul.u32 30, %s20
      %p253 = scmp.lt.s32.totalorder %s252, 119
      %s254 = scalar_select %p253, %s252, 119
      %s255 = smul.addr %s254, 2
      %s256 = scalar_lea.vmem %s0, %s255
      %p257 = pneg %p41
      %p258 = pneg %p38
      %s259 = smul.u32 480, %s20
      %p260 = scmp.lt.s32.totalorder %s259, 1919
      %s261 = scalar_select %p260, %s259, 1919
      %s262 = smul.addr %s261, 8
      %s263 = scalar_lea.vmem %s1, %s262
      %p264 = pneg %p67
      %p265 = pneg %p64
      %p266 = pneg %p88
      %p267 = pneg %p85
      %p268 = pneg %p109
      %p269 = pneg %p106
      %p270 = pneg %p130
      %p271 = pneg %p127
      %p272 = pneg %p151
      %p273 = pneg %p148
      %p274 = pneg %p172
      %p275 = pneg %p169
      %p276 = pneg %p193
      %p277 = pneg %p190
      %s278 = smul.u32 30, %s20
      %p279 = scmp.lt.s32.totalorder %s278, 119
      %s280 = scalar_select %p279, %s278, 119
      %s281 = smul.addr %s280, 2
      %s282 = scalar_lea.vmem %s0, %s281
      %s283 = smul.u32 30, %s20
      %s284 = smul.u32 480, %s20
      %p285 = scmp.lt.s32.totalorder %s284, 1919
      %s286 = scalar_select %p285, %s284, 1919
      %s287 = smul.addr %s286, 8
      %s288 = scalar_lea.vmem %s1, %s287
      %s289 = smul.u32 480, %s20
      %p290 = scmp.eq.s32.totalorder %s20, 0
      // Predicated region
      $region49: #{critic_forward.5} parent=47 // pred_check
        %p291 = pneg %p290
      $region50: #{critic_forward.5} parent=47 // pred_check_branch
        %293 = sbr.rel (%p291) target = $region52
      $region51: #{critic_forward.5} parent=47 // pred_region
        %294 = vst [vmem:[#allocation2] sm:$0x3] 0.0
      $region52: #{critic_forward.5} parent=47 // pred_fallthru
        _
      %v295 = vld [vmem:[#allocation2] sm:$0x3]
      %v296 = vld [vmem:[%s282] sm:$0xff]
      %v297 = vld [vmem:[%s282 + $0x8] sm:$0xff]
      %v298 = vld [vmem:[%s282 + $0x10] sm:$0xff]
      %v299 = vld [vmem:[%s282 + $0x18] sm:$0xff]
      %v300 = vld [vmem:[%s282 + $0x20] sm:$0xff]
      %v301 = vld [vmem:[%s282 + $0x28] sm:$0xff]
      %v302 = vld [vmem:[%s282 + $0x30] sm:$0xff]
      %v303 = vld [vmem:[%s282 + $0x38] sm:$0xf]
      %v304 = vld [vmem:[%s288] sm:$0xff]
      %v305 = vld [vmem:[%s288 + $0x8] sm:$0xff]
      %v306 = vld [vmem:[%s288 + $0x10] sm:$0xff]
      %v307 = vld [vmem:[%s288 + $0x18] sm:$0xff]
      %v308 = vld [vmem:[%s288 + $0x20] sm:$0xff]
      %v309 = vld [vmem:[%s288 + $0x28] sm:$0xff]
      %v310 = vld [vmem:[%s288 + $0x30] sm:$0xff]
      %v311 = vld [vmem:[%s288 + $0x38] sm:$0xff]
      %v312 = vld [vmem:[%s288 + $0x40] sm:$0xff]
      %v313 = vld [vmem:[%s288 + $0x48] sm:$0xff]
      %v314 = vld [vmem:[%s288 + $0x50] sm:$0xff]
      %v315 = vld [vmem:[%s288 + $0x58] sm:$0xff]
      %v316 = vld [vmem:[%s288 + $0x60] sm:$0xff]
      %v317 = vld [vmem:[%s288 + $0x68] sm:$0xff]
      %v318 = vld [vmem:[%s288 + $0x70] sm:$0xff]
      %v319 = vld [vmem:[%s288 + $0x78] sm:$0xff]
      %v320 = vld [vmem:[%s288 + $0x80] sm:$0xff]
      %v321 = vld [vmem:[%s288 + $0x88] sm:$0xff]
      %v322 = vld [vmem:[%s288 + $0x90] sm:$0xff]
      %v323 = vld [vmem:[%s288 + $0x98] sm:$0xff]
      %v324 = vld [vmem:[%s288 + $0xa0] sm:$0xff]
      %v325 = vld [vmem:[%s288 + $0xa8] sm:$0xff]
      %v326 = vld [vmem:[%s288 + $0xb0] sm:$0xff]
      %v327 = vld [vmem:[%s288 + $0xb8] sm:$0xff]
      %v328 = vld [vmem:[%s288 + $0xc0] sm:$0xff]
      %v329 = vld [vmem:[%s288 + $0xc8] sm:$0xff]
      %v330 = vld [vmem:[%s288 + $0xd0] sm:$0xff]
      %v331 = vld [vmem:[%s288 + $0xd8] sm:$0xff]
      %v332 = vld [vmem:[%s288 + $0xe0] sm:$0xff]
      %v333 = vld [vmem:[%s288 + $0xe8] sm:$0xff]
      %v334 = vld [vmem:[%s288 + $0xf0] sm:$0xff]
      %v335 = vld [vmem:[%s288 + $0xf8] sm:$0xff]
      %v336 = vld [vmem:[%s288 + $0x100] sm:$0xff]
      %v337 = vld [vmem:[%s288 + $0x108] sm:$0xff]
      %v338 = vld [vmem:[%s288 + $0x110] sm:$0xff]
      %v339 = vld [vmem:[%s288 + $0x118] sm:$0xff]
      %v340 = vld [vmem:[%s288 + $0x120] sm:$0xff]
      %v341 = vld [vmem:[%s288 + $0x128] sm:$0xff]
      %v342 = vld [vmem:[%s288 + $0x130] sm:$0xff]
      %v343 = vld [vmem:[%s288 + $0x138] sm:$0xff]
      %v344 = vld [vmem:[%s288 + $0x140] sm:$0xff]
      %v345 = vld [vmem:[%s288 + $0x148] sm:$0xff]
      %v346 = vld [vmem:[%s288 + $0x150] sm:$0xff]
      %v347 = vld [vmem:[%s288 + $0x158] sm:$0xff]
      %v348 = vld [vmem:[%s288 + $0x160] sm:$0xff]
      %v349 = vld [vmem:[%s288 + $0x168] sm:$0xff]
      %v350 = vld [vmem:[%s288 + $0x170] sm:$0xff]
      %v351 = vld [vmem:[%s288 + $0x178] sm:$0xff]
      %v352 = vld [vmem:[%s288 + $0x180] sm:$0xff]
      %v353 = vld [vmem:[%s288 + $0x188] sm:$0xff]
      %v354 = vld [vmem:[%s288 + $0x190] sm:$0xff]
      %v355 = vld [vmem:[%s288 + $0x198] sm:$0xff]
      %v356 = vld [vmem:[%s288 + $0x1a0] sm:$0xff]
      %v357 = vld [vmem:[%s288 + $0x1a8] sm:$0xff]
      %v358 = vld [vmem:[%s288 + $0x1b0] sm:$0xff]
      %v359 = vld [vmem:[%s288 + $0x1b8] sm:$0xff]
      %v360 = vld [vmem:[%s288 + $0x1c0] sm:$0xff]
      %v361 = vld [vmem:[%s288 + $0x1c8] sm:$0xff]
      %v362 = vld [vmem:[%s288 + $0x1d0] sm:$0xff]
      %v363 = vld [vmem:[%s288 + $0x1d8] sm:$0xff]
      %v364 = vld [vmem:[%s288 + $0x1e0] sm:$0xff]
      %v365 = vld [vmem:[%s288 + $0x1e8] sm:$0xff]
      %v366 = vld [vmem:[%s288 + $0x1f0] sm:$0xff]
      %v367 = vld [vmem:[%s288 + $0x1f8] sm:$0xff]
      %v368 = vld [vmem:[%s288 + $0x200] sm:$0xff]
      %v369 = vld [vmem:[%s288 + $0x208] sm:$0xff]
      %v370 = vld [vmem:[%s288 + $0x210] sm:$0xff]
      %v371 = vld [vmem:[%s288 + $0x218] sm:$0xff]
      %v372 = vld [vmem:[%s288 + $0x220] sm:$0xff]
      %v373 = vld [vmem:[%s288 + $0x228] sm:$0xff]
      %v374 = vld [vmem:[%s288 + $0x230] sm:$0xff]
      %v375 = vld [vmem:[%s288 + $0x238] sm:$0xff]
      %v376 = vld [vmem:[%s288 + $0x240] sm:$0xff]
      %v377 = vld [vmem:[%s288 + $0x248] sm:$0xff]
      %v378 = vld [vmem:[%s288 + $0x250] sm:$0xff]
      %v379 = vld [vmem:[%s288 + $0x258] sm:$0xff]
      %v380 = vld [vmem:[%s288 + $0x260] sm:$0xff]
      %v381 = vld [vmem:[%s288 + $0x268] sm:$0xff]
      %v382 = vld [vmem:[%s288 + $0x270] sm:$0xff]
      %v383 = vld [vmem:[%s288 + $0x278] sm:$0xff]
      %v384 = vld [vmem:[%s288 + $0x280] sm:$0xff]
      %v385 = vld [vmem:[%s288 + $0x288] sm:$0xff]
      %v386 = vld [vmem:[%s288 + $0x290] sm:$0xff]
      %v387 = vld [vmem:[%s288 + $0x298] sm:$0xff]
      %v388 = vld [vmem:[%s288 + $0x2a0] sm:$0xff]
      %v389 = vld [vmem:[%s288 + $0x2a8] sm:$0xff]
      %v390 = vld [vmem:[%s288 + $0x2b0] sm:$0xff]
      %v391 = vld [vmem:[%s288 + $0x2b8] sm:$0xff]
      %v392 = vld [vmem:[%s288 + $0x2c0] sm:$0xff]
      %v393 = vld [vmem:[%s288 + $0x2c8] sm:$0xff]
      %v394 = vld [vmem:[%s288 + $0x2d0] sm:$0xff]
      %v395 = vld [vmem:[%s288 + $0x2d8] sm:$0xff]
      %v396 = vld [vmem:[%s288 + $0x2e0] sm:$0xff]
      %v397 = vld [vmem:[%s288 + $0x2e8] sm:$0xff]
      %v398 = vld [vmem:[%s288 + $0x2f0] sm:$0xff]
      %v399 = vld [vmem:[%s288 + $0x2f8] sm:$0xff]
      %v400 = vld [vmem:[%s288 + $0x300] sm:$0xff]
      %v401 = vld [vmem:[%s288 + $0x308] sm:$0xff]
      %v402 = vld [vmem:[%s288 + $0x310] sm:$0xff]
      %v403 = vld [vmem:[%s288 + $0x318] sm:$0xff]
      %v404 = vld [vmem:[%s288 + $0x320] sm:$0xff]
      %v405 = vld [vmem:[%s288 + $0x328] sm:$0xff]
      %v406 = vld [vmem:[%s288 + $0x330] sm:$0xff]
      %v407 = vld [vmem:[%s288 + $0x338] sm:$0xff]
      %v408 = vld [vmem:[%s288 + $0x340] sm:$0xff]
      %v409 = vld [vmem:[%s288 + $0x348] sm:$0xff]
      %v410 = vld [vmem:[%s288 + $0x350] sm:$0xff]
      %v411 = vld [vmem:[%s288 + $0x358] sm:$0xff]
      %v412 = vld [vmem:[%s288 + $0x360] sm:$0xff]
      %v413 = vld [vmem:[%s288 + $0x368] sm:$0xff]
      %v414 = vld [vmem:[%s288 + $0x370] sm:$0xff]
      %v415 = vld [vmem:[%s288 + $0x378] sm:$0xff]
      %v416 = vld [vmem:[%s288 + $0x380] sm:$0xff]
      %v417 = vld [vmem:[%s288 + $0x388] sm:$0xff]
      %v418 = vld [vmem:[%s288 + $0x390] sm:$0xff]
      %v419 = vld [vmem:[%s288 + $0x398] sm:$0xff]
      %v420 = vld [vmem:[%s288 + $0x3a0] sm:$0xff]
      %v421 = vld [vmem:[%s288 + $0x3a8] sm:$0xff]
      %v422 = vld [vmem:[%s288 + $0x3b0] sm:$0xff]
      %v423 = vld [vmem:[%s288 + $0x3b8] sm:$0xff]
      %v424 = vld [vmem:[%s288 + $0x3c0] sm:$0xff]
      %v425 = vld [vmem:[%s288 + $0x3c8] sm:$0xff]
      %v426 = vld [vmem:[%s288 + $0x3d0] sm:$0xff]
      %v427 = vld [vmem:[%s288 + $0x3d8] sm:$0xff]
      %v428 = vld [vmem:[%s288 + $0x3e0] sm:$0xff]
      %v429 = vld [vmem:[%s288 + $0x3e8] sm:$0xff]
      %v430 = vld [vmem:[%s288 + $0x3f0] sm:$0xff]
      %v431 = vld [vmem:[%s288 + $0x3f8] sm:$0xff]
      %v432 = vld [vmem:[%s288 + $0x400] sm:$0xff]
      %v433 = vld [vmem:[%s288 + $0x408] sm:$0xff]
      %v434 = vld [vmem:[%s288 + $0x410] sm:$0xff]
      %v435 = vld [vmem:[%s288 + $0x418] sm:$0xff]
      %v436 = vld [vmem:[%s288 + $0x420] sm:$0xff]
      %v437 = vld [vmem:[%s288 + $0x428] sm:$0xff]
      %v438 = vld [vmem:[%s288 + $0x430] sm:$0xff]
      %v439 = vld [vmem:[%s288 + $0x438] sm:$0xff]
      %v440 = vld [vmem:[%s288 + $0x440] sm:$0xff]
      %v441 = vld [vmem:[%s288 + $0x448] sm:$0xff]
      %v442 = vld [vmem:[%s288 + $0x450] sm:$0xff]
      %v443 = vld [vmem:[%s288 + $0x458] sm:$0xff]
      %v444 = vld [vmem:[%s288 + $0x460] sm:$0xff]
      %v445 = vld [vmem:[%s288 + $0x468] sm:$0xff]
      %v446 = vld [vmem:[%s288 + $0x470] sm:$0xff]
      %v447 = vld [vmem:[%s288 + $0x478] sm:$0xff]
      %v448 = vld [vmem:[%s288 + $0x480] sm:$0xff]
      %v449 = vld [vmem:[%s288 + $0x488] sm:$0xff]
      %v450 = vld [vmem:[%s288 + $0x490] sm:$0xff]
      %v451 = vld [vmem:[%s288 + $0x498] sm:$0xff]
      %v452 = vld [vmem:[%s288 + $0x4a0] sm:$0xff]
      %v453 = vld [vmem:[%s288 + $0x4a8] sm:$0xff]
      %v454 = vld [vmem:[%s288 + $0x4b0] sm:$0xff]
      %v455 = vld [vmem:[%s288 + $0x4b8] sm:$0xff]
      %v456 = vld [vmem:[%s288 + $0x4c0] sm:$0xff]
      %v457 = vld [vmem:[%s288 + $0x4c8] sm:$0xff]
      %v458 = vld [vmem:[%s288 + $0x4d0] sm:$0xff]
      %v459 = vld [vmem:[%s288 + $0x4d8] sm:$0xff]
      %v460 = vld [vmem:[%s288 + $0x4e0] sm:$0xff]
      %v461 = vld [vmem:[%s288 + $0x4e8] sm:$0xff]
      %v462 = vld [vmem:[%s288 + $0x4f0] sm:$0xff]
      %v463 = vld [vmem:[%s288 + $0x4f8] sm:$0xff]
      %v464 = vld [vmem:[%s288 + $0x500] sm:$0xff]
      %v465 = vld [vmem:[%s288 + $0x508] sm:$0xff]
      %v466 = vld [vmem:[%s288 + $0x510] sm:$0xff]
      %v467 = vld [vmem:[%s288 + $0x518] sm:$0xff]
      %v468 = vld [vmem:[%s288 + $0x520] sm:$0xff]
      %v469 = vld [vmem:[%s288 + $0x528] sm:$0xff]
      %v470 = vld [vmem:[%s288 + $0x530] sm:$0xff]
      %v471 = vld [vmem:[%s288 + $0x538] sm:$0xff]
      %v472 = vld [vmem:[%s288 + $0x540] sm:$0xff]
      %v473 = vld [vmem:[%s288 + $0x548] sm:$0xff]
      %v474 = vld [vmem:[%s288 + $0x550] sm:$0xff]
      %v475 = vld [vmem:[%s288 + $0x558] sm:$0xff]
      %v476 = vld [vmem:[%s288 + $0x560] sm:$0xff]
      %v477 = vld [vmem:[%s288 + $0x568] sm:$0xff]
      %v478 = vld [vmem:[%s288 + $0x570] sm:$0xff]
      %v479 = vld [vmem:[%s288 + $0x578] sm:$0xff]
      %v480 = vld [vmem:[%s288 + $0x580] sm:$0xff]
      %v481 = vld [vmem:[%s288 + $0x588] sm:$0xff]
      %v482 = vld [vmem:[%s288 + $0x590] sm:$0xff]
      %v483 = vld [vmem:[%s288 + $0x598] sm:$0xff]
      %v484 = vld [vmem:[%s288 + $0x5a0] sm:$0xff]
      %v485 = vld [vmem:[%s288 + $0x5a8] sm:$0xff]
      %v486 = vld [vmem:[%s288 + $0x5b0] sm:$0xff]
      %v487 = vld [vmem:[%s288 + $0x5b8] sm:$0xff]
      %v488 = vld [vmem:[%s288 + $0x5c0] sm:$0xff]
      %v489 = vld [vmem:[%s288 + $0x5c8] sm:$0xff]
      %v490 = vld [vmem:[%s288 + $0x5d0] sm:$0xff]
      %v491 = vld [vmem:[%s288 + $0x5d8] sm:$0xff]
      %v492 = vld [vmem:[%s288 + $0x5e0] sm:$0xff]
      %v493 = vld [vmem:[%s288 + $0x5e8] sm:$0xff]
      %v494 = vld [vmem:[%s288 + $0x5f0] sm:$0xff]
      %v495 = vld [vmem:[%s288 + $0x5f8] sm:$0xff]
      %v496 = vld [vmem:[%s288 + $0x600] sm:$0xff]
      %v497 = vld [vmem:[%s288 + $0x608] sm:$0xff]
      %v498 = vld [vmem:[%s288 + $0x610] sm:$0xff]
      %v499 = vld [vmem:[%s288 + $0x618] sm:$0xff]
      %v500 = vld [vmem:[%s288 + $0x620] sm:$0xff]
      %v501 = vld [vmem:[%s288 + $0x628] sm:$0xff]
      %v502 = vld [vmem:[%s288 + $0x630] sm:$0xff]
      %v503 = vld [vmem:[%s288 + $0x638] sm:$0xff]
      %v504 = vld [vmem:[%s288 + $0x640] sm:$0xff]
      %v505 = vld [vmem:[%s288 + $0x648] sm:$0xff]
      %v506 = vld [vmem:[%s288 + $0x650] sm:$0xff]
      %v507 = vld [vmem:[%s288 + $0x658] sm:$0xff]
      %v508 = vld [vmem:[%s288 + $0x660] sm:$0xff]
      %v509 = vld [vmem:[%s288 + $0x668] sm:$0xff]
      %v510 = vld [vmem:[%s288 + $0x670] sm:$0xff]
      %v511 = vld [vmem:[%s288 + $0x678] sm:$0xff]
      %v512 = vld [vmem:[%s288 + $0x680] sm:$0xff]
      %v513 = vld [vmem:[%s288 + $0x688] sm:$0xff]
      %v514 = vld [vmem:[%s288 + $0x690] sm:$0xff]
      %v515 = vld [vmem:[%s288 + $0x698] sm:$0xff]
      %v516 = vld [vmem:[%s288 + $0x6a0] sm:$0xff]
      %v517 = vld [vmem:[%s288 + $0x6a8] sm:$0xff]
      %v518 = vld [vmem:[%s288 + $0x6b0] sm:$0xff]
      %v519 = vld [vmem:[%s288 + $0x6b8] sm:$0xff]
      %v520 = vld [vmem:[%s288 + $0x6c0] sm:$0xff]
      %v521 = vld [vmem:[%s288 + $0x6c8] sm:$0xff]
      %v522 = vld [vmem:[%s288 + $0x6d0] sm:$0xff]
      %v523 = vld [vmem:[%s288 + $0x6d8] sm:$0xff]
      %v524 = vld [vmem:[%s288 + $0x6e0] sm:$0xff]
      %v525 = vld [vmem:[%s288 + $0x6e8] sm:$0xff]
      %v526 = vld [vmem:[%s288 + $0x6f0] sm:$0xff]
      %v527 = vld [vmem:[%s288 + $0x6f8] sm:$0xff]
      %v528 = vld [vmem:[%s288 + $0x700] sm:$0xff]
      %v529 = vld [vmem:[%s288 + $0x708] sm:$0xff]
      %v530 = vld [vmem:[%s288 + $0x710] sm:$0xff]
      %v531 = vld [vmem:[%s288 + $0x718] sm:$0xff]
      %v532 = vld [vmem:[%s288 + $0x720] sm:$0xff]
      %v533 = vld [vmem:[%s288 + $0x728] sm:$0xff]
      %v534 = vld [vmem:[%s288 + $0x730] sm:$0xff]
      %v535 = vld [vmem:[%s288 + $0x738] sm:$0xff]
      %v536 = vld [vmem:[%s288 + $0x740] sm:$0xff]
      %v537 = vld [vmem:[%s288 + $0x748] sm:$0xff]
      %v538 = vld [vmem:[%s288 + $0x750] sm:$0xff]
      %v539 = vld [vmem:[%s288 + $0x758] sm:$0xff]
      %v540 = vld [vmem:[%s288 + $0x760] sm:$0xff]
      %v541 = vld [vmem:[%s288 + $0x768] sm:$0xff]
      %v542 = vld [vmem:[%s288 + $0x770] sm:$0xff]
      %v543 = vld [vmem:[%s288 + $0x778] sm:$0xff]
      %v544 = vld [vmem:[%s288 + $0x780] sm:$0xff]
      %v545 = vld [vmem:[%s288 + $0x788] sm:$0xff]
      %v546 = vld [vmem:[%s288 + $0x790] sm:$0xff]
      %v547 = vld [vmem:[%s288 + $0x798] sm:$0xff]
      %v548 = vld [vmem:[%s288 + $0x7a0] sm:$0xff]
      %v549 = vld [vmem:[%s288 + $0x7a8] sm:$0xff]
      %v550 = vld [vmem:[%s288 + $0x7b0] sm:$0xff]
      %v551 = vld [vmem:[%s288 + $0x7b8] sm:$0xff]
      %v552 = vld [vmem:[%s288 + $0x7c0] sm:$0xff]
      %v553 = vld [vmem:[%s288 + $0x7c8] sm:$0xff]
      %v554 = vld [vmem:[%s288 + $0x7d0] sm:$0xff]
      %v555 = vld [vmem:[%s288 + $0x7d8] sm:$0xff]
      %v556 = vld [vmem:[%s288 + $0x7e0] sm:$0xff]
      %v557 = vld [vmem:[%s288 + $0x7e8] sm:$0xff]
      %v558 = vld [vmem:[%s288 + $0x7f0] sm:$0xff]
      %v559 = vld [vmem:[%s288 + $0x7f8] sm:$0xff]
      %v560 = vld [vmem:[%s288 + $0x800] sm:$0xff]
      %v561 = vld [vmem:[%s288 + $0x808] sm:$0xff]
      %v562 = vld [vmem:[%s288 + $0x810] sm:$0xff]
      %v563 = vld [vmem:[%s288 + $0x818] sm:$0xff]
      %v564 = vld [vmem:[%s288 + $0x820] sm:$0xff]
      %v565 = vld [vmem:[%s288 + $0x828] sm:$0xff]
      %v566 = vld [vmem:[%s288 + $0x830] sm:$0xff]
      %v567 = vld [vmem:[%s288 + $0x838] sm:$0xff]
      %v568 = vld [vmem:[%s288 + $0x840] sm:$0xff]
      %v569 = vld [vmem:[%s288 + $0x848] sm:$0xff]
      %v570 = vld [vmem:[%s288 + $0x850] sm:$0xff]
      %v571 = vld [vmem:[%s288 + $0x858] sm:$0xff]
      %v572 = vld [vmem:[%s288 + $0x860] sm:$0xff]
      %v573 = vld [vmem:[%s288 + $0x868] sm:$0xff]
      %v574 = vld [vmem:[%s288 + $0x870] sm:$0xff]
      %v575 = vld [vmem:[%s288 + $0x878] sm:$0xff]
      %v576 = vld [vmem:[%s288 + $0x880] sm:$0xff]
      %v577 = vld [vmem:[%s288 + $0x888] sm:$0xff]
      %v578 = vld [vmem:[%s288 + $0x890] sm:$0xff]
      %v579 = vld [vmem:[%s288 + $0x898] sm:$0xff]
      %v580 = vld [vmem:[%s288 + $0x8a0] sm:$0xff]
      %v581 = vld [vmem:[%s288 + $0x8a8] sm:$0xff]
      %v582 = vld [vmem:[%s288 + $0x8b0] sm:$0xff]
      %v583 = vld [vmem:[%s288 + $0x8b8] sm:$0xff]
      %v584 = vld [vmem:[%s288 + $0x8c0] sm:$0xff]
      %v585 = vld [vmem:[%s288 + $0x8c8] sm:$0xff]
      %v586 = vld [vmem:[%s288 + $0x8d0] sm:$0xff]
      %v587 = vld [vmem:[%s288 + $0x8d8] sm:$0xff]
      %v588 = vld [vmem:[%s288 + $0x8e0] sm:$0xff]
      %v589 = vld [vmem:[%s288 + $0x8e8] sm:$0xff]
      %v590 = vld [vmem:[%s288 + $0x8f0] sm:$0xff]
      %v591 = vld [vmem:[%s288 + $0x8f8] sm:$0xff]
      %v592 = vld [vmem:[%s288 + $0x900] sm:$0xff]
      %v593 = vld [vmem:[%s288 + $0x908] sm:$0xff]
      %v594 = vld [vmem:[%s288 + $0x910] sm:$0xff]
      %v595 = vld [vmem:[%s288 + $0x918] sm:$0xff]
      %v596 = vld [vmem:[%s288 + $0x920] sm:$0xff]
      %v597 = vld [vmem:[%s288 + $0x928] sm:$0xff]
      %v598 = vld [vmem:[%s288 + $0x930] sm:$0xff]
      %v599 = vld [vmem:[%s288 + $0x938] sm:$0xff]
      %v600 = vld [vmem:[%s288 + $0x940] sm:$0xff]
      %v601 = vld [vmem:[%s288 + $0x948] sm:$0xff]
      %v602 = vld [vmem:[%s288 + $0x950] sm:$0xff]
      %v603 = vld [vmem:[%s288 + $0x958] sm:$0xff]
      %v604 = vld [vmem:[%s288 + $0x960] sm:$0xff]
      %v605 = vld [vmem:[%s288 + $0x968] sm:$0xff]
      %v606 = vld [vmem:[%s288 + $0x970] sm:$0xff]
      %v607 = vld [vmem:[%s288 + $0x978] sm:$0xff]
      %v608 = vld [vmem:[%s288 + $0x980] sm:$0xff]
      %v609 = vld [vmem:[%s288 + $0x988] sm:$0xff]
      %v610 = vld [vmem:[%s288 + $0x990] sm:$0xff]
      %v611 = vld [vmem:[%s288 + $0x998] sm:$0xff]
      %v612 = vld [vmem:[%s288 + $0x9a0] sm:$0xff]
      %v613 = vld [vmem:[%s288 + $0x9a8] sm:$0xff]
      %v614 = vld [vmem:[%s288 + $0x9b0] sm:$0xff]
      %v615 = vld [vmem:[%s288 + $0x9b8] sm:$0xff]
      %v616 = vld [vmem:[%s288 + $0x9c0] sm:$0xff]
      %v617 = vld [vmem:[%s288 + $0x9c8] sm:$0xff]
      %v618 = vld [vmem:[%s288 + $0x9d0] sm:$0xff]
      %v619 = vld [vmem:[%s288 + $0x9d8] sm:$0xff]
      %v620 = vld [vmem:[%s288 + $0x9e0] sm:$0xff]
      %v621 = vld [vmem:[%s288 + $0x9e8] sm:$0xff]
      %v622 = vld [vmem:[%s288 + $0x9f0] sm:$0xff]
      %v623 = vld [vmem:[%s288 + $0x9f8] sm:$0xff]
      %v624 = vld [vmem:[%s288 + $0xa00] sm:$0xff]
      %v625 = vld [vmem:[%s288 + $0xa08] sm:$0xff]
      %v626 = vld [vmem:[%s288 + $0xa10] sm:$0xff]
      %v627 = vld [vmem:[%s288 + $0xa18] sm:$0xff]
      %v628 = vld [vmem:[%s288 + $0xa20] sm:$0xff]
      %v629 = vld [vmem:[%s288 + $0xa28] sm:$0xff]
      %v630 = vld [vmem:[%s288 + $0xa30] sm:$0xff]
      %v631 = vld [vmem:[%s288 + $0xa38] sm:$0xff]
      %v632 = vld [vmem:[%s288 + $0xa40] sm:$0xff]
      %v633 = vld [vmem:[%s288 + $0xa48] sm:$0xff]
      %v634 = vld [vmem:[%s288 + $0xa50] sm:$0xff]
      %v635 = vld [vmem:[%s288 + $0xa58] sm:$0xff]
      %v636 = vld [vmem:[%s288 + $0xa60] sm:$0xff]
      %v637 = vld [vmem:[%s288 + $0xa68] sm:$0xff]
      %v638 = vld [vmem:[%s288 + $0xa70] sm:$0xff]
      %v639 = vld [vmem:[%s288 + $0xa78] sm:$0xff]
      %v640 = vld [vmem:[%s288 + $0xa80] sm:$0xff]
      %v641 = vld [vmem:[%s288 + $0xa88] sm:$0xff]
      %v642 = vld [vmem:[%s288 + $0xa90] sm:$0xff]
      %v643 = vld [vmem:[%s288 + $0xa98] sm:$0xff]
      %v644 = vld [vmem:[%s288 + $0xaa0] sm:$0xff]
      %v645 = vld [vmem:[%s288 + $0xaa8] sm:$0xff]
      %v646 = vld [vmem:[%s288 + $0xab0] sm:$0xff]
      %v647 = vld [vmem:[%s288 + $0xab8] sm:$0xff]
      %v648 = vld [vmem:[%s288 + $0xac0] sm:$0xff]
      %v649 = vld [vmem:[%s288 + $0xac8] sm:$0xff]
      %v650 = vld [vmem:[%s288 + $0xad0] sm:$0xff]
      %v651 = vld [vmem:[%s288 + $0xad8] sm:$0xff]
      %v652 = vld [vmem:[%s288 + $0xae0] sm:$0xff]
      %v653 = vld [vmem:[%s288 + $0xae8] sm:$0xff]
      %v654 = vld [vmem:[%s288 + $0xaf0] sm:$0xff]
      %v655 = vld [vmem:[%s288 + $0xaf8] sm:$0xff]
      %v656 = vld [vmem:[%s288 + $0xb00] sm:$0xff]
      %v657 = vld [vmem:[%s288 + $0xb08] sm:$0xff]
      %v658 = vld [vmem:[%s288 + $0xb10] sm:$0xff]
      %v659 = vld [vmem:[%s288 + $0xb18] sm:$0xff]
      %v660 = vld [vmem:[%s288 + $0xb20] sm:$0xff]
      %v661 = vld [vmem:[%s288 + $0xb28] sm:$0xff]
      %v662 = vld [vmem:[%s288 + $0xb30] sm:$0xff]
      %v663 = vld [vmem:[%s288 + $0xb38] sm:$0xff]
      %v664 = vld [vmem:[%s288 + $0xb40] sm:$0xff]
      %v665 = vld [vmem:[%s288 + $0xb48] sm:$0xff]
      %v666 = vld [vmem:[%s288 + $0xb50] sm:$0xff]
      %v667 = vld [vmem:[%s288 + $0xb58] sm:$0xff]
      %v668 = vld [vmem:[%s288 + $0xb60] sm:$0xff]
      %v669 = vld [vmem:[%s288 + $0xb68] sm:$0xff]
      %v670 = vld [vmem:[%s288 + $0xb70] sm:$0xff]
      %v671 = vld [vmem:[%s288 + $0xb78] sm:$0xff]
      %v672 = vld [vmem:[%s288 + $0xb80] sm:$0xff]
      %v673 = vld [vmem:[%s288 + $0xb88] sm:$0xff]
      %v674 = vld [vmem:[%s288 + $0xb90] sm:$0xff]
      %v675 = vld [vmem:[%s288 + $0xb98] sm:$0xff]
      %v676 = vld [vmem:[%s288 + $0xba0] sm:$0xff]
      %v677 = vld [vmem:[%s288 + $0xba8] sm:$0xff]
      %v678 = vld [vmem:[%s288 + $0xbb0] sm:$0xff]
      %v679 = vld [vmem:[%s288 + $0xbb8] sm:$0xff]
      %v680 = vld [vmem:[%s288 + $0xbc0] sm:$0xff]
      %v681 = vld [vmem:[%s288 + $0xbc8] sm:$0xff]
      %v682 = vld [vmem:[%s288 + $0xbd0] sm:$0xff]
      %v683 = vld [vmem:[%s288 + $0xbd8] sm:$0xff]
      %v684 = vld [vmem:[%s288 + $0xbe0] sm:$0xff]
      %v685 = vld [vmem:[%s288 + $0xbe8] sm:$0xff]
      %v686 = vld [vmem:[%s288 + $0xbf0] sm:$0xff]
      %v687 = vld [vmem:[%s288 + $0xbf8] sm:$0xff]
      %v688 = vld [vmem:[%s288 + $0xc00] sm:$0xff]
      %v689 = vld [vmem:[%s288 + $0xc08] sm:$0xff]
      %v690 = vld [vmem:[%s288 + $0xc10] sm:$0xff]
      %v691 = vld [vmem:[%s288 + $0xc18] sm:$0xff]
      %v692 = vld [vmem:[%s288 + $0xc20] sm:$0xff]
      %v693 = vld [vmem:[%s288 + $0xc28] sm:$0xff]
      %v694 = vld [vmem:[%s288 + $0xc30] sm:$0xff]
      %v695 = vld [vmem:[%s288 + $0xc38] sm:$0xff]
      %v696 = vld [vmem:[%s288 + $0xc40] sm:$0xff]
      %v697 = vld [vmem:[%s288 + $0xc48] sm:$0xff]
      %v698 = vld [vmem:[%s288 + $0xc50] sm:$0xff]
      %v699 = vld [vmem:[%s288 + $0xc58] sm:$0xff]
      %v700 = vld [vmem:[%s288 + $0xc60] sm:$0xff]
      %v701 = vld [vmem:[%s288 + $0xc68] sm:$0xff]
      %v702 = vld [vmem:[%s288 + $0xc70] sm:$0xff]
      %v703 = vld [vmem:[%s288 + $0xc78] sm:$0xff]
      %v704 = vld [vmem:[%s288 + $0xc80] sm:$0xff]
      %v705 = vld [vmem:[%s288 + $0xc88] sm:$0xff]
      %v706 = vld [vmem:[%s288 + $0xc90] sm:$0xff]
      %v707 = vld [vmem:[%s288 + $0xc98] sm:$0xff]
      %v708 = vld [vmem:[%s288 + $0xca0] sm:$0xff]
      %v709 = vld [vmem:[%s288 + $0xca8] sm:$0xff]
      %v710 = vld [vmem:[%s288 + $0xcb0] sm:$0xff]
      %v711 = vld [vmem:[%s288 + $0xcb8] sm:$0xff]
      %v712 = vld [vmem:[%s288 + $0xcc0] sm:$0xff]
      %v713 = vld [vmem:[%s288 + $0xcc8] sm:$0xff]
      %v714 = vld [vmem:[%s288 + $0xcd0] sm:$0xff]
      %v715 = vld [vmem:[%s288 + $0xcd8] sm:$0xff]
      %v716 = vld [vmem:[%s288 + $0xce0] sm:$0xff]
      %v717 = vld [vmem:[%s288 + $0xce8] sm:$0xff]
      %v718 = vld [vmem:[%s288 + $0xcf0] sm:$0xff]
      %v719 = vld [vmem:[%s288 + $0xcf8] sm:$0xff]
      %v720 = vld [vmem:[%s288 + $0xd00] sm:$0xff]
      %v721 = vld [vmem:[%s288 + $0xd08] sm:$0xff]
      %v722 = vld [vmem:[%s288 + $0xd10] sm:$0xff]
      %v723 = vld [vmem:[%s288 + $0xd18] sm:$0xff]
      %v724 = vld [vmem:[%s288 + $0xd20] sm:$0xff]
      %v725 = vld [vmem:[%s288 + $0xd28] sm:$0xff]
      %v726 = vld [vmem:[%s288 + $0xd30] sm:$0xff]
      %v727 = vld [vmem:[%s288 + $0xd38] sm:$0xff]
      %v728 = vld [vmem:[%s288 + $0xd40] sm:$0xff]
      %v729 = vld [vmem:[%s288 + $0xd48] sm:$0xff]
      %v730 = vld [vmem:[%s288 + $0xd50] sm:$0xff]
      %v731 = vld [vmem:[%s288 + $0xd58] sm:$0xff]
      %v732 = vld [vmem:[%s288 + $0xd60] sm:$0xff]
      %v733 = vld [vmem:[%s288 + $0xd68] sm:$0xff]
      %v734 = vld [vmem:[%s288 + $0xd70] sm:$0xff]
      %v735 = vld [vmem:[%s288 + $0xd78] sm:$0xff]
      %v736 = vld [vmem:[%s288 + $0xd80] sm:$0xff]
      %v737 = vld [vmem:[%s288 + $0xd88] sm:$0xff]
      %v738 = vld [vmem:[%s288 + $0xd90] sm:$0xff]
      %v739 = vld [vmem:[%s288 + $0xd98] sm:$0xff]
      %v740 = vld [vmem:[%s288 + $0xda0] sm:$0xff]
      %v741 = vld [vmem:[%s288 + $0xda8] sm:$0xff]
      %v742 = vld [vmem:[%s288 + $0xdb0] sm:$0xff]
      %v743 = vld [vmem:[%s288 + $0xdb8] sm:$0xff]
      %v744 = vld [vmem:[%s288 + $0xdc0] sm:$0xff]
      %v745 = vld [vmem:[%s288 + $0xdc8] sm:$0xff]
      %v746 = vld [vmem:[%s288 + $0xdd0] sm:$0xff]
      %v747 = vld [vmem:[%s288 + $0xdd8] sm:$0xff]
      %v748 = vld [vmem:[%s288 + $0xde0] sm:$0xff]
      %v749 = vld [vmem:[%s288 + $0xde8] sm:$0xff]
      %v750 = vld [vmem:[%s288 + $0xdf0] sm:$0xff]
      %v751 = vld [vmem:[%s288 + $0xdf8] sm:$0xff]
      %v752 = vld [vmem:[%s288 + $0xe00] sm:$0xff]
      %v753 = vld [vmem:[%s288 + $0xe08] sm:$0xff]
      %v754 = vld [vmem:[%s288 + $0xe10] sm:$0xff]
      %v755 = vld [vmem:[%s288 + $0xe18] sm:$0xff]
      %v756 = vld [vmem:[%s288 + $0xe20] sm:$0xff]
      %v757 = vld [vmem:[%s288 + $0xe28] sm:$0xff]
      %v758 = vld [vmem:[%s288 + $0xe30] sm:$0xff]
      %v759 = vld [vmem:[%s288 + $0xe38] sm:$0xff]
      %v760 = vld [vmem:[%s288 + $0xe40] sm:$0xff]
      %v761 = vld [vmem:[%s288 + $0xe48] sm:$0xff]
      %v762 = vld [vmem:[%s288 + $0xe50] sm:$0xff]
      %v763 = vld [vmem:[%s288 + $0xe58] sm:$0xff]
      %v764 = vld [vmem:[%s288 + $0xe60] sm:$0xff]
      %v765 = vld [vmem:[%s288 + $0xe68] sm:$0xff]
      %v766 = vld [vmem:[%s288 + $0xe70] sm:$0xff]
      %v767 = vld [vmem:[%s288 + $0xe78] sm:$0xff]
      %v768 = vld [vmem:[%s288 + $0xe80] sm:$0xff]
      %v769 = vld [vmem:[%s288 + $0xe88] sm:$0xff]
      %v770 = vld [vmem:[%s288 + $0xe90] sm:$0xff]
      %v771 = vld [vmem:[%s288 + $0xe98] sm:$0xff]
      %v772 = vld [vmem:[%s288 + $0xea0] sm:$0xff]
      %v773 = vld [vmem:[%s288 + $0xea8] sm:$0xff]
      %v774 = vld [vmem:[%s288 + $0xeb0] sm:$0xff]
      %v775 = vld [vmem:[%s288 + $0xeb8] sm:$0xff]
      %v776 = vld [vmem:[%s288 + $0xec0] sm:$0xff]
      %v777 = vld [vmem:[%s288 + $0xec8] sm:$0xff]
      %v778 = vld [vmem:[%s288 + $0xed0] sm:$0xff]
      %v779 = vld [vmem:[%s288 + $0xed8] sm:$0xff]
      %v780 = vld [vmem:[%s288 + $0xee0] sm:$0xff]
      %v781 = vld [vmem:[%s288 + $0xee8] sm:$0xff]
      %v782 = vld [vmem:[%s288 + $0xef0] sm:$0xff]
      %v783 = vld [vmem:[%s288 + $0xef8] sm:$0xff]
      %792 = vst [vmem:[#allocation1] ss:$4 sm:$0xff] %v296
      %s793 = scalar_lea.vmem [#allocation1], 32
      %794 = vst [vmem:[%s793] ss:$4 sm:$0xff] %v297
      %v795 = vld.sshfl [vmem:[#allocation1] sm:$0xff pattern:$0x73625140]
      %v796 = vld.sshfl [vmem:[#allocation1 + $0x8] sm:$0xff pattern:$0x73625140]
      %v797 = vld.sshfl [vmem:[#allocation1 + $0x10] sm:$0xff pattern:$0x73625140]
      %v798 = vld.sshfl [vmem:[#allocation1 + $0x18] sm:$0xff pattern:$0x73625140]
      %v799 = vld.sshfl [vmem:[#allocation1 + $0x20] sm:$0xff pattern:$0x73625140]
      %v800 = vld.sshfl [vmem:[#allocation1 + $0x28] sm:$0xff pattern:$0x73625140]
      %v801 = vld.sshfl [vmem:[#allocation1 + $0x30] sm:$0xff pattern:$0x73625140]
      %v802 = vld.sshfl [vmem:[#allocation1 + $0x38] sm:$0xff pattern:$0x73625140]
      %803 = vst [vmem:[#allocation1] ss:$4 sm:$0xff] %v298
      %804 = vst [vmem:[%s793] ss:$4 sm:$0xff] %v299
      %v805 = vld.sshfl [vmem:[#allocation1] sm:$0xff pattern:$0x73625140]
      %v806 = vld.sshfl [vmem:[#allocation1 + $0x8] sm:$0xff pattern:$0x73625140]
      %v807 = vld.sshfl [vmem:[#allocation1 + $0x10] sm:$0xff pattern:$0x73625140]
      %v808 = vld.sshfl [vmem:[#allocation1 + $0x18] sm:$0xff pattern:$0x73625140]
      %v809 = vld.sshfl [vmem:[#allocation1 + $0x20] sm:$0xff pattern:$0x73625140]
      %v810 = vld.sshfl [vmem:[#allocation1 + $0x28] sm:$0xff pattern:$0x73625140]
      %v811 = vld.sshfl [vmem:[#allocation1 + $0x30] sm:$0xff pattern:$0x73625140]
      %v812 = vld.sshfl [vmem:[#allocation1 + $0x38] sm:$0xff pattern:$0x73625140]
      %813 = vst [vmem:[#allocation1] ss:$4 sm:$0xff] %v300
      %814 = vst [vmem:[%s793] ss:$4 sm:$0xff] %v301
      %v815 = vld.sshfl [vmem:[#allocation1] sm:$0xff pattern:$0x73625140]
      %v816 = vld.sshfl [vmem:[#allocation1 + $0x8] sm:$0xff pattern:$0x73625140]
      %v817 = vld.sshfl [vmem:[#allocation1 + $0x10] sm:$0xff pattern:$0x73625140]
      %v818 = vld.sshfl [vmem:[#allocation1 + $0x18] sm:$0xff pattern:$0x73625140]
      %v819 = vld.sshfl [vmem:[#allocation1 + $0x20] sm:$0xff pattern:$0x73625140]
      %v820 = vld.sshfl [vmem:[#allocation1 + $0x28] sm:$0xff pattern:$0x73625140]
      %v821 = vld.sshfl [vmem:[#allocation1 + $0x30] sm:$0xff pattern:$0x73625140]
      %v822 = vld.sshfl [vmem:[#allocation1 + $0x38] sm:$0xff pattern:$0x73625140]
      %823 = vst [vmem:[#allocation1] ss:$4 sm:$0xff] %v302
      %824 = vst [vmem:[%s793] ss:$4 sm:$0xff] %v303
      %v825 = vld.sshfl [vmem:[#allocation1] sm:$0xff pattern:$0x73625140]
      %v826 = vld.sshfl [vmem:[#allocation1 + $0x8] sm:$0xff pattern:$0x73625140]
      %v827 = vld.sshfl [vmem:[#allocation1 + $0x10] sm:$0xff pattern:$0x73625140]
      %v828 = vld.sshfl [vmem:[#allocation1 + $0x18] sm:$0xff pattern:$0x73625140]
      %v829 = vld.sshfl [vmem:[#allocation1 + $0x20] sm:$0xff pattern:$0x73625140]
      %v830 = vld.sshfl [vmem:[#allocation1 + $0x28] sm:$0xff pattern:$0x73625140]
      %861 = vmatpush.msra.mxu0 %v319
      %862 = vmatpush.msra.mxu0 %v318
      %863 = vmatpush.msra.mxu0 %v317
      %864 = vmatpush.msra.mxu0 %v316
      %865 = vmatpush.msra.mxu0 %v315
      %866 = vmatpush.msra.mxu0 %v314
      %867 = vmatpush.msra.mxu0 %v313
      %868 = vmatpush.msra.mxu0 %v312
      %869 = vmatpush.msra.mxu0 %v311
      %870 = vmatpush.msra.mxu0 %v310
      %871 = vmatpush.msra.mxu0 %v309
      %872 = vmatpush.msra.mxu0 %v308
      %873 = vmatpush.msra.mxu0 %v307
      %874 = vmatpush.msra.mxu0 %v306
      %875 = vmatpush.msra.mxu0 %v305
      %876 = vmatpush.msra.mxu0 %v304
      %877 = vmatmul.f32.gmra.mxu0 %v795
      %v878 = vpop.f32.mrf.mxu0
      %v879 = vadd.f32 0.0, %v878
      %880 = vdwg.mxu0
      %881 = vmatpush.msra.mxu0 %v335
      %882 = vmatpush.msra.mxu0 %v334
      %883 = vmatpush.msra.mxu0 %v333
      %884 = vmatpush.msra.mxu0 %v332
      %885 = vmatpush.msra.mxu0 %v331
      %886 = vmatpush.msra.mxu0 %v330
      %887 = vmatpush.msra.mxu0 %v329
      %888 = vmatpush.msra.mxu0 %v328
      %889 = vmatpush.msra.mxu0 %v327
      %890 = vmatpush.msra.mxu0 %v326
      %891 = vmatpush.msra.mxu0 %v325
      %892 = vmatpush.msra.mxu0 %v324
      %893 = vmatpush.msra.mxu0 %v323
      %894 = vmatpush.msra.mxu0 %v322
      %895 = vmatpush.msra.mxu0 %v321
      %896 = vmatpush.msra.mxu0 %v320
      %897 = vmatmul.f32.gmra.mxu0 %v796
      %v898 = vpop.f32.mrf.mxu0
      %v899 = vadd.f32 %v879, %v898
      %900 = vdwg.mxu0
      %901 = vmatpush.msra.mxu0 %v351
      %902 = vmatpush.msra.mxu0 %v350
      %903 = vmatpush.msra.mxu0 %v349
      %904 = vmatpush.msra.mxu0 %v348
      %905 = vmatpush.msra.mxu0 %v347
      %906 = vmatpush.msra.mxu0 %v346
      %907 = vmatpush.msra.mxu0 %v345
      %908 = vmatpush.msra.mxu0 %v344
      %909 = vmatpush.msra.mxu0 %v343
      %910 = vmatpush.msra.mxu0 %v342
      %911 = vmatpush.msra.mxu0 %v341
      %912 = vmatpush.msra.mxu0 %v340
      %913 = vmatpush.msra.mxu0 %v339
      %914 = vmatpush.msra.mxu0 %v338
      %915 = vmatpush.msra.mxu0 %v337
      %916 = vmatpush.msra.mxu0 %v336
      %917 = vmatmul.f32.gmra.mxu0 %v797
      %v918 = vpop.f32.mrf.mxu0
      %v919 = vadd.f32 %v899, %v918
      %920 = vdwg.mxu0
      %921 = vmatpush.msra.mxu0 %v367
      %922 = vmatpush.msra.mxu0 %v366
      %923 = vmatpush.msra.mxu0 %v365
      %924 = vmatpush.msra.mxu0 %v364
      %925 = vmatpush.msra.mxu0 %v363
      %926 = vmatpush.msra.mxu0 %v362
      %927 = vmatpush.msra.mxu0 %v361
      %928 = vmatpush.msra.mxu0 %v360
      %929 = vmatpush.msra.mxu0 %v359
      %930 = vmatpush.msra.mxu0 %v358
      %931 = vmatpush.msra.mxu0 %v357
      %932 = vmatpush.msra.mxu0 %v356
      %933 = vmatpush.msra.mxu0 %v355
      %934 = vmatpush.msra.mxu0 %v354
      %935 = vmatpush.msra.mxu0 %v353
      %936 = vmatpush.msra.mxu0 %v352
      %937 = vmatmul.f32.gmra.mxu0 %v798
      %v938 = vpop.f32.mrf.mxu0
      %v939 = vadd.f32 %v919, %v938
      %940 = vdwg.mxu0
      %941 = vmatpush.msra.mxu0 %v383
      %942 = vmatpush.msra.mxu0 %v382
      %943 = vmatpush.msra.mxu0 %v381
      %944 = vmatpush.msra.mxu0 %v380
      %945 = vmatpush.msra.mxu0 %v379
      %946 = vmatpush.msra.mxu0 %v378
      %947 = vmatpush.msra.mxu0 %v377
      %948 = vmatpush.msra.mxu0 %v376
      %949 = vmatpush.msra.mxu0 %v375
      %950 = vmatpush.msra.mxu0 %v374
      %951 = vmatpush.msra.mxu0 %v373
      %952 = vmatpush.msra.mxu0 %v372
      %953 = vmatpush.msra.mxu0 %v371
      %954 = vmatpush.msra.mxu0 %v370
      %955 = vmatpush.msra.mxu0 %v369
      %956 = vmatpush.msra.mxu0 %v368
      %957 = vmatmul.f32.gmra.mxu0 %v799
      %v958 = vpop.f32.mrf.mxu0
      %v959 = vadd.f32 %v939, %v958
      %960 = vdwg.mxu0
      %961 = vmatpush.msra.mxu0 %v399
      %962 = vmatpush.msra.mxu0 %v398
      %963 = vmatpush.msra.mxu0 %v397
      %964 = vmatpush.msra.mxu0 %v396
      %965 = vmatpush.msra.mxu0 %v395
      %966 = vmatpush.msra.mxu0 %v394
      %967 = vmatpush.msra.mxu0 %v393
      %968 = vmatpush.msra.mxu0 %v392
      %969 = vmatpush.msra.mxu0 %v391
      %970 = vmatpush.msra.mxu0 %v390
      %971 = vmatpush.msra.mxu0 %v389
      %972 = vmatpush.msra.mxu0 %v388
      %973 = vmatpush.msra.mxu0 %v387
      %974 = vmatpush.msra.mxu0 %v386
      %975 = vmatpush.msra.mxu0 %v385
      %976 = vmatpush.msra.mxu0 %v384
      %977 = vmatmul.f32.gmra.mxu0 %v800
      %v978 = vpop.f32.mrf.mxu0
      %v979 = vadd.f32 %v959, %v978
      %980 = vdwg.mxu0
      %981 = vmatpush.msra.mxu0 %v415
      %982 = vmatpush.msra.mxu0 %v414
      %983 = vmatpush.msra.mxu0 %v413
      %984 = vmatpush.msra.mxu0 %v412
      %985 = vmatpush.msra.mxu0 %v411
      %986 = vmatpush.msra.mxu0 %v410
      %987 = vmatpush.msra.mxu0 %v409
      %988 = vmatpush.msra.mxu0 %v408
      %989 = vmatpush.msra.mxu0 %v407
      %990 = vmatpush.msra.mxu0 %v406
      %991 = vmatpush.msra.mxu0 %v405
      %992 = vmatpush.msra.mxu0 %v404
      %993 = vmatpush.msra.mxu0 %v403
      %994 = vmatpush.msra.mxu0 %v402
      %995 = vmatpush.msra.mxu0 %v401
      %996 = vmatpush.msra.mxu0 %v400
      %997 = vmatmul.f32.gmra.mxu0 %v801
      %v998 = vpop.f32.mrf.mxu0
      %v999 = vadd.f32 %v979, %v998
      %1000 = vdwg.mxu0
      %1001 = vmatpush.msra.mxu0 %v431
      %1002 = vmatpush.msra.mxu0 %v430
      %1003 = vmatpush.msra.mxu0 %v429
      %1004 = vmatpush.msra.mxu0 %v428
      %1005 = vmatpush.msra.mxu0 %v427
      %1006 = vmatpush.msra.mxu0 %v426
      %1007 = vmatpush.msra.mxu0 %v425
      %1008 = vmatpush.msra.mxu0 %v424
      %1009 = vmatpush.msra.mxu0 %v423
      %1010 = vmatpush.msra.mxu0 %v422
      %1011 = vmatpush.msra.mxu0 %v421
      %1012 = vmatpush.msra.mxu0 %v420
      %1013 = vmatpush.msra.mxu0 %v419
      %1014 = vmatpush.msra.mxu0 %v418
      %1015 = vmatpush.msra.mxu0 %v417
      %1016 = vmatpush.msra.mxu0 %v416
      %1017 = vmatmul.f32.gmra.mxu0 %v802
      %v1018 = vpop.f32.mrf.mxu0
      %v1019 = vadd.f32 %v999, %v1018
      %1020 = vdwg.mxu0
      %1021 = vmatpush.msra.mxu0 %v447
      %1022 = vmatpush.msra.mxu0 %v446
      %1023 = vmatpush.msra.mxu0 %v445
      %1024 = vmatpush.msra.mxu0 %v444
      %1025 = vmatpush.msra.mxu0 %v443
      %1026 = vmatpush.msra.mxu0 %v442
      %1027 = vmatpush.msra.mxu0 %v441
      %1028 = vmatpush.msra.mxu0 %v440
      %1029 = vmatpush.msra.mxu0 %v439
      %1030 = vmatpush.msra.mxu0 %v438
      %1031 = vmatpush.msra.mxu0 %v437
      %1032 = vmatpush.msra.mxu0 %v436
      %1033 = vmatpush.msra.mxu0 %v435
      %1034 = vmatpush.msra.mxu0 %v434
      %1035 = vmatpush.msra.mxu0 %v433
      %1036 = vmatpush.msra.mxu0 %v432
      %1037 = vmatmul.f32.gmra.mxu0 %v805
      %v1038 = vpop.f32.mrf.mxu0
      %v1039 = vadd.f32 %v1019, %v1038
      %1040 = vdwg.mxu0
      %1041 = vmatpush.msra.mxu0 %v463
      %1042 = vmatpush.msra.mxu0 %v462
      %1043 = vmatpush.msra.mxu0 %v461
      %1044 = vmatpush.msra.mxu0 %v460
      %1045 = vmatpush.msra.mxu0 %v459
      %1046 = vmatpush.msra.mxu0 %v458
      %1047 = vmatpush.msra.mxu0 %v457
      %1048 = vmatpush.msra.mxu0 %v456
      %1049 = vmatpush.msra.mxu0 %v455
      %1050 = vmatpush.msra.mxu0 %v454
      %1051 = vmatpush.msra.mxu0 %v453
      %1052 = vmatpush.msra.mxu0 %v452
      %1053 = vmatpush.msra.mxu0 %v451
      %1054 = vmatpush.msra.mxu0 %v450
      %1055 = vmatpush.msra.mxu0 %v449
      %1056 = vmatpush.msra.mxu0 %v448
      %1057 = vmatmul.f32.gmra.mxu0 %v806
      %v1058 = vpop.f32.mrf.mxu0
      %v1059 = vadd.f32 %v1039, %v1058
      %1060 = vdwg.mxu0
      %1061 = vmatpush.msra.mxu0 %v479
      %1062 = vmatpush.msra.mxu0 %v478
      %1063 = vmatpush.msra.mxu0 %v477
      %1064 = vmatpush.msra.mxu0 %v476
      %1065 = vmatpush.msra.mxu0 %v475
      %1066 = vmatpush.msra.mxu0 %v474
      %1067 = vmatpush.msra.mxu0 %v473
      %1068 = vmatpush.msra.mxu0 %v472
      %1069 = vmatpush.msra.mxu0 %v471
      %1070 = vmatpush.msra.mxu0 %v470
      %1071 = vmatpush.msra.mxu0 %v469
      %1072 = vmatpush.msra.mxu0 %v468
      %1073 = vmatpush.msra.mxu0 %v467
      %1074 = vmatpush.msra.mxu0 %v466
      %1075 = vmatpush.msra.mxu0 %v465
      %1076 = vmatpush.msra.mxu0 %v464
      %1077 = vmatmul.f32.gmra.mxu0 %v807
      %v1078 = vpop.f32.mrf.mxu0
      %v1079 = vadd.f32 %v1059, %v1078
      %1080 = vdwg.mxu0
      %1081 = vmatpush.msra.mxu0 %v495
      %1082 = vmatpush.msra.mxu0 %v494
      %1083 = vmatpush.msra.mxu0 %v493
      %1084 = vmatpush.msra.mxu0 %v492
      %1085 = vmatpush.msra.mxu0 %v491
      %1086 = vmatpush.msra.mxu0 %v490
      %1087 = vmatpush.msra.mxu0 %v489
      %1088 = vmatpush.msra.mxu0 %v488
      %1089 = vmatpush.msra.mxu0 %v487
      %1090 = vmatpush.msra.mxu0 %v486
      %1091 = vmatpush.msra.mxu0 %v485
      %1092 = vmatpush.msra.mxu0 %v484
      %1093 = vmatpush.msra.mxu0 %v483
      %1094 = vmatpush.msra.mxu0 %v482
      %1095 = vmatpush.msra.mxu0 %v481
      %1096 = vmatpush.msra.mxu0 %v480
      %1097 = vmatmul.f32.gmra.mxu0 %v808
      %v1098 = vpop.f32.mrf.mxu0
      %v1099 = vadd.f32 %v1079, %v1098
      %1100 = vdwg.mxu0
      %1101 = vmatpush.msra.mxu0 %v511
      %1102 = vmatpush.msra.mxu0 %v510
      %1103 = vmatpush.msra.mxu0 %v509
      %1104 = vmatpush.msra.mxu0 %v508
      %1105 = vmatpush.msra.mxu0 %v507
      %1106 = vmatpush.msra.mxu0 %v506
      %1107 = vmatpush.msra.mxu0 %v505
      %1108 = vmatpush.msra.mxu0 %v504
      %1109 = vmatpush.msra.mxu0 %v503
      %1110 = vmatpush.msra.mxu0 %v502
      %1111 = vmatpush.msra.mxu0 %v501
      %1112 = vmatpush.msra.mxu0 %v500
      %1113 = vmatpush.msra.mxu0 %v499
      %1114 = vmatpush.msra.mxu0 %v498
      %1115 = vmatpush.msra.mxu0 %v497
      %1116 = vmatpush.msra.mxu0 %v496
      %1117 = vmatmul.f32.gmra.mxu0 %v809
      %v1118 = vpop.f32.mrf.mxu0
      %v1119 = vadd.f32 %v1099, %v1118
      %1120 = vdwg.mxu0
      %1121 = vmatpush.msra.mxu0 %v527
      %1122 = vmatpush.msra.mxu0 %v526
      %1123 = vmatpush.msra.mxu0 %v525
      %1124 = vmatpush.msra.mxu0 %v524
      %1125 = vmatpush.msra.mxu0 %v523
      %1126 = vmatpush.msra.mxu0 %v522
      %1127 = vmatpush.msra.mxu0 %v521
      %1128 = vmatpush.msra.mxu0 %v520
      %1129 = vmatpush.msra.mxu0 %v519
      %1130 = vmatpush.msra.mxu0 %v518
      %1131 = vmatpush.msra.mxu0 %v517
      %1132 = vmatpush.msra.mxu0 %v516
      %1133 = vmatpush.msra.mxu0 %v515
      %1134 = vmatpush.msra.mxu0 %v514
      %1135 = vmatpush.msra.mxu0 %v513
      %1136 = vmatpush.msra.mxu0 %v512
      %1137 = vmatmul.f32.gmra.mxu0 %v810
      %v1138 = vpop.f32.mrf.mxu0
      %v1139 = vadd.f32 %v1119, %v1138
      %1140 = vdwg.mxu0
      %1141 = vmatpush.msra.mxu0 %v543
      %1142 = vmatpush.msra.mxu0 %v542
      %1143 = vmatpush.msra.mxu0 %v541
      %1144 = vmatpush.msra.mxu0 %v540
      %1145 = vmatpush.msra.mxu0 %v539
      %1146 = vmatpush.msra.mxu0 %v538
      %1147 = vmatpush.msra.mxu0 %v537
      %1148 = vmatpush.msra.mxu0 %v536
      %1149 = vmatpush.msra.mxu0 %v535
      %1150 = vmatpush.msra.mxu0 %v534
      %1151 = vmatpush.msra.mxu0 %v533
      %1152 = vmatpush.msra.mxu0 %v532
      %1153 = vmatpush.msra.mxu0 %v531
      %1154 = vmatpush.msra.mxu0 %v530
      %1155 = vmatpush.msra.mxu0 %v529
      %1156 = vmatpush.msra.mxu0 %v528
      %1157 = vmatmul.f32.gmra.mxu0 %v811
      %v1158 = vpop.f32.mrf.mxu0
      %v1159 = vadd.f32 %v1139, %v1158
      %1160 = vdwg.mxu0
      %1161 = vmatpush.msra.mxu0 %v559
      %1162 = vmatpush.msra.mxu0 %v558
      %1163 = vmatpush.msra.mxu0 %v557
      %1164 = vmatpush.msra.mxu0 %v556
      %1165 = vmatpush.msra.mxu0 %v555
      %1166 = vmatpush.msra.mxu0 %v554
      %1167 = vmatpush.msra.mxu0 %v553
      %1168 = vmatpush.msra.mxu0 %v552
      %1169 = vmatpush.msra.mxu0 %v551
      %1170 = vmatpush.msra.mxu0 %v550
      %1171 = vmatpush.msra.mxu0 %v549
      %1172 = vmatpush.msra.mxu0 %v548
      %1173 = vmatpush.msra.mxu0 %v547
      %1174 = vmatpush.msra.mxu0 %v546
      %1175 = vmatpush.msra.mxu0 %v545
      %1176 = vmatpush.msra.mxu0 %v544
      %1177 = vmatmul.f32.gmra.mxu0 %v812
      %v1178 = vpop.f32.mrf.mxu0
      %v1179 = vadd.f32 %v1159, %v1178
      %1180 = vdwg.mxu0
      %1181 = vmatpush.msra.mxu0 %v575
      %1182 = vmatpush.msra.mxu0 %v574
      %1183 = vmatpush.msra.mxu0 %v573
      %1184 = vmatpush.msra.mxu0 %v572
      %1185 = vmatpush.msra.mxu0 %v571
      %1186 = vmatpush.msra.mxu0 %v570
      %1187 = vmatpush.msra.mxu0 %v569
      %1188 = vmatpush.msra.mxu0 %v568
      %1189 = vmatpush.msra.mxu0 %v567
      %1190 = vmatpush.msra.mxu0 %v566
      %1191 = vmatpush.msra.mxu0 %v565
      %1192 = vmatpush.msra.mxu0 %v564
      %1193 = vmatpush.msra.mxu0 %v563
      %1194 = vmatpush.msra.mxu0 %v562
      %1195 = vmatpush.msra.mxu0 %v561
      %1196 = vmatpush.msra.mxu0 %v560
      %1197 = vmatmul.f32.gmra.mxu0 %v815
      %v1198 = vpop.f32.mrf.mxu0
      %v1199 = vadd.f32 %v1179, %v1198
      %1200 = vdwg.mxu0
      %1201 = vmatpush.msra.mxu0 %v591
      %1202 = vmatpush.msra.mxu0 %v590
      %1203 = vmatpush.msra.mxu0 %v589
      %1204 = vmatpush.msra.mxu0 %v588
      %1205 = vmatpush.msra.mxu0 %v587
      %1206 = vmatpush.msra.mxu0 %v586
      %1207 = vmatpush.msra.mxu0 %v585
      %1208 = vmatpush.msra.mxu0 %v584
      %1209 = vmatpush.msra.mxu0 %v583
      %1210 = vmatpush.msra.mxu0 %v582
      %1211 = vmatpush.msra.mxu0 %v581
      %1212 = vmatpush.msra.mxu0 %v580
      %1213 = vmatpush.msra.mxu0 %v579
      %1214 = vmatpush.msra.mxu0 %v578
      %1215 = vmatpush.msra.mxu0 %v577
      %1216 = vmatpush.msra.mxu0 %v576
      %1217 = vmatmul.f32.gmra.mxu0 %v816
      %v1218 = vpop.f32.mrf.mxu0
      %v1219 = vadd.f32 %v1199, %v1218
      %1220 = vdwg.mxu0
      %1221 = vmatpush.msra.mxu0 %v607
      %1222 = vmatpush.msra.mxu0 %v606
      %1223 = vmatpush.msra.mxu0 %v605
      %1224 = vmatpush.msra.mxu0 %v604
      %1225 = vmatpush.msra.mxu0 %v603
      %1226 = vmatpush.msra.mxu0 %v602
      %1227 = vmatpush.msra.mxu0 %v601
      %1228 = vmatpush.msra.mxu0 %v600
      %1229 = vmatpush.msra.mxu0 %v599
      %1230 = vmatpush.msra.mxu0 %v598
      %1231 = vmatpush.msra.mxu0 %v597
      %1232 = vmatpush.msra.mxu0 %v596
      %1233 = vmatpush.msra.mxu0 %v595
      %1234 = vmatpush.msra.mxu0 %v594
      %1235 = vmatpush.msra.mxu0 %v593
      %1236 = vmatpush.msra.mxu0 %v592
      %1237 = vmatmul.f32.gmra.mxu0 %v817
      %v1238 = vpop.f32.mrf.mxu0
      %v1239 = vadd.f32 %v1219, %v1238
      %1240 = vdwg.mxu0
      %1241 = vmatpush.msra.mxu0 %v623
      %1242 = vmatpush.msra.mxu0 %v622
      %1243 = vmatpush.msra.mxu0 %v621
      %1244 = vmatpush.msra.mxu0 %v620
      %1245 = vmatpush.msra.mxu0 %v619
      %1246 = vmatpush.msra.mxu0 %v618
      %1247 = vmatpush.msra.mxu0 %v617
      %1248 = vmatpush.msra.mxu0 %v616
      %1249 = vmatpush.msra.mxu0 %v615
      %1250 = vmatpush.msra.mxu0 %v614
      %1251 = vmatpush.msra.mxu0 %v613
      %1252 = vmatpush.msra.mxu0 %v612
      %1253 = vmatpush.msra.mxu0 %v611
      %1254 = vmatpush.msra.mxu0 %v610
      %1255 = vmatpush.msra.mxu0 %v609
      %1256 = vmatpush.msra.mxu0 %v608
      %1257 = vmatmul.f32.gmra.mxu0 %v818
      %v1258 = vpop.f32.mrf.mxu0
      %v1259 = vadd.f32 %v1239, %v1258
      %1260 = vdwg.mxu0
      %1261 = vmatpush.msra.mxu0 %v639
      %1262 = vmatpush.msra.mxu0 %v638
      %1263 = vmatpush.msra.mxu0 %v637
      %1264 = vmatpush.msra.mxu0 %v636
      %1265 = vmatpush.msra.mxu0 %v635
      %1266 = vmatpush.msra.mxu0 %v634
      %1267 = vmatpush.msra.mxu0 %v633
      %1268 = vmatpush.msra.mxu0 %v632
      %1269 = vmatpush.msra.mxu0 %v631
      %1270 = vmatpush.msra.mxu0 %v630
      %1271 = vmatpush.msra.mxu0 %v629
      %1272 = vmatpush.msra.mxu0 %v628
      %1273 = vmatpush.msra.mxu0 %v627
      %1274 = vmatpush.msra.mxu0 %v626
      %1275 = vmatpush.msra.mxu0 %v625
      %1276 = vmatpush.msra.mxu0 %v624
      %1277 = vmatmul.f32.gmra.mxu0 %v819
      %v1278 = vpop.f32.mrf.mxu0
      %v1279 = vadd.f32 %v1259, %v1278
      %1280 = vdwg.mxu0
      %1281 = vmatpush.msra.mxu0 %v655
      %1282 = vmatpush.msra.mxu0 %v654
      %1283 = vmatpush.msra.mxu0 %v653
      %1284 = vmatpush.msra.mxu0 %v652
      %1285 = vmatpush.msra.mxu0 %v651
      %1286 = vmatpush.msra.mxu0 %v650
      %1287 = vmatpush.msra.mxu0 %v649
      %1288 = vmatpush.msra.mxu0 %v648
      %1289 = vmatpush.msra.mxu0 %v647
      %1290 = vmatpush.msra.mxu0 %v646
      %1291 = vmatpush.msra.mxu0 %v645
      %1292 = vmatpush.msra.mxu0 %v644
      %1293 = vmatpush.msra.mxu0 %v643
      %1294 = vmatpush.msra.mxu0 %v642
      %1295 = vmatpush.msra.mxu0 %v641
      %1296 = vmatpush.msra.mxu0 %v640
      %1297 = vmatmul.f32.gmra.mxu0 %v820
      %v1298 = vpop.f32.mrf.mxu0
      %v1299 = vadd.f32 %v1279, %v1298
      %1300 = vdwg.mxu0
      %1301 = vmatpush.msra.mxu0 %v671
      %1302 = vmatpush.msra.mxu0 %v670
      %1303 = vmatpush.msra.mxu0 %v669
      %1304 = vmatpush.msra.mxu0 %v668
      %1305 = vmatpush.msra.mxu0 %v667
      %1306 = vmatpush.msra.mxu0 %v666
      %1307 = vmatpush.msra.mxu0 %v665
      %1308 = vmatpush.msra.mxu0 %v664
      %1309 = vmatpush.msra.mxu0 %v663
      %1310 = vmatpush.msra.mxu0 %v662
      %1311 = vmatpush.msra.mxu0 %v661
      %1312 = vmatpush.msra.mxu0 %v660
      %1313 = vmatpush.msra.mxu0 %v659
      %1314 = vmatpush.msra.mxu0 %v658
      %1315 = vmatpush.msra.mxu0 %v657
      %1316 = vmatpush.msra.mxu0 %v656
      %1317 = vmatmul.f32.gmra.mxu0 %v821
      %v1318 = vpop.f32.mrf.mxu0
      %v1319 = vadd.f32 %v1299, %v1318
      %1320 = vdwg.mxu0
      %1321 = vmatpush.msra.mxu0 %v687
      %1322 = vmatpush.msra.mxu0 %v686
      %1323 = vmatpush.msra.mxu0 %v685
      %1324 = vmatpush.msra.mxu0 %v684
      %1325 = vmatpush.msra.mxu0 %v683
      %1326 = vmatpush.msra.mxu0 %v682
      %1327 = vmatpush.msra.mxu0 %v681
      %1328 = vmatpush.msra.mxu0 %v680
      %1329 = vmatpush.msra.mxu0 %v679
      %1330 = vmatpush.msra.mxu0 %v678
      %1331 = vmatpush.msra.mxu0 %v677
      %1332 = vmatpush.msra.mxu0 %v676
      %1333 = vmatpush.msra.mxu0 %v675
      %1334 = vmatpush.msra.mxu0 %v674
      %1335 = vmatpush.msra.mxu0 %v673
      %1336 = vmatpush.msra.mxu0 %v672
      %1337 = vmatmul.f32.gmra.mxu0 %v822
      %v1338 = vpop.f32.mrf.mxu0
      %v1339 = vadd.f32 %v1319, %v1338
      %1340 = vdwg.mxu0
      %1341 = vmatpush.msra.mxu0 %v703
      %1342 = vmatpush.msra.mxu0 %v702
      %1343 = vmatpush.msra.mxu0 %v701
      %1344 = vmatpush.msra.mxu0 %v700
      %1345 = vmatpush.msra.mxu0 %v699
      %1346 = vmatpush.msra.mxu0 %v698
      %1347 = vmatpush.msra.mxu0 %v697
      %1348 = vmatpush.msra.mxu0 %v696
      %1349 = vmatpush.msra.mxu0 %v695
      %1350 = vmatpush.msra.mxu0 %v694
      %1351 = vmatpush.msra.mxu0 %v693
      %1352 = vmatpush.msra.mxu0 %v692
      %1353 = vmatpush.msra.mxu0 %v691
      %1354 = vmatpush.msra.mxu0 %v690
      %1355 = vmatpush.msra.mxu0 %v689
      %1356 = vmatpush.msra.mxu0 %v688
      %1357 = vmatmul.f32.gmra.mxu0 %v825
      %v1358 = vpop.f32.mrf.mxu0
      %v1359 = vadd.f32 %v1339, %v1358
      %1360 = vdwg.mxu0
      %1361 = vmatpush.msra.mxu0 %v719
      %1362 = vmatpush.msra.mxu0 %v718
      %1363 = vmatpush.msra.mxu0 %v717
      %1364 = vmatpush.msra.mxu0 %v716
      %1365 = vmatpush.msra.mxu0 %v715
      %1366 = vmatpush.msra.mxu0 %v714
      %1367 = vmatpush.msra.mxu0 %v713
      %1368 = vmatpush.msra.mxu0 %v712
      %1369 = vmatpush.msra.mxu0 %v711
      %1370 = vmatpush.msra.mxu0 %v710
      %1371 = vmatpush.msra.mxu0 %v709
      %1372 = vmatpush.msra.mxu0 %v708
      %1373 = vmatpush.msra.mxu0 %v707
      %1374 = vmatpush.msra.mxu0 %v706
      %1375 = vmatpush.msra.mxu0 %v705
      %1376 = vmatpush.msra.mxu0 %v704
      %1377 = vmatmul.f32.gmra.mxu0 %v826
      %v1378 = vpop.f32.mrf.mxu0
      %v1379 = vadd.f32 %v1359, %v1378
      %1380 = vdwg.mxu0
      %1381 = vmatpush.msra.mxu0 %v735
      %1382 = vmatpush.msra.mxu0 %v734
      %1383 = vmatpush.msra.mxu0 %v733
      %1384 = vmatpush.msra.mxu0 %v732
      %1385 = vmatpush.msra.mxu0 %v731
      %1386 = vmatpush.msra.mxu0 %v730
      %1387 = vmatpush.msra.mxu0 %v729
      %1388 = vmatpush.msra.mxu0 %v728
      %1389 = vmatpush.msra.mxu0 %v727
      %1390 = vmatpush.msra.mxu0 %v726
      %1391 = vmatpush.msra.mxu0 %v725
      %1392 = vmatpush.msra.mxu0 %v724
      %1393 = vmatpush.msra.mxu0 %v723
      %1394 = vmatpush.msra.mxu0 %v722
      %1395 = vmatpush.msra.mxu0 %v721
      %1396 = vmatpush.msra.mxu0 %v720
      %1397 = vmatmul.f32.gmra.mxu0 %v827
      %v1398 = vpop.f32.mrf.mxu0
      %v1399 = vadd.f32 %v1379, %v1398
      %1400 = vdwg.mxu0
      %1401 = vmatpush.msra.mxu0 %v751
      %1402 = vmatpush.msra.mxu0 %v750
      %1403 = vmatpush.msra.mxu0 %v749
      %1404 = vmatpush.msra.mxu0 %v748
      %1405 = vmatpush.msra.mxu0 %v747
      %1406 = vmatpush.msra.mxu0 %v746
      %1407 = vmatpush.msra.mxu0 %v745
      %1408 = vmatpush.msra.mxu0 %v744
      %1409 = vmatpush.msra.mxu0 %v743
      %1410 = vmatpush.msra.mxu0 %v742
      %1411 = vmatpush.msra.mxu0 %v741
      %1412 = vmatpush.msra.mxu0 %v740
      %1413 = vmatpush.msra.mxu0 %v739
      %1414 = vmatpush.msra.mxu0 %v738
      %1415 = vmatpush.msra.mxu0 %v737
      %1416 = vmatpush.msra.mxu0 %v736
      %1417 = vmatmul.f32.gmra.mxu0 %v828
      %v1418 = vpop.f32.mrf.mxu0
      %v1419 = vadd.f32 %v1399, %v1418
      %1420 = vdwg.mxu0
      %1421 = vmatpush.msra.mxu0 %v767
      %1422 = vmatpush.msra.mxu0 %v766
      %1423 = vmatpush.msra.mxu0 %v765
      %1424 = vmatpush.msra.mxu0 %v764
      %1425 = vmatpush.msra.mxu0 %v763
      %1426 = vmatpush.msra.mxu0 %v762
      %1427 = vmatpush.msra.mxu0 %v761
      %1428 = vmatpush.msra.mxu0 %v760
      %1429 = vmatpush.msra.mxu0 %v759
      %1430 = vmatpush.msra.mxu0 %v758
      %1431 = vmatpush.msra.mxu0 %v757
      %1432 = vmatpush.msra.mxu0 %v756
      %1433 = vmatpush.msra.mxu0 %v755
      %1434 = vmatpush.msra.mxu0 %v754
      %1435 = vmatpush.msra.mxu0 %v753
      %1436 = vmatpush.msra.mxu0 %v752
      %1437 = vmatmul.f32.gmra.mxu0 %v829
      %v1438 = vpop.f32.mrf.mxu0
      %v1439 = vadd.f32 %v1419, %v1438
      %1440 = vdwg.mxu0
      %1441 = vmatpush.msra.mxu0 %v783
      %1442 = vmatpush.msra.mxu0 %v782
      %1443 = vmatpush.msra.mxu0 %v781
      %1444 = vmatpush.msra.mxu0 %v780
      %1445 = vmatpush.msra.mxu0 %v779
      %1446 = vmatpush.msra.mxu0 %v778
      %1447 = vmatpush.msra.mxu0 %v777
      %1448 = vmatpush.msra.mxu0 %v776
      %1449 = vmatpush.msra.mxu0 %v775
      %1450 = vmatpush.msra.mxu0 %v774
      %1451 = vmatpush.msra.mxu0 %v773
      %1452 = vmatpush.msra.mxu0 %v772
      %1453 = vmatpush.msra.mxu0 %v771
      %1454 = vmatpush.msra.mxu0 %v770
      %1455 = vmatpush.msra.mxu0 %v769
      %1456 = vmatpush.msra.mxu0 %v768
      %1457 = vmatmul.f32.gmra.mxu0 %v830
      %v1458 = vpop.f32.mrf.mxu0
      %v1459 = vadd.f32 %v1439, %v1458
      %1460 = vdwg.mxu0
      %v1461 = vadd.f32 %v295, %v1459
      %1462 = vst [vmem:[#allocation2] sm:$0x3] %v1461
      %p1463 = scmp.eq.s32.totalorder %s20, 3
      // Predicated region
      $region53: #{critic_forward.5} parent=47 // pred_check
        %p1464 = pneg %p1463
      $region54: #{critic_forward.5} parent=47 // pred_check_branch
        %1466 = sbr.rel (%p1464) target = $region56
      $region55: #{critic_forward.5} parent=47 // pred_region
        %v1467 = vld [vmem:[#allocation2] sm:$0x3]
        %v1468 = vld [vmem:[%s2] sm:$0x1]
        %v1470 = vperm.slane %v1468, 0
        %v1472 = vadd.f32 %v1467, %v1470
        %v1473 = vmax.f32 %v1472, 0.0
        %v1474 = vld [vmem:[%s3] sm:$0xff]
        %v1475 = vld [vmem:[%s3 + $0x8] sm:$0xff]
        %v1476 = vld [vmem:[%s3 + $0x10] sm:$0xff]
        %v1477 = vld [vmem:[%s3 + $0x18] sm:$0xff]
        %v1478 = vld [vmem:[%s3 + $0x20] sm:$0xff]
        %v1479 = vld [vmem:[%s3 + $0x28] sm:$0xff]
        %v1480 = vld [vmem:[%s3 + $0x30] sm:$0xff]
        %v1481 = vld [vmem:[%s3 + $0x38] sm:$0xff]
        %v1482 = vld [vmem:[%s3 + $0x40] sm:$0xff]
        %v1483 = vld [vmem:[%s3 + $0x48] sm:$0xff]
        %v1484 = vld [vmem:[%s3 + $0x50] sm:$0xff]
        %v1485 = vld [vmem:[%s3 + $0x58] sm:$0xff]
        %v1486 = vld [vmem:[%s3 + $0x60] sm:$0xff]
        %v1487 = vld [vmem:[%s3 + $0x68] sm:$0xff]
        %v1488 = vld [vmem:[%s3 + $0x70] sm:$0xff]
        %v1489 = vld [vmem:[%s3 + $0x78] sm:$0xff]
        %v1490 = vld [vmem:[%s4] sm:$0x1]
        %v1492 = vperm.slane %v1490, 0
        %1494 = vmatpush.msra.mxu0 %v1489
        %1495 = vmatpush.msra.mxu0 %v1488
        %1496 = vmatpush.msra.mxu0 %v1487
        %1497 = vmatpush.msra.mxu0 %v1486
        %1498 = vmatpush.msra.mxu0 %v1485
        %1499 = vmatpush.msra.mxu0 %v1484
        %1500 = vmatpush.msra.mxu0 %v1483
        %1501 = vmatpush.msra.mxu0 %v1482
        %1502 = vmatpush.msra.mxu0 %v1481
        %1503 = vmatpush.msra.mxu0 %v1480
        %1504 = vmatpush.msra.mxu0 %v1479
        %1505 = vmatpush.msra.mxu0 %v1478
        %1506 = vmatpush.msra.mxu0 %v1477
        %1507 = vmatpush.msra.mxu0 %v1476
        %1508 = vmatpush.msra.mxu0 %v1475
        %1509 = vmatpush.msra.mxu0 %v1474
        %1510 = vmatmul.f32.gmra.mxu0 %v1473
        %v1511 = vpop.f32.mrf.mxu0
        %v1512 = vadd.f32 %v1492, %v1511
        %1513 = vdwg.mxu0
        %v1514 = vmax.f32 %v1512, 0.0
        %v1515 = vld [vmem:[%s5] sm:$0x1]
        %v1517 = vperm.slane %v1515, 0
        %v1519 = vmul.f32 %v1514, %v1517
        %vm1520 = vcmask 517120
        %v1521 = vsel %vm1520, %v1519, 0.0
        %1522 = vadd.xlane.f32.xlu0 %v1521
        %v1523 = vpop.xlane.xlu0 %1522
        %v1524 = vld [vmem:[#allocation3] sm:$0x1]
        %v1526 = vperm.slane %v1524, 0
        %v1528 = vadd.f32 %v1523, %v1526
        %vm1529 = vcmask 1024
        %1530 = vst.msk [vmem:[%s7] sm:$0x3] %vm1529, %v1528
      $region56: #{critic_forward.5} parent=47 // pred_fallthru
        _
      // Predicated region
      $region57: #{critic_forward.5} parent=47 // pred_check
        %p1531 = pneg %p190
      $region58: #{critic_forward.5} parent=47 // pred_check_branch
        %1533 = sbr.rel (%p1531) target = $region60
      $region59: #{critic_forward.5} parent=47 // pred_region
        _
      $region60: #{critic_forward.5} parent=47 // pred_fallthru
        _
      // Predicated region
      $region61: #{critic_forward.5} parent=47 // pred_check
        %p1534 = pneg %p190
      $region62: #{critic_forward.5} parent=47 // pred_check_branch
        %1536 = sbr.rel (%p1534) target = $region64
      $region63: #{critic_forward.5} parent=47 // pred_region
        _
      $region64: #{critic_forward.5} parent=47 // pred_fallthru
        _
    $region48: #{critic_forward.5} parent=5 // pred_fallthru
      _
    %p1537 = scmp.le.s32.totalorder 2, %s15
    // Predicated region
    $region65: #{critic_forward.5} parent=5 // pred_check
      %p1538 = pneg %p1537
    $region66: #{critic_forward.5} parent=5 // pred_check_branch
      %1540 = sbr.rel (%p1538) target = $region68
    $region67: #{critic_forward.5} parent=5 // pred_region
      %s1541 = ssub.s32 %s15, 2
    $region68: #{critic_forward.5} parent=5 // pred_fallthru
      _
  $region6: #{critic_forward.5} parent=0 // loop_footer
    %s19 = sadd.s32 1, %s15
  $region7: #{critic_forward.5} parent=0 // loop_footer_branch
    %14 = sbr.rel target = $region3
  $region8: #{critic_forward.5} parent=0 // loop_exit
    _

</llo_original>
